<compile_context>
chip_gen: v5e
topology: v5e:2x2
jax: 0.10.0
libtpu: 0.0.40
codegen_flags: <defaults>
</compile_context>

<pallas_src>
import functools

import jax
import jax.numpy as jnp
from jax import lax
from jax.experimental import pallas as pl
from jax.experimental.pallas import tpu as pltpu


# ----------------------------------------------------------------------------
# Pallas kernels
# ----------------------------------------------------------------------------
def _embed_kernel(x_ref, w_ref, b_ref, pos_ref, o_ref):
    """Fused patch projection + bias + positional embedding, lane-dense output."""
    y = jnp.dot(x_ref[...].astype(jnp.bfloat16), w_ref[...],
                preferred_element_type=jnp.float32)
    o_ref[...] = y + b_ref[...] + pos_ref[...]


def patch_embed_pallas(x, w_blk, b_row, pos_rows):
    """x: (M, G*P) f32, w_blk: (G*P, D) bf16 block-diagonal, output (M, D) f32."""
    M, K = x.shape
    N = w_blk.shape[1]
    return pl.pallas_call(
        _embed_kernel,
        grid=(1,),
        in_specs=[pl.BlockSpec((M, K), lambda i: (0, 0)),
                  pl.BlockSpec((K, N), lambda i: (0, 0)),
                  pl.BlockSpec((1, N), lambda i: (0, 0)),
                  pl.BlockSpec((M, N), lambda i: (0, 0))],
        out_specs=pl.BlockSpec((M, N), lambda i: (0, 0)),
        out_shape=jax.ShapeDtypeStruct((M, N), jnp.float32),
    )(x, w_blk, b_row, pos_rows)


def _linear_kernel(x_ref, w_ref, b_ref, o_ref):
    o_ref[...] = (jnp.dot(x_ref[...].astype(jnp.bfloat16), w_ref[...],
                          preferred_element_type=jnp.float32) + b_ref[...])


def linear_pallas(x, w, b):
    """x: (M, K) f32, w: (K, N) bf16 (N a multiple of 128), b: (1, N) f32."""
    M, K = x.shape
    N = w.shape[1]
    return pl.pallas_call(
        _linear_kernel,
        grid=(1,),
        in_specs=[pl.BlockSpec((M, K), lambda i: (0, 0)),
                  pl.BlockSpec((K, N), lambda i: (0, 0)),
                  pl.BlockSpec((1, N), lambda i: (0, 0))],
        out_specs=pl.BlockSpec((M, N), lambda i: (0, 0)),
        out_shape=jax.ShapeDtypeStruct((M, N), jnp.float32),
    )(x, w, b)


def _layer_norm(x, g, b, eps=1e-5):
    mu = jnp.mean(x, axis=-1, keepdims=True)
    var = jnp.mean((x - mu) ** 2, axis=-1, keepdims=True)
    return (x - mu) * lax.rsqrt(var + eps) * g + b


def _block_forward(x, w, num_head, head_dim):
    """One pre-norm ViT block on an (S, D) tile. bf16 MXU inputs, f32 accumulate."""
    (ln1g, ln1b, wqkv, bqkv, wo, bo, ln2g, ln2b, w1, b1, w2, b2) = w
    D = x.shape[-1]
    bf16 = jnp.bfloat16

    # --- multi-head self-attention ---
    xn = _layer_norm(x, ln1g[...], ln1b[...]).astype(bf16)
    qkv = jnp.dot(xn, wqkv[...], preferred_element_type=jnp.float32) + bqkv[...]
    scale = 1.0 / (head_dim ** 0.5)
    q = (qkv[:, 0 * D:1 * D] * scale).astype(bf16)   # scale folded into q once
    k = qkv[:, 1 * D:2 * D].astype(bf16)
    v = qkv[:, 2 * D:3 * D].astype(bf16)
    heads = []
    for h in range(num_head):                        # static unroll (S is tiny)
        lo, hi = h * head_dim, (h + 1) * head_dim
        s = lax.dot_general(q[:, lo:hi], k[:, lo:hi], (((1,), (1,)), ((), ())),
                            preferred_element_type=jnp.float32)
        s = s - jnp.max(s, axis=-1, keepdims=True)
        p = jnp.exp(s)
        p = p * pl.reciprocal(jnp.sum(p, axis=-1, keepdims=True), approx=True)
        heads.append(jnp.dot(p.astype(bf16), v[:, lo:hi],
                             preferred_element_type=jnp.float32))
    # one full-width output projection on the lane-concatenated head outputs
    attn = jnp.dot(jnp.concatenate(heads, axis=-1).astype(bf16), wo[...],
                   preferred_element_type=jnp.float32) + bo[...]
    x = x + attn

    # --- MLP ---
    xn2 = _layer_norm(x, ln2g[...], ln2b[...]).astype(bf16)
    h1 = jnp.dot(xn2, w1[...], preferred_element_type=jnp.float32) + b1[...]
    # TODO(synk): PyTorch nn.GELU defaults to exact erf; tanh approximation used here.
    h1 = jax.nn.gelu(h1, approximate=True).astype(bf16)
    return x + jnp.dot(h1, w2[...], preferred_element_type=jnp.float32) + b2[...]


_BLOCK_KEYS = ("ln1_g", "ln1_b", "w_qkv", "b_qkv", "w_o", "b_o",
               "ln2_g", "ln2_b", "w_1", "b_1", "w_2", "b_2")


def make_stack_kernel(num_layer, num_head, head_dim, has_pos, has_final_ln):
    """Whole transformer stack (optional pos-add / final LN) for one batch element."""

    def kernel(*refs):
        x_ref, o_ref = refs[0], refs[-1]
        idx = 1
        x = x_ref[0]                                  # (S, D)
        if has_pos:
            x = x + refs[idx][...]
            idx += 1
        for l in range(num_layer):
            w = refs[idx + 12 * l: idx + 12 * (l + 1)]
            x = _block_forward(x, w, num_head, head_dim)
        idx += 12 * num_layer
        if has_final_ln:
            x = _layer_norm(x, refs[idx][...], refs[idx + 1][...])
        o_ref[0] = x

    return kernel


def transformer_stack_pallas(seq, blocks, num_head, pos_seq=None, final_ln=None):
    B, S, D = seq.shape
    head_dim = D // num_head
    weights = []
    if pos_seq is not None:
        weights.append(pos_seq)
    for blk in blocks:
        weights.extend(blk[k] for k in _BLOCK_KEYS)
    if final_ln is not None:
        weights.extend(final_ln)

    def const_spec(w):
        return pl.BlockSpec(w.shape, lambda b: (0, 0))

    kernel = make_stack_kernel(len(blocks), num_head, head_dim,
                               pos_seq is not None, final_ln is not None)
    return pl.pallas_call(
        kernel,
        grid=(B,),
        in_specs=[pl.BlockSpec((1, S, D), lambda b: (b, 0, 0))]
                 + [const_spec(w) for w in weights],
        out_specs=pl.BlockSpec((1, S, D), lambda b: (b, 0, 0)),
        out_shape=jax.ShapeDtypeStruct((B, S, D), jnp.float32),
        compiler_params=pltpu.CompilerParams(dimension_semantics=("parallel",)),
    )(seq, *weights)


# ----------------------------------------------------------------------------
# Parameter init (deterministic, synthetic) + kernel-layout preparation
# ----------------------------------------------------------------------------
def init_params(key, num_channels, patch_size, emb_dim, num_layer):
    E, C, P = emb_dim, num_channels, patch_size
    D = E * C
    L = 3840 // P
    keys = iter(jax.random.split(key, 256))

    def tn(shape, std=0.02):
        return std * jax.random.truncated_normal(next(keys), -2.0, 2.0, shape,
                                                 jnp.float32)

    def lin(shape):
        bound = 1.0 / (shape[0] ** 0.5)
        return jax.random.uniform(next(keys), shape, jnp.float32, -bound, bound)

    def block_params(dim):
        hidden = 4 * dim
        return dict(
            ln1_g=jnp.ones((1, dim), jnp.float32),
            ln1_b=jnp.zeros((1, dim), jnp.float32),
            w_qkv=lin((dim, 3 * dim)),
            b_qkv=jnp.zeros((1, 3 * dim), jnp.float32),
            w_o=lin((dim, dim)),
            b_o=jnp.zeros((1, dim), jnp.float32),
            ln2_g=jnp.ones((1, dim), jnp.float32),
            ln2_b=jnp.zeros((1, dim), jnp.float32),
            w_1=lin((dim, hidden)),
            b_1=jnp.zeros((1, hidden), jnp.float32),
            w_2=lin((hidden, dim)),
            b_2=jnp.zeros((1, dim), jnp.float32),
        )

    return dict(
        # encoder
        enc_proj_w=lin((P, E)),
        enc_proj_b=jnp.zeros((1, E), jnp.float32),
        enc_cls=tn((1, 1, 1, E)),
        enc_pos=tn((1, C, L + 1, E)),
        enc_blocks=[block_params(D) for _ in range(num_layer)],
        enc_ln_g=jnp.ones((1, D), jnp.float32),
        enc_ln_b=jnp.zeros((1, D), jnp.float32),
        # decoder
        dec_mask_token=tn((1, 1, 1, E)),   # unused on remove=False path
        dec_pos=tn((1, C, L + 1, E)),
        dec_blocks=[block_params(D) for _ in range(num_layer)],
        dec_head_w=lin((E, P)),
        dec_head_b=jnp.zeros((1, P), jnp.float32),
    )


def prepare_params(params, batch_size):
    """Kernel-ready params: bf16 matmul weights, lane-dense embed/head layouts."""
    _, C, S, E = params["enc_pos"].shape
    L = S - 1
    D = C * E
    G = D // E                # patches packed per lane-dense output row
    P = params["enc_proj_w"].shape[0]
    assert L % G == 0 and D % 128 == 0

    def bf(a):
        return a.astype(jnp.bfloat16)

    def prep_block(blk):
        out = dict(blk)
        for kname in ("w_qkv", "w_o", "w_1", "w_2"):
            out[kname] = bf(out[kname])
        return out

    # Block-diagonal projection weight: (G*P, D) so the embed matmul writes
    # full 128-lane rows (G consecutive patch embeddings per row).
    w_blk = bf(jnp.kron(jnp.eye(G, dtype=jnp.float32), params["enc_proj_w"]))
    b_row = jnp.tile(params["enc_proj_b"], (1, G))
    pos_rows = params["enc_pos"][:, :, 1:, :].reshape(C * L // G, G * E)
    pos_rows = jnp.tile(pos_rows, (batch_size, 1))

    # Decoder head padded to a 128-lane multiple (sliced back outside the kernel).
    P_pad = ((P + 127) // 128) * 128
    head_w = bf(jnp.pad(params["dec_head_w"], ((0, 0), (0, P_pad - P))))
    head_b = jnp.pad(params["dec_head_b"], ((0, 0), (0, P_pad - P)))

    return dict(
        enc_w_blk=w_blk, enc_b_row=b_row, enc_pos_rows=pos_rows,
        enc_cls=params["enc_cls"], enc_pos=params["enc_pos"],
        enc_blocks=[prep_block(b) for b in params["enc_blocks"]],
        enc_ln_g=params["enc_ln_g"], enc_ln_b=params["enc_ln_b"],
        dec_pos_seq=params["dec_pos"].reshape(S, D),
        dec_blocks=[prep_block(b) for b in params["dec_blocks"]],
        dec_head_w=head_w, dec_head_b=head_b,
    )


# ----------------------------------------------------------------------------
# Forward pass (glue in plain JAX, hot paths in Pallas)
# ----------------------------------------------------------------------------
def pedsleep_mae_forward(img, kp, num_head):
    B, C, T = img.shape
    _, _, S, E = kp["enc_pos"].shape
    L = S - 1
    P = T // L
    D = C * E
    G = D // E

    # ---------------- Encoder ----------------
    # img.unfold(2, P, P) with stride == size is a pure reshape; G consecutive
    # patches of a channel are packed per row so the fused embed kernel
    # (projection + bias + pos-embed) writes lane-dense D-wide rows.
    rows = img.reshape(B * C * (L // G), G * P)
    emb = patch_embed_pallas(rows, kp["enc_w_blk"], kp["enc_b_row"],
                             kp["enc_pos_rows"])
    x = emb.reshape(B, C, L, E)
    # PatchShuffle(mask_ratio=0) keeps all patches in order -> identity.
    cls = jnp.broadcast_to(kp["enc_cls"] + kp["enc_pos"][:, :, :1, :], (B, C, 1, E))
    seq = jnp.concatenate([cls, x], axis=2).reshape(B, S, D)   # torch .view layout
    # All encoder blocks + final LayerNorm fused into one pallas_call.
    seq = transformer_stack_pallas(seq, kp["enc_blocks"], num_head,
                                   final_ln=(kp["enc_ln_g"], kp["enc_ln_b"]))

    # ---------------- Decoder (remove=False path) ----------------
    # The decoder's cls split / re-concat is an identity on this path; the
    # decoder pos-embedding add is fused into the decoder stack kernel.
    seq = transformer_stack_pallas(seq, kp["dec_blocks"], num_head,
                                   pos_seq=kp["dec_pos_seq"])
    out = seq.reshape(B, C, S, E)[:, :, 1:, :].reshape(B * C * L, E)
    pred = linear_pallas(out, kp["dec_head_w"], kp["dec_head_b"])[:, :P]
    predicted_img = pred.reshape(B, C, L * P)
    # TODO(synk): reference decoder call signature is inconsistent with its
    # definition (missing `remove` arg, single-tensor return unpacked as two);
    # remove=False path is implemented and "mask" is synthesized as zeros.
    mask = jnp.zeros_like(predicted_img)
    return predicted_img, mask


# ----------------------------------------------------------------------------
if __name__ == "__main__":
    batch_size = 2
    num_channels = 4
    patch_size = 480          # -> L = 3840 / 480 = 8 patches, S = 9
    emb_dim = 32              # -> transformer dim D = 4 * 32 = 128
    num_head = 4
    num_layer = 2

    key = jax.random.PRNGKey(0)
    pkey, xkey = jax.random.split(key)
    params = init_params(pkey, num_channels, patch_size, emb_dim, num_layer)
    kparams = prepare_params(params, batch_size)
    img = jax.random.normal(xkey, (batch_size, num_channels, 3840), jnp.float32)

    fwd = jax.jit(functools.partial(pedsleep_mae_forward, num_head=num_head))
    predicted_img, mask = fwd(img, kparams)
    jax.block_until_ready(predicted_img)

    assert predicted_img.shape == (batch_size, num_channels, 3840)
    assert mask.shape == (batch_size, num_channels, 3840)
    print("KERNEL_OK")
</pallas_src>

<mosaic_0001>
module attributes {stable_mosaic.version = 11 : i64} {
  func.func @_embed_kernel(%arg0: i32, %arg1: memref<16x1920xf32, #tpu.memory_space<vmem>>, %arg2: memref<1920x128xbf16, #tpu.memory_space<vmem>>, %arg3: memref<1x128xf32, #tpu.memory_space<vmem>>, %arg4: memref<16x128xf32, #tpu.memory_space<vmem>>, %arg5: memref<16x128xf32, #tpu.memory_space<vmem>>) attributes {dimension_semantics = [#tpu.dimension_semantics<arbitrary>], iteration_bounds = array<i64: 1>, scalar_prefetch = 0 : i64, scratch_operands = 0 : i64, tpu.core_type = #tpu.core_type<tc>, window_params = [{pipeline_mode = #tpu.pipeline_mode<synchronous>, transform_indices = @transform_0, window_bounds = array<i64: 16, 1920>}, {pipeline_mode = #tpu.pipeline_mode<synchronous>, transform_indices = @transform_1, window_bounds = array<i64: 1920, 128>}, {pipeline_mode = #tpu.pipeline_mode<synchronous>, transform_indices = @transform_2, window_bounds = array<i64: 1, 128>}, {pipeline_mode = #tpu.pipeline_mode<synchronous>, transform_indices = @transform_3, window_bounds = array<i64: 16, 128>}, {pipeline_mode = #tpu.pipeline_mode<synchronous>, transform_indices = @transform_4, window_bounds = array<i64: 16, 128>}]} {
    %c0 = arith.constant 0 : index
    %c0_0 = arith.constant 0 : index
    %0 = vector.load %arg1[%c0, %c0_0] : memref<16x1920xf32, #tpu.memory_space<vmem>>, vector<16x1920xf32>
    %1 = arith.truncf %0 : vector<16x1920xf32> to vector<16x1920xbf16>
    %c0_1 = arith.constant 0 : index
    %c0_2 = arith.constant 0 : index
    %2 = vector.load %arg2[%c0_1, %c0_2] : memref<1920x128xbf16, #tpu.memory_space<vmem>>, vector<1920x128xbf16>
    %cst = arith.constant dense<0.000000e+00> : vector<16x128xf32>
    %3 = tpu.matmul %1, %2, %cst {dimension_numbers = #tpu.dot_dimension_numbers<[1], [0], [0], [1], [0, 0, 1, 1], [], []>} : vector<16x1920xbf16>, vector<1920x128xbf16>, vector<16x128xf32> -> vector<16x128xf32>
    %c0_3 = arith.constant 0 : index
    %c0_4 = arith.constant 0 : index
    %4 = vector.load %arg3[%c0_3, %c0_4] : memref<1x128xf32, #tpu.memory_space<vmem>>, vector<1x128xf32>
    %5 = vector.broadcast %4 : vector<1x128xf32> to vector<16x128xf32>
    %6 = arith.addf %3, %5 : vector<16x128xf32>
    %c0_5 = arith.constant 0 : index
    %c0_6 = arith.constant 0 : index
    %7 = vector.load %arg4[%c0_5, %c0_6] : memref<16x128xf32, #tpu.memory_space<vmem>>, vector<16x128xf32>
    %8 = arith.addf %6, %7 : vector<16x128xf32>
    %c0_7 = arith.constant 0 : index
    %c0_8 = arith.constant 0 : index
    %9 = vector.load %arg5[%c0_7, %c0_8] : memref<16x128xf32, #tpu.memory_space<vmem>>, vector<16x128xf32>
    tpu.vector_store %arg5[%c0_7, %c0_8], %8 {strides = array<i32>} : memref<16x128xf32, #tpu.memory_space<vmem>>, vector<16x128xf32>,
    return
  }
  func.func @transform_0(%arg0: i32) -> (i32, i32) {
    %c0_i32 = arith.constant 0 : i32
    %c0_i32_0 = arith.constant 0 : i32
    %c0_i32_1 = arith.constant 0 : i32
    return %c0_i32, %c0_i32_0 : i32, i32
  }
  func.func @transform_1(%arg0: i32) -> (i32, i32) {
    %c0_i32 = arith.constant 0 : i32
    %c0_i32_0 = arith.constant 0 : i32
    %c0_i32_1 = arith.constant 0 : i32
    return %c0_i32, %c0_i32_0 : i32, i32
  }
  func.func @transform_2(%arg0: i32) -> (i32, i32) {
    %c0_i32 = arith.constant 0 : i32
    %c0_i32_0 = arith.constant 0 : i32
    %c0_i32_1 = arith.constant 0 : i32
    return %c0_i32, %c0_i32_0 : i32, i32
  }
  func.func @transform_3(%arg0: i32) -> (i32, i32) {
    %c0_i32 = arith.constant 0 : i32
    %c0_i32_0 = arith.constant 0 : i32
    %c0_i32_1 = arith.constant 0 : i32
    return %c0_i32, %c0_i32_0 : i32, i32
  }
  func.func @transform_4(%arg0: i32) -> (i32, i32) {
    %c0_i32 = arith.constant 0 : i32
    %c0_i32_0 = arith.constant 0 : i32
    %c0_i32_1 = arith.constant 0 : i32
    return %c0_i32, %c0_i32_0 : i32, i32
  }
}

module attributes {stable_mosaic.version = 11 : i64} {
  func.func @kernel(%arg0: i32, %arg1: memref<1x9x128xf32, #tpu.memory_space<vmem>>, %arg2: memref<1x128xf32, #tpu.memory_space<vmem>>, %arg3: memref<1x128xf32, #tpu.memory_space<vmem>>, %arg4: memref<128x384xbf16, #tpu.memory_space<vmem>>, %arg5: memref<1x384xf32, #tpu.memory_space<vmem>>, %arg6: memref<128x128xbf16, #tpu.memory_space<vmem>>, %arg7: memref<1x128xf32, #tpu.memory_space<vmem>>, %arg8: memref<1x128xf32, #tpu.memory_space<vmem>>, %arg9: memref<1x128xf32, #tpu.memory_space<vmem>>, %arg10: memref<128x512xbf16, #tpu.memory_space<vmem>>, %arg11: memref<1x512xf32, #tpu.memory_space<vmem>>, %arg12: memref<512x128xbf16, #tpu.memory_space<vmem>>, %arg13: memref<1x128xf32, #tpu.memory_space<vmem>>, %arg14: memref<1x128xf32, #tpu.memory_space<vmem>>, %arg15: memref<1x128xf32, #tpu.memory_space<vmem>>, %arg16: memref<128x384xbf16, #tpu.memory_space<vmem>>, %arg17: memref<1x384xf32, #tpu.memory_space<vmem>>, %arg18: memref<128x128xbf16, #tpu.memory_space<vmem>>, %arg19: memref<1x128xf32, #tpu.memory_space<vmem>>, %arg20: memref<1x128xf32, #tpu.memory_space<vmem>>, %arg21: memref<1x128xf32, #tpu.memory_space<vmem>>, %arg22: memref<128x512xbf16, #tpu.memory_space<vmem>>, %arg23: memref<1x512xf32, #tpu.memory_space<vmem>>, %arg24: memref<512x128xbf16, #tpu.memory_space<vmem>>, %arg25: memref<1x128xf32, #tpu.memory_space<vmem>>, %arg26: memref<1x128xf32, #tpu.memory_space<vmem>>, %arg27: memref<1x128xf32, #tpu.memory_space<vmem>>, %arg28: memref<1x9x128xf32, #tpu.memory_space<vmem>>) attributes {dimension_semantics = [#tpu.dimension_semantics<parallel>], iteration_bounds = array<i64: 2>, scalar_prefetch = 0 : i64, scratch_operands = 0 : i64, tpu.core_type = #tpu.core_type<tc>, window_params = [{transform_indices = @transform_0, window_bounds = array<i64: 1, 9, 128>}, {pipeline_mode = #tpu.pipeline_mode<synchronous>, transform_indices = @transform_1, window_bounds = array<i64: 1, 128>}, {pipeline_mode = #tpu.pipeline_mode<synchronous>, transform_indices = @transform_2, window_bounds = array<i64: 1, 128>}, {pipeline_mode = #tpu.pipeline_mode<synchronous>, transform_indices = @transform_3, window_bounds = array<i64: 128, 384>}, {pipeline_mode = #tpu.pipeline_mode<synchronous>, transform_indices = @transform_4, window_bounds = array<i64: 1, 384>}, {pipeline_mode = #tpu.pipeline_mode<synchronous>, transform_indices = @transform_5, window_bounds = array<i64: 128, 128>}, {pipeline_mode = #tpu.pipeline_mode<synchronous>, transform_indices = @transform_6, window_bounds = array<i64: 1, 128>}, {pipeline_mode = #tpu.pipeline_mode<synchronous>, transform_indices = @transform_7, window_bounds = array<i64: 1, 128>}, {pipeline_mode = #tpu.pipeline_mode<synchronous>, transform_indices = @transform_8, window_bounds = array<i64: 1, 128>}, {pipeline_mode = #tpu.pipeline_mode<synchronous>, transform_indices = @transform_9, window_bounds = array<i64: 128, 512>}, {pipeline_mode = #tpu.pipeline_mode<synchronous>, transform_indices = @transform_10, window_bounds = array<i64: 1, 512>}, {pipeline_mode = #tpu.pipeline_mode<synchronous>, transform_indices = @transform_11, window_bounds = array<i64: 512, 128>}, {pipeline_mode = #tpu.pipeline_mode<synchronous>, transform_indices = @transform_12, window_bounds = array<i64: 1, 128>}, {pipeline_mode = #tpu.pipeline_mode<synchronous>, transform_indices = @transform_13, window_bounds = array<i64: 1, 128>}, {pipeline_mode = #tpu.pipeline_mode<synchronous>, transform_indices = @transform_14, window_bounds = array<i64: 1, 128>}, {pipeline_mode = #tpu.pipeline_mode<synchronous>, transform_indices = @transform_15, window_bounds = array<i64: 128, 384>}, {pipeline_mode = #tpu.pipeline_mode<synchronous>, transform_indices = @transform_16, window_bounds = array<i64: 1, 384>}, {pipeline_mode = #tpu.pipeline_mode<synchronous>, transform_indices = @transform_17, window_bounds = array<i64: 128, 128>}, {pipeline_mode = #tpu.pipeline_mode<synchronous>, transform_indices = @transform_18, window_bounds = array<i64: 1, 128>}, {pipeline_mode = #tpu.pipeline_mode<synchronous>, transform_indices = @transform_19, window_bounds = array<i64: 1, 128>}, {pipeline_mode = #tpu.pipeline_mode<synchronous>, transform_indices = @transform_20, window_bounds = array<i64: 1, 128>}, {pipeline_mode = #tpu.pipeline_mode<synchronous>, transform_indices = @transform_21, window_bounds = array<i64: 128, 512>}, {pipeline_mode = #tpu.pipeline_mode<synchronous>, transform_indices = @transform_22, window_bounds = array<i64: 1, 512>}, {pipeline_mode = #tpu.pipeline_mode<synchronous>, transform_indices = @transform_23, window_bounds = array<i64: 512, 128>}, {pipeline_mode = #tpu.pipeline_mode<synchronous>, transform_indices = @transform_24, window_bounds = array<i64: 1, 128>}, {pipeline_mode = #tpu.pipeline_mode<synchronous>, transform_indices = @transform_25, window_bounds = array<i64: 1, 128>}, {pipeline_mode = #tpu.pipeline_mode<synchronous>, transform_indices = @transform_26, window_bounds = array<i64: 1, 128>}, {transform_indices = @transform_27, window_bounds = array<i64: 1, 9, 128>}]} {
    %c0 = arith.constant 0 : index
    %c0_0 = arith.constant 0 : index
    %c0_1 = arith.constant 0 : index
    %0 = vector.load %arg1[%c0, %c0_0, %c0_1] : memref<1x9x128xf32, #tpu.memory_space<vmem>>, vector<1x9x128xf32>
    %1 = vector.shape_cast %0 : vector<1x9x128xf32> to vector<9x128xf32>
    %c0_2 = arith.constant 0 : index
    %c0_3 = arith.constant 0 : index
    %2 = vector.load %arg2[%c0_2, %c0_3] : memref<1x128xf32, #tpu.memory_space<vmem>>, vector<1x128xf32>
    %c0_4 = arith.constant 0 : index
    %c0_5 = arith.constant 0 : index
    %3 = vector.load %arg3[%c0_4, %c0_5] : memref<1x128xf32, #tpu.memory_space<vmem>>, vector<1x128xf32>
    %cst = arith.constant dense<0.000000e+00> : vector<9xf32>
    %4 = vector.multi_reduction <add>, %1, %cst [1] : vector<9x128xf32> to vector<9xf32>
    %5 = vector.shape_cast %4 : vector<9xf32> to vector<9x1xf32>
    %cst_6 = arith.constant 1.280000e+02 : f32
    %6 = vector.broadcast %cst_6 : f32 to vector<9x1xf32>
    %7 = arith.divf %5, %6 : vector<9x1xf32>
    %8 = vector.broadcast %7 : vector<9x1xf32> to vector<9x128xf32>
    %9 = arith.subf %1, %8 : vector<9x128xf32>
    %10 = arith.mulf %9, %9 : vector<9x128xf32>
    %cst_7 = arith.constant dense<0.000000e+00> : vector<9xf32>
    %11 = vector.multi_reduction <add>, %10, %cst_7 [1] : vector<9x128xf32> to vector<9xf32>
    %12 = vector.shape_cast %11 : vector<9xf32> to vector<9x1xf32>
    %cst_8 = arith.constant 1.280000e+02 : f32
    %13 = vector.broadcast %cst_8 : f32 to vector<9x1xf32>
    %14 = arith.divf %12, %13 : vector<9x1xf32>
    %15 = vector.broadcast %7 : vector<9x1xf32> to vector<9x128xf32>
    %16 = arith.subf %1, %15 : vector<9x128xf32>
    %cst_9 = arith.constant 9.99999974E-6 : f32
    %17 = vector.broadcast %cst_9 : f32 to vector<9x1xf32>
    %18 = arith.addf %14, %17 : vector<9x1xf32>
    %19 = math.rsqrt %18 : vector<9x1xf32>
    %20 = vector.broadcast %19 : vector<9x1xf32> to vector<9x128xf32>
    %21 = arith.mulf %16, %20 : vector<9x128xf32>
    %22 = vector.broadcast %2 : vector<1x128xf32> to vector<9x128xf32>
    %23 = arith.mulf %21, %22 : vector<9x128xf32>
    %24 = vector.broadcast %3 : vector<1x128xf32> to vector<9x128xf32>
    %25 = arith.addf %23, %24 : vector<9x128xf32>
    %26 = arith.truncf %25 : vector<9x128xf32> to vector<9x128xbf16>
    %c0_10 = arith.constant 0 : index
    %c0_11 = arith.constant 0 : index
    %27 = vector.load %arg4[%c0_10, %c0_11] : memref<128x384xbf16, #tpu.memory_space<vmem>>, vector<128x384xbf16>
    %cst_12 = arith.constant dense<0.000000e+00> : vector<9x384xf32>
    %28 = tpu.matmul %26, %27, %cst_12 {dimension_numbers = #tpu.dot_dimension_numbers<[1], [0], [0], [1], [0, 0, 1, 1], [], []>} : vector<9x128xbf16>, vector<128x384xbf16>, vector<9x384xf32> -> vector<9x384xf32>
    %c0_13 = arith.constant 0 : index
    %c0_14 = arith.constant 0 : index
    %29 = vector.load %arg5[%c0_13, %c0_14] : memref<1x384xf32, #tpu.memory_space<vmem>>, vector<1x384xf32>
    %30 = vector.broadcast %29 : vector<1x384xf32> to vector<9x384xf32>
    %31 = arith.addf %28, %30 : vector<9x384xf32>
    %32 = vector.extract_strided_slice %31 {offsets = [0, 0], sizes = [9, 128], strides = [1, 1]} : vector<9x384xf32> to vector<9x128xf32>
    %cst_15 = arith.constant 0.176776692 : f32
    %33 = vector.broadcast %cst_15 : f32 to vector<9x128xf32>
    %34 = arith.mulf %32, %33 : vector<9x128xf32>
    %35 = arith.truncf %34 : vector<9x128xf32> to vector<9x128xbf16>
    %36 = vector.extract_strided_slice %31 {offsets = [0, 128], sizes = [9, 128], strides = [1, 1]} : vector<9x384xf32> to vector<9x128xf32>
    %37 = arith.truncf %36 : vector<9x128xf32> to vector<9x128xbf16>
    %38 = vector.extract_strided_slice %31 {offsets = [0, 256], sizes = [9, 128], strides = [1, 1]} : vector<9x384xf32> to vector<9x128xf32>
    %39 = arith.truncf %38 : vector<9x128xf32> to vector<9x128xbf16>
    %40 = vector.extract_strided_slice %35 {offsets = [0, 0], sizes = [9, 32], strides = [1, 1]} : vector<9x128xbf16> to vector<9x32xbf16>
    %41 = vector.extract_strided_slice %37 {offsets = [0, 0], sizes = [9, 32], strides = [1, 1]} : vector<9x128xbf16> to vector<9x32xbf16>
    %cst_16 = arith.constant dense<0.000000e+00> : vector<9x9xf32>
    %42 = tpu.matmul %40, %41, %cst_16 {dimension_numbers = #tpu.dot_dimension_numbers<[1], [1], [0], [0], [0, 0, 1, 0], [], []>} : vector<9x32xbf16>, vector<9x32xbf16>, vector<9x9xf32> -> vector<9x9xf32>
    %cst_17 = arith.constant dense<0xFF800000> : vector<9xf32>
    %43 = vector.multi_reduction <maximumf>, %42, %cst_17 [1] : vector<9x9xf32> to vector<9xf32>
    %44 = vector.shape_cast %43 : vector<9xf32> to vector<9x1xf32>
    %45 = vector.broadcast %44 : vector<9x1xf32> to vector<9x9xf32>
    %46 = arith.subf %42, %45 : vector<9x9xf32>
    %47 = math.exp %46 : vector<9x9xf32>
    %cst_18 = arith.constant dense<0.000000e+00> : vector<9xf32>
    %48 = vector.multi_reduction <add>, %47, %cst_18 [1] : vector<9x9xf32> to vector<9xf32>
    %49 = vector.shape_cast %48 : vector<9xf32> to vector<9x1xf32>
    %50 = tpu.reciprocal %49 {approx = true} : vector<9x1xf32> -> vector<9x1xf32>
    %51 = vector.broadcast %50 : vector<9x1xf32> to vector<9x9xf32>
    %52 = arith.mulf %47, %51 : vector<9x9xf32>
    %53 = arith.truncf %52 : vector<9x9xf32> to vector<9x9xbf16>
    %54 = vector.extract_strided_slice %39 {offsets = [0, 0], sizes = [9, 32], strides = [1, 1]} : vector<9x128xbf16> to vector<9x32xbf16>
    %cst_19 = arith.constant dense<0.000000e+00> : vector<9x32xf32>
    %55 = tpu.matmul %53, %54, %cst_19 {dimension_numbers = #tpu.dot_dimension_numbers<[1], [0], [0], [1], [0, 0, 1, 1], [], []>} : vector<9x9xbf16>, vector<9x32xbf16>, vector<9x32xf32> -> vector<9x32xf32>
    %56 = vector.extract_strided_slice %35 {offsets = [0, 32], sizes = [9, 32], strides = [1, 1]} : vector<9x128xbf16> to vector<9x32xbf16>
    %57 = vector.extract_strided_slice %37 {offsets = [0, 32], sizes = [9, 32], strides = [1, 1]} : vector<9x128xbf16> to vector<9x32xbf16>
    %cst_20 = arith.constant dense<0.000000e+00> : vector<9x9xf32>
    %58 = tpu.matmul %56, %57, %cst_20 {dimension_numbers = #tpu.dot_dimension_numbers<[1], [1], [0], [0], [0, 0, 1, 0], [], []>} : vector<9x32xbf16>, vector<9x32xbf16>, vector<9x9xf32> -> vector<9x9xf32>
    %cst_21 = arith.constant dense<0xFF800000> : vector<9xf32>
    %59 = vector.multi_reduction <maximumf>, %58, %cst_21 [1] : vector<9x9xf32> to vector<9xf32>
    %60 = vector.shape_cast %59 : vector<9xf32> to vector<9x1xf32>
    %61 = vector.broadcast %60 : vector<9x1xf32> to vector<9x9xf32>
    %62 = arith.subf %58, %61 : vector<9x9xf32>
    %63 = math.exp %62 : vector<9x9xf32>
    %cst_22 = arith.constant dense<0.000000e+00> : vector<9xf32>
    %64 = vector.multi_reduction <add>, %63, %cst_22 [1] : vector<9x9xf32> to vector<9xf32>
    %65 = vector.shape_cast %64 : vector<9xf32> to vector<9x1xf32>
    %66 = tpu.reciprocal %65 {approx = true} : vector<9x1xf32> -> vector<9x1xf32>
    %67 = vector.broadcast %66 : vector<9x1xf32> to vector<9x9xf32>
    %68 = arith.mulf %63, %67 : vector<9x9xf32>
    %69 = arith.truncf %68 : vector<9x9xf32> to vector<9x9xbf16>
    %70 = vector.extract_strided_slice %39 {offsets = [0, 32], sizes = [9, 32], strides = [1, 1]} : vector<9x128xbf16> to vector<9x32xbf16>
    %cst_23 = arith.constant dense<0.000000e+00> : vector<9x32xf32>
    %71 = tpu.matmul %69, %70, %cst_23 {dimension_numbers = #tpu.dot_dimension_numbers<[1], [0], [0], [1], [0, 0, 1, 1], [], []>} : vector<9x9xbf16>, vector<9x32xbf16>, vector<9x32xf32> -> vector<9x32xf32>
    %72 = vector.extract_strided_slice %35 {offsets = [0, 64], sizes = [9, 32], strides = [1, 1]} : vector<9x128xbf16> to vector<9x32xbf16>
    %73 = vector.extract_strided_slice %37 {offsets = [0, 64], sizes = [9, 32], strides = [1, 1]} : vector<9x128xbf16> to vector<9x32xbf16>
    %cst_24 = arith.constant dense<0.000000e+00> : vector<9x9xf32>
    %74 = tpu.matmul %72, %73, %cst_24 {dimension_numbers = #tpu.dot_dimension_numbers<[1], [1], [0], [0], [0, 0, 1, 0], [], []>} : vector<9x32xbf16>, vector<9x32xbf16>, vector<9x9xf32> -> vector<9x9xf32>
    %cst_25 = arith.constant dense<0xFF800000> : vector<9xf32>
    %75 = vector.multi_reduction <maximumf>, %74, %cst_25 [1] : vector<9x9xf32> to vector<9xf32>
    %76 = vector.shape_cast %75 : vector<9xf32> to vector<9x1xf32>
    %77 = vector.broadcast %76 : vector<9x1xf32> to vector<9x9xf32>
    %78 = arith.subf %74, %77 : vector<9x9xf32>
    %79 = math.exp %78 : vector<9x9xf32>
    %cst_26 = arith.constant dense<0.000000e+00> : vector<9xf32>
    %80 = vector.multi_reduction <add>, %79, %cst_26 [1] : vector<9x9xf32> to vector<9xf32>
    %81 = vector.shape_cast %80 : vector<9xf32> to vector<9x1xf32>
    %82 = tpu.reciprocal %81 {approx = true} : vector<9x1xf32> -> vector<9x1xf32>
    %83 = vector.broadcast %82 : vector<9x1xf32> to vector<9x9xf32>
    %84 = arith.mulf %79, %83 : vector<9x9xf32>
    %85 = arith.truncf %84 : vector<9x9xf32> to vector<9x9xbf16>
    %86 = vector.extract_strided_slice %39 {offsets = [0, 64], sizes = [9, 32], strides = [1, 1]} : vector<9x128xbf16> to vector<9x32xbf16>
    %cst_27 = arith.constant dense<0.000000e+00> : vector<9x32xf32>
    %87 = tpu.matmul %85, %86, %cst_27 {dimension_numbers = #tpu.dot_dimension_numbers<[1], [0], [0], [1], [0, 0, 1, 1], [], []>} : vector<9x9xbf16>, vector<9x32xbf16>, vector<9x32xf32> -> vector<9x32xf32>
    %88 = vector.extract_strided_slice %35 {offsets = [0, 96], sizes = [9, 32], strides = [1, 1]} : vector<9x128xbf16> to vector<9x32xbf16>
    %89 = vector.extract_strided_slice %37 {offsets = [0, 96], sizes = [9, 32], strides = [1, 1]} : vector<9x128xbf16> to vector<9x32xbf16>
    %cst_28 = arith.constant dense<0.000000e+00> : vector<9x9xf32>
    %90 = tpu.matmul %88, %89, %cst_28 {dimension_numbers = #tpu.dot_dimension_numbers<[1], [1], [0], [0], [0, 0, 1, 0], [], []>} : vector<9x32xbf16>, vector<9x32xbf16>, vector<9x9xf32> -> vector<9x9xf32>
    %cst_29 = arith.constant dense<0xFF800000> : vector<9xf32>
    %91 = vector.multi_reduction <maximumf>, %90, %cst_29 [1] : vector<9x9xf32> to vector<9xf32>
    %92 = vector.shape_cast %91 : vector<9xf32> to vector<9x1xf32>
    %93 = vector.broadcast %92 : vector<9x1xf32> to vector<9x9xf32>
    %94 = arith.subf %90, %93 : vector<9x9xf32>
    %95 = math.exp %94 : vector<9x9xf32>
    %cst_30 = arith.constant dense<0.000000e+00> : vector<9xf32>
    %96 = vector.multi_reduction <add>, %95, %cst_30 [1] : vector<9x9xf32> to vector<9xf32>
    %97 = vector.shape_cast %96 : vector<9xf32> to vector<9x1xf32>
    %98 = tpu.reciprocal %97 {approx = true} : vector<9x1xf32> -> vector<9x1xf32>
    %99 = vector.broadcast %98 : vector<9x1xf32> to vector<9x9xf32>
    %100 = arith.mulf %95, %99 : vector<9x9xf32>
    %101 = arith.truncf %100 : vector<9x9xf32> to vector<9x9xbf16>
    %102 = vector.extract_strided_slice %39 {offsets = [0, 96], sizes = [9, 32], strides = [1, 1]} : vector<9x128xbf16> to vector<9x32xbf16>
    %cst_31 = arith.constant dense<0.000000e+00> : vector<9x32xf32>
    %103 = tpu.matmul %101, %102, %cst_31 {dimension_numbers = #tpu.dot_dimension_numbers<[1], [0], [0], [1], [0, 0, 1, 1], [], []>} : vector<9x9xbf16>, vector<9x32xbf16>, vector<9x32xf32> -> vector<9x32xf32>
    %104 = tpu.concatenate %55, %71, %87, %103 in 1 : vector<9x32xf32>, vector<9x32xf32>, vector<9x32xf32>, vector<9x32xf32> -> vector<9x128xf32>
    %105 = arith.truncf %104 : vector<9x128xf32> to vector<9x128xbf16>
    %c0_32 = arith.constant 0 : index
    %c0_33 = arith.constant 0 : index
    %106 = vector.load %arg6[%c0_32, %c0_33] : memref<128x128xbf16, #tpu.memory_space<vmem>>, vector<128x128xbf16>
    %cst_34 = arith.constant dense<0.000000e+00> : vector<9x128xf32>
    %107 = tpu.matmul %105, %106, %cst_34 {dimension_numbers = #tpu.dot_dimension_numbers<[1], [0], [0], [1], [0, 0, 1, 1], [], []>} : vector<9x128xbf16>, vector<128x128xbf16>, vector<9x128xf32> -> vector<9x128xf32>
    %c0_35 = arith.constant 0 : index
    %c0_36 = arith.constant 0 : index
    %108 = vector.load %arg7[%c0_35, %c0_36] : memref<1x128xf32, #tpu.memory_space<vmem>>, vector<1x128xf32>
    %109 = vector.broadcast %108 : vector<1x128xf32> to vector<9x128xf32>
    %110 = arith.addf %107, %109 : vector<9x128xf32>
    %111 = arith.addf %1, %110 : vector<9x128xf32>
    %c0_37 = arith.constant 0 : index
    %c0_38 = arith.constant 0 : index
    %112 = vector.load %arg8[%c0_37, %c0_38] : memref<1x128xf32, #tpu.memory_space<vmem>>, vector<1x128xf32>
    %c0_39 = arith.constant 0 : index
    %c0_40 = arith.constant 0 : index
    %113 = vector.load %arg9[%c0_39, %c0_40] : memref<1x128xf32, #tpu.memory_space<vmem>>, vector<1x128xf32>
    %cst_41 = arith.constant dense<0.000000e+00> : vector<9xf32>
    %114 = vector.multi_reduction <add>, %111, %cst_41 [1] : vector<9x128xf32> to vector<9xf32>
    %115 = vector.shape_cast %114 : vector<9xf32> to vector<9x1xf32>
    %cst_42 = arith.constant 1.280000e+02 : f32
    %116 = vector.broadcast %cst_42 : f32 to vector<9x1xf32>
    %117 = arith.divf %115, %116 : vector<9x1xf32>
    %118 = vector.broadcast %117 : vector<9x1xf32> to vector<9x128xf32>
    %119 = arith.subf %111, %118 : vector<9x128xf32>
    %120 = arith.mulf %119, %119 : vector<9x128xf32>
    %cst_43 = arith.constant dense<0.000000e+00> : vector<9xf32>
    %121 = vector.multi_reduction <add>, %120, %cst_43 [1] : vector<9x128xf32> to vector<9xf32>
    %122 = vector.shape_cast %121 : vector<9xf32> to vector<9x1xf32>
    %cst_44 = arith.constant 1.280000e+02 : f32
    %123 = vector.broadcast %cst_44 : f32 to vector<9x1xf32>
    %124 = arith.divf %122, %123 : vector<9x1xf32>
    %125 = vector.broadcast %117 : vector<9x1xf32> to vector<9x128xf32>
    %126 = arith.subf %111, %125 : vector<9x128xf32>
    %cst_45 = arith.constant 9.99999974E-6 : f32
    %127 = vector.broadcast %cst_45 : f32 to vector<9x1xf32>
    %128 = arith.addf %124, %127 : vector<9x1xf32>
    %129 = math.rsqrt %128 : vector<9x1xf32>
    %130 = vector.broadcast %129 : vector<9x1xf32> to vector<9x128xf32>
    %131 = arith.mulf %126, %130 : vector<9x128xf32>
    %132 = vector.broadcast %112 : vector<1x128xf32> to vector<9x128xf32>
    %133 = arith.mulf %131, %132 : vector<9x128xf32>
    %134 = vector.broadcast %113 : vector<1x128xf32> to vector<9x128xf32>
    %135 = arith.addf %133, %134 : vector<9x128xf32>
    %136 = arith.truncf %135 : vector<9x128xf32> to vector<9x128xbf16>
    %c0_46 = arith.constant 0 : index
    %c0_47 = arith.constant 0 : index
    %137 = vector.load %arg10[%c0_46, %c0_47] : memref<128x512xbf16, #tpu.memory_space<vmem>>, vector<128x512xbf16>
    %cst_48 = arith.constant dense<0.000000e+00> : vector<9x512xf32>
    %138 = tpu.matmul %136, %137, %cst_48 {dimension_numbers = #tpu.dot_dimension_numbers<[1], [0], [0], [1], [0, 0, 1, 1], [], []>} : vector<9x128xbf16>, vector<128x512xbf16>, vector<9x512xf32> -> vector<9x512xf32>
    %c0_49 = arith.constant 0 : index
    %c0_50 = arith.constant 0 : index
    %139 = vector.load %arg11[%c0_49, %c0_50] : memref<1x512xf32, #tpu.memory_space<vmem>>, vector<1x512xf32>
    %140 = vector.broadcast %139 : vector<1x512xf32> to vector<9x512xf32>
    %141 = arith.addf %138, %140 : vector<9x512xf32>
    %142 = arith.mulf %141, %141 : vector<9x512xf32>
    %143 = arith.mulf %141, %142 : vector<9x512xf32>
    %cst_51 = arith.constant 4.471500e-02 : f32
    %144 = vector.broadcast %cst_51 : f32 to vector<9x512xf32>
    %145 = arith.mulf %144, %143 : vector<9x512xf32>
    %146 = arith.addf %141, %145 : vector<9x512xf32>
    %cst_52 = arith.constant 0.797884583 : f32
    %147 = vector.broadcast %cst_52 : f32 to vector<9x512xf32>
    %148 = arith.mulf %147, %146 : vector<9x512xf32>
    %149 = math.tanh %148 : vector<9x512xf32>
    %cst_53 = arith.constant 1.000000e+00 : f32
    %150 = vector.broadcast %cst_53 : f32 to vector<9x512xf32>
    %151 = arith.addf %150, %149 : vector<9x512xf32>
    %cst_54 = arith.constant 5.000000e-01 : f32
    %152 = vector.broadcast %cst_54 : f32 to vector<9x512xf32>
    %153 = arith.mulf %152, %151 : vector<9x512xf32>
    %154 = arith.mulf %141, %153 : vector<9x512xf32>
    %155 = arith.truncf %154 : vector<9x512xf32> to vector<9x512xbf16>
    %c0_55 = arith.constant 0 : index
    %c0_56 = arith.constant 0 : index
    %156 = vector.load %arg12[%c0_55, %c0_56] : memref<512x128xbf16, #tpu.memory_space<vmem>>, vector<512x128xbf16>
    %cst_57 = arith.constant dense<0.000000e+00> : vector<9x128xf32>
    %157 = tpu.matmul %155, %156, %cst_57 {dimension_numbers = #tpu.dot_dimension_numbers<[1], [0], [0], [1], [0, 0, 1, 1], [], []>} : vector<9x512xbf16>, vector<512x128xbf16>, vector<9x128xf32> -> vector<9x128xf32>
    %158 = arith.addf %111, %157 : vector<9x128xf32>
    %c0_58 = arith.constant 0 : index
    %c0_59 = arith.constant 0 : index
    %159 = vector.load %arg13[%c0_58, %c0_59] : memref<1x128xf32, #tpu.memory_space<vmem>>, vector<1x128xf32>
    %160 = vector.broadcast %159 : vector<1x128xf32> to vector<9x128xf32>
    %161 = arith.addf %158, %160 : vector<9x128xf32>
    %c0_60 = arith.constant 0 : index
    %c0_61 = arith.constant 0 : index
    %162 = vector.load %arg14[%c0_60, %c0_61] : memref<1x128xf32, #tpu.memory_space<vmem>>, vector<1x128xf32>
    %c0_62 = arith.constant 0 : index
    %c0_63 = arith.constant 0 : index
    %163 = vector.load %arg15[%c0_62, %c0_63] : memref<1x128xf32, #tpu.memory_space<vmem>>, vector<1x128xf32>
    %cst_64 = arith.constant dense<0.000000e+00> : vector<9xf32>
    %164 = vector.multi_reduction <add>, %161, %cst_64 [1] : vector<9x128xf32> to vector<9xf32>
    %165 = vector.shape_cast %164 : vector<9xf32> to vector<9x1xf32>
    %cst_65 = arith.constant 1.280000e+02 : f32
    %166 = vector.broadcast %cst_65 : f32 to vector<9x1xf32>
    %167 = arith.divf %165, %166 : vector<9x1xf32>
    %168 = vector.broadcast %167 : vector<9x1xf32> to vector<9x128xf32>
    %169 = arith.subf %161, %168 : vector<9x128xf32>
    %170 = arith.mulf %169, %169 : vector<9x128xf32>
    %cst_66 = arith.constant dense<0.000000e+00> : vector<9xf32>
    %171 = vector.multi_reduction <add>, %170, %cst_66 [1] : vector<9x128xf32> to vector<9xf32>
    %172 = vector.shape_cast %171 : vector<9xf32> to vector<9x1xf32>
    %cst_67 = arith.constant 1.280000e+02 : f32
    %173 = vector.broadcast %cst_67 : f32 to vector<9x1xf32>
    %174 = arith.divf %172, %173 : vector<9x1xf32>
    %175 = vector.broadcast %167 : vector<9x1xf32> to vector<9x128xf32>
    %176 = arith.subf %161, %175 : vector<9x128xf32>
    %cst_68 = arith.constant 9.99999974E-6 : f32
    %177 = vector.broadcast %cst_68 : f32 to vector<9x1xf32>
    %178 = arith.addf %174, %177 : vector<9x1xf32>
    %179 = math.rsqrt %178 : vector<9x1xf32>
    %180 = vector.broadcast %179 : vector<9x1xf32> to vector<9x128xf32>
    %181 = arith.mulf %176, %180 : vector<9x128xf32>
    %182 = vector.broadcast %162 : vector<1x128xf32> to vector<9x128xf32>
    %183 = arith.mulf %181, %182 : vector<9x128xf32>
    %184 = vector.broadcast %163 : vector<1x128xf32> to vector<9x128xf32>
    %185 = arith.addf %183, %184 : vector<9x128xf32>
    %186 = arith.truncf %185 : vector<9x128xf32> to vector<9x128xbf16>
    %c0_69 = arith.constant 0 : index
    %c0_70 = arith.constant 0 : index
    %187 = vector.load %arg16[%c0_69, %c0_70] : memref<128x384xbf16, #tpu.memory_space<vmem>>, vector<128x384xbf16>
    %cst_71 = arith.constant dense<0.000000e+00> : vector<9x384xf32>
    %188 = tpu.matmul %186, %187, %cst_71 {dimension_numbers = #tpu.dot_dimension_numbers<[1], [0], [0], [1], [0, 0, 1, 1], [], []>} : vector<9x128xbf16>, vector<128x384xbf16>, vector<9x384xf32> -> vector<9x384xf32>
    %c0_72 = arith.constant 0 : index
    %c0_73 = arith.constant 0 : index
    %189 = vector.load %arg17[%c0_72, %c0_73] : memref<1x384xf32, #tpu.memory_space<vmem>>, vector<1x384xf32>
    %190 = vector.broadcast %189 : vector<1x384xf32> to vector<9x384xf32>
    %191 = arith.addf %188, %190 : vector<9x384xf32>
    %192 = vector.extract_strided_slice %191 {offsets = [0, 0], sizes = [9, 128], strides = [1, 1]} : vector<9x384xf32> to vector<9x128xf32>
    %cst_74 = arith.constant 0.176776692 : f32
    %193 = vector.broadcast %cst_74 : f32 to vector<9x128xf32>
    %194 = arith.mulf %192, %193 : vector<9x128xf32>
    %195 = arith.truncf %194 : vector<9x128xf32> to vector<9x128xbf16>
    %196 = vector.extract_strided_slice %191 {offsets = [0, 128], sizes = [9, 128], strides = [1, 1]} : vector<9x384xf32> to vector<9x128xf32>
    %197 = arith.truncf %196 : vector<9x128xf32> to vector<9x128xbf16>
    %198 = vector.extract_strided_slice %191 {offsets = [0, 256], sizes = [9, 128], strides = [1, 1]} : vector<9x384xf32> to vector<9x128xf32>
    %199 = arith.truncf %198 : vector<9x128xf32> to vector<9x128xbf16>
    %200 = vector.extract_strided_slice %195 {offsets = [0, 0], sizes = [9, 32], strides = [1, 1]} : vector<9x128xbf16> to vector<9x32xbf16>
    %201 = vector.extract_strided_slice %197 {offsets = [0, 0], sizes = [9, 32], strides = [1, 1]} : vector<9x128xbf16> to vector<9x32xbf16>
    %cst_75 = arith.constant dense<0.000000e+00> : vector<9x9xf32>
    %202 = tpu.matmul %200, %201, %cst_75 {dimension_numbers = #tpu.dot_dimension_numbers<[1], [1], [0], [0], [0, 0, 1, 0], [], []>} : vector<9x32xbf16>, vector<9x32xbf16>, vector<9x9xf32> -> vector<9x9xf32>
    %cst_76 = arith.constant dense<0xFF800000> : vector<9xf32>
    %203 = vector.multi_reduction <maximumf>, %202, %cst_76 [1] : vector<9x9xf32> to vector<9xf32>
    %204 = vector.shape_cast %203 : vector<9xf32> to vector<9x1xf32>
    %205 = vector.broadcast %204 : vector<9x1xf32> to vector<9x9xf32>
    %206 = arith.subf %202, %205 : vector<9x9xf32>
    %207 = math.exp %206 : vector<9x9xf32>
    %cst_77 = arith.constant dense<0.000000e+00> : vector<9xf32>
    %208 = vector.multi_reduction <add>, %207, %cst_77 [1] : vector<9x9xf32> to vector<9xf32>
    %209 = vector.shape_cast %208 : vector<9xf32> to vector<9x1xf32>
    %210 = tpu.reciprocal %209 {approx = true} : vector<9x1xf32> -> vector<9x1xf32>
    %211 = vector.broadcast %210 : vector<9x1xf32> to vector<9x9xf32>
    %212 = arith.mulf %207, %211 : vector<9x9xf32>
    %213 = arith.truncf %212 : vector<9x9xf32> to vector<9x9xbf16>
    %214 = vector.extract_strided_slice %199 {offsets = [0, 0], sizes = [9, 32], strides = [1, 1]} : vector<9x128xbf16> to vector<9x32xbf16>
    %cst_78 = arith.constant dense<0.000000e+00> : vector<9x32xf32>
    %215 = tpu.matmul %213, %214, %cst_78 {dimension_numbers = #tpu.dot_dimension_numbers<[1], [0], [0], [1], [0, 0, 1, 1], [], []>} : vector<9x9xbf16>, vector<9x32xbf16>, vector<9x32xf32> -> vector<9x32xf32>
    %216 = vector.extract_strided_slice %195 {offsets = [0, 32], sizes = [9, 32], strides = [1, 1]} : vector<9x128xbf16> to vector<9x32xbf16>
    %217 = vector.extract_strided_slice %197 {offsets = [0, 32], sizes = [9, 32], strides = [1, 1]} : vector<9x128xbf16> to vector<9x32xbf16>
    %cst_79 = arith.constant dense<0.000000e+00> : vector<9x9xf32>
    %218 = tpu.matmul %216, %217, %cst_79 {dimension_numbers = #tpu.dot_dimension_numbers<[1], [1], [0], [0], [0, 0, 1, 0], [], []>} : vector<9x32xbf16>, vector<9x32xbf16>, vector<9x9xf32> -> vector<9x9xf32>
    %cst_80 = arith.constant dense<0xFF800000> : vector<9xf32>
    %219 = vector.multi_reduction <maximumf>, %218, %cst_80 [1] : vector<9x9xf32> to vector<9xf32>
    %220 = vector.shape_cast %219 : vector<9xf32> to vector<9x1xf32>
    %221 = vector.broadcast %220 : vector<9x1xf32> to vector<9x9xf32>
    %222 = arith.subf %218, %221 : vector<9x9xf32>
    %223 = math.exp %222 : vector<9x9xf32>
    %cst_81 = arith.constant dense<0.000000e+00> : vector<9xf32>
    %224 = vector.multi_reduction <add>, %223, %cst_81 [1] : vector<9x9xf32> to vector<9xf32>
    %225 = vector.shape_cast %224 : vector<9xf32> to vector<9x1xf32>
    %226 = tpu.reciprocal %225 {approx = true} : vector<9x1xf32> -> vector<9x1xf32>
    %227 = vector.broadcast %226 : vector<9x1xf32> to vector<9x9xf32>
    %228 = arith.mulf %223, %227 : vector<9x9xf32>
    %229 = arith.truncf %228 : vector<9x9xf32> to vector<9x9xbf16>
    %230 = vector.extract_strided_slice %199 {offsets = [0, 32], sizes = [9, 32], strides = [1, 1]} : vector<9x128xbf16> to vector<9x32xbf16>
    %cst_82 = arith.constant dense<0.000000e+00> : vector<9x32xf32>
    %231 = tpu.matmul %229, %230, %cst_82 {dimension_numbers = #tpu.dot_dimension_numbers<[1], [0], [0], [1], [0, 0, 1, 1], [], []>} : vector<9x9xbf16>, vector<9x32xbf16>, vector<9x32xf32> -> vector<9x32xf32>
    %232 = vector.extract_strided_slice %195 {offsets = [0, 64], sizes = [9, 32], strides = [1, 1]} : vector<9x128xbf16> to vector<9x32xbf16>
    %233 = vector.extract_strided_slice %197 {offsets = [0, 64], sizes = [9, 32], strides = [1, 1]} : vector<9x128xbf16> to vector<9x32xbf16>
    %cst_83 = arith.constant dense<0.000000e+00> : vector<9x9xf32>
    %234 = tpu.matmul %232, %233, %cst_83 {dimension_numbers = #tpu.dot_dimension_numbers<[1], [1], [0], [0], [0, 0, 1, 0], [], []>} : vector<9x32xbf16>, vector<9x32xbf16>, vector<9x9xf32> -> vector<9x9xf32>
    %cst_84 = arith.constant dense<0xFF800000> : vector<9xf32>
    %235 = vector.multi_reduction <maximumf>, %234, %cst_84 [1] : vector<9x9xf32> to vector<9xf32>
    %236 = vector.shape_cast %235 : vector<9xf32> to vector<9x1xf32>
    %237 = vector.broadcast %236 : vector<9x1xf32> to vector<9x9xf32>
    %238 = arith.subf %234, %237 : vector<9x9xf32>
    %239 = math.exp %238 : vector<9x9xf32>
    %cst_85 = arith.constant dense<0.000000e+00> : vector<9xf32>
    %240 = vector.multi_reduction <add>, %239, %cst_85 [1] : vector<9x9xf32> to vector<9xf32>
    %241 = vector.shape_cast %240 : vector<9xf32> to vector<9x1xf32>
    %242 = tpu.reciprocal %241 {approx = true} : vector<9x1xf32> -> vector<9x1xf32>
    %243 = vector.broadcast %242 : vector<9x1xf32> to vector<9x9xf32>
    %244 = arith.mulf %239, %243 : vector<9x9xf32>
    %245 = arith.truncf %244 : vector<9x9xf32> to vector<9x9xbf16>
    %246 = vector.extract_strided_slice %199 {offsets = [0, 64], sizes = [9, 32], strides = [1, 1]} : vector<9x128xbf16> to vector<9x32xbf16>
    %cst_86 = arith.constant dense<0.000000e+00> : vector<9x32xf32>
    %247 = tpu.matmul %245, %246, %cst_86 {dimension_numbers = #tpu.dot_dimension_numbers<[1], [0], [0], [1], [0, 0, 1, 1], [], []>} : vector<9x9xbf16>, vector<9x32xbf16>, vector<9x32xf32> -> vector<9x32xf32>
    %248 = vector.extract_strided_slice %195 {offsets = [0, 96], sizes = [9, 32], strides = [1, 1]} : vector<9x128xbf16> to vector<9x32xbf16>
    %249 = vector.extract_strided_slice %197 {offsets = [0, 96], sizes = [9, 32], strides = [1, 1]} : vector<9x128xbf16> to vector<9x32xbf16>
    %cst_87 = arith.constant dense<0.000000e+00> : vector<9x9xf32>
    %250 = tpu.matmul %248, %249, %cst_87 {dimension_numbers = #tpu.dot_dimension_numbers<[1], [1], [0], [0], [0, 0, 1, 0], [], []>} : vector<9x32xbf16>, vector<9x32xbf16>, vector<9x9xf32> -> vector<9x9xf32>
    %cst_88 = arith.constant dense<0xFF800000> : vector<9xf32>
    %251 = vector.multi_reduction <maximumf>, %250, %cst_88 [1] : vector<9x9xf32> to vector<9xf32>
    %252 = vector.shape_cast %251 : vector<9xf32> to vector<9x1xf32>
    %253 = vector.broadcast %252 : vector<9x1xf32> to vector<9x9xf32>
    %254 = arith.subf %250, %253 : vector<9x9xf32>
    %255 = math.exp %254 : vector<9x9xf32>
    %cst_89 = arith.constant dense<0.000000e+00> : vector<9xf32>
    %256 = vector.multi_reduction <add>, %255, %cst_89 [1] : vector<9x9xf32> to vector<9xf32>
    %257 = vector.shape_cast %256 : vector<9xf32> to vector<9x1xf32>
    %258 = tpu.reciprocal %257 {approx = true} : vector<9x1xf32> -> vector<9x1xf32>
    %259 = vector.broadcast %258 : vector<9x1xf32> to vector<9x9xf32>
    %260 = arith.mulf %255, %259 : vector<9x9xf32>
    %261 = arith.truncf %260 : vector<9x9xf32> to vector<9x9xbf16>
    %262 = vector.extract_strided_slice %199 {offsets = [0, 96], sizes = [9, 32], strides = [1, 1]} : vector<9x128xbf16> to vector<9x32xbf16>
    %cst_90 = arith.constant dense<0.000000e+00> : vector<9x32xf32>
    %263 = tpu.matmul %261, %262, %cst_90 {dimension_numbers = #tpu.dot_dimension_numbers<[1], [0], [0], [1], [0, 0, 1, 1], [], []>} : vector<9x9xbf16>, vector<9x32xbf16>, vector<9x32xf32> -> vector<9x32xf32>
    %264 = tpu.concatenate %215, %231, %247, %263 in 1 : vector<9x32xf32>, vector<9x32xf32>, vector<9x32xf32>, vector<9x32xf32> -> vector<9x128xf32>
    %265 = arith.truncf %264 : vector<9x128xf32> to vector<9x128xbf16>
    %c0_91 = arith.constant 0 : index
    %c0_92 = arith.constant 0 : index
    %266 = vector.load %arg18[%c0_91, %c0_92] : memref<128x128xbf16, #tpu.memory_space<vmem>>, vector<128x128xbf16>
    %cst_93 = arith.constant dense<0.000000e+00> : vector<9x128xf32>
    %267 = tpu.matmul %265, %266, %cst_93 {dimension_numbers = #tpu.dot_dimension_numbers<[1], [0], [0], [1], [0, 0, 1, 1], [], []>} : vector<9x128xbf16>, vector<128x128xbf16>, vector<9x128xf32> -> vector<9x128xf32>
    %c0_94 = arith.constant 0 : index
    %c0_95 = arith.constant 0 : index
    %268 = vector.load %arg19[%c0_94, %c0_95] : memref<1x128xf32, #tpu.memory_space<vmem>>, vector<1x128xf32>
    %269 = vector.broadcast %268 : vector<1x128xf32> to vector<9x128xf32>
    %270 = arith.addf %267, %269 : vector<9x128xf32>
    %271 = arith.addf %161, %270 : vector<9x128xf32>
    %c0_96 = arith.constant 0 : index
    %c0_97 = arith.constant 0 : index
    %272 = vector.load %arg20[%c0_96, %c0_97] : memref<1x128xf32, #tpu.memory_space<vmem>>, vector<1x128xf32>
    %c0_98 = arith.constant 0 : index
    %c0_99 = arith.constant 0 : index
    %273 = vector.load %arg21[%c0_98, %c0_99] : memref<1x128xf32, #tpu.memory_space<vmem>>, vector<1x128xf32>
    %cst_100 = arith.constant dense<0.000000e+00> : vector<9xf32>
    %274 = vector.multi_reduction <add>, %271, %cst_100 [1] : vector<9x128xf32> to vector<9xf32>
    %275 = vector.shape_cast %274 : vector<9xf32> to vector<9x1xf32>
    %cst_101 = arith.constant 1.280000e+02 : f32
    %276 = vector.broadcast %cst_101 : f32 to vector<9x1xf32>
    %277 = arith.divf %275, %276 : vector<9x1xf32>
    %278 = vector.broadcast %277 : vector<9x1xf32> to vector<9x128xf32>
    %279 = arith.subf %271, %278 : vector<9x128xf32>
    %280 = arith.mulf %279, %279 : vector<9x128xf32>
    %cst_102 = arith.constant dense<0.000000e+00> : vector<9xf32>
    %281 = vector.multi_reduction <add>, %280, %cst_102 [1] : vector<9x128xf32> to vector<9xf32>
    %282 = vector.shape_cast %281 : vector<9xf32> to vector<9x1xf32>
    %cst_103 = arith.constant 1.280000e+02 : f32
    %283 = vector.broadcast %cst_103 : f32 to vector<9x1xf32>
    %284 = arith.divf %282, %283 : vector<9x1xf32>
    %285 = vector.broadcast %277 : vector<9x1xf32> to vector<9x128xf32>
    %286 = arith.subf %271, %285 : vector<9x128xf32>
    %cst_104 = arith.constant 9.99999974E-6 : f32
    %287 = vector.broadcast %cst_104 : f32 to vector<9x1xf32>
    %288 = arith.addf %284, %287 : vector<9x1xf32>
    %289 = math.rsqrt %288 : vector<9x1xf32>
    %290 = vector.broadcast %289 : vector<9x1xf32> to vector<9x128xf32>
    %291 = arith.mulf %286, %290 : vector<9x128xf32>
    %292 = vector.broadcast %272 : vector<1x128xf32> to vector<9x128xf32>
    %293 = arith.mulf %291, %292 : vector<9x128xf32>
    %294 = vector.broadcast %273 : vector<1x128xf32> to vector<9x128xf32>
    %295 = arith.addf %293, %294 : vector<9x128xf32>
    %296 = arith.truncf %295 : vector<9x128xf32> to vector<9x128xbf16>
    %c0_105 = arith.constant 0 : index
    %c0_106 = arith.constant 0 : index
    %297 = vector.load %arg22[%c0_105, %c0_106] : memref<128x512xbf16, #tpu.memory_space<vmem>>, vector<128x512xbf16>
    %cst_107 = arith.constant dense<0.000000e+00> : vector<9x512xf32>
    %298 = tpu.matmul %296, %297, %cst_107 {dimension_numbers = #tpu.dot_dimension_numbers<[1], [0], [0], [1], [0, 0, 1, 1], [], []>} : vector<9x128xbf16>, vector<128x512xbf16>, vector<9x512xf32> -> vector<9x512xf32>
    %c0_108 = arith.constant 0 : index
    %c0_109 = arith.constant 0 : index
    %299 = vector.load %arg23[%c0_108, %c0_109] : memref<1x512xf32, #tpu.memory_space<vmem>>, vector<1x512xf32>
    %300 = vector.broadcast %299 : vector<1x512xf32> to vector<9x512xf32>
    %301 = arith.addf %298, %300 : vector<9x512xf32>
    %302 = arith.mulf %301, %301 : vector<9x512xf32>
    %303 = arith.mulf %301, %302 : vector<9x512xf32>
    %cst_110 = arith.constant 4.471500e-02 : f32
    %304 = vector.broadcast %cst_110 : f32 to vector<9x512xf32>
    %305 = arith.mulf %304, %303 : vector<9x512xf32>
    %306 = arith.addf %301, %305 : vector<9x512xf32>
    %cst_111 = arith.constant 0.797884583 : f32
    %307 = vector.broadcast %cst_111 : f32 to vector<9x512xf32>
    %308 = arith.mulf %307, %306 : vector<9x512xf32>
    %309 = math.tanh %308 : vector<9x512xf32>
    %cst_112 = arith.constant 1.000000e+00 : f32
    %310 = vector.broadcast %cst_112 : f32 to vector<9x512xf32>
    %311 = arith.addf %310, %309 : vector<9x512xf32>
    %cst_113 = arith.constant 5.000000e-01 : f32
    %312 = vector.broadcast %cst_113 : f32 to vector<9x512xf32>
    %313 = arith.mulf %312, %311 : vector<9x512xf32>
    %314 = arith.mulf %301, %313 : vector<9x512xf32>
    %315 = arith.truncf %314 : vector<9x512xf32> to vector<9x512xbf16>
    %c0_114 = arith.constant 0 : index
    %c0_115 = arith.constant 0 : index
    %316 = vector.load %arg24[%c0_114, %c0_115] : memref<512x128xbf16, #tpu.memory_space<vmem>>, vector<512x128xbf16>
    %cst_116 = arith.constant dense<0.000000e+00> : vector<9x128xf32>
    %317 = tpu.matmul %315, %316, %cst_116 {dimension_numbers = #tpu.dot_dimension_numbers<[1], [0], [0], [1], [0, 0, 1, 1], [], []>} : vector<9x512xbf16>, vector<512x128xbf16>, vector<9x128xf32> -> vector<9x128xf32>
    %318 = arith.addf %271, %317 : vector<9x128xf32>
    %c0_117 = arith.constant 0 : index
    %c0_118 = arith.constant 0 : index
    %319 = vector.load %arg25[%c0_117, %c0_118] : memref<1x128xf32, #tpu.memory_space<vmem>>, vector<1x128xf32>
    %320 = vector.broadcast %319 : vector<1x128xf32> to vector<9x128xf32>
    %321 = arith.addf %318, %320 : vector<9x128xf32>
    %c0_119 = arith.constant 0 : index
    %c0_120 = arith.constant 0 : index
    %322 = vector.load %arg26[%c0_119, %c0_120] : memref<1x128xf32, #tpu.memory_space<vmem>>, vector<1x128xf32>
    %c0_121 = arith.constant 0 : index
    %c0_122 = arith.constant 0 : index
    %323 = vector.load %arg27[%c0_121, %c0_122] : memref<1x128xf32, #tpu.memory_space<vmem>>, vector<1x128xf32>
    %cst_123 = arith.constant dense<0.000000e+00> : vector<9xf32>
    %324 = vector.multi_reduction <add>, %321, %cst_123 [1] : vector<9x128xf32> to vector<9xf32>
    %325 = vector.shape_cast %324 : vector<9xf32> to vector<9x1xf32>
    %cst_124 = arith.constant 1.280000e+02 : f32
    %326 = vector.broadcast %cst_124 : f32 to vector<9x1xf32>
    %327 = arith.divf %325, %326 : vector<9x1xf32>
    %328 = vector.broadcast %327 : vector<9x1xf32> to vector<9x128xf32>
    %329 = arith.subf %321, %328 : vector<9x128xf32>
    %330 = arith.mulf %329, %329 : vector<9x128xf32>
    %cst_125 = arith.constant dense<0.000000e+00> : vector<9xf32>
    %331 = vector.multi_reduction <add>, %330, %cst_125 [1] : vector<9x128xf32> to vector<9xf32>
    %332 = vector.shape_cast %331 : vector<9xf32> to vector<9x1xf32>
    %cst_126 = arith.constant 1.280000e+02 : f32
    %333 = vector.broadcast %cst_126 : f32 to vector<9x1xf32>
    %334 = arith.divf %332, %333 : vector<9x1xf32>
    %335 = vector.broadcast %327 : vector<9x1xf32> to vector<9x128xf32>
    %336 = arith.subf %321, %335 : vector<9x128xf32>
    %cst_127 = arith.constant 9.99999974E-6 : f32
    %337 = vector.broadcast %cst_127 : f32 to vector<9x1xf32>
    %338 = arith.addf %334, %337 : vector<9x1xf32>
    %339 = math.rsqrt %338 : vector<9x1xf32>
    %340 = vector.broadcast %339 : vector<9x1xf32> to vector<9x128xf32>
    %341 = arith.mulf %336, %340 : vector<9x128xf32>
    %342 = vector.broadcast %322 : vector<1x128xf32> to vector<9x128xf32>
    %343 = arith.mulf %341, %342 : vector<9x128xf32>
    %344 = vector.broadcast %323 : vector<1x128xf32> to vector<9x128xf32>
    %345 = arith.addf %343, %344 : vector<9x128xf32>
    %c0_128 = arith.constant 0 : index
    %c0_129 = arith.constant 0 : index
    %c0_130 = arith.constant 0 : index
    %346 = vector.load %arg28[%c0_128, %c0_129, %c0_130] : memref<1x9x128xf32, #tpu.memory_space<vmem>>, vector<1x9x128xf32>
    %347 = vector.shape_cast %346 : vector<1x9x128xf32> to vector<9x128xf32>
    %348 = vector.shape_cast %345 : vector<9x128xf32> to vector<1x9x128xf32>
    tpu.vector_store %arg28[%c0_128, %c0_129, %c0_130], %348 {strides = array<i32>} : memref<1x9x128xf32, #tpu.memory_space<vmem>>, vector<1x9x128xf32>,
    return
  }
  func.func @transform_0(%arg0: i32) -> (i32, i32, i32) {
    %c0_i32 = arith.constant 0 : i32
    %c0_i32_0 = arith.constant 0 : i32
    %c0_i32_1 = arith.constant 0 : i32
    return %arg0, %c0_i32, %c0_i32_0 : i32, i32, i32
  }
  func.func @transform_1(%arg0: i32) -> (i32, i32) {
    %c0_i32 = arith.constant 0 : i32
    %c0_i32_0 = arith.constant 0 : i32
    %c0_i32_1 = arith.constant 0 : i32
    return %c0_i32, %c0_i32_0 : i32, i32
  }
  func.func @transform_2(%arg0: i32) -> (i32, i32) {
    %c0_i32 = arith.constant 0 : i32
    %c0_i32_0 = arith.constant 0 : i32
    %c0_i32_1 = arith.constant 0 : i32
    return %c0_i32, %c0_i32_0 : i32, i32
  }
  func.func @transform_3(%arg0: i32) -> (i32, i32) {
    %c0_i32 = arith.constant 0 : i32
    %c0_i32_0 = arith.constant 0 : i32
    %c0_i32_1 = arith.constant 0 : i32
    return %c0_i32, %c0_i32_0 : i32, i32
  }
  func.func @transform_4(%arg0: i32) -> (i32, i32) {
    %c0_i32 = arith.constant 0 : i32
    %c0_i32_0 = arith.constant 0 : i32
    %c0_i32_1 = arith.constant 0 : i32
    return %c0_i32, %c0_i32_0 : i32, i32
  }
  func.func @transform_5(%arg0: i32) -> (i32, i32) {
    %c0_i32 = arith.constant 0 : i32
    %c0_i32_0 = arith.constant 0 : i32
    %c0_i32_1 = arith.constant 0 : i32
    return %c0_i32, %c0_i32_0 : i32, i32
  }
  func.func @transform_6(%arg0: i32) -> (i32, i32) {
    %c0_i32 = arith.constant 0 : i32
    %c0_i32_0 = arith.constant 0 : i32
    %c0_i32_1 = arith.constant 0 : i32
    return %c0_i32, %c0_i32_0 : i32, i32
  }
  func.func @transform_7(%arg0: i32) -> (i32, i32) {
    %c0_i32 = arith.constant 0 : i32
    %c0_i32_0 = arith.constant 0 : i32
    %c0_i32_1 = arith.constant 0 : i32
    return %c0_i32, %c0_i32_0 : i32, i32
  }
  func.func @transform_8(%arg0: i32) -> (i32, i32) {
    %c0_i32 = arith.constant 0 : i32
    %c0_i32_0 = arith.constant 0 : i32
    %c0_i32_1 = arith.constant 0 : i32
    return %c0_i32, %c0_i32_0 : i32, i32
  }
  func.func @transform_9(%arg0: i32) -> (i32, i32) {
    %c0_i32 = arith.constant 0 : i32
    %c0_i32_0 = arith.constant 0 : i32
    %c0_i32_1 = arith.constant 0 : i32
    return %c0_i32, %c0_i32_0 : i32, i32
  }
  func.func @transform_10(%arg0: i32) -> (i32, i32) {
    %c0_i32 = arith.constant 0 : i32
    %c0_i32_0 = arith.constant 0 : i32
    %c0_i32_1 = arith.constant 0 : i32
    return %c0_i32, %c0_i32_0 : i32, i32
  }
  func.func @transform_11(%arg0: i32) -> (i32, i32) {
    %c0_i32 = arith.constant 0 : i32
    %c0_i32_0 = arith.constant 0 : i32
    %c0_i32_1 = arith.constant 0 : i32
    return %c0_i32, %c0_i32_0 : i32, i32
  }
  func.func @transform_12(%arg0: i32) -> (i32, i32) {
    %c0_i32 = arith.constant 0 : i32
    %c0_i32_0 = arith.constant 0 : i32
    %c0_i32_1 = arith.constant 0 : i32
    return %c0_i32, %c0_i32_0 : i32, i32
  }
  func.func @transform_13(%arg0: i32) -> (i32, i32) {
    %c0_i32 = arith.constant 0 : i32
    %c0_i32_0 = arith.constant 0 : i32
    %c0_i32_1 = arith.constant 0 : i32
    return %c0_i32, %c0_i32_0 : i32, i32
  }
  func.func @transform_14(%arg0: i32) -> (i32, i32) {
    %c0_i32 = arith.constant 0 : i32
    %c0_i32_0 = arith.constant 0 : i32
    %c0_i32_1 = arith.constant 0 : i32
    return %c0_i32, %c0_i32_0 : i32, i32
  }
  func.func @transform_15(%arg0: i32) -> (i32, i32) {
    %c0_i32 = arith.constant 0 : i32
    %c0_i32_0 = arith.constant 0 : i32
    %c0_i32_1 = arith.constant 0 : i32
    return %c0_i32, %c0_i32_0 : i32, i32
  }
  func.func @transform_16(%arg0: i32) -> (i32, i32) {
    %c0_i32 = arith.constant 0 : i32
    %c0_i32_0 = arith.constant 0 : i32
    %c0_i32_1 = arith.constant 0 : i32
    return %c0_i32, %c0_i32_0 : i32, i32
  }
  func.func @transform_17(%arg0: i32) -> (i32, i32) {
    %c0_i32 = arith.constant 0 : i32
    %c0_i32_0 = arith.constant 0 : i32
    %c0_i32_1 = arith.constant 0 : i32
    return %c0_i32, %c0_i32_0 : i32, i32
  }
  func.func @transform_18(%arg0: i32) -> (i32, i32) {
    %c0_i32 = arith.constant 0 : i32
    %c0_i32_0 = arith.constant 0 : i32
    %c0_i32_1 = arith.constant 0 : i32
    return %c0_i32, %c0_i32_0 : i32, i32
  }
  func.func @transform_19(%arg0: i32) -> (i32, i32) {
    %c0_i32 = arith.constant 0 : i32
    %c0_i32_0 = arith.constant 0 : i32
    %c0_i32_1 = arith.constant 0 : i32
    return %c0_i32, %c0_i32_0 : i32, i32
  }
  func.func @transform_20(%arg0: i32) -> (i32, i32) {
    %c0_i32 = arith.constant 0 : i32
    %c0_i32_0 = arith.constant 0 : i32
    %c0_i32_1 = arith.constant 0 : i32
    return %c0_i32, %c0_i32_0 : i32, i32
  }
  func.func @transform_21(%arg0: i32) -> (i32, i32) {
    %c0_i32 = arith.constant 0 : i32
    %c0_i32_0 = arith.constant 0 : i32
    %c0_i32_1 = arith.constant 0 : i32
    return %c0_i32, %c0_i32_0 : i32, i32
  }
  func.func @transform_22(%arg0: i32) -> (i32, i32) {
    %c0_i32 = arith.constant 0 : i32
    %c0_i32_0 = arith.constant 0 : i32
    %c0_i32_1 = arith.constant 0 : i32
    return %c0_i32, %c0_i32_0 : i32, i32
  }
  func.func @transform_23(%arg0: i32) -> (i32, i32) {
    %c0_i32 = arith.constant 0 : i32
    %c0_i32_0 = arith.constant 0 : i32
    %c0_i32_1 = arith.constant 0 : i32
    return %c0_i32, %c0_i32_0 : i32, i32
  }
  func.func @transform_24(%arg0: i32) -> (i32, i32) {
    %c0_i32 = arith.constant 0 : i32
    %c0_i32_0 = arith.constant 0 : i32
    %c0_i32_1 = arith.constant 0 : i32
    return %c0_i32, %c0_i32_0 : i32, i32
  }
  func.func @transform_25(%arg0: i32) -> (i32, i32) {
    %c0_i32 = arith.constant 0 : i32
    %c0_i32_0 = arith.constant 0 : i32
    %c0_i32_1 = arith.constant 0 : i32
    return %c0_i32, %c0_i32_0 : i32, i32
  }
  func.func @transform_26(%arg0: i32) -> (i32, i32) {
    %c0_i32 = arith.constant 0 : i32
    %c0_i32_0 = arith.constant 0 : i32
    %c0_i32_1 = arith.constant 0 : i32
    return %c0_i32, %c0_i32_0 : i32, i32
  }
  func.func @transform_27(%arg0: i32) -> (i32, i32, i32) {
    %c0_i32 = arith.constant 0 : i32
    %c0_i32_0 = arith.constant 0 : i32
    %c0_i32_1 = arith.constant 0 : i32
    return %arg0, %c0_i32, %c0_i32_0 : i32, i32, i32
  }
}

module attributes {stable_mosaic.version = 11 : i64} {
  func.func @kernel(%arg0: i32, %arg1: memref<1x9x128xf32, #tpu.memory_space<vmem>>, %arg2: memref<9x128xf32, #tpu.memory_space<vmem>>, %arg3: memref<1x128xf32, #tpu.memory_space<vmem>>, %arg4: memref<1x128xf32, #tpu.memory_space<vmem>>, %arg5: memref<128x384xbf16, #tpu.memory_space<vmem>>, %arg6: memref<1x384xf32, #tpu.memory_space<vmem>>, %arg7: memref<128x128xbf16, #tpu.memory_space<vmem>>, %arg8: memref<1x128xf32, #tpu.memory_space<vmem>>, %arg9: memref<1x128xf32, #tpu.memory_space<vmem>>, %arg10: memref<1x128xf32, #tpu.memory_space<vmem>>, %arg11: memref<128x512xbf16, #tpu.memory_space<vmem>>, %arg12: memref<1x512xf32, #tpu.memory_space<vmem>>, %arg13: memref<512x128xbf16, #tpu.memory_space<vmem>>, %arg14: memref<1x128xf32, #tpu.memory_space<vmem>>, %arg15: memref<1x128xf32, #tpu.memory_space<vmem>>, %arg16: memref<1x128xf32, #tpu.memory_space<vmem>>, %arg17: memref<128x384xbf16, #tpu.memory_space<vmem>>, %arg18: memref<1x384xf32, #tpu.memory_space<vmem>>, %arg19: memref<128x128xbf16, #tpu.memory_space<vmem>>, %arg20: memref<1x128xf32, #tpu.memory_space<vmem>>, %arg21: memref<1x128xf32, #tpu.memory_space<vmem>>, %arg22: memref<1x128xf32, #tpu.memory_space<vmem>>, %arg23: memref<128x512xbf16, #tpu.memory_space<vmem>>, %arg24: memref<1x512xf32, #tpu.memory_space<vmem>>, %arg25: memref<512x128xbf16, #tpu.memory_space<vmem>>, %arg26: memref<1x128xf32, #tpu.memory_space<vmem>>, %arg27: memref<1x9x128xf32, #tpu.memory_space<vmem>>) attributes {dimension_semantics = [#tpu.dimension_semantics<parallel>], iteration_bounds = array<i64: 2>, scalar_prefetch = 0 : i64, scratch_operands = 0 : i64, tpu.core_type = #tpu.core_type<tc>, window_params = [{transform_indices = @transform_0, window_bounds = array<i64: 1, 9, 128>}, {pipeline_mode = #tpu.pipeline_mode<synchronous>, transform_indices = @transform_1, window_bounds = array<i64: 9, 128>}, {pipeline_mode = #tpu.pipeline_mode<synchronous>, transform_indices = @transform_2, window_bounds = array<i64: 1, 128>}, {pipeline_mode = #tpu.pipeline_mode<synchronous>, transform_indices = @transform_3, window_bounds = array<i64: 1, 128>}, {pipeline_mode = #tpu.pipeline_mode<synchronous>, transform_indices = @transform_4, window_bounds = array<i64: 128, 384>}, {pipeline_mode = #tpu.pipeline_mode<synchronous>, transform_indices = @transform_5, window_bounds = array<i64: 1, 384>}, {pipeline_mode = #tpu.pipeline_mode<synchronous>, transform_indices = @transform_6, window_bounds = array<i64: 128, 128>}, {pipeline_mode = #tpu.pipeline_mode<synchronous>, transform_indices = @transform_7, window_bounds = array<i64: 1, 128>}, {pipeline_mode = #tpu.pipeline_mode<synchronous>, transform_indices = @transform_8, window_bounds = array<i64: 1, 128>}, {pipeline_mode = #tpu.pipeline_mode<synchronous>, transform_indices = @transform_9, window_bounds = array<i64: 1, 128>}, {pipeline_mode = #tpu.pipeline_mode<synchronous>, transform_indices = @transform_10, window_bounds = array<i64: 128, 512>}, {pipeline_mode = #tpu.pipeline_mode<synchronous>, transform_indices = @transform_11, window_bounds = array<i64: 1, 512>}, {pipeline_mode = #tpu.pipeline_mode<synchronous>, transform_indices = @transform_12, window_bounds = array<i64: 512, 128>}, {pipeline_mode = #tpu.pipeline_mode<synchronous>, transform_indices = @transform_13, window_bounds = array<i64: 1, 128>}, {pipeline_mode = #tpu.pipeline_mode<synchronous>, transform_indices = @transform_14, window_bounds = array<i64: 1, 128>}, {pipeline_mode = #tpu.pipeline_mode<synchronous>, transform_indices = @transform_15, window_bounds = array<i64: 1, 128>}, {pipeline_mode = #tpu.pipeline_mode<synchronous>, transform_indices = @transform_16, window_bounds = array<i64: 128, 384>}, {pipeline_mode = #tpu.pipeline_mode<synchronous>, transform_indices = @transform_17, window_bounds = array<i64: 1, 384>}, {pipeline_mode = #tpu.pipeline_mode<synchronous>, transform_indices = @transform_18, window_bounds = array<i64: 128, 128>}, {pipeline_mode = #tpu.pipeline_mode<synchronous>, transform_indices = @transform_19, window_bounds = array<i64: 1, 128>}, {pipeline_mode = #tpu.pipeline_mode<synchronous>, transform_indices = @transform_20, window_bounds = array<i64: 1, 128>}, {pipeline_mode = #tpu.pipeline_mode<synchronous>, transform_indices = @transform_21, window_bounds = array<i64: 1, 128>}, {pipeline_mode = #tpu.pipeline_mode<synchronous>, transform_indices = @transform_22, window_bounds = array<i64: 128, 512>}, {pipeline_mode = #tpu.pipeline_mode<synchronous>, transform_indices = @transform_23, window_bounds = array<i64: 1, 512>}, {pipeline_mode = #tpu.pipeline_mode<synchronous>, transform_indices = @transform_24, window_bounds = array<i64: 512, 128>}, {pipeline_mode = #tpu.pipeline_mode<synchronous>, transform_indices = @transform_25, window_bounds = array<i64: 1, 128>}, {transform_indices = @transform_26, window_bounds = array<i64: 1, 9, 128>}]} {
    %c0 = arith.constant 0 : index
    %c0_0 = arith.constant 0 : index
    %c0_1 = arith.constant 0 : index
    %0 = vector.load %arg1[%c0, %c0_0, %c0_1] : memref<1x9x128xf32, #tpu.memory_space<vmem>>, vector<1x9x128xf32>
    %1 = vector.shape_cast %0 : vector<1x9x128xf32> to vector<9x128xf32>
    %c0_2 = arith.constant 0 : index
    %c0_3 = arith.constant 0 : index
    %2 = vector.load %arg2[%c0_2, %c0_3] : memref<9x128xf32, #tpu.memory_space<vmem>>, vector<9x128xf32>
    %3 = arith.addf %1, %2 : vector<9x128xf32>
    %c0_4 = arith.constant 0 : index
    %c0_5 = arith.constant 0 : index
    %4 = vector.load %arg3[%c0_4, %c0_5] : memref<1x128xf32, #tpu.memory_space<vmem>>, vector<1x128xf32>
    %c0_6 = arith.constant 0 : index
    %c0_7 = arith.constant 0 : index
    %5 = vector.load %arg4[%c0_6, %c0_7] : memref<1x128xf32, #tpu.memory_space<vmem>>, vector<1x128xf32>
    %cst = arith.constant dense<0.000000e+00> : vector<9xf32>
    %6 = vector.multi_reduction <add>, %3, %cst [1] : vector<9x128xf32> to vector<9xf32>
    %7 = vector.shape_cast %6 : vector<9xf32> to vector<9x1xf32>
    %cst_8 = arith.constant 1.280000e+02 : f32
    %8 = vector.broadcast %cst_8 : f32 to vector<9x1xf32>
    %9 = arith.divf %7, %8 : vector<9x1xf32>
    %10 = vector.broadcast %9 : vector<9x1xf32> to vector<9x128xf32>
    %11 = arith.subf %3, %10 : vector<9x128xf32>
    %12 = arith.mulf %11, %11 : vector<9x128xf32>
    %cst_9 = arith.constant dense<0.000000e+00> : vector<9xf32>
    %13 = vector.multi_reduction <add>, %12, %cst_9 [1] : vector<9x128xf32> to vector<9xf32>
    %14 = vector.shape_cast %13 : vector<9xf32> to vector<9x1xf32>
    %cst_10 = arith.constant 1.280000e+02 : f32
    %15 = vector.broadcast %cst_10 : f32 to vector<9x1xf32>
    %16 = arith.divf %14, %15 : vector<9x1xf32>
    %17 = vector.broadcast %9 : vector<9x1xf32> to vector<9x128xf32>
    %18 = arith.subf %3, %17 : vector<9x128xf32>
    %cst_11 = arith.constant 9.99999974E-6 : f32
    %19 = vector.broadcast %cst_11 : f32 to vector<9x1xf32>
    %20 = arith.addf %16, %19 : vector<9x1xf32>
    %21 = math.rsqrt %20 : vector<9x1xf32>
    %22 = vector.broadcast %21 : vector<9x1xf32> to vector<9x128xf32>
    %23 = arith.mulf %18, %22 : vector<9x128xf32>
    %24 = vector.broadcast %4 : vector<1x128xf32> to vector<9x128xf32>
    %25 = arith.mulf %23, %24 : vector<9x128xf32>
    %26 = vector.broadcast %5 : vector<1x128xf32> to vector<9x128xf32>
    %27 = arith.addf %25, %26 : vector<9x128xf32>
    %28 = arith.truncf %27 : vector<9x128xf32> to vector<9x128xbf16>
    %c0_12 = arith.constant 0 : index
    %c0_13 = arith.constant 0 : index
    %29 = vector.load %arg5[%c0_12, %c0_13] : memref<128x384xbf16, #tpu.memory_space<vmem>>, vector<128x384xbf16>
    %cst_14 = arith.constant dense<0.000000e+00> : vector<9x384xf32>
    %30 = tpu.matmul %28, %29, %cst_14 {dimension_numbers = #tpu.dot_dimension_numbers<[1], [0], [0], [1], [0, 0, 1, 1], [], []>} : vector<9x128xbf16>, vector<128x384xbf16>, vector<9x384xf32> -> vector<9x384xf32>
    %c0_15 = arith.constant 0 : index
    %c0_16 = arith.constant 0 : index
    %31 = vector.load %arg6[%c0_15, %c0_16] : memref<1x384xf32, #tpu.memory_space<vmem>>, vector<1x384xf32>
    %32 = vector.broadcast %31 : vector<1x384xf32> to vector<9x384xf32>
    %33 = arith.addf %30, %32 : vector<9x384xf32>
    %34 = vector.extract_strided_slice %33 {offsets = [0, 0], sizes = [9, 128], strides = [1, 1]} : vector<9x384xf32> to vector<9x128xf32>
    %cst_17 = arith.constant 0.176776692 : f32
    %35 = vector.broadcast %cst_17 : f32 to vector<9x128xf32>
    %36 = arith.mulf %34, %35 : vector<9x128xf32>
    %37 = arith.truncf %36 : vector<9x128xf32> to vector<9x128xbf16>
    %38 = vector.extract_strided_slice %33 {offsets = [0, 128], sizes = [9, 128], strides = [1, 1]} : vector<9x384xf32> to vector<9x128xf32>
    %39 = arith.truncf %38 : vector<9x128xf32> to vector<9x128xbf16>
    %40 = vector.extract_strided_slice %33 {offsets = [0, 256], sizes = [9, 128], strides = [1, 1]} : vector<9x384xf32> to vector<9x128xf32>
    %41 = arith.truncf %40 : vector<9x128xf32> to vector<9x128xbf16>
    %42 = vector.extract_strided_slice %37 {offsets = [0, 0], sizes = [9, 32], strides = [1, 1]} : vector<9x128xbf16> to vector<9x32xbf16>
    %43 = vector.extract_strided_slice %39 {offsets = [0, 0], sizes = [9, 32], strides = [1, 1]} : vector<9x128xbf16> to vector<9x32xbf16>
    %cst_18 = arith.constant dense<0.000000e+00> : vector<9x9xf32>
    %44 = tpu.matmul %42, %43, %cst_18 {dimension_numbers = #tpu.dot_dimension_numbers<[1], [1], [0], [0], [0, 0, 1, 0], [], []>} : vector<9x32xbf16>, vector<9x32xbf16>, vector<9x9xf32> -> vector<9x9xf32>
    %cst_19 = arith.constant dense<0xFF800000> : vector<9xf32>
    %45 = vector.multi_reduction <maximumf>, %44, %cst_19 [1] : vector<9x9xf32> to vector<9xf32>
    %46 = vector.shape_cast %45 : vector<9xf32> to vector<9x1xf32>
    %47 = vector.broadcast %46 : vector<9x1xf32> to vector<9x9xf32>
    %48 = arith.subf %44, %47 : vector<9x9xf32>
    %49 = math.exp %48 : vector<9x9xf32>
    %cst_20 = arith.constant dense<0.000000e+00> : vector<9xf32>
    %50 = vector.multi_reduction <add>, %49, %cst_20 [1] : vector<9x9xf32> to vector<9xf32>
    %51 = vector.shape_cast %50 : vector<9xf32> to vector<9x1xf32>
    %52 = tpu.reciprocal %51 {approx = true} : vector<9x1xf32> -> vector<9x1xf32>
    %53 = vector.broadcast %52 : vector<9x1xf32> to vector<9x9xf32>
    %54 = arith.mulf %49, %53 : vector<9x9xf32>
    %55 = arith.truncf %54 : vector<9x9xf32> to vector<9x9xbf16>
    %56 = vector.extract_strided_slice %41 {offsets = [0, 0], sizes = [9, 32], strides = [1, 1]} : vector<9x128xbf16> to vector<9x32xbf16>
    %cst_21 = arith.constant dense<0.000000e+00> : vector<9x32xf32>
    %57 = tpu.matmul %55, %56, %cst_21 {dimension_numbers = #tpu.dot_dimension_numbers<[1], [0], [0], [1], [0, 0, 1, 1], [], []>} : vector<9x9xbf16>, vector<9x32xbf16>, vector<9x32xf32> -> vector<9x32xf32>
    %58 = vector.extract_strided_slice %37 {offsets = [0, 32], sizes = [9, 32], strides = [1, 1]} : vector<9x128xbf16> to vector<9x32xbf16>
    %59 = vector.extract_strided_slice %39 {offsets = [0, 32], sizes = [9, 32], strides = [1, 1]} : vector<9x128xbf16> to vector<9x32xbf16>
    %cst_22 = arith.constant dense<0.000000e+00> : vector<9x9xf32>
    %60 = tpu.matmul %58, %59, %cst_22 {dimension_numbers = #tpu.dot_dimension_numbers<[1], [1], [0], [0], [0, 0, 1, 0], [], []>} : vector<9x32xbf16>, vector<9x32xbf16>, vector<9x9xf32> -> vector<9x9xf32>
    %cst_23 = arith.constant dense<0xFF800000> : vector<9xf32>
    %61 = vector.multi_reduction <maximumf>, %60, %cst_23 [1] : vector<9x9xf32> to vector<9xf32>
    %62 = vector.shape_cast %61 : vector<9xf32> to vector<9x1xf32>
    %63 = vector.broadcast %62 : vector<9x1xf32> to vector<9x9xf32>
    %64 = arith.subf %60, %63 : vector<9x9xf32>
    %65 = math.exp %64 : vector<9x9xf32>
    %cst_24 = arith.constant dense<0.000000e+00> : vector<9xf32>
    %66 = vector.multi_reduction <add>, %65, %cst_24 [1] : vector<9x9xf32> to vector<9xf32>
    %67 = vector.shape_cast %66 : vector<9xf32> to vector<9x1xf32>
    %68 = tpu.reciprocal %67 {approx = true} : vector<9x1xf32> -> vector<9x1xf32>
    %69 = vector.broadcast %68 : vector<9x1xf32> to vector<9x9xf32>
    %70 = arith.mulf %65, %69 : vector<9x9xf32>
    %71 = arith.truncf %70 : vector<9x9xf32> to vector<9x9xbf16>
    %72 = vector.extract_strided_slice %41 {offsets = [0, 32], sizes = [9, 32], strides = [1, 1]} : vector<9x128xbf16> to vector<9x32xbf16>
    %cst_25 = arith.constant dense<0.000000e+00> : vector<9x32xf32>
    %73 = tpu.matmul %71, %72, %cst_25 {dimension_numbers = #tpu.dot_dimension_numbers<[1], [0], [0], [1], [0, 0, 1, 1], [], []>} : vector<9x9xbf16>, vector<9x32xbf16>, vector<9x32xf32> -> vector<9x32xf32>
    %74 = vector.extract_strided_slice %37 {offsets = [0, 64], sizes = [9, 32], strides = [1, 1]} : vector<9x128xbf16> to vector<9x32xbf16>
    %75 = vector.extract_strided_slice %39 {offsets = [0, 64], sizes = [9, 32], strides = [1, 1]} : vector<9x128xbf16> to vector<9x32xbf16>
    %cst_26 = arith.constant dense<0.000000e+00> : vector<9x9xf32>
    %76 = tpu.matmul %74, %75, %cst_26 {dimension_numbers = #tpu.dot_dimension_numbers<[1], [1], [0], [0], [0, 0, 1, 0], [], []>} : vector<9x32xbf16>, vector<9x32xbf16>, vector<9x9xf32> -> vector<9x9xf32>
    %cst_27 = arith.constant dense<0xFF800000> : vector<9xf32>
    %77 = vector.multi_reduction <maximumf>, %76, %cst_27 [1] : vector<9x9xf32> to vector<9xf32>
    %78 = vector.shape_cast %77 : vector<9xf32> to vector<9x1xf32>
    %79 = vector.broadcast %78 : vector<9x1xf32> to vector<9x9xf32>
    %80 = arith.subf %76, %79 : vector<9x9xf32>
    %81 = math.exp %80 : vector<9x9xf32>
    %cst_28 = arith.constant dense<0.000000e+00> : vector<9xf32>
    %82 = vector.multi_reduction <add>, %81, %cst_28 [1] : vector<9x9xf32> to vector<9xf32>
    %83 = vector.shape_cast %82 : vector<9xf32> to vector<9x1xf32>
    %84 = tpu.reciprocal %83 {approx = true} : vector<9x1xf32> -> vector<9x1xf32>
    %85 = vector.broadcast %84 : vector<9x1xf32> to vector<9x9xf32>
    %86 = arith.mulf %81, %85 : vector<9x9xf32>
    %87 = arith.truncf %86 : vector<9x9xf32> to vector<9x9xbf16>
    %88 = vector.extract_strided_slice %41 {offsets = [0, 64], sizes = [9, 32], strides = [1, 1]} : vector<9x128xbf16> to vector<9x32xbf16>
    %cst_29 = arith.constant dense<0.000000e+00> : vector<9x32xf32>
    %89 = tpu.matmul %87, %88, %cst_29 {dimension_numbers = #tpu.dot_dimension_numbers<[1], [0], [0], [1], [0, 0, 1, 1], [], []>} : vector<9x9xbf16>, vector<9x32xbf16>, vector<9x32xf32> -> vector<9x32xf32>
    %90 = vector.extract_strided_slice %37 {offsets = [0, 96], sizes = [9, 32], strides = [1, 1]} : vector<9x128xbf16> to vector<9x32xbf16>
    %91 = vector.extract_strided_slice %39 {offsets = [0, 96], sizes = [9, 32], strides = [1, 1]} : vector<9x128xbf16> to vector<9x32xbf16>
    %cst_30 = arith.constant dense<0.000000e+00> : vector<9x9xf32>
    %92 = tpu.matmul %90, %91, %cst_30 {dimension_numbers = #tpu.dot_dimension_numbers<[1], [1], [0], [0], [0, 0, 1, 0], [], []>} : vector<9x32xbf16>, vector<9x32xbf16>, vector<9x9xf32> -> vector<9x9xf32>
    %cst_31 = arith.constant dense<0xFF800000> : vector<9xf32>
    %93 = vector.multi_reduction <maximumf>, %92, %cst_31 [1] : vector<9x9xf32> to vector<9xf32>
    %94 = vector.shape_cast %93 : vector<9xf32> to vector<9x1xf32>
    %95 = vector.broadcast %94 : vector<9x1xf32> to vector<9x9xf32>
    %96 = arith.subf %92, %95 : vector<9x9xf32>
    %97 = math.exp %96 : vector<9x9xf32>
    %cst_32 = arith.constant dense<0.000000e+00> : vector<9xf32>
    %98 = vector.multi_reduction <add>, %97, %cst_32 [1] : vector<9x9xf32> to vector<9xf32>
    %99 = vector.shape_cast %98 : vector<9xf32> to vector<9x1xf32>
    %100 = tpu.reciprocal %99 {approx = true} : vector<9x1xf32> -> vector<9x1xf32>
    %101 = vector.broadcast %100 : vector<9x1xf32> to vector<9x9xf32>
    %102 = arith.mulf %97, %101 : vector<9x9xf32>
    %103 = arith.truncf %102 : vector<9x9xf32> to vector<9x9xbf16>
    %104 = vector.extract_strided_slice %41 {offsets = [0, 96], sizes = [9, 32], strides = [1, 1]} : vector<9x128xbf16> to vector<9x32xbf16>
    %cst_33 = arith.constant dense<0.000000e+00> : vector<9x32xf32>
    %105 = tpu.matmul %103, %104, %cst_33 {dimension_numbers = #tpu.dot_dimension_numbers<[1], [0], [0], [1], [0, 0, 1, 1], [], []>} : vector<9x9xbf16>, vector<9x32xbf16>, vector<9x32xf32> -> vector<9x32xf32>
    %106 = tpu.concatenate %57, %73, %89, %105 in 1 : vector<9x32xf32>, vector<9x32xf32>, vector<9x32xf32>, vector<9x32xf32> -> vector<9x128xf32>
    %107 = arith.truncf %106 : vector<9x128xf32> to vector<9x128xbf16>
    %c0_34 = arith.constant 0 : index
    %c0_35 = arith.constant 0 : index
    %108 = vector.load %arg7[%c0_34, %c0_35] : memref<128x128xbf16, #tpu.memory_space<vmem>>, vector<128x128xbf16>
    %cst_36 = arith.constant dense<0.000000e+00> : vector<9x128xf32>
    %109 = tpu.matmul %107, %108, %cst_36 {dimension_numbers = #tpu.dot_dimension_numbers<[1], [0], [0], [1], [0, 0, 1, 1], [], []>} : vector<9x128xbf16>, vector<128x128xbf16>, vector<9x128xf32> -> vector<9x128xf32>
    %c0_37 = arith.constant 0 : index
    %c0_38 = arith.constant 0 : index
    %110 = vector.load %arg8[%c0_37, %c0_38] : memref<1x128xf32, #tpu.memory_space<vmem>>, vector<1x128xf32>
    %111 = vector.broadcast %110 : vector<1x128xf32> to vector<9x128xf32>
    %112 = arith.addf %109, %111 : vector<9x128xf32>
    %113 = arith.addf %3, %112 : vector<9x128xf32>
    %c0_39 = arith.constant 0 : index
    %c0_40 = arith.constant 0 : index
    %114 = vector.load %arg9[%c0_39, %c0_40] : memref<1x128xf32, #tpu.memory_space<vmem>>, vector<1x128xf32>
    %c0_41 = arith.constant 0 : index
    %c0_42 = arith.constant 0 : index
    %115 = vector.load %arg10[%c0_41, %c0_42] : memref<1x128xf32, #tpu.memory_space<vmem>>, vector<1x128xf32>
    %cst_43 = arith.constant dense<0.000000e+00> : vector<9xf32>
    %116 = vector.multi_reduction <add>, %113, %cst_43 [1] : vector<9x128xf32> to vector<9xf32>
    %117 = vector.shape_cast %116 : vector<9xf32> to vector<9x1xf32>
    %cst_44 = arith.constant 1.280000e+02 : f32
    %118 = vector.broadcast %cst_44 : f32 to vector<9x1xf32>
    %119 = arith.divf %117, %118 : vector<9x1xf32>
    %120 = vector.broadcast %119 : vector<9x1xf32> to vector<9x128xf32>
    %121 = arith.subf %113, %120 : vector<9x128xf32>
    %122 = arith.mulf %121, %121 : vector<9x128xf32>
    %cst_45 = arith.constant dense<0.000000e+00> : vector<9xf32>
    %123 = vector.multi_reduction <add>, %122, %cst_45 [1] : vector<9x128xf32> to vector<9xf32>
    %124 = vector.shape_cast %123 : vector<9xf32> to vector<9x1xf32>
    %cst_46 = arith.constant 1.280000e+02 : f32
    %125 = vector.broadcast %cst_46 : f32 to vector<9x1xf32>
    %126 = arith.divf %124, %125 : vector<9x1xf32>
    %127 = vector.broadcast %119 : vector<9x1xf32> to vector<9x128xf32>
    %128 = arith.subf %113, %127 : vector<9x128xf32>
    %cst_47 = arith.constant 9.99999974E-6 : f32
    %129 = vector.broadcast %cst_47 : f32 to vector<9x1xf32>
    %130 = arith.addf %126, %129 : vector<9x1xf32>
    %131 = math.rsqrt %130 : vector<9x1xf32>
    %132 = vector.broadcast %131 : vector<9x1xf32> to vector<9x128xf32>
    %133 = arith.mulf %128, %132 : vector<9x128xf32>
    %134 = vector.broadcast %114 : vector<1x128xf32> to vector<9x128xf32>
    %135 = arith.mulf %133, %134 : vector<9x128xf32>
    %136 = vector.broadcast %115 : vector<1x128xf32> to vector<9x128xf32>
    %137 = arith.addf %135, %136 : vector<9x128xf32>
    %138 = arith.truncf %137 : vector<9x128xf32> to vector<9x128xbf16>
    %c0_48 = arith.constant 0 : index
    %c0_49 = arith.constant 0 : index
    %139 = vector.load %arg11[%c0_48, %c0_49] : memref<128x512xbf16, #tpu.memory_space<vmem>>, vector<128x512xbf16>
    %cst_50 = arith.constant dense<0.000000e+00> : vector<9x512xf32>
    %140 = tpu.matmul %138, %139, %cst_50 {dimension_numbers = #tpu.dot_dimension_numbers<[1], [0], [0], [1], [0, 0, 1, 1], [], []>} : vector<9x128xbf16>, vector<128x512xbf16>, vector<9x512xf32> -> vector<9x512xf32>
    %c0_51 = arith.constant 0 : index
    %c0_52 = arith.constant 0 : index
    %141 = vector.load %arg12[%c0_51, %c0_52] : memref<1x512xf32, #tpu.memory_space<vmem>>, vector<1x512xf32>
    %142 = vector.broadcast %141 : vector<1x512xf32> to vector<9x512xf32>
    %143 = arith.addf %140, %142 : vector<9x512xf32>
    %144 = arith.mulf %143, %143 : vector<9x512xf32>
    %145 = arith.mulf %143, %144 : vector<9x512xf32>
    %cst_53 = arith.constant 4.471500e-02 : f32
    %146 = vector.broadcast %cst_53 : f32 to vector<9x512xf32>
    %147 = arith.mulf %146, %145 : vector<9x512xf32>
    %148 = arith.addf %143, %147 : vector<9x512xf32>
    %cst_54 = arith.constant 0.797884583 : f32
    %149 = vector.broadcast %cst_54 : f32 to vector<9x512xf32>
    %150 = arith.mulf %149, %148 : vector<9x512xf32>
    %151 = math.tanh %150 : vector<9x512xf32>
    %cst_55 = arith.constant 1.000000e+00 : f32
    %152 = vector.broadcast %cst_55 : f32 to vector<9x512xf32>
    %153 = arith.addf %152, %151 : vector<9x512xf32>
    %cst_56 = arith.constant 5.000000e-01 : f32
    %154 = vector.broadcast %cst_56 : f32 to vector<9x512xf32>
    %155 = arith.mulf %154, %153 : vector<9x512xf32>
    %156 = arith.mulf %143, %155 : vector<9x512xf32>
    %157 = arith.truncf %156 : vector<9x512xf32> to vector<9x512xbf16>
    %c0_57 = arith.constant 0 : index
    %c0_58 = arith.constant 0 : index
    %158 = vector.load %arg13[%c0_57, %c0_58] : memref<512x128xbf16, #tpu.memory_space<vmem>>, vector<512x128xbf16>
    %cst_59 = arith.constant dense<0.000000e+00> : vector<9x128xf32>
    %159 = tpu.matmul %157, %158, %cst_59 {dimension_numbers = #tpu.dot_dimension_numbers<[1], [0], [0], [1], [0, 0, 1, 1], [], []>} : vector<9x512xbf16>, vector<512x128xbf16>, vector<9x128xf32> -> vector<9x128xf32>
    %160 = arith.addf %113, %159 : vector<9x128xf32>
    %c0_60 = arith.constant 0 : index
    %c0_61 = arith.constant 0 : index
    %161 = vector.load %arg14[%c0_60, %c0_61] : memref<1x128xf32, #tpu.memory_space<vmem>>, vector<1x128xf32>
    %162 = vector.broadcast %161 : vector<1x128xf32> to vector<9x128xf32>
    %163 = arith.addf %160, %162 : vector<9x128xf32>
    %c0_62 = arith.constant 0 : index
    %c0_63 = arith.constant 0 : index
    %164 = vector.load %arg15[%c0_62, %c0_63] : memref<1x128xf32, #tpu.memory_space<vmem>>, vector<1x128xf32>
    %c0_64 = arith.constant 0 : index
    %c0_65 = arith.constant 0 : index
    %165 = vector.load %arg16[%c0_64, %c0_65] : memref<1x128xf32, #tpu.memory_space<vmem>>, vector<1x128xf32>
    %cst_66 = arith.constant dense<0.000000e+00> : vector<9xf32>
    %166 = vector.multi_reduction <add>, %163, %cst_66 [1] : vector<9x128xf32> to vector<9xf32>
    %167 = vector.shape_cast %166 : vector<9xf32> to vector<9x1xf32>
    %cst_67 = arith.constant 1.280000e+02 : f32
    %168 = vector.broadcast %cst_67 : f32 to vector<9x1xf32>
    %169 = arith.divf %167, %168 : vector<9x1xf32>
    %170 = vector.broadcast %169 : vector<9x1xf32> to vector<9x128xf32>
    %171 = arith.subf %163, %170 : vector<9x128xf32>
    %172 = arith.mulf %171, %171 : vector<9x128xf32>
    %cst_68 = arith.constant dense<0.000000e+00> : vector<9xf32>
    %173 = vector.multi_reduction <add>, %172, %cst_68 [1] : vector<9x128xf32> to vector<9xf32>
    %174 = vector.shape_cast %173 : vector<9xf32> to vector<9x1xf32>
    %cst_69 = arith.constant 1.280000e+02 : f32
    %175 = vector.broadcast %cst_69 : f32 to vector<9x1xf32>
    %176 = arith.divf %174, %175 : vector<9x1xf32>
    %177 = vector.broadcast %169 : vector<9x1xf32> to vector<9x128xf32>
    %178 = arith.subf %163, %177 : vector<9x128xf32>
    %cst_70 = arith.constant 9.99999974E-6 : f32
    %179 = vector.broadcast %cst_70 : f32 to vector<9x1xf32>
    %180 = arith.addf %176, %179 : vector<9x1xf32>
    %181 = math.rsqrt %180 : vector<9x1xf32>
    %182 = vector.broadcast %181 : vector<9x1xf32> to vector<9x128xf32>
    %183 = arith.mulf %178, %182 : vector<9x128xf32>
    %184 = vector.broadcast %164 : vector<1x128xf32> to vector<9x128xf32>
    %185 = arith.mulf %183, %184 : vector<9x128xf32>
    %186 = vector.broadcast %165 : vector<1x128xf32> to vector<9x128xf32>
    %187 = arith.addf %185, %186 : vector<9x128xf32>
    %188 = arith.truncf %187 : vector<9x128xf32> to vector<9x128xbf16>
    %c0_71 = arith.constant 0 : index
    %c0_72 = arith.constant 0 : index
    %189 = vector.load %arg17[%c0_71, %c0_72] : memref<128x384xbf16, #tpu.memory_space<vmem>>, vector<128x384xbf16>
    %cst_73 = arith.constant dense<0.000000e+00> : vector<9x384xf32>
    %190 = tpu.matmul %188, %189, %cst_73 {dimension_numbers = #tpu.dot_dimension_numbers<[1], [0], [0], [1], [0, 0, 1, 1], [], []>} : vector<9x128xbf16>, vector<128x384xbf16>, vector<9x384xf32> -> vector<9x384xf32>
    %c0_74 = arith.constant 0 : index
    %c0_75 = arith.constant 0 : index
    %191 = vector.load %arg18[%c0_74, %c0_75] : memref<1x384xf32, #tpu.memory_space<vmem>>, vector<1x384xf32>
    %192 = vector.broadcast %191 : vector<1x384xf32> to vector<9x384xf32>
    %193 = arith.addf %190, %192 : vector<9x384xf32>
    %194 = vector.extract_strided_slice %193 {offsets = [0, 0], sizes = [9, 128], strides = [1, 1]} : vector<9x384xf32> to vector<9x128xf32>
    %cst_76 = arith.constant 0.176776692 : f32
    %195 = vector.broadcast %cst_76 : f32 to vector<9x128xf32>
    %196 = arith.mulf %194, %195 : vector<9x128xf32>
    %197 = arith.truncf %196 : vector<9x128xf32> to vector<9x128xbf16>
    %198 = vector.extract_strided_slice %193 {offsets = [0, 128], sizes = [9, 128], strides = [1, 1]} : vector<9x384xf32> to vector<9x128xf32>
    %199 = arith.truncf %198 : vector<9x128xf32> to vector<9x128xbf16>
    %200 = vector.extract_strided_slice %193 {offsets = [0, 256], sizes = [9, 128], strides = [1, 1]} : vector<9x384xf32> to vector<9x128xf32>
    %201 = arith.truncf %200 : vector<9x128xf32> to vector<9x128xbf16>
    %202 = vector.extract_strided_slice %197 {offsets = [0, 0], sizes = [9, 32], strides = [1, 1]} : vector<9x128xbf16> to vector<9x32xbf16>
    %203 = vector.extract_strided_slice %199 {offsets = [0, 0], sizes = [9, 32], strides = [1, 1]} : vector<9x128xbf16> to vector<9x32xbf16>
    %cst_77 = arith.constant dense<0.000000e+00> : vector<9x9xf32>
    %204 = tpu.matmul %202, %203, %cst_77 {dimension_numbers = #tpu.dot_dimension_numbers<[1], [1], [0], [0], [0, 0, 1, 0], [], []>} : vector<9x32xbf16>, vector<9x32xbf16>, vector<9x9xf32> -> vector<9x9xf32>
    %cst_78 = arith.constant dense<0xFF800000> : vector<9xf32>
    %205 = vector.multi_reduction <maximumf>, %204, %cst_78 [1] : vector<9x9xf32> to vector<9xf32>
    %206 = vector.shape_cast %205 : vector<9xf32> to vector<9x1xf32>
    %207 = vector.broadcast %206 : vector<9x1xf32> to vector<9x9xf32>
    %208 = arith.subf %204, %207 : vector<9x9xf32>
    %209 = math.exp %208 : vector<9x9xf32>
    %cst_79 = arith.constant dense<0.000000e+00> : vector<9xf32>
    %210 = vector.multi_reduction <add>, %209, %cst_79 [1] : vector<9x9xf32> to vector<9xf32>
    %211 = vector.shape_cast %210 : vector<9xf32> to vector<9x1xf32>
    %212 = tpu.reciprocal %211 {approx = true} : vector<9x1xf32> -> vector<9x1xf32>
    %213 = vector.broadcast %212 : vector<9x1xf32> to vector<9x9xf32>
    %214 = arith.mulf %209, %213 : vector<9x9xf32>
    %215 = arith.truncf %214 : vector<9x9xf32> to vector<9x9xbf16>
    %216 = vector.extract_strided_slice %201 {offsets = [0, 0], sizes = [9, 32], strides = [1, 1]} : vector<9x128xbf16> to vector<9x32xbf16>
    %cst_80 = arith.constant dense<0.000000e+00> : vector<9x32xf32>
    %217 = tpu.matmul %215, %216, %cst_80 {dimension_numbers = #tpu.dot_dimension_numbers<[1], [0], [0], [1], [0, 0, 1, 1], [], []>} : vector<9x9xbf16>, vector<9x32xbf16>, vector<9x32xf32> -> vector<9x32xf32>
    %218 = vector.extract_strided_slice %197 {offsets = [0, 32], sizes = [9, 32], strides = [1, 1]} : vector<9x128xbf16> to vector<9x32xbf16>
    %219 = vector.extract_strided_slice %199 {offsets = [0, 32], sizes = [9, 32], strides = [1, 1]} : vector<9x128xbf16> to vector<9x32xbf16>
    %cst_81 = arith.constant dense<0.000000e+00> : vector<9x9xf32>
    %220 = tpu.matmul %218, %219, %cst_81 {dimension_numbers = #tpu.dot_dimension_numbers<[1], [1], [0], [0], [0, 0, 1, 0], [], []>} : vector<9x32xbf16>, vector<9x32xbf16>, vector<9x9xf32> -> vector<9x9xf32>
    %cst_82 = arith.constant dense<0xFF800000> : vector<9xf32>
    %221 = vector.multi_reduction <maximumf>, %220, %cst_82 [1] : vector<9x9xf32> to vector<9xf32>
    %222 = vector.shape_cast %221 : vector<9xf32> to vector<9x1xf32>
    %223 = vector.broadcast %222 : vector<9x1xf32> to vector<9x9xf32>
    %224 = arith.subf %220, %223 : vector<9x9xf32>
    %225 = math.exp %224 : vector<9x9xf32>
    %cst_83 = arith.constant dense<0.000000e+00> : vector<9xf32>
    %226 = vector.multi_reduction <add>, %225, %cst_83 [1] : vector<9x9xf32> to vector<9xf32>
    %227 = vector.shape_cast %226 : vector<9xf32> to vector<9x1xf32>
    %228 = tpu.reciprocal %227 {approx = true} : vector<9x1xf32> -> vector<9x1xf32>
    %229 = vector.broadcast %228 : vector<9x1xf32> to vector<9x9xf32>
    %230 = arith.mulf %225, %229 : vector<9x9xf32>
    %231 = arith.truncf %230 : vector<9x9xf32> to vector<9x9xbf16>
    %232 = vector.extract_strided_slice %201 {offsets = [0, 32], sizes = [9, 32], strides = [1, 1]} : vector<9x128xbf16> to vector<9x32xbf16>
    %cst_84 = arith.constant dense<0.000000e+00> : vector<9x32xf32>
    %233 = tpu.matmul %231, %232, %cst_84 {dimension_numbers = #tpu.dot_dimension_numbers<[1], [0], [0], [1], [0, 0, 1, 1], [], []>} : vector<9x9xbf16>, vector<9x32xbf16>, vector<9x32xf32> -> vector<9x32xf32>
    %234 = vector.extract_strided_slice %197 {offsets = [0, 64], sizes = [9, 32], strides = [1, 1]} : vector<9x128xbf16> to vector<9x32xbf16>
    %235 = vector.extract_strided_slice %199 {offsets = [0, 64], sizes = [9, 32], strides = [1, 1]} : vector<9x128xbf16> to vector<9x32xbf16>
    %cst_85 = arith.constant dense<0.000000e+00> : vector<9x9xf32>
    %236 = tpu.matmul %234, %235, %cst_85 {dimension_numbers = #tpu.dot_dimension_numbers<[1], [1], [0], [0], [0, 0, 1, 0], [], []>} : vector<9x32xbf16>, vector<9x32xbf16>, vector<9x9xf32> -> vector<9x9xf32>
    %cst_86 = arith.constant dense<0xFF800000> : vector<9xf32>
    %237 = vector.multi_reduction <maximumf>, %236, %cst_86 [1] : vector<9x9xf32> to vector<9xf32>
    %238 = vector.shape_cast %237 : vector<9xf32> to vector<9x1xf32>
    %239 = vector.broadcast %238 : vector<9x1xf32> to vector<9x9xf32>
    %240 = arith.subf %236, %239 : vector<9x9xf32>
    %241 = math.exp %240 : vector<9x9xf32>
    %cst_87 = arith.constant dense<0.000000e+00> : vector<9xf32>
    %242 = vector.multi_reduction <add>, %241, %cst_87 [1] : vector<9x9xf32> to vector<9xf32>
    %243 = vector.shape_cast %242 : vector<9xf32> to vector<9x1xf32>
    %244 = tpu.reciprocal %243 {approx = true} : vector<9x1xf32> -> vector<9x1xf32>
    %245 = vector.broadcast %244 : vector<9x1xf32> to vector<9x9xf32>
    %246 = arith.mulf %241, %245 : vector<9x9xf32>
    %247 = arith.truncf %246 : vector<9x9xf32> to vector<9x9xbf16>
    %248 = vector.extract_strided_slice %201 {offsets = [0, 64], sizes = [9, 32], strides = [1, 1]} : vector<9x128xbf16> to vector<9x32xbf16>
    %cst_88 = arith.constant dense<0.000000e+00> : vector<9x32xf32>
    %249 = tpu.matmul %247, %248, %cst_88 {dimension_numbers = #tpu.dot_dimension_numbers<[1], [0], [0], [1], [0, 0, 1, 1], [], []>} : vector<9x9xbf16>, vector<9x32xbf16>, vector<9x32xf32> -> vector<9x32xf32>
    %250 = vector.extract_strided_slice %197 {offsets = [0, 96], sizes = [9, 32], strides = [1, 1]} : vector<9x128xbf16> to vector<9x32xbf16>
    %251 = vector.extract_strided_slice %199 {offsets = [0, 96], sizes = [9, 32], strides = [1, 1]} : vector<9x128xbf16> to vector<9x32xbf16>
    %cst_89 = arith.constant dense<0.000000e+00> : vector<9x9xf32>
    %252 = tpu.matmul %250, %251, %cst_89 {dimension_numbers = #tpu.dot_dimension_numbers<[1], [1], [0], [0], [0, 0, 1, 0], [], []>} : vector<9x32xbf16>, vector<9x32xbf16>, vector<9x9xf32> -> vector<9x9xf32>
    %cst_90 = arith.constant dense<0xFF800000> : vector<9xf32>
    %253 = vector.multi_reduction <maximumf>, %252, %cst_90 [1] : vector<9x9xf32> to vector<9xf32>
    %254 = vector.shape_cast %253 : vector<9xf32> to vector<9x1xf32>
    %255 = vector.broadcast %254 : vector<9x1xf32> to vector<9x9xf32>
    %256 = arith.subf %252, %255 : vector<9x9xf32>
    %257 = math.exp %256 : vector<9x9xf32>
    %cst_91 = arith.constant dense<0.000000e+00> : vector<9xf32>
    %258 = vector.multi_reduction <add>, %257, %cst_91 [1] : vector<9x9xf32> to vector<9xf32>
    %259 = vector.shape_cast %258 : vector<9xf32> to vector<9x1xf32>
    %260 = tpu.reciprocal %259 {approx = true} : vector<9x1xf32> -> vector<9x1xf32>
    %261 = vector.broadcast %260 : vector<9x1xf32> to vector<9x9xf32>
    %262 = arith.mulf %257, %261 : vector<9x9xf32>
    %263 = arith.truncf %262 : vector<9x9xf32> to vector<9x9xbf16>
    %264 = vector.extract_strided_slice %201 {offsets = [0, 96], sizes = [9, 32], strides = [1, 1]} : vector<9x128xbf16> to vector<9x32xbf16>
    %cst_92 = arith.constant dense<0.000000e+00> : vector<9x32xf32>
    %265 = tpu.matmul %263, %264, %cst_92 {dimension_numbers = #tpu.dot_dimension_numbers<[1], [0], [0], [1], [0, 0, 1, 1], [], []>} : vector<9x9xbf16>, vector<9x32xbf16>, vector<9x32xf32> -> vector<9x32xf32>
    %266 = tpu.concatenate %217, %233, %249, %265 in 1 : vector<9x32xf32>, vector<9x32xf32>, vector<9x32xf32>, vector<9x32xf32> -> vector<9x128xf32>
    %267 = arith.truncf %266 : vector<9x128xf32> to vector<9x128xbf16>
    %c0_93 = arith.constant 0 : index
    %c0_94 = arith.constant 0 : index
    %268 = vector.load %arg19[%c0_93, %c0_94] : memref<128x128xbf16, #tpu.memory_space<vmem>>, vector<128x128xbf16>
    %cst_95 = arith.constant dense<0.000000e+00> : vector<9x128xf32>
    %269 = tpu.matmul %267, %268, %cst_95 {dimension_numbers = #tpu.dot_dimension_numbers<[1], [0], [0], [1], [0, 0, 1, 1], [], []>} : vector<9x128xbf16>, vector<128x128xbf16>, vector<9x128xf32> -> vector<9x128xf32>
    %c0_96 = arith.constant 0 : index
    %c0_97 = arith.constant 0 : index
    %270 = vector.load %arg20[%c0_96, %c0_97] : memref<1x128xf32, #tpu.memory_space<vmem>>, vector<1x128xf32>
    %271 = vector.broadcast %270 : vector<1x128xf32> to vector<9x128xf32>
    %272 = arith.addf %269, %271 : vector<9x128xf32>
    %273 = arith.addf %163, %272 : vector<9x128xf32>
    %c0_98 = arith.constant 0 : index
    %c0_99 = arith.constant 0 : index
    %274 = vector.load %arg21[%c0_98, %c0_99] : memref<1x128xf32, #tpu.memory_space<vmem>>, vector<1x128xf32>
    %c0_100 = arith.constant 0 : index
    %c0_101 = arith.constant 0 : index
    %275 = vector.load %arg22[%c0_100, %c0_101] : memref<1x128xf32, #tpu.memory_space<vmem>>, vector<1x128xf32>
    %cst_102 = arith.constant dense<0.000000e+00> : vector<9xf32>
    %276 = vector.multi_reduction <add>, %273, %cst_102 [1] : vector<9x128xf32> to vector<9xf32>
    %277 = vector.shape_cast %276 : vector<9xf32> to vector<9x1xf32>
    %cst_103 = arith.constant 1.280000e+02 : f32
    %278 = vector.broadcast %cst_103 : f32 to vector<9x1xf32>
    %279 = arith.divf %277, %278 : vector<9x1xf32>
    %280 = vector.broadcast %279 : vector<9x1xf32> to vector<9x128xf32>
    %281 = arith.subf %273, %280 : vector<9x128xf32>
    %282 = arith.mulf %281, %281 : vector<9x128xf32>
    %cst_104 = arith.constant dense<0.000000e+00> : vector<9xf32>
    %283 = vector.multi_reduction <add>, %282, %cst_104 [1] : vector<9x128xf32> to vector<9xf32>
    %284 = vector.shape_cast %283 : vector<9xf32> to vector<9x1xf32>
    %cst_105 = arith.constant 1.280000e+02 : f32
    %285 = vector.broadcast %cst_105 : f32 to vector<9x1xf32>
    %286 = arith.divf %284, %285 : vector<9x1xf32>
    %287 = vector.broadcast %279 : vector<9x1xf32> to vector<9x128xf32>
    %288 = arith.subf %273, %287 : vector<9x128xf32>
    %cst_106 = arith.constant 9.99999974E-6 : f32
    %289 = vector.broadcast %cst_106 : f32 to vector<9x1xf32>
    %290 = arith.addf %286, %289 : vector<9x1xf32>
    %291 = math.rsqrt %290 : vector<9x1xf32>
    %292 = vector.broadcast %291 : vector<9x1xf32> to vector<9x128xf32>
    %293 = arith.mulf %288, %292 : vector<9x128xf32>
    %294 = vector.broadcast %274 : vector<1x128xf32> to vector<9x128xf32>
    %295 = arith.mulf %293, %294 : vector<9x128xf32>
    %296 = vector.broadcast %275 : vector<1x128xf32> to vector<9x128xf32>
    %297 = arith.addf %295, %296 : vector<9x128xf32>
    %298 = arith.truncf %297 : vector<9x128xf32> to vector<9x128xbf16>
    %c0_107 = arith.constant 0 : index
    %c0_108 = arith.constant 0 : index
    %299 = vector.load %arg23[%c0_107, %c0_108] : memref<128x512xbf16, #tpu.memory_space<vmem>>, vector<128x512xbf16>
    %cst_109 = arith.constant dense<0.000000e+00> : vector<9x512xf32>
    %300 = tpu.matmul %298, %299, %cst_109 {dimension_numbers = #tpu.dot_dimension_numbers<[1], [0], [0], [1], [0, 0, 1, 1], [], []>} : vector<9x128xbf16>, vector<128x512xbf16>, vector<9x512xf32> -> vector<9x512xf32>
    %c0_110 = arith.constant 0 : index
    %c0_111 = arith.constant 0 : index
    %301 = vector.load %arg24[%c0_110, %c0_111] : memref<1x512xf32, #tpu.memory_space<vmem>>, vector<1x512xf32>
    %302 = vector.broadcast %301 : vector<1x512xf32> to vector<9x512xf32>
    %303 = arith.addf %300, %302 : vector<9x512xf32>
    %304 = arith.mulf %303, %303 : vector<9x512xf32>
    %305 = arith.mulf %303, %304 : vector<9x512xf32>
    %cst_112 = arith.constant 4.471500e-02 : f32
    %306 = vector.broadcast %cst_112 : f32 to vector<9x512xf32>
    %307 = arith.mulf %306, %305 : vector<9x512xf32>
    %308 = arith.addf %303, %307 : vector<9x512xf32>
    %cst_113 = arith.constant 0.797884583 : f32
    %309 = vector.broadcast %cst_113 : f32 to vector<9x512xf32>
    %310 = arith.mulf %309, %308 : vector<9x512xf32>
    %311 = math.tanh %310 : vector<9x512xf32>
    %cst_114 = arith.constant 1.000000e+00 : f32
    %312 = vector.broadcast %cst_114 : f32 to vector<9x512xf32>
    %313 = arith.addf %312, %311 : vector<9x512xf32>
    %cst_115 = arith.constant 5.000000e-01 : f32
    %314 = vector.broadcast %cst_115 : f32 to vector<9x512xf32>
    %315 = arith.mulf %314, %313 : vector<9x512xf32>
    %316 = arith.mulf %303, %315 : vector<9x512xf32>
    %317 = arith.truncf %316 : vector<9x512xf32> to vector<9x512xbf16>
    %c0_116 = arith.constant 0 : index
    %c0_117 = arith.constant 0 : index
    %318 = vector.load %arg25[%c0_116, %c0_117] : memref<512x128xbf16, #tpu.memory_space<vmem>>, vector<512x128xbf16>
    %cst_118 = arith.constant dense<0.000000e+00> : vector<9x128xf32>
    %319 = tpu.matmul %317, %318, %cst_118 {dimension_numbers = #tpu.dot_dimension_numbers<[1], [0], [0], [1], [0, 0, 1, 1], [], []>} : vector<9x512xbf16>, vector<512x128xbf16>, vector<9x128xf32> -> vector<9x128xf32>
    %320 = arith.addf %273, %319 : vector<9x128xf32>
    %c0_119 = arith.constant 0 : index
    %c0_120 = arith.constant 0 : index
    %321 = vector.load %arg26[%c0_119, %c0_120] : memref<1x128xf32, #tpu.memory_space<vmem>>, vector<1x128xf32>
    %322 = vector.broadcast %321 : vector<1x128xf32> to vector<9x128xf32>
    %323 = arith.addf %320, %322 : vector<9x128xf32>
    %c0_121 = arith.constant 0 : index
    %c0_122 = arith.constant 0 : index
    %c0_123 = arith.constant 0 : index
    %324 = vector.load %arg27[%c0_121, %c0_122, %c0_123] : memref<1x9x128xf32, #tpu.memory_space<vmem>>, vector<1x9x128xf32>
    %325 = vector.shape_cast %324 : vector<1x9x128xf32> to vector<9x128xf32>
    %326 = vector.shape_cast %323 : vector<9x128xf32> to vector<1x9x128xf32>
    tpu.vector_store %arg27[%c0_121, %c0_122, %c0_123], %326 {strides = array<i32>} : memref<1x9x128xf32, #tpu.memory_space<vmem>>, vector<1x9x128xf32>,
    return
  }
  func.func @transform_0(%arg0: i32) -> (i32, i32, i32) {
    %c0_i32 = arith.constant 0 : i32
    %c0_i32_0 = arith.constant 0 : i32
    %c0_i32_1 = arith.constant 0 : i32
    return %arg0, %c0_i32, %c0_i32_0 : i32, i32, i32
  }
  func.func @transform_1(%arg0: i32) -> (i32, i32) {
    %c0_i32 = arith.constant 0 : i32
    %c0_i32_0 = arith.constant 0 : i32
    %c0_i32_1 = arith.constant 0 : i32
    return %c0_i32, %c0_i32_0 : i32, i32
  }
  func.func @transform_2(%arg0: i32) -> (i32, i32) {
    %c0_i32 = arith.constant 0 : i32
    %c0_i32_0 = arith.constant 0 : i32
    %c0_i32_1 = arith.constant 0 : i32
    return %c0_i32, %c0_i32_0 : i32, i32
  }
  func.func @transform_3(%arg0: i32) -> (i32, i32) {
    %c0_i32 = arith.constant 0 : i32
    %c0_i32_0 = arith.constant 0 : i32
    %c0_i32_1 = arith.constant 0 : i32
    return %c0_i32, %c0_i32_0 : i32, i32
  }
  func.func @transform_4(%arg0: i32) -> (i32, i32) {
    %c0_i32 = arith.constant 0 : i32
    %c0_i32_0 = arith.constant 0 : i32
    %c0_i32_1 = arith.constant 0 : i32
    return %c0_i32, %c0_i32_0 : i32, i32
  }
  func.func @transform_5(%arg0: i32) -> (i32, i32) {
    %c0_i32 = arith.constant 0 : i32
    %c0_i32_0 = arith.constant 0 : i32
    %c0_i32_1 = arith.constant 0 : i32
    return %c0_i32, %c0_i32_0 : i32, i32
  }
  func.func @transform_6(%arg0: i32) -> (i32, i32) {
    %c0_i32 = arith.constant 0 : i32
    %c0_i32_0 = arith.constant 0 : i32
    %c0_i32_1 = arith.constant 0 : i32
    return %c0_i32, %c0_i32_0 : i32, i32
  }
  func.func @transform_7(%arg0: i32) -> (i32, i32) {
    %c0_i32 = arith.constant 0 : i32
    %c0_i32_0 = arith.constant 0 : i32
    %c0_i32_1 = arith.constant 0 : i32
    return %c0_i32, %c0_i32_0 : i32, i32
  }
  func.func @transform_8(%arg0: i32) -> (i32, i32) {
    %c0_i32 = arith.constant 0 : i32
    %c0_i32_0 = arith.constant 0 : i32
    %c0_i32_1 = arith.constant 0 : i32
    return %c0_i32, %c0_i32_0 : i32, i32
  }
  func.func @transform_9(%arg0: i32) -> (i32, i32) {
    %c0_i32 = arith.constant 0 : i32
    %c0_i32_0 = arith.constant 0 : i32
    %c0_i32_1 = arith.constant 0 : i32
    return %c0_i32, %c0_i32_0 : i32, i32
  }
  func.func @transform_10(%arg0: i32) -> (i32, i32) {
    %c0_i32 = arith.constant 0 : i32
    %c0_i32_0 = arith.constant 0 : i32
    %c0_i32_1 = arith.constant 0 : i32
    return %c0_i32, %c0_i32_0 : i32, i32
  }
  func.func @transform_11(%arg0: i32) -> (i32, i32) {
    %c0_i32 = arith.constant 0 : i32
    %c0_i32_0 = arith.constant 0 : i32
    %c0_i32_1 = arith.constant 0 : i32
    return %c0_i32, %c0_i32_0 : i32, i32
  }
  func.func @transform_12(%arg0: i32) -> (i32, i32) {
    %c0_i32 = arith.constant 0 : i32
    %c0_i32_0 = arith.constant 0 : i32
    %c0_i32_1 = arith.constant 0 : i32
    return %c0_i32, %c0_i32_0 : i32, i32
  }
  func.func @transform_13(%arg0: i32) -> (i32, i32) {
    %c0_i32 = arith.constant 0 : i32
    %c0_i32_0 = arith.constant 0 : i32
    %c0_i32_1 = arith.constant 0 : i32
    return %c0_i32, %c0_i32_0 : i32, i32
  }
  func.func @transform_14(%arg0: i32) -> (i32, i32) {
    %c0_i32 = arith.constant 0 : i32
    %c0_i32_0 = arith.constant 0 : i32
    %c0_i32_1 = arith.constant 0 : i32
    return %c0_i32, %c0_i32_0 : i32, i32
  }
  func.func @transform_15(%arg0: i32) -> (i32, i32) {
    %c0_i32 = arith.constant 0 : i32
    %c0_i32_0 = arith.constant 0 : i32
    %c0_i32_1 = arith.constant 0 : i32
    return %c0_i32, %c0_i32_0 : i32, i32
  }
  func.func @transform_16(%arg0: i32) -> (i32, i32) {
    %c0_i32 = arith.constant 0 : i32
    %c0_i32_0 = arith.constant 0 : i32
    %c0_i32_1 = arith.constant 0 : i32
    return %c0_i32, %c0_i32_0 : i32, i32
  }
  func.func @transform_17(%arg0: i32) -> (i32, i32) {
    %c0_i32 = arith.constant 0 : i32
    %c0_i32_0 = arith.constant 0 : i32
    %c0_i32_1 = arith.constant 0 : i32
    return %c0_i32, %c0_i32_0 : i32, i32
  }
  func.func @transform_18(%arg0: i32) -> (i32, i32) {
    %c0_i32 = arith.constant 0 : i32
    %c0_i32_0 = arith.constant 0 : i32
    %c0_i32_1 = arith.constant 0 : i32
    return %c0_i32, %c0_i32_0 : i32, i32
  }
  func.func @transform_19(%arg0: i32) -> (i32, i32) {
    %c0_i32 = arith.constant 0 : i32
    %c0_i32_0 = arith.constant 0 : i32
    %c0_i32_1 = arith.constant 0 : i32
    return %c0_i32, %c0_i32_0 : i32, i32
  }
  func.func @transform_20(%arg0: i32) -> (i32, i32) {
    %c0_i32 = arith.constant 0 : i32
    %c0_i32_0 = arith.constant 0 : i32
    %c0_i32_1 = arith.constant 0 : i32
    return %c0_i32, %c0_i32_0 : i32, i32
  }
  func.func @transform_21(%arg0: i32) -> (i32, i32) {
    %c0_i32 = arith.constant 0 : i32
    %c0_i32_0 = arith.constant 0 : i32
    %c0_i32_1 = arith.constant 0 : i32
    return %c0_i32, %c0_i32_0 : i32, i32
  }
  func.func @transform_22(%arg0: i32) -> (i32, i32) {
    %c0_i32 = arith.constant 0 : i32
    %c0_i32_0 = arith.constant 0 : i32
    %c0_i32_1 = arith.constant 0 : i32
    return %c0_i32, %c0_i32_0 : i32, i32
  }
  func.func @transform_23(%arg0: i32) -> (i32, i32) {
    %c0_i32 = arith.constant 0 : i32
    %c0_i32_0 = arith.constant 0 : i32
    %c0_i32_1 = arith.constant 0 : i32
    return %c0_i32, %c0_i32_0 : i32, i32
  }
  func.func @transform_24(%arg0: i32) -> (i32, i32) {
    %c0_i32 = arith.constant 0 : i32
    %c0_i32_0 = arith.constant 0 : i32
    %c0_i32_1 = arith.constant 0 : i32
    return %c0_i32, %c0_i32_0 : i32, i32
  }
  func.func @transform_25(%arg0: i32) -> (i32, i32) {
    %c0_i32 = arith.constant 0 : i32
    %c0_i32_0 = arith.constant 0 : i32
    %c0_i32_1 = arith.constant 0 : i32
    return %c0_i32, %c0_i32_0 : i32, i32
  }
  func.func @transform_26(%arg0: i32) -> (i32, i32, i32) {
    %c0_i32 = arith.constant 0 : i32
    %c0_i32_0 = arith.constant 0 : i32
    %c0_i32_1 = arith.constant 0 : i32
    return %arg0, %c0_i32, %c0_i32_0 : i32, i32, i32
  }
}

module attributes {stable_mosaic.version = 11 : i64} {
  func.func @_linear_kernel(%arg0: i32, %arg1: memref<64x32xf32, #tpu.memory_space<vmem>>, %arg2: memref<32x512xbf16, #tpu.memory_space<vmem>>, %arg3: memref<1x512xf32, #tpu.memory_space<vmem>>, %arg4: memref<64x512xf32, #tpu.memory_space<vmem>>) attributes {dimension_semantics = [#tpu.dimension_semantics<arbitrary>], iteration_bounds = array<i64: 1>, scalar_prefetch = 0 : i64, scratch_operands = 0 : i64, tpu.core_type = #tpu.core_type<tc>, window_params = [{pipeline_mode = #tpu.pipeline_mode<synchronous>, transform_indices = @transform_0, window_bounds = array<i64: 64, 32>}, {pipeline_mode = #tpu.pipeline_mode<synchronous>, transform_indices = @transform_1, window_bounds = array<i64: 32, 512>}, {pipeline_mode = #tpu.pipeline_mode<synchronous>, transform_indices = @transform_2, window_bounds = array<i64: 1, 512>}, {pipeline_mode = #tpu.pipeline_mode<synchronous>, transform_indices = @transform_3, window_bounds = array<i64: 64, 512>}]} {
    %c0 = arith.constant 0 : index
    %c0_0 = arith.constant 0 : index
    %0 = vector.load %arg1[%c0, %c0_0] : memref<64x32xf32, #tpu.memory_space<vmem>>, vector<64x32xf32>
    %1 = arith.truncf %0 : vector<64x32xf32> to vector<64x32xbf16>
    %c0_1 = arith.constant 0 : index
    %c0_2 = arith.constant 0 : index
    %2 = vector.load %arg2[%c0_1, %c0_2] : memref<32x512xbf16, #tpu.memory_space<vmem>>, vector<32x512xbf16>
    %cst = arith.constant dense<0.000000e+00> : vector<64x512xf32>
    %3 = tpu.matmul %1, %2, %cst {dimension_numbers = #tpu.dot_dimension_numbers<[1], [0], [0], [1], [0, 0, 1, 1], [], []>} : vector<64x32xbf16>, vector<32x512xbf16>, vector<64x512xf32> -> vector<64x512xf32>
    %c0_3 = arith.constant 0 : index
    %c0_4 = arith.constant 0 : index
    %4 = vector.load %arg3[%c0_3, %c0_4] : memref<1x512xf32, #tpu.memory_space<vmem>>, vector<1x512xf32>
    %5 = vector.broadcast %4 : vector<1x512xf32> to vector<64x512xf32>
    %6 = arith.addf %3, %5 : vector<64x512xf32>
    %c0_5 = arith.constant 0 : index
    %c0_6 = arith.constant 0 : index
    %7 = vector.load %arg4[%c0_5, %c0_6] : memref<64x512xf32, #tpu.memory_space<vmem>>, vector<64x512xf32>
    tpu.vector_store %arg4[%c0_5, %c0_6], %6 {strides = array<i32>} : memref<64x512xf32, #tpu.memory_space<vmem>>, vector<64x512xf32>,
    return
  }
  func.func @transform_0(%arg0: i32) -> (i32, i32) {
    %c0_i32 = arith.constant 0 : i32
    %c0_i32_0 = arith.constant 0 : i32
    %c0_i32_1 = arith.constant 0 : i32
    return %c0_i32, %c0_i32_0 : i32, i32
  }
  func.func @transform_1(%arg0: i32) -> (i32, i32) {
    %c0_i32 = arith.constant 0 : i32
    %c0_i32_0 = arith.constant 0 : i32
    %c0_i32_1 = arith.constant 0 : i32
    return %c0_i32, %c0_i32_0 : i32, i32
  }
  func.func @transform_2(%arg0: i32) -> (i32, i32) {
    %c0_i32 = arith.constant 0 : i32
    %c0_i32_0 = arith.constant 0 : i32
    %c0_i32_1 = arith.constant 0 : i32
    return %c0_i32, %c0_i32_0 : i32, i32
  }
  func.func @transform_3(%arg0: i32) -> (i32, i32) {
    %c0_i32 = arith.constant 0 : i32
    %c0_i32_0 = arith.constant 0 : i32
    %c0_i32_1 = arith.constant 0 : i32
    return %c0_i32, %c0_i32_0 : i32, i32
  }
}

</mosaic_0001>

<llo_original>
// kernel: pedsleep_mae_forward.7
$region0: #{pedsleep_mae_forward.7}
  #allocation0 [shape = 'u32[]', space=smem, size = 0x4, offset = 0x4, fixed_abs, tag = 'smem constant byte address 0x4 - core index']
  #allocation1 [shape = 'u32[72,128]{1,0:T(1,128)}', space=vmem, size = 0x9000, scoped, tag = 'internal scratch']
  %s0 = inlined_call_operand.vmem [shape: f32[64,32], index: 0, kind: input, shape index: {}]
  %s1 = inlined_call_operand.vmem [shape: bf16[32,512], index: 1, kind: input, shape index: {}]
  %s2 = inlined_call_operand.vmem [shape: f32[1,512], index: 2, kind: input, shape index: {}]
  %s3 = inlined_call_operand.vmem [shape: f32[64,512], index: 3, kind: output, shape index: {}]
  %s4 = sld [smem:[#allocation0]]
  $region22: #{pedsleep_mae_forward.7} parent=0
    _
  %s6 = ssub.s32 1, %s4
  %s7 = scalar_select 0, %s6, %s4
  // Predicated region
  $region2: #{pedsleep_mae_forward.7} parent=0 // pred_check
    _
  $region3: #{pedsleep_mae_forward.7} parent=0 // pred_check_branch
    %9 = sbr.rel (0) target = $region5
  $region4: #{pedsleep_mae_forward.7} parent=0 // pred_region
    _
  $region5: #{pedsleep_mae_forward.7} parent=0 // pred_fallthru
    _
  // Predicated region
  $region6: #{pedsleep_mae_forward.7} parent=0 // pred_check
    _
  $region7: #{pedsleep_mae_forward.7} parent=0 // pred_check_branch
    %11 = sbr.rel (0) target = $region9
  $region8: #{pedsleep_mae_forward.7} parent=0 // pred_region
    _
  $region9: #{pedsleep_mae_forward.7} parent=0 // pred_fallthru
    _
  // Predicated region
  $region10: #{pedsleep_mae_forward.7} parent=0 // pred_check
    _
  $region11: #{pedsleep_mae_forward.7} parent=0 // pred_check_branch
    %13 = sbr.rel (0) target = $region13
  $region12: #{pedsleep_mae_forward.7} parent=0 // pred_region
    _
  $region13: #{pedsleep_mae_forward.7} parent=0 // pred_fallthru
    _
  %v15 = vld [vmem:[%s0] sm:$0xff]
  %v16 = vld [vmem:[%s0 + $0x8] sm:$0xff]
  %v17 = vld [vmem:[%s0 + $0x10] sm:$0xff]
  %v18 = vld [vmem:[%s0 + $0x18] sm:$0xff]
  %v19 = vld [vmem:[%s0 + $0x20] sm:$0xff]
  %v20 = vld [vmem:[%s0 + $0x28] sm:$0xff]
  %v21 = vld [vmem:[%s0 + $0x30] sm:$0xff]
  %v22 = vld [vmem:[%s0 + $0x38] sm:$0xff]
  %v23 = vpack.c.bf16 %v16, %v15
  %v24 = vpack.c.bf16 %v18, %v17
  %v25 = vpack.c.bf16 %v20, %v19
  %v26 = vpack.c.bf16 %v22, %v21
  %v27 = vld [vmem:[%s1] sm:$0xff]
  %v28 = vld [vmem:[%s1 + $0x8] sm:$0xff]
  %v29 = vld [vmem:[%s1 + $0x10] sm:$0xff]
  %v30 = vld [vmem:[%s1 + $0x18] sm:$0xff]
  %v31 = vld [vmem:[%s1 + $0x20] sm:$0xff]
  %v32 = vld [vmem:[%s1 + $0x28] sm:$0xff]
  %v33 = vld [vmem:[%s1 + $0x30] sm:$0xff]
  %v34 = vld [vmem:[%s1 + $0x38] sm:$0xff]
  %v35 = vld [vmem:[%s2] sm:$0xf]
  %v37 = vperm.slane %v35, 0
  %v38 = vperm.slane %v35, 1
  %v39 = vperm.slane %v35, 2
  %v40 = vperm.slane %v35, 3
  %v53 = vunpack.c.l.b16 %v27
  %v54 = vunpack.c.h.b16 %v27
  %v55 = vunpack.c.l.b16 %v28
  %v56 = vunpack.c.h.b16 %v28
  %v57 = vunpack.c.l.b16 %v29
  %v58 = vunpack.c.h.b16 %v29
  %v59 = vunpack.c.l.b16 %v30
  %v60 = vunpack.c.h.b16 %v30
  %v61 = vunpack.c.l.b16 %v31
  %v62 = vunpack.c.h.b16 %v31
  %v63 = vunpack.c.l.b16 %v32
  %v64 = vunpack.c.h.b16 %v32
  %v65 = vunpack.c.l.b16 %v33
  %v66 = vunpack.c.h.b16 %v33
  %v67 = vunpack.c.l.b16 %v34
  %v68 = vunpack.c.h.b16 %v34
  %v69 = vpack.c.b16 %v57, %v53
  %v70 = vpack.c.b16 %v58, %v54
  %v71 = vpack.c.b16 %v59, %v55
  %v72 = vpack.c.b16 %v60, %v56
  %v73 = vpack.c.b16 %v65, %v61
  %v74 = vpack.c.b16 %v66, %v62
  %v75 = vpack.c.b16 %v67, %v63
  %v76 = vpack.c.b16 %v68, %v64
  %vm85 = vcmask 261120
  %v87 = vsel %vm85, %v23, 0
  %v90 = vsel %vm85, %v24, 0
  %v93 = vsel %vm85, %v25, 0
  %v96 = vsel %vm85, %v26, 0
  %98 = vmatpush.bf16.msra.mxu0 0
  %99 = vmatpush.bf16.msra.mxu0 0
  %100 = vmatpush.bf16.msra.mxu0 0
  %101 = vmatpush.bf16.msra.mxu0 0
  %102 = vmatpush.bf16.msra.mxu0 0
  %103 = vmatpush.bf16.msra.mxu0 0
  %104 = vmatpush.bf16.msra.mxu0 %v73
  %105 = vmatpush.bf16.msra.mxu0 %v69
  %106 = vmatmul.bf16.gmra.mxu0 %v87
  %v107 = vpop.f32.mrf.mxu0
  %v108 = vadd.f32 %v37, %v107
  %v109 = vpop.f32.mrf.mxu0
  %v110 = vadd.f32 %v37, %v109
  %111 = vmatmul.bf16.gmra.mxu0 %v90
  %v112 = vpop.f32.mrf.mxu0
  %v113 = vadd.f32 %v37, %v112
  %v114 = vpop.f32.mrf.mxu0
  %v115 = vadd.f32 %v37, %v114
  %116 = vmatmul.bf16.gmra.mxu0 %v93
  %v117 = vpop.f32.mrf.mxu0
  %v118 = vadd.f32 %v37, %v117
  %v119 = vpop.f32.mrf.mxu0
  %v120 = vadd.f32 %v37, %v119
  %121 = vmatmul.bf16.gmra.mxu0 %v96
  %v122 = vpop.f32.mrf.mxu0
  %v123 = vadd.f32 %v37, %v122
  %v124 = vpop.f32.mrf.mxu0
  %v125 = vadd.f32 %v37, %v124
  %126 = vdwg.mxu0
  %127 = vmatpush.bf16.msra.mxu0 0
  %128 = vmatpush.bf16.msra.mxu0 0
  %129 = vmatpush.bf16.msra.mxu0 0
  %130 = vmatpush.bf16.msra.mxu0 0
  %131 = vmatpush.bf16.msra.mxu0 0
  %132 = vmatpush.bf16.msra.mxu0 0
  %133 = vmatpush.bf16.msra.mxu0 %v74
  %134 = vmatpush.bf16.msra.mxu0 %v70
  %135 = vmatmul.bf16.gmra.mxu0 %v87
  %v136 = vpop.f32.mrf.mxu0
  %v137 = vadd.f32 %v38, %v136
  %v138 = vpop.f32.mrf.mxu0
  %v139 = vadd.f32 %v38, %v138
  %140 = vmatmul.bf16.gmra.mxu0 %v90
  %v141 = vpop.f32.mrf.mxu0
  %v142 = vadd.f32 %v38, %v141
  %v143 = vpop.f32.mrf.mxu0
  %v144 = vadd.f32 %v38, %v143
  %145 = vmatmul.bf16.gmra.mxu0 %v93
  %v146 = vpop.f32.mrf.mxu0
  %v147 = vadd.f32 %v38, %v146
  %v148 = vpop.f32.mrf.mxu0
  %v149 = vadd.f32 %v38, %v148
  %150 = vmatmul.bf16.gmra.mxu0 %v96
  %v151 = vpop.f32.mrf.mxu0
  %v152 = vadd.f32 %v38, %v151
  %v153 = vpop.f32.mrf.mxu0
  %v154 = vadd.f32 %v38, %v153
  %155 = vdwg.mxu0
  %156 = vmatpush.bf16.msra.mxu0 0
  %157 = vmatpush.bf16.msra.mxu0 0
  %158 = vmatpush.bf16.msra.mxu0 0
  %159 = vmatpush.bf16.msra.mxu0 0
  %160 = vmatpush.bf16.msra.mxu0 0
  %161 = vmatpush.bf16.msra.mxu0 0
  %162 = vmatpush.bf16.msra.mxu0 %v75
  %163 = vmatpush.bf16.msra.mxu0 %v71
  %164 = vmatmul.bf16.gmra.mxu0 %v87
  %v165 = vpop.f32.mrf.mxu0
  %v166 = vadd.f32 %v39, %v165
  %v167 = vpop.f32.mrf.mxu0
  %v168 = vadd.f32 %v39, %v167
  %169 = vmatmul.bf16.gmra.mxu0 %v90
  %v170 = vpop.f32.mrf.mxu0
  %v171 = vadd.f32 %v39, %v170
  %v172 = vpop.f32.mrf.mxu0
  %v173 = vadd.f32 %v39, %v172
  %174 = vmatmul.bf16.gmra.mxu0 %v93
  %v175 = vpop.f32.mrf.mxu0
  %v176 = vadd.f32 %v39, %v175
  %v177 = vpop.f32.mrf.mxu0
  %v178 = vadd.f32 %v39, %v177
  %179 = vmatmul.bf16.gmra.mxu0 %v96
  %v180 = vpop.f32.mrf.mxu0
  %v181 = vadd.f32 %v39, %v180
  %v182 = vpop.f32.mrf.mxu0
  %v183 = vadd.f32 %v39, %v182
  %184 = vdwg.mxu0
  %185 = vmatpush.bf16.msra.mxu0 0
  %186 = vmatpush.bf16.msra.mxu0 0
  %187 = vmatpush.bf16.msra.mxu0 0
  %188 = vmatpush.bf16.msra.mxu0 0
  %189 = vmatpush.bf16.msra.mxu0 0
  %190 = vmatpush.bf16.msra.mxu0 0
  %191 = vmatpush.bf16.msra.mxu0 %v76
  %192 = vmatpush.bf16.msra.mxu0 %v72
  %193 = vmatmul.bf16.gmra.mxu0 %v87
  %v194 = vpop.f32.mrf.mxu0
  %v195 = vadd.f32 %v40, %v194
  %v196 = vpop.f32.mrf.mxu0
  %v197 = vadd.f32 %v40, %v196
  %198 = vmatmul.bf16.gmra.mxu0 %v90
  %v199 = vpop.f32.mrf.mxu0
  %v200 = vadd.f32 %v40, %v199
  %v201 = vpop.f32.mrf.mxu0
  %v202 = vadd.f32 %v40, %v201
  %203 = vmatmul.bf16.gmra.mxu0 %v93
  %v204 = vpop.f32.mrf.mxu0
  %v205 = vadd.f32 %v40, %v204
  %v206 = vpop.f32.mrf.mxu0
  %v207 = vadd.f32 %v40, %v206
  %208 = vmatmul.bf16.gmra.mxu0 %v96
  %v209 = vpop.f32.mrf.mxu0
  %v210 = vadd.f32 %v40, %v209
  %v211 = vpop.f32.mrf.mxu0
  %v212 = vadd.f32 %v40, %v211
  %213 = vdwg.mxu0
  %214 = vst [vmem:[%s3] sm:$0xff] %v108
  %215 = vst [vmem:[%s3 + $0x8] sm:$0xff] %v137
  %216 = vst [vmem:[%s3 + $0x10] sm:$0xff] %v166
  %217 = vst [vmem:[%s3 + $0x18] sm:$0xff] %v195
  %218 = vst [vmem:[%s3 + $0x20] sm:$0xff] %v110
  %219 = vst [vmem:[%s3 + $0x28] sm:$0xff] %v139
  %220 = vst [vmem:[%s3 + $0x30] sm:$0xff] %v168
  %221 = vst [vmem:[%s3 + $0x38] sm:$0xff] %v197
  %222 = vst [vmem:[%s3 + $0x40] sm:$0xff] %v113
  %223 = vst [vmem:[%s3 + $0x48] sm:$0xff] %v142
  %224 = vst [vmem:[%s3 + $0x50] sm:$0xff] %v171
  %225 = vst [vmem:[%s3 + $0x58] sm:$0xff] %v200
  %226 = vst [vmem:[%s3 + $0x60] sm:$0xff] %v115
  %227 = vst [vmem:[%s3 + $0x68] sm:$0xff] %v144
  %228 = vst [vmem:[%s3 + $0x70] sm:$0xff] %v173
  %229 = vst [vmem:[%s3 + $0x78] sm:$0xff] %v202
  %230 = vst [vmem:[%s3 + $0x80] sm:$0xff] %v118
  %231 = vst [vmem:[%s3 + $0x88] sm:$0xff] %v147
  %232 = vst [vmem:[%s3 + $0x90] sm:$0xff] %v176
  %233 = vst [vmem:[%s3 + $0x98] sm:$0xff] %v205
  %234 = vst [vmem:[%s3 + $0xa0] sm:$0xff] %v120
  %235 = vst [vmem:[%s3 + $0xa8] sm:$0xff] %v149
  %236 = vst [vmem:[%s3 + $0xb0] sm:$0xff] %v178
  %237 = vst [vmem:[%s3 + $0xb8] sm:$0xff] %v207
  %238 = vst [vmem:[%s3 + $0xc0] sm:$0xff] %v123
  %239 = vst [vmem:[%s3 + $0xc8] sm:$0xff] %v152
  %240 = vst [vmem:[%s3 + $0xd0] sm:$0xff] %v181
  %241 = vst [vmem:[%s3 + $0xd8] sm:$0xff] %v210
  %242 = vst [vmem:[%s3 + $0xe0] sm:$0xff] %v125
  %243 = vst [vmem:[%s3 + $0xe8] sm:$0xff] %v154
  %244 = vst [vmem:[%s3 + $0xf0] sm:$0xff] %v183
  %245 = vst [vmem:[%s3 + $0xf8] sm:$0xff] %v212
  // Predicated region
  $region14: #{pedsleep_mae_forward.7} parent=0 // pred_check
    _
  $region15: #{pedsleep_mae_forward.7} parent=0 // pred_check_branch
    %247 = sbr.rel (0) target = $region17
  $region16: #{pedsleep_mae_forward.7} parent=0 // pred_region
    _
  $region17: #{pedsleep_mae_forward.7} parent=0 // pred_fallthru
    _
  // Predicated region
  $region18: #{pedsleep_mae_forward.7} parent=0 // pred_check
    _
  $region19: #{pedsleep_mae_forward.7} parent=0 // pred_check_branch
    %249 = sbr.rel (0) target = $region21
  $region20: #{pedsleep_mae_forward.7} parent=0 // pred_region
    _
  $region21: #{pedsleep_mae_forward.7} parent=0 // pred_fallthru
    _

// kernel: pedsleep_mae_forward.4
$region0: #{pedsleep_mae_forward.4}
  #allocation0 [shape = 'u32[]', space=smem, size = 0x4, offset = 0x4, fixed_abs, tag = 'smem constant byte address 0x4 - core index']
  #allocation1 [shape = 'u32[72,128]{1,0:T(1,128)}', space=vmem, size = 0x9000, scoped, tag = 'internal scratch']
  %s0 = inlined_call_operand.vmem [shape: f32[16,1920], index: 0, kind: input, shape index: {}]
  %s1 = inlined_call_operand.hbm [shape: bf16[1920,128], index: 1, kind: input, shape index: {}]
  %s2 = inlined_call_operand.vmem [shape: f32[1,128], index: 2, kind: input, shape index: {}]
  %s3 = inlined_call_operand.vmem [shape: f32[16,128], index: 3, kind: input, shape index: {}]
  %s4 = inlined_call_operand.vmem [shape: f32[16,128], index: 4, kind: output, shape index: {}]
  %s5 = sld [smem:[#allocation0]]
  $region30: #{pedsleep_mae_forward.4} parent=0
    _
  %s7 = ssub.s32 1, %s5
  %s8 = scalar_select 0, %s7, %s5
  $region1: #{pedsleep_mae_forward.4} parent=0
    #allocation2 [shape = 'u8[491520]{0}', space=vmem, size = 0x78000, scoped, tag = 'input window, operand 1, single buffered']
    #allocation3 [shape = 's32[1]{0}', space=sflag, size = 0x4, scoped, tag = 'scoped memory for pedsleep_mae_forward.4']
    %9 = vsyncpa [#allocation3], 0
    // Predicated region
    $region2: #{pedsleep_mae_forward.4} parent=1 // pred_check
      _
    $region3: #{pedsleep_mae_forward.4} parent=1 // pred_check_branch
      %11 = sbr.rel (0) target = $region5
    $region4: #{pedsleep_mae_forward.4} parent=1 // pred_region
      _
    $region5: #{pedsleep_mae_forward.4} parent=1 // pred_fallthru
      _
    // Predicated region
    $region6: #{pedsleep_mae_forward.4} parent=1 // pred_check
      _
    $region7: #{pedsleep_mae_forward.4} parent=1 // pred_check_branch
      %13 = sbr.rel (0) target = $region9
    $region8: #{pedsleep_mae_forward.4} parent=1 // pred_region
      %15 = vsyncadd [#allocation3], 0
      %s16 = sshll.u32 %s1, 4
      %s17 = int_to_ptr.hbm [resolvable:$true] %s16
      %s18 = sshll.u32 [#allocation2], 4
      %s19 = int_to_ptr.vmem [resolvable:$true] %s18
      %24 = dma.hbm_to_vmem [thread:$0]  %s17, 15360, %s19, [#allocation3], 64, 64, 4
    $region9: #{pedsleep_mae_forward.4} parent=1 // pred_fallthru
      _
    // Predicated region
    $region10: #{pedsleep_mae_forward.4} parent=1 // pred_check
      _
    $region11: #{pedsleep_mae_forward.4} parent=1 // pred_check_branch
      %26 = sbr.rel (0) target = $region13
    $region12: #{pedsleep_mae_forward.4} parent=1 // pred_region
      _
    $region13: #{pedsleep_mae_forward.4} parent=1 // pred_fallthru
      _
    // Predicated region
    $region14: #{pedsleep_mae_forward.4} parent=1 // pred_check
      _
    $region15: #{pedsleep_mae_forward.4} parent=1 // pred_check_branch
      %28 = sbr.rel (0) target = $region17
    $region16: #{pedsleep_mae_forward.4} parent=1 // pred_region
      _
    $region17: #{pedsleep_mae_forward.4} parent=1 // pred_fallthru
      _
    // Predicated region
    $region18: #{pedsleep_mae_forward.4} parent=1 // pred_check
      _
    $region19: #{pedsleep_mae_forward.4} parent=1 // pred_check_branch
      %30 = sbr.rel (0) target = $region21
    $region20: #{pedsleep_mae_forward.4} parent=1 // pred_region
      %32 = dma.done [#allocation3], 15360
    $region21: #{pedsleep_mae_forward.4} parent=1 // pred_fallthru
      _
    %v33 = vld [vmem:[%s0] sm:$0xff]
    %v34 = vld [vmem:[%s0 + $0x8] sm:$0xff]
    %v35 = vld [vmem:[%s0 + $0x10] sm:$0xff]
    %v36 = vld [vmem:[%s0 + $0x18] sm:$0xff]
    %v37 = vld [vmem:[%s0 + $0x20] sm:$0xff]
    %v38 = vld [vmem:[%s0 + $0x28] sm:$0xff]
    %v39 = vld [vmem:[%s0 + $0x30] sm:$0xff]
    %v40 = vld [vmem:[%s0 + $0x38] sm:$0xff]
    %v41 = vld [vmem:[%s0 + $0x40] sm:$0xff]
    %v42 = vld [vmem:[%s0 + $0x48] sm:$0xff]
    %v43 = vld [vmem:[%s0 + $0x50] sm:$0xff]
    %v44 = vld [vmem:[%s0 + $0x58] sm:$0xff]
    %v45 = vld [vmem:[%s0 + $0x60] sm:$0xff]
    %v46 = vld [vmem:[%s0 + $0x68] sm:$0xff]
    %v47 = vld [vmem:[%s0 + $0x70] sm:$0xff]
    %v48 = vld [vmem:[%s0 + $0x78] sm:$0xff]
    %v49 = vld [vmem:[%s0 + $0x80] sm:$0xff]
    %v50 = vld [vmem:[%s0 + $0x88] sm:$0xff]
    %v51 = vld [vmem:[%s0 + $0x90] sm:$0xff]
    %v52 = vld [vmem:[%s0 + $0x98] sm:$0xff]
    %v53 = vld [vmem:[%s0 + $0xa0] sm:$0xff]
    %v54 = vld [vmem:[%s0 + $0xa8] sm:$0xff]
    %v55 = vld [vmem:[%s0 + $0xb0] sm:$0xff]
    %v56 = vld [vmem:[%s0 + $0xb8] sm:$0xff]
    %v57 = vld [vmem:[%s0 + $0xc0] sm:$0xff]
    %v58 = vld [vmem:[%s0 + $0xc8] sm:$0xff]
    %v59 = vld [vmem:[%s0 + $0xd0] sm:$0xff]
    %v60 = vld [vmem:[%s0 + $0xd8] sm:$0xff]
    %v61 = vld [vmem:[%s0 + $0xe0] sm:$0xff]
    %v62 = vld [vmem:[%s0 + $0xe8] sm:$0xff]
    %v63 = vpack.c.bf16 %v48, %v33
    %v64 = vpack.c.bf16 %v49, %v34
    %v65 = vpack.c.bf16 %v50, %v35
    %v66 = vpack.c.bf16 %v51, %v36
    %v67 = vpack.c.bf16 %v52, %v37
    %v68 = vpack.c.bf16 %v53, %v38
    %v69 = vpack.c.bf16 %v54, %v39
    %v70 = vpack.c.bf16 %v55, %v40
    %v71 = vpack.c.bf16 %v56, %v41
    %v72 = vpack.c.bf16 %v57, %v42
    %v73 = vpack.c.bf16 %v58, %v43
    %v74 = vpack.c.bf16 %v59, %v44
    %v75 = vpack.c.bf16 %v60, %v45
    %v76 = vpack.c.bf16 %v61, %v46
    %v77 = vpack.c.bf16 %v62, %v47
    %v78 = vld [vmem:[#allocation2] sm:$0xf]
    %v79 = vld [vmem:[#allocation2 + $0x4] sm:$0xf]
    %v80 = vld [vmem:[#allocation2 + $0x8] sm:$0xf]
    %v81 = vld [vmem:[#allocation2 + $0xc] sm:$0xf]
    %v82 = vld [vmem:[#allocation2 + $0x10] sm:$0xf]
    %v83 = vld [vmem:[#allocation2 + $0x14] sm:$0xf]
    %v84 = vld [vmem:[#allocation2 + $0x18] sm:$0xf]
    %v85 = vld [vmem:[#allocation2 + $0x1c] sm:$0xf]
    %v86 = vld [vmem:[#allocation2 + $0x20] sm:$0xf]
    %v87 = vld [vmem:[#allocation2 + $0x24] sm:$0xf]
    %v88 = vld [vmem:[#allocation2 + $0x28] sm:$0xf]
    %v89 = vld [vmem:[#allocation2 + $0x2c] sm:$0xf]
    %v90 = vld [vmem:[#allocation2 + $0x30] sm:$0xf]
    %v91 = vld [vmem:[#allocation2 + $0x34] sm:$0xf]
    %v92 = vld [vmem:[#allocation2 + $0x38] sm:$0xf]
    %v93 = vld [vmem:[#allocation2 + $0x3c] sm:$0xf]
    %v94 = vld [vmem:[#allocation2 + $0x40] sm:$0xf]
    %v95 = vld [vmem:[#allocation2 + $0x44] sm:$0xf]
    %v96 = vld [vmem:[#allocation2 + $0x48] sm:$0xf]
    %v97 = vld [vmem:[#allocation2 + $0x4c] sm:$0xf]
    %v98 = vld [vmem:[#allocation2 + $0x50] sm:$0xf]
    %v99 = vld [vmem:[#allocation2 + $0x54] sm:$0xf]
    %v100 = vld [vmem:[#allocation2 + $0x58] sm:$0xf]
    %v101 = vld [vmem:[#allocation2 + $0x5c] sm:$0xf]
    %v102 = vld [vmem:[#allocation2 + $0x60] sm:$0xf]
    %v103 = vld [vmem:[#allocation2 + $0x64] sm:$0xf]
    %v104 = vld [vmem:[#allocation2 + $0x68] sm:$0xf]
    %v105 = vld [vmem:[#allocation2 + $0x6c] sm:$0xf]
    %v106 = vld [vmem:[#allocation2 + $0x70] sm:$0xf]
    %v107 = vld [vmem:[#allocation2 + $0x74] sm:$0xf]
    %v108 = vld [vmem:[#allocation2 + $0x78] sm:$0xf]
    %v109 = vld [vmem:[#allocation2 + $0x7c] sm:$0xf]
    %v110 = vld [vmem:[#allocation2 + $0x80] sm:$0xf]
    %v111 = vld [vmem:[#allocation2 + $0x84] sm:$0xf]
    %v112 = vld [vmem:[#allocation2 + $0x88] sm:$0xf]
    %v113 = vld [vmem:[#allocation2 + $0x8c] sm:$0xf]
    %v114 = vld [vmem:[#allocation2 + $0x90] sm:$0xf]
    %v115 = vld [vmem:[#allocation2 + $0x94] sm:$0xf]
    %v116 = vld [vmem:[#allocation2 + $0x98] sm:$0xf]
    %v117 = vld [vmem:[#allocation2 + $0x9c] sm:$0xf]
    %v118 = vld [vmem:[#allocation2 + $0xa0] sm:$0xf]
    %v119 = vld [vmem:[#allocation2 + $0xa4] sm:$0xf]
    %v120 = vld [vmem:[#allocation2 + $0xa8] sm:$0xf]
    %v121 = vld [vmem:[#allocation2 + $0xac] sm:$0xf]
    %v122 = vld [vmem:[#allocation2 + $0xb0] sm:$0xf]
    %v123 = vld [vmem:[#allocation2 + $0xb4] sm:$0xf]
    %v124 = vld [vmem:[#allocation2 + $0xb8] sm:$0xf]
    %v125 = vld [vmem:[#allocation2 + $0xbc] sm:$0xf]
    %v126 = vld [vmem:[#allocation2 + $0xc0] sm:$0xf]
    %v127 = vld [vmem:[#allocation2 + $0xc4] sm:$0xf]
    %v128 = vld [vmem:[#allocation2 + $0xc8] sm:$0xf]
    %v129 = vld [vmem:[#allocation2 + $0xcc] sm:$0xf]
    %v130 = vld [vmem:[#allocation2 + $0xd0] sm:$0xf]
    %v131 = vld [vmem:[#allocation2 + $0xd4] sm:$0xf]
    %v132 = vld [vmem:[#allocation2 + $0xd8] sm:$0xf]
    %v133 = vld [vmem:[#allocation2 + $0xdc] sm:$0xf]
    %v134 = vld [vmem:[#allocation2 + $0xe0] sm:$0xf]
    %v135 = vld [vmem:[#allocation2 + $0xe4] sm:$0xf]
    %v136 = vld [vmem:[#allocation2 + $0xe8] sm:$0xf]
    %v137 = vld [vmem:[#allocation2 + $0xec] sm:$0xf]
    %v138 = vld [vmem:[#allocation2 + $0xf0] sm:$0xf]
    %v139 = vld [vmem:[#allocation2 + $0xf4] sm:$0xf]
    %v140 = vld [vmem:[#allocation2 + $0xf8] sm:$0xf]
    %v141 = vld [vmem:[#allocation2 + $0xfc] sm:$0xf]
    %v142 = vld [vmem:[#allocation2 + $0x100] sm:$0xf]
    %v143 = vld [vmem:[#allocation2 + $0x104] sm:$0xf]
    %v144 = vld [vmem:[#allocation2 + $0x108] sm:$0xf]
    %v145 = vld [vmem:[#allocation2 + $0x10c] sm:$0xf]
    %v146 = vld [vmem:[#allocation2 + $0x110] sm:$0xf]
    %v147 = vld [vmem:[#allocation2 + $0x114] sm:$0xf]
    %v148 = vld [vmem:[#allocation2 + $0x118] sm:$0xf]
    %v149 = vld [vmem:[#allocation2 + $0x11c] sm:$0xf]
    %v150 = vld [vmem:[#allocation2 + $0x120] sm:$0xf]
    %v151 = vld [vmem:[#allocation2 + $0x124] sm:$0xf]
    %v152 = vld [vmem:[#allocation2 + $0x128] sm:$0xf]
    %v153 = vld [vmem:[#allocation2 + $0x12c] sm:$0xf]
    %v154 = vld [vmem:[#allocation2 + $0x130] sm:$0xf]
    %v155 = vld [vmem:[#allocation2 + $0x134] sm:$0xf]
    %v156 = vld [vmem:[#allocation2 + $0x138] sm:$0xf]
    %v157 = vld [vmem:[#allocation2 + $0x13c] sm:$0xf]
    %v158 = vld [vmem:[#allocation2 + $0x140] sm:$0xf]
    %v159 = vld [vmem:[#allocation2 + $0x144] sm:$0xf]
    %v160 = vld [vmem:[#allocation2 + $0x148] sm:$0xf]
    %v161 = vld [vmem:[#allocation2 + $0x14c] sm:$0xf]
    %v162 = vld [vmem:[#allocation2 + $0x150] sm:$0xf]
    %v163 = vld [vmem:[#allocation2 + $0x154] sm:$0xf]
    %v164 = vld [vmem:[#allocation2 + $0x158] sm:$0xf]
    %v165 = vld [vmem:[#allocation2 + $0x15c] sm:$0xf]
    %v166 = vld [vmem:[#allocation2 + $0x160] sm:$0xf]
    %v167 = vld [vmem:[#allocation2 + $0x164] sm:$0xf]
    %v168 = vld [vmem:[#allocation2 + $0x168] sm:$0xf]
    %v169 = vld [vmem:[#allocation2 + $0x16c] sm:$0xf]
    %v170 = vld [vmem:[#allocation2 + $0x170] sm:$0xf]
    %v171 = vld [vmem:[#allocation2 + $0x174] sm:$0xf]
    %v172 = vld [vmem:[#allocation2 + $0x178] sm:$0xf]
    %v173 = vld [vmem:[#allocation2 + $0x17c] sm:$0xf]
    %v174 = vld [vmem:[#allocation2 + $0x180] sm:$0xf]
    %v175 = vld [vmem:[#allocation2 + $0x184] sm:$0xf]
    %v176 = vld [vmem:[#allocation2 + $0x188] sm:$0xf]
    %v177 = vld [vmem:[#allocation2 + $0x18c] sm:$0xf]
    %v178 = vld [vmem:[#allocation2 + $0x190] sm:$0xf]
    %v179 = vld [vmem:[#allocation2 + $0x194] sm:$0xf]
    %v180 = vld [vmem:[#allocation2 + $0x198] sm:$0xf]
    %v181 = vld [vmem:[#allocation2 + $0x19c] sm:$0xf]
    %v182 = vld [vmem:[#allocation2 + $0x1a0] sm:$0xf]
    %v183 = vld [vmem:[#allocation2 + $0x1a4] sm:$0xf]
    %v184 = vld [vmem:[#allocation2 + $0x1a8] sm:$0xf]
    %v185 = vld [vmem:[#allocation2 + $0x1ac] sm:$0xf]
    %v186 = vld [vmem:[#allocation2 + $0x1b0] sm:$0xf]
    %v187 = vld [vmem:[#allocation2 + $0x1b4] sm:$0xf]
    %v188 = vld [vmem:[#allocation2 + $0x1b8] sm:$0xf]
    %v189 = vld [vmem:[#allocation2 + $0x1bc] sm:$0xf]
    %v190 = vld [vmem:[#allocation2 + $0x1c0] sm:$0xf]
    %v191 = vld [vmem:[#allocation2 + $0x1c4] sm:$0xf]
    %v192 = vld [vmem:[#allocation2 + $0x1c8] sm:$0xf]
    %v193 = vld [vmem:[#allocation2 + $0x1cc] sm:$0xf]
    %v194 = vld [vmem:[#allocation2 + $0x1d0] sm:$0xf]
    %v195 = vld [vmem:[#allocation2 + $0x1d4] sm:$0xf]
    %v196 = vld [vmem:[#allocation2 + $0x1d8] sm:$0xf]
    %v197 = vld [vmem:[#allocation2 + $0x1dc] sm:$0xf]
    %v198 = vld [vmem:[#allocation2 + $0x1e0] sm:$0xf]
    %v199 = vld [vmem:[#allocation2 + $0x1e4] sm:$0xf]
    %v200 = vld [vmem:[#allocation2 + $0x1e8] sm:$0xf]
    %v201 = vld [vmem:[#allocation2 + $0x1ec] sm:$0xf]
    %v202 = vld [vmem:[#allocation2 + $0x1f0] sm:$0xf]
    %v203 = vld [vmem:[#allocation2 + $0x1f4] sm:$0xf]
    %v204 = vld [vmem:[#allocation2 + $0x1f8] sm:$0xf]
    %v205 = vld [vmem:[#allocation2 + $0x1fc] sm:$0xf]
    %v206 = vld [vmem:[#allocation2 + $0x200] sm:$0xf]
    %v207 = vld [vmem:[#allocation2 + $0x204] sm:$0xf]
    %v208 = vld [vmem:[#allocation2 + $0x208] sm:$0xf]
    %v209 = vld [vmem:[#allocation2 + $0x20c] sm:$0xf]
    %v210 = vld [vmem:[#allocation2 + $0x210] sm:$0xf]
    %v211 = vld [vmem:[#allocation2 + $0x214] sm:$0xf]
    %v212 = vld [vmem:[#allocation2 + $0x218] sm:$0xf]
    %v213 = vld [vmem:[#allocation2 + $0x21c] sm:$0xf]
    %v214 = vld [vmem:[#allocation2 + $0x220] sm:$0xf]
    %v215 = vld [vmem:[#allocation2 + $0x224] sm:$0xf]
    %v216 = vld [vmem:[#allocation2 + $0x228] sm:$0xf]
    %v217 = vld [vmem:[#allocation2 + $0x22c] sm:$0xf]
    %v218 = vld [vmem:[#allocation2 + $0x230] sm:$0xf]
    %v219 = vld [vmem:[#allocation2 + $0x234] sm:$0xf]
    %v220 = vld [vmem:[#allocation2 + $0x238] sm:$0xf]
    %v221 = vld [vmem:[#allocation2 + $0x23c] sm:$0xf]
    %v222 = vld [vmem:[#allocation2 + $0x240] sm:$0xf]
    %v223 = vld [vmem:[#allocation2 + $0x244] sm:$0xf]
    %v224 = vld [vmem:[#allocation2 + $0x248] sm:$0xf]
    %v225 = vld [vmem:[#allocation2 + $0x24c] sm:$0xf]
    %v226 = vld [vmem:[#allocation2 + $0x250] sm:$0xf]
    %v227 = vld [vmem:[#allocation2 + $0x254] sm:$0xf]
    %v228 = vld [vmem:[#allocation2 + $0x258] sm:$0xf]
    %v229 = vld [vmem:[#allocation2 + $0x25c] sm:$0xf]
    %v230 = vld [vmem:[#allocation2 + $0x260] sm:$0xf]
    %v231 = vld [vmem:[#allocation2 + $0x264] sm:$0xf]
    %v232 = vld [vmem:[#allocation2 + $0x268] sm:$0xf]
    %v233 = vld [vmem:[#allocation2 + $0x26c] sm:$0xf]
    %v234 = vld [vmem:[#allocation2 + $0x270] sm:$0xf]
    %v235 = vld [vmem:[#allocation2 + $0x274] sm:$0xf]
    %v236 = vld [vmem:[#allocation2 + $0x278] sm:$0xf]
    %v237 = vld [vmem:[#allocation2 + $0x27c] sm:$0xf]
    %v238 = vld [vmem:[#allocation2 + $0x280] sm:$0xf]
    %v239 = vld [vmem:[#allocation2 + $0x284] sm:$0xf]
    %v240 = vld [vmem:[#allocation2 + $0x288] sm:$0xf]
    %v241 = vld [vmem:[#allocation2 + $0x28c] sm:$0xf]
    %v242 = vld [vmem:[#allocation2 + $0x290] sm:$0xf]
    %v243 = vld [vmem:[#allocation2 + $0x294] sm:$0xf]
    %v244 = vld [vmem:[#allocation2 + $0x298] sm:$0xf]
    %v245 = vld [vmem:[#allocation2 + $0x29c] sm:$0xf]
    %v246 = vld [vmem:[#allocation2 + $0x2a0] sm:$0xf]
    %v247 = vld [vmem:[#allocation2 + $0x2a4] sm:$0xf]
    %v248 = vld [vmem:[#allocation2 + $0x2a8] sm:$0xf]
    %v249 = vld [vmem:[#allocation2 + $0x2ac] sm:$0xf]
    %v250 = vld [vmem:[#allocation2 + $0x2b0] sm:$0xf]
    %v251 = vld [vmem:[#allocation2 + $0x2b4] sm:$0xf]
    %v252 = vld [vmem:[#allocation2 + $0x2b8] sm:$0xf]
    %v253 = vld [vmem:[#allocation2 + $0x2bc] sm:$0xf]
    %v254 = vld [vmem:[#allocation2 + $0x2c0] sm:$0xf]
    %v255 = vld [vmem:[#allocation2 + $0x2c4] sm:$0xf]
    %v256 = vld [vmem:[#allocation2 + $0x2c8] sm:$0xf]
    %v257 = vld [vmem:[#allocation2 + $0x2cc] sm:$0xf]
    %v258 = vld [vmem:[#allocation2 + $0x2d0] sm:$0xf]
    %v259 = vld [vmem:[#allocation2 + $0x2d4] sm:$0xf]
    %v260 = vld [vmem:[#allocation2 + $0x2d8] sm:$0xf]
    %v261 = vld [vmem:[#allocation2 + $0x2dc] sm:$0xf]
    %v262 = vld [vmem:[#allocation2 + $0x2e0] sm:$0xf]
    %v263 = vld [vmem:[#allocation2 + $0x2e4] sm:$0xf]
    %v264 = vld [vmem:[#allocation2 + $0x2e8] sm:$0xf]
    %v265 = vld [vmem:[#allocation2 + $0x2ec] sm:$0xf]
    %v266 = vld [vmem:[#allocation2 + $0x2f0] sm:$0xf]
    %v267 = vld [vmem:[#allocation2 + $0x2f4] sm:$0xf]
    %v268 = vld [vmem:[#allocation2 + $0x2f8] sm:$0xf]
    %v269 = vld [vmem:[#allocation2 + $0x2fc] sm:$0xf]
    %v270 = vld [vmem:[#allocation2 + $0x300] sm:$0xf]
    %v271 = vld [vmem:[#allocation2 + $0x304] sm:$0xf]
    %v272 = vld [vmem:[#allocation2 + $0x308] sm:$0xf]
    %v273 = vld [vmem:[#allocation2 + $0x30c] sm:$0xf]
    %v274 = vld [vmem:[#allocation2 + $0x310] sm:$0xf]
    %v275 = vld [vmem:[#allocation2 + $0x314] sm:$0xf]
    %v276 = vld [vmem:[#allocation2 + $0x318] sm:$0xf]
    %v277 = vld [vmem:[#allocation2 + $0x31c] sm:$0xf]
    %v278 = vld [vmem:[#allocation2 + $0x320] sm:$0xf]
    %v279 = vld [vmem:[#allocation2 + $0x324] sm:$0xf]
    %v280 = vld [vmem:[#allocation2 + $0x328] sm:$0xf]
    %v281 = vld [vmem:[#allocation2 + $0x32c] sm:$0xf]
    %v282 = vld [vmem:[#allocation2 + $0x330] sm:$0xf]
    %v283 = vld [vmem:[#allocation2 + $0x334] sm:$0xf]
    %v284 = vld [vmem:[#allocation2 + $0x338] sm:$0xf]
    %v285 = vld [vmem:[#allocation2 + $0x33c] sm:$0xf]
    %v286 = vld [vmem:[#allocation2 + $0x340] sm:$0xf]
    %v287 = vld [vmem:[#allocation2 + $0x344] sm:$0xf]
    %v288 = vld [vmem:[#allocation2 + $0x348] sm:$0xf]
    %v289 = vld [vmem:[#allocation2 + $0x34c] sm:$0xf]
    %v290 = vld [vmem:[#allocation2 + $0x350] sm:$0xf]
    %v291 = vld [vmem:[#allocation2 + $0x354] sm:$0xf]
    %v292 = vld [vmem:[#allocation2 + $0x358] sm:$0xf]
    %v293 = vld [vmem:[#allocation2 + $0x35c] sm:$0xf]
    %v294 = vld [vmem:[#allocation2 + $0x360] sm:$0xf]
    %v295 = vld [vmem:[#allocation2 + $0x364] sm:$0xf]
    %v296 = vld [vmem:[#allocation2 + $0x368] sm:$0xf]
    %v297 = vld [vmem:[#allocation2 + $0x36c] sm:$0xf]
    %v298 = vld [vmem:[#allocation2 + $0x370] sm:$0xf]
    %v299 = vld [vmem:[#allocation2 + $0x374] sm:$0xf]
    %v300 = vld [vmem:[#allocation2 + $0x378] sm:$0xf]
    %v301 = vld [vmem:[#allocation2 + $0x37c] sm:$0xf]
    %v302 = vld [vmem:[#allocation2 + $0x380] sm:$0xf]
    %v303 = vld [vmem:[#allocation2 + $0x384] sm:$0xf]
    %v304 = vld [vmem:[#allocation2 + $0x388] sm:$0xf]
    %v305 = vld [vmem:[#allocation2 + $0x38c] sm:$0xf]
    %v306 = vld [vmem:[#allocation2 + $0x390] sm:$0xf]
    %v307 = vld [vmem:[#allocation2 + $0x394] sm:$0xf]
    %v308 = vld [vmem:[#allocation2 + $0x398] sm:$0xf]
    %v309 = vld [vmem:[#allocation2 + $0x39c] sm:$0xf]
    %v310 = vld [vmem:[#allocation2 + $0x3a0] sm:$0xf]
    %v311 = vld [vmem:[#allocation2 + $0x3a4] sm:$0xf]
    %v312 = vld [vmem:[#allocation2 + $0x3a8] sm:$0xf]
    %v313 = vld [vmem:[#allocation2 + $0x3ac] sm:$0xf]
    %v314 = vld [vmem:[#allocation2 + $0x3b0] sm:$0xf]
    %v315 = vld [vmem:[#allocation2 + $0x3b4] sm:$0xf]
    %v316 = vld [vmem:[#allocation2 + $0x3b8] sm:$0xf]
    %v317 = vld [vmem:[#allocation2 + $0x3bc] sm:$0xf]
    %v318 = vld [vmem:[%s2] sm:$0x1]
    %v320 = vperm.slane %v318, 0
    %v562 = vunpack.c.l.b16 %v78
    %v563 = vunpack.c.l.b16 %v79
    %v564 = vunpack.c.l.b16 %v80
    %v565 = vunpack.c.l.b16 %v81
    %v566 = vunpack.c.l.b16 %v82
    %v567 = vunpack.c.l.b16 %v83
    %v568 = vunpack.c.l.b16 %v84
    %v569 = vunpack.c.l.b16 %v85
    %v570 = vunpack.c.l.b16 %v86
    %v571 = vunpack.c.l.b16 %v87
    %v572 = vunpack.c.l.b16 %v88
    %v573 = vunpack.c.l.b16 %v89
    %v574 = vunpack.c.l.b16 %v90
    %v575 = vunpack.c.l.b16 %v91
    %v576 = vunpack.c.l.b16 %v92
    %v577 = vunpack.c.l.b16 %v93
    %v578 = vunpack.c.l.b16 %v94
    %v579 = vunpack.c.l.b16 %v95
    %v580 = vunpack.c.l.b16 %v96
    %v581 = vunpack.c.l.b16 %v97
    %v582 = vunpack.c.l.b16 %v98
    %v583 = vunpack.c.l.b16 %v99
    %v584 = vunpack.c.l.b16 %v100
    %v585 = vunpack.c.l.b16 %v101
    %v586 = vunpack.c.l.b16 %v102
    %v587 = vunpack.c.l.b16 %v103
    %v588 = vunpack.c.l.b16 %v104
    %v589 = vunpack.c.l.b16 %v105
    %v590 = vunpack.c.l.b16 %v106
    %v591 = vunpack.c.l.b16 %v107
    %v592 = vunpack.c.l.b16 %v108
    %v593 = vunpack.c.l.b16 %v109
    %v594 = vunpack.c.l.b16 %v110
    %v595 = vunpack.c.l.b16 %v111
    %v596 = vunpack.c.l.b16 %v112
    %v597 = vunpack.c.l.b16 %v113
    %v598 = vunpack.c.l.b16 %v114
    %v599 = vunpack.c.l.b16 %v115
    %v600 = vunpack.c.l.b16 %v116
    %v601 = vunpack.c.l.b16 %v117
    %v602 = vunpack.c.l.b16 %v118
    %v603 = vunpack.c.l.b16 %v119
    %v604 = vunpack.c.l.b16 %v120
    %v605 = vunpack.c.l.b16 %v121
    %v606 = vunpack.c.l.b16 %v122
    %v607 = vunpack.c.l.b16 %v123
    %v608 = vunpack.c.l.b16 %v124
    %v609 = vunpack.c.l.b16 %v125
    %v610 = vunpack.c.l.b16 %v126
    %v611 = vunpack.c.l.b16 %v127
    %v612 = vunpack.c.l.b16 %v128
    %v613 = vunpack.c.l.b16 %v129
    %v614 = vunpack.c.l.b16 %v130
    %v615 = vunpack.c.l.b16 %v131
    %v616 = vunpack.c.l.b16 %v132
    %v617 = vunpack.c.l.b16 %v133
    %v618 = vunpack.c.l.b16 %v134
    %v619 = vunpack.c.l.b16 %v135
    %v620 = vunpack.c.l.b16 %v136
    %v621 = vunpack.c.l.b16 %v137
    %v622 = vunpack.c.l.b16 %v138
    %v623 = vunpack.c.l.b16 %v139
    %v624 = vunpack.c.l.b16 %v140
    %v625 = vunpack.c.l.b16 %v141
    %v626 = vunpack.c.l.b16 %v142
    %v627 = vunpack.c.l.b16 %v143
    %v628 = vunpack.c.l.b16 %v144
    %v629 = vunpack.c.l.b16 %v145
    %v630 = vunpack.c.l.b16 %v146
    %v631 = vunpack.c.l.b16 %v147
    %v632 = vunpack.c.l.b16 %v148
    %v633 = vunpack.c.l.b16 %v149
    %v634 = vunpack.c.l.b16 %v150
    %v635 = vunpack.c.l.b16 %v151
    %v636 = vunpack.c.l.b16 %v152
    %v637 = vunpack.c.l.b16 %v153
    %v638 = vunpack.c.l.b16 %v154
    %v639 = vunpack.c.l.b16 %v155
    %v640 = vunpack.c.l.b16 %v156
    %v641 = vunpack.c.l.b16 %v157
    %v642 = vunpack.c.l.b16 %v158
    %v643 = vunpack.c.l.b16 %v159
    %v644 = vunpack.c.l.b16 %v160
    %v645 = vunpack.c.l.b16 %v161
    %v646 = vunpack.c.l.b16 %v162
    %v647 = vunpack.c.l.b16 %v163
    %v648 = vunpack.c.l.b16 %v164
    %v649 = vunpack.c.l.b16 %v165
    %v650 = vunpack.c.l.b16 %v166
    %v651 = vunpack.c.l.b16 %v167
    %v652 = vunpack.c.l.b16 %v168
    %v653 = vunpack.c.l.b16 %v169
    %v654 = vunpack.c.l.b16 %v170
    %v655 = vunpack.c.l.b16 %v171
    %v656 = vunpack.c.l.b16 %v172
    %v657 = vunpack.c.l.b16 %v173
    %v658 = vunpack.c.l.b16 %v174
    %v659 = vunpack.c.l.b16 %v175
    %v660 = vunpack.c.l.b16 %v176
    %v661 = vunpack.c.l.b16 %v177
    %v662 = vunpack.c.l.b16 %v178
    %v663 = vunpack.c.l.b16 %v179
    %v664 = vunpack.c.l.b16 %v180
    %v665 = vunpack.c.l.b16 %v181
    %v666 = vunpack.c.l.b16 %v182
    %v667 = vunpack.c.l.b16 %v183
    %v668 = vunpack.c.l.b16 %v184
    %v669 = vunpack.c.l.b16 %v185
    %v670 = vunpack.c.l.b16 %v186
    %v671 = vunpack.c.l.b16 %v187
    %v672 = vunpack.c.l.b16 %v188
    %v673 = vunpack.c.l.b16 %v189
    %v674 = vunpack.c.l.b16 %v190
    %v675 = vunpack.c.l.b16 %v191
    %v676 = vunpack.c.l.b16 %v192
    %v677 = vunpack.c.l.b16 %v193
    %v678 = vunpack.c.l.b16 %v194
    %v679 = vunpack.c.l.b16 %v195
    %v680 = vunpack.c.l.b16 %v196
    %v681 = vunpack.c.l.b16 %v197
    %v682 = vunpack.c.l.b16 %v198
    %v683 = vunpack.c.l.b16 %v199
    %v684 = vunpack.c.l.b16 %v200
    %v685 = vunpack.c.l.b16 %v201
    %v686 = vunpack.c.l.b16 %v202
    %v687 = vunpack.c.l.b16 %v203
    %v688 = vunpack.c.l.b16 %v204
    %v689 = vunpack.c.l.b16 %v205
    %v690 = vunpack.c.l.b16 %v206
    %v691 = vunpack.c.l.b16 %v207
    %v692 = vunpack.c.l.b16 %v208
    %v693 = vunpack.c.l.b16 %v209
    %v694 = vunpack.c.l.b16 %v210
    %v695 = vunpack.c.l.b16 %v211
    %v696 = vunpack.c.l.b16 %v212
    %v697 = vunpack.c.l.b16 %v213
    %v698 = vunpack.c.l.b16 %v214
    %v699 = vunpack.c.l.b16 %v215
    %v700 = vunpack.c.l.b16 %v216
    %v701 = vunpack.c.l.b16 %v217
    %v702 = vunpack.c.l.b16 %v218
    %v703 = vunpack.c.l.b16 %v219
    %v704 = vunpack.c.l.b16 %v220
    %v705 = vunpack.c.l.b16 %v221
    %v706 = vunpack.c.l.b16 %v222
    %v707 = vunpack.c.l.b16 %v223
    %v708 = vunpack.c.l.b16 %v224
    %v709 = vunpack.c.l.b16 %v225
    %v710 = vunpack.c.l.b16 %v226
    %v711 = vunpack.c.l.b16 %v227
    %v712 = vunpack.c.l.b16 %v228
    %v713 = vunpack.c.l.b16 %v229
    %v714 = vunpack.c.l.b16 %v230
    %v715 = vunpack.c.l.b16 %v231
    %v716 = vunpack.c.l.b16 %v232
    %v717 = vunpack.c.l.b16 %v233
    %v718 = vunpack.c.l.b16 %v234
    %v719 = vunpack.c.l.b16 %v235
    %v720 = vunpack.c.l.b16 %v236
    %v721 = vunpack.c.l.b16 %v237
    %v722 = vunpack.c.l.b16 %v238
    %v723 = vunpack.c.l.b16 %v239
    %v724 = vunpack.c.l.b16 %v240
    %v725 = vunpack.c.l.b16 %v241
    %v726 = vunpack.c.l.b16 %v242
    %v727 = vunpack.c.l.b16 %v243
    %v728 = vunpack.c.l.b16 %v244
    %v729 = vunpack.c.l.b16 %v245
    %v730 = vunpack.c.l.b16 %v246
    %v731 = vunpack.c.l.b16 %v247
    %v732 = vunpack.c.l.b16 %v248
    %v733 = vunpack.c.l.b16 %v249
    %v734 = vunpack.c.l.b16 %v250
    %v735 = vunpack.c.l.b16 %v251
    %v736 = vunpack.c.l.b16 %v252
    %v737 = vunpack.c.l.b16 %v253
    %v738 = vunpack.c.l.b16 %v254
    %v739 = vunpack.c.l.b16 %v255
    %v740 = vunpack.c.l.b16 %v256
    %v741 = vunpack.c.l.b16 %v257
    %v742 = vunpack.c.l.b16 %v258
    %v743 = vunpack.c.l.b16 %v259
    %v744 = vunpack.c.l.b16 %v260
    %v745 = vunpack.c.l.b16 %v261
    %v746 = vunpack.c.l.b16 %v262
    %v747 = vunpack.c.l.b16 %v263
    %v748 = vunpack.c.l.b16 %v264
    %v749 = vunpack.c.l.b16 %v265
    %v750 = vunpack.c.l.b16 %v266
    %v751 = vunpack.c.l.b16 %v267
    %v752 = vunpack.c.l.b16 %v268
    %v753 = vunpack.c.l.b16 %v269
    %v754 = vunpack.c.l.b16 %v270
    %v755 = vunpack.c.l.b16 %v271
    %v756 = vunpack.c.l.b16 %v272
    %v757 = vunpack.c.l.b16 %v273
    %v758 = vunpack.c.l.b16 %v274
    %v759 = vunpack.c.l.b16 %v275
    %v760 = vunpack.c.l.b16 %v276
    %v761 = vunpack.c.l.b16 %v277
    %v762 = vunpack.c.l.b16 %v278
    %v763 = vunpack.c.l.b16 %v279
    %v764 = vunpack.c.l.b16 %v280
    %v765 = vunpack.c.l.b16 %v281
    %v766 = vunpack.c.l.b16 %v282
    %v767 = vunpack.c.l.b16 %v283
    %v768 = vunpack.c.l.b16 %v284
    %v769 = vunpack.c.l.b16 %v285
    %v770 = vunpack.c.l.b16 %v286
    %v771 = vunpack.c.l.b16 %v287
    %v772 = vunpack.c.l.b16 %v288
    %v773 = vunpack.c.l.b16 %v289
    %v774 = vunpack.c.l.b16 %v290
    %v775 = vunpack.c.l.b16 %v291
    %v776 = vunpack.c.l.b16 %v292
    %v777 = vunpack.c.l.b16 %v293
    %v778 = vunpack.c.l.b16 %v294
    %v779 = vunpack.c.l.b16 %v295
    %v780 = vunpack.c.l.b16 %v296
    %v781 = vunpack.c.l.b16 %v297
    %v782 = vunpack.c.l.b16 %v298
    %v783 = vunpack.c.l.b16 %v299
    %v784 = vunpack.c.l.b16 %v300
    %v785 = vunpack.c.l.b16 %v301
    %v786 = vunpack.c.l.b16 %v302
    %v787 = vunpack.c.l.b16 %v303
    %v788 = vunpack.c.l.b16 %v304
    %v789 = vunpack.c.l.b16 %v305
    %v790 = vunpack.c.l.b16 %v306
    %v791 = vunpack.c.l.b16 %v307
    %v792 = vunpack.c.l.b16 %v308
    %v793 = vunpack.c.l.b16 %v309
    %v794 = vunpack.c.l.b16 %v310
    %v795 = vunpack.c.l.b16 %v311
    %v796 = vunpack.c.l.b16 %v312
    %v797 = vunpack.c.l.b16 %v313
    %v798 = vunpack.c.l.b16 %v314
    %v799 = vunpack.c.l.b16 %v315
    %v800 = vunpack.c.l.b16 %v316
    %v801 = vunpack.c.l.b16 %v317
    %v802 = vpack.c.b16 %v563, %v562
    %v803 = vpack.c.b16 %v565, %v564
    %v804 = vpack.c.b16 %v567, %v566
    %v805 = vpack.c.b16 %v569, %v568
    %v806 = vpack.c.b16 %v571, %v570
    %v807 = vpack.c.b16 %v573, %v572
    %v808 = vpack.c.b16 %v575, %v574
    %v809 = vpack.c.b16 %v577, %v576
    %v810 = vpack.c.b16 %v579, %v578
    %v811 = vpack.c.b16 %v581, %v580
    %v812 = vpack.c.b16 %v583, %v582
    %v813 = vpack.c.b16 %v585, %v584
    %v814 = vpack.c.b16 %v587, %v586
    %v815 = vpack.c.b16 %v589, %v588
    %v816 = vpack.c.b16 %v591, %v590
    %v817 = vpack.c.b16 %v593, %v592
    %v818 = vpack.c.b16 %v595, %v594
    %v819 = vpack.c.b16 %v597, %v596
    %v820 = vpack.c.b16 %v599, %v598
    %v821 = vpack.c.b16 %v601, %v600
    %v822 = vpack.c.b16 %v603, %v602
    %v823 = vpack.c.b16 %v605, %v604
    %v824 = vpack.c.b16 %v607, %v606
    %v825 = vpack.c.b16 %v609, %v608
    %v826 = vpack.c.b16 %v611, %v610
    %v827 = vpack.c.b16 %v613, %v612
    %v828 = vpack.c.b16 %v615, %v614
    %v829 = vpack.c.b16 %v617, %v616
    %v830 = vpack.c.b16 %v619, %v618
    %v831 = vpack.c.b16 %v621, %v620
    %v832 = vpack.c.b16 %v623, %v622
    %v833 = vpack.c.b16 %v625, %v624
    %v834 = vpack.c.b16 %v627, %v626
    %v835 = vpack.c.b16 %v629, %v628
    %v836 = vpack.c.b16 %v631, %v630
    %v837 = vpack.c.b16 %v633, %v632
    %v838 = vpack.c.b16 %v635, %v634
    %v839 = vpack.c.b16 %v637, %v636
    %v840 = vpack.c.b16 %v639, %v638
    %v841 = vpack.c.b16 %v641, %v640
    %v842 = vpack.c.b16 %v643, %v642
    %v843 = vpack.c.b16 %v645, %v644
    %v844 = vpack.c.b16 %v647, %v646
    %v845 = vpack.c.b16 %v649, %v648
    %v846 = vpack.c.b16 %v651, %v650
    %v847 = vpack.c.b16 %v653, %v652
    %v848 = vpack.c.b16 %v655, %v654
    %v849 = vpack.c.b16 %v657, %v656
    %v850 = vpack.c.b16 %v659, %v658
    %v851 = vpack.c.b16 %v661, %v660
    %v852 = vpack.c.b16 %v663, %v662
    %v853 = vpack.c.b16 %v665, %v664
    %v854 = vpack.c.b16 %v667, %v666
    %v855 = vpack.c.b16 %v669, %v668
    %v856 = vpack.c.b16 %v671, %v670
    %v857 = vpack.c.b16 %v673, %v672
    %v858 = vpack.c.b16 %v675, %v674
    %v859 = vpack.c.b16 %v677, %v676
    %v860 = vpack.c.b16 %v679, %v678
    %v861 = vpack.c.b16 %v681, %v680
    %v862 = vpack.c.b16 %v683, %v682
    %v863 = vpack.c.b16 %v685, %v684
    %v864 = vpack.c.b16 %v687, %v686
    %v865 = vpack.c.b16 %v689, %v688
    %v866 = vpack.c.b16 %v691, %v690
    %v867 = vpack.c.b16 %v693, %v692
    %v868 = vpack.c.b16 %v695, %v694
    %v869 = vpack.c.b16 %v697, %v696
    %v870 = vpack.c.b16 %v699, %v698
    %v871 = vpack.c.b16 %v701, %v700
    %v872 = vpack.c.b16 %v703, %v702
    %v873 = vpack.c.b16 %v705, %v704
    %v874 = vpack.c.b16 %v707, %v706
    %v875 = vpack.c.b16 %v709, %v708
    %v876 = vpack.c.b16 %v711, %v710
    %v877 = vpack.c.b16 %v713, %v712
    %v878 = vpack.c.b16 %v715, %v714
    %v879 = vpack.c.b16 %v717, %v716
    %v880 = vpack.c.b16 %v719, %v718
    %v881 = vpack.c.b16 %v721, %v720
    %v882 = vpack.c.b16 %v723, %v722
    %v883 = vpack.c.b16 %v725, %v724
    %v884 = vpack.c.b16 %v727, %v726
    %v885 = vpack.c.b16 %v729, %v728
    %v886 = vpack.c.b16 %v731, %v730
    %v887 = vpack.c.b16 %v733, %v732
    %v888 = vpack.c.b16 %v735, %v734
    %v889 = vpack.c.b16 %v737, %v736
    %v890 = vpack.c.b16 %v739, %v738
    %v891 = vpack.c.b16 %v741, %v740
    %v892 = vpack.c.b16 %v743, %v742
    %v893 = vpack.c.b16 %v745, %v744
    %v894 = vpack.c.b16 %v747, %v746
    %v895 = vpack.c.b16 %v749, %v748
    %v896 = vpack.c.b16 %v751, %v750
    %v897 = vpack.c.b16 %v753, %v752
    %v898 = vpack.c.b16 %v755, %v754
    %v899 = vpack.c.b16 %v757, %v756
    %v900 = vpack.c.b16 %v759, %v758
    %v901 = vpack.c.b16 %v761, %v760
    %v902 = vpack.c.b16 %v763, %v762
    %v903 = vpack.c.b16 %v765, %v764
    %v904 = vpack.c.b16 %v767, %v766
    %v905 = vpack.c.b16 %v769, %v768
    %v906 = vpack.c.b16 %v771, %v770
    %v907 = vpack.c.b16 %v773, %v772
    %v908 = vpack.c.b16 %v775, %v774
    %v909 = vpack.c.b16 %v777, %v776
    %v910 = vpack.c.b16 %v779, %v778
    %v911 = vpack.c.b16 %v781, %v780
    %v912 = vpack.c.b16 %v783, %v782
    %v913 = vpack.c.b16 %v785, %v784
    %v914 = vpack.c.b16 %v787, %v786
    %v915 = vpack.c.b16 %v789, %v788
    %v916 = vpack.c.b16 %v791, %v790
    %v917 = vpack.c.b16 %v793, %v792
    %v918 = vpack.c.b16 %v795, %v794
    %v919 = vpack.c.b16 %v797, %v796
    %v920 = vpack.c.b16 %v799, %v798
    %v921 = vpack.c.b16 %v801, %v800
    %1042 = vmatpush.bf16.msra.mxu0 %v809
    %1043 = vmatpush.bf16.msra.mxu0 %v808
    %1044 = vmatpush.bf16.msra.mxu0 %v807
    %1045 = vmatpush.bf16.msra.mxu0 %v806
    %1046 = vmatpush.bf16.msra.mxu0 %v805
    %1047 = vmatpush.bf16.msra.mxu0 %v804
    %1048 = vmatpush.bf16.msra.mxu0 %v803
    %1049 = vmatpush.bf16.msra.mxu0 %v802
    %1050 = vmatmul.bf16.gmra.mxu0 %v63
    %v1051 = vpop.f32.mrf.mxu0
    %v1052 = vadd.f32 %v320, %v1051
    %v1053 = vpop.f32.mrf.mxu0
    %v1054 = vadd.f32 %v320, %v1053
    %1055 = vdwg.mxu0
    %1056 = vmatpush.bf16.msra.mxu0 %v817
    %1057 = vmatpush.bf16.msra.mxu0 %v816
    %1058 = vmatpush.bf16.msra.mxu0 %v815
    %1059 = vmatpush.bf16.msra.mxu0 %v814
    %1060 = vmatpush.bf16.msra.mxu0 %v813
    %1061 = vmatpush.bf16.msra.mxu0 %v812
    %1062 = vmatpush.bf16.msra.mxu0 %v811
    %1063 = vmatpush.bf16.msra.mxu0 %v810
    %1064 = vmatmul.bf16.gmra.mxu0 %v64
    %v1065 = vpop.f32.mrf.mxu0
    %v1066 = vadd.f32 %v1052, %v1065
    %v1067 = vpop.f32.mrf.mxu0
    %v1068 = vadd.f32 %v1054, %v1067
    %1069 = vdwg.mxu0
    %1070 = vmatpush.bf16.msra.mxu0 %v825
    %1071 = vmatpush.bf16.msra.mxu0 %v824
    %1072 = vmatpush.bf16.msra.mxu0 %v823
    %1073 = vmatpush.bf16.msra.mxu0 %v822
    %1074 = vmatpush.bf16.msra.mxu0 %v821
    %1075 = vmatpush.bf16.msra.mxu0 %v820
    %1076 = vmatpush.bf16.msra.mxu0 %v819
    %1077 = vmatpush.bf16.msra.mxu0 %v818
    %1078 = vmatmul.bf16.gmra.mxu0 %v65
    %v1079 = vpop.f32.mrf.mxu0
    %v1080 = vadd.f32 %v1066, %v1079
    %v1081 = vpop.f32.mrf.mxu0
    %v1082 = vadd.f32 %v1068, %v1081
    %1083 = vdwg.mxu0
    %1084 = vmatpush.bf16.msra.mxu0 %v833
    %1085 = vmatpush.bf16.msra.mxu0 %v832
    %1086 = vmatpush.bf16.msra.mxu0 %v831
    %1087 = vmatpush.bf16.msra.mxu0 %v830
    %1088 = vmatpush.bf16.msra.mxu0 %v829
    %1089 = vmatpush.bf16.msra.mxu0 %v828
    %1090 = vmatpush.bf16.msra.mxu0 %v827
    %1091 = vmatpush.bf16.msra.mxu0 %v826
    %1092 = vmatmul.bf16.gmra.mxu0 %v66
    %v1093 = vpop.f32.mrf.mxu0
    %v1094 = vadd.f32 %v1080, %v1093
    %v1095 = vpop.f32.mrf.mxu0
    %v1096 = vadd.f32 %v1082, %v1095
    %1097 = vdwg.mxu0
    %1098 = vmatpush.bf16.msra.mxu0 %v841
    %1099 = vmatpush.bf16.msra.mxu0 %v840
    %1100 = vmatpush.bf16.msra.mxu0 %v839
    %1101 = vmatpush.bf16.msra.mxu0 %v838
    %1102 = vmatpush.bf16.msra.mxu0 %v837
    %1103 = vmatpush.bf16.msra.mxu0 %v836
    %1104 = vmatpush.bf16.msra.mxu0 %v835
    %1105 = vmatpush.bf16.msra.mxu0 %v834
    %1106 = vmatmul.bf16.gmra.mxu0 %v67
    %v1107 = vpop.f32.mrf.mxu0
    %v1108 = vadd.f32 %v1094, %v1107
    %v1109 = vpop.f32.mrf.mxu0
    %v1110 = vadd.f32 %v1096, %v1109
    %1111 = vdwg.mxu0
    %1112 = vmatpush.bf16.msra.mxu0 %v849
    %1113 = vmatpush.bf16.msra.mxu0 %v848
    %1114 = vmatpush.bf16.msra.mxu0 %v847
    %1115 = vmatpush.bf16.msra.mxu0 %v846
    %1116 = vmatpush.bf16.msra.mxu0 %v845
    %1117 = vmatpush.bf16.msra.mxu0 %v844
    %1118 = vmatpush.bf16.msra.mxu0 %v843
    %1119 = vmatpush.bf16.msra.mxu0 %v842
    %1120 = vmatmul.bf16.gmra.mxu0 %v68
    %v1121 = vpop.f32.mrf.mxu0
    %v1122 = vadd.f32 %v1108, %v1121
    %v1123 = vpop.f32.mrf.mxu0
    %v1124 = vadd.f32 %v1110, %v1123
    %1125 = vdwg.mxu0
    %1126 = vmatpush.bf16.msra.mxu0 %v857
    %1127 = vmatpush.bf16.msra.mxu0 %v856
    %1128 = vmatpush.bf16.msra.mxu0 %v855
    %1129 = vmatpush.bf16.msra.mxu0 %v854
    %1130 = vmatpush.bf16.msra.mxu0 %v853
    %1131 = vmatpush.bf16.msra.mxu0 %v852
    %1132 = vmatpush.bf16.msra.mxu0 %v851
    %1133 = vmatpush.bf16.msra.mxu0 %v850
    %1134 = vmatmul.bf16.gmra.mxu0 %v69
    %v1135 = vpop.f32.mrf.mxu0
    %v1136 = vadd.f32 %v1122, %v1135
    %v1137 = vpop.f32.mrf.mxu0
    %v1138 = vadd.f32 %v1124, %v1137
    %1139 = vdwg.mxu0
    %1140 = vmatpush.bf16.msra.mxu0 %v865
    %1141 = vmatpush.bf16.msra.mxu0 %v864
    %1142 = vmatpush.bf16.msra.mxu0 %v863
    %1143 = vmatpush.bf16.msra.mxu0 %v862
    %1144 = vmatpush.bf16.msra.mxu0 %v861
    %1145 = vmatpush.bf16.msra.mxu0 %v860
    %1146 = vmatpush.bf16.msra.mxu0 %v859
    %1147 = vmatpush.bf16.msra.mxu0 %v858
    %1148 = vmatmul.bf16.gmra.mxu0 %v70
    %v1149 = vpop.f32.mrf.mxu0
    %v1150 = vadd.f32 %v1136, %v1149
    %v1151 = vpop.f32.mrf.mxu0
    %v1152 = vadd.f32 %v1138, %v1151
    %1153 = vdwg.mxu0
    %1154 = vmatpush.bf16.msra.mxu0 %v873
    %1155 = vmatpush.bf16.msra.mxu0 %v872
    %1156 = vmatpush.bf16.msra.mxu0 %v871
    %1157 = vmatpush.bf16.msra.mxu0 %v870
    %1158 = vmatpush.bf16.msra.mxu0 %v869
    %1159 = vmatpush.bf16.msra.mxu0 %v868
    %1160 = vmatpush.bf16.msra.mxu0 %v867
    %1161 = vmatpush.bf16.msra.mxu0 %v866
    %1162 = vmatmul.bf16.gmra.mxu0 %v71
    %v1163 = vpop.f32.mrf.mxu0
    %v1164 = vadd.f32 %v1150, %v1163
    %v1165 = vpop.f32.mrf.mxu0
    %v1166 = vadd.f32 %v1152, %v1165
    %1167 = vdwg.mxu0
    %1168 = vmatpush.bf16.msra.mxu0 %v881
    %1169 = vmatpush.bf16.msra.mxu0 %v880
    %1170 = vmatpush.bf16.msra.mxu0 %v879
    %1171 = vmatpush.bf16.msra.mxu0 %v878
    %1172 = vmatpush.bf16.msra.mxu0 %v877
    %1173 = vmatpush.bf16.msra.mxu0 %v876
    %1174 = vmatpush.bf16.msra.mxu0 %v875
    %1175 = vmatpush.bf16.msra.mxu0 %v874
    %1176 = vmatmul.bf16.gmra.mxu0 %v72
    %v1177 = vpop.f32.mrf.mxu0
    %v1178 = vadd.f32 %v1164, %v1177
    %v1179 = vpop.f32.mrf.mxu0
    %v1180 = vadd.f32 %v1166, %v1179
    %1181 = vdwg.mxu0
    %1182 = vmatpush.bf16.msra.mxu0 %v889
    %1183 = vmatpush.bf16.msra.mxu0 %v888
    %1184 = vmatpush.bf16.msra.mxu0 %v887
    %1185 = vmatpush.bf16.msra.mxu0 %v886
    %1186 = vmatpush.bf16.msra.mxu0 %v885
    %1187 = vmatpush.bf16.msra.mxu0 %v884
    %1188 = vmatpush.bf16.msra.mxu0 %v883
    %1189 = vmatpush.bf16.msra.mxu0 %v882
    %1190 = vmatmul.bf16.gmra.mxu0 %v73
    %v1191 = vpop.f32.mrf.mxu0
    %v1192 = vadd.f32 %v1178, %v1191
    %v1193 = vpop.f32.mrf.mxu0
    %v1194 = vadd.f32 %v1180, %v1193
    %1195 = vdwg.mxu0
    %1196 = vmatpush.bf16.msra.mxu0 %v897
    %1197 = vmatpush.bf16.msra.mxu0 %v896
    %1198 = vmatpush.bf16.msra.mxu0 %v895
    %1199 = vmatpush.bf16.msra.mxu0 %v894
    %1200 = vmatpush.bf16.msra.mxu0 %v893
    %1201 = vmatpush.bf16.msra.mxu0 %v892
    %1202 = vmatpush.bf16.msra.mxu0 %v891
    %1203 = vmatpush.bf16.msra.mxu0 %v890
    %1204 = vmatmul.bf16.gmra.mxu0 %v74
    %v1205 = vpop.f32.mrf.mxu0
    %v1206 = vadd.f32 %v1192, %v1205
    %v1207 = vpop.f32.mrf.mxu0
    %v1208 = vadd.f32 %v1194, %v1207
    %1209 = vdwg.mxu0
    %1210 = vmatpush.bf16.msra.mxu0 %v905
    %1211 = vmatpush.bf16.msra.mxu0 %v904
    %1212 = vmatpush.bf16.msra.mxu0 %v903
    %1213 = vmatpush.bf16.msra.mxu0 %v902
    %1214 = vmatpush.bf16.msra.mxu0 %v901
    %1215 = vmatpush.bf16.msra.mxu0 %v900
    %1216 = vmatpush.bf16.msra.mxu0 %v899
    %1217 = vmatpush.bf16.msra.mxu0 %v898
    %1218 = vmatmul.bf16.gmra.mxu0 %v75
    %v1219 = vpop.f32.mrf.mxu0
    %v1220 = vadd.f32 %v1206, %v1219
    %v1221 = vpop.f32.mrf.mxu0
    %v1222 = vadd.f32 %v1208, %v1221
    %1223 = vdwg.mxu0
    %1224 = vmatpush.bf16.msra.mxu0 %v913
    %1225 = vmatpush.bf16.msra.mxu0 %v912
    %1226 = vmatpush.bf16.msra.mxu0 %v911
    %1227 = vmatpush.bf16.msra.mxu0 %v910
    %1228 = vmatpush.bf16.msra.mxu0 %v909
    %1229 = vmatpush.bf16.msra.mxu0 %v908
    %1230 = vmatpush.bf16.msra.mxu0 %v907
    %1231 = vmatpush.bf16.msra.mxu0 %v906
    %1232 = vmatmul.bf16.gmra.mxu0 %v76
    %v1233 = vpop.f32.mrf.mxu0
    %v1234 = vadd.f32 %v1220, %v1233
    %v1235 = vpop.f32.mrf.mxu0
    %v1236 = vadd.f32 %v1222, %v1235
    %1237 = vdwg.mxu0
    %1238 = vmatpush.bf16.msra.mxu0 %v921
    %1239 = vmatpush.bf16.msra.mxu0 %v920
    %1240 = vmatpush.bf16.msra.mxu0 %v919
    %1241 = vmatpush.bf16.msra.mxu0 %v918
    %1242 = vmatpush.bf16.msra.mxu0 %v917
    %1243 = vmatpush.bf16.msra.mxu0 %v916
    %1244 = vmatpush.bf16.msra.mxu0 %v915
    %1245 = vmatpush.bf16.msra.mxu0 %v914
    %1246 = vmatmul.bf16.gmra.mxu0 %v77
    %v1247 = vpop.f32.mrf.mxu0
    %v1248 = vadd.f32 %v1234, %v1247
    %v1249 = vpop.f32.mrf.mxu0
    %v1250 = vadd.f32 %v1236, %v1249
    %1251 = vdwg.mxu0
    %v1252 = vld [vmem:[%s3] sm:$0xff]
    %v1253 = vld [vmem:[%s3 + $0x8] sm:$0xff]
    %v1254 = vadd.f32 %v1248, %v1252
    %v1255 = vadd.f32 %v1250, %v1253
    %1256 = vst [vmem:[%s4] sm:$0xff] %v1254
    %1257 = vst [vmem:[%s4 + $0x8] sm:$0xff] %v1255
    // Predicated region
    $region22: #{pedsleep_mae_forward.4} parent=1 // pred_check
      _
    $region23: #{pedsleep_mae_forward.4} parent=1 // pred_check_branch
      %1259 = sbr.rel (0) target = $region25
    $region24: #{pedsleep_mae_forward.4} parent=1 // pred_region
      _
    $region25: #{pedsleep_mae_forward.4} parent=1 // pred_fallthru
      _
    // Predicated region
    $region26: #{pedsleep_mae_forward.4} parent=1 // pred_check
      _
    $region27: #{pedsleep_mae_forward.4} parent=1 // pred_check_branch
      %1261 = sbr.rel (0) target = $region29
    $region28: #{pedsleep_mae_forward.4} parent=1 // pred_region
      _
    $region29: #{pedsleep_mae_forward.4} parent=1 // pred_fallthru
      _
    %1262 = vsyncpa [#allocation3], 1

// kernel: pedsleep_mae_forward.5
$region0: #{pedsleep_mae_forward.5}
  #allocation0 [shape = 'u32[]', space=smem, size = 0x4, offset = 0x4, fixed_abs, tag = 'smem constant byte address 0x4 - core index']
  #allocation1 [shape = 'u32[72,128]{1,0:T(1,128)}', space=vmem, size = 0x9000, scoped, tag = 'internal scratch']
  %s0 = inlined_call_operand.vmem [shape: f32[2,9,128], index: 0, kind: input, shape index: {}]
  %s1 = inlined_call_operand.vmem [shape: f32[1,128], index: 1, kind: input, shape index: {}]
  %s2 = inlined_call_operand.vmem [shape: f32[1,128], index: 2, kind: input, shape index: {}]
  %s3 = inlined_call_operand.hbm [shape: bf16[128,384], index: 3, kind: input, shape index: {}]
  %s4 = inlined_call_operand.vmem [shape: f32[1,384], index: 4, kind: input, shape index: {}]
  %s5 = inlined_call_operand.vmem [shape: bf16[128,128], index: 5, kind: input, shape index: {}]
  %s6 = inlined_call_operand.vmem [shape: f32[1,128], index: 6, kind: input, shape index: {}]
  %s7 = inlined_call_operand.vmem [shape: f32[1,128], index: 7, kind: input, shape index: {}]
  %s8 = inlined_call_operand.vmem [shape: f32[1,128], index: 8, kind: input, shape index: {}]
  %s9 = inlined_call_operand.vmem [shape: bf16[128,512], index: 9, kind: input, shape index: {}]
  %s10 = inlined_call_operand.vmem [shape: f32[1,512], index: 10, kind: input, shape index: {}]
  %s11 = inlined_call_operand.vmem [shape: bf16[512,128], index: 11, kind: input, shape index: {}]
  %s12 = inlined_call_operand.vmem [shape: f32[1,128], index: 12, kind: input, shape index: {}]
  %s13 = inlined_call_operand.vmem [shape: f32[1,128], index: 13, kind: input, shape index: {}]
  %s14 = inlined_call_operand.vmem [shape: f32[1,128], index: 14, kind: input, shape index: {}]
  %s15 = inlined_call_operand.hbm [shape: bf16[128,384], index: 15, kind: input, shape index: {}]
  %s16 = inlined_call_operand.vmem [shape: f32[1,384], index: 16, kind: input, shape index: {}]
  %s17 = inlined_call_operand.vmem [shape: bf16[128,128], index: 17, kind: input, shape index: {}]
  %s18 = inlined_call_operand.vmem [shape: f32[1,128], index: 18, kind: input, shape index: {}]
  %s19 = inlined_call_operand.vmem [shape: f32[1,128], index: 19, kind: input, shape index: {}]
  %s20 = inlined_call_operand.vmem [shape: f32[1,128], index: 20, kind: input, shape index: {}]
  %s21 = inlined_call_operand.vmem [shape: bf16[128,512], index: 21, kind: input, shape index: {}]
  %s22 = inlined_call_operand.vmem [shape: f32[1,512], index: 22, kind: input, shape index: {}]
  %s23 = inlined_call_operand.hbm [shape: bf16[512,128], index: 23, kind: input, shape index: {}]
  %s24 = inlined_call_operand.vmem [shape: f32[1,128], index: 24, kind: input, shape index: {}]
  %s25 = inlined_call_operand.vmem [shape: f32[1,128], index: 25, kind: input, shape index: {}]
  %s26 = inlined_call_operand.vmem [shape: f32[1,128], index: 26, kind: input, shape index: {}]
  %s27 = inlined_call_operand.vmem [shape: f32[2,9,128], index: 27, kind: output, shape index: {}]
  %s28 = sld [smem:[#allocation0]]
  $region153: #{pedsleep_mae_forward.5} parent=0
    _
  %s30 = ssub.s32 1, %s28
  %s31 = scalar_select 0, %s30, %s28
  $region1: #{pedsleep_mae_forward.5} parent=0
    #allocation2 [shape = 'u8[98304]{0}', space=vmem, size = 0x18000, scoped, tag = 'input window, operand 3, single buffered']
    #allocation3 [shape = 's32[2]{0}', space=sflag, size = 0x8, scoped, tag = 'scoped memory for pedsleep_mae_forward.5']
    #allocation4 [shape = 'u8[98304]{0}', space=vmem, size = 0x18000, scoped, tag = 'input window, operand 15, single buffered']
    #allocation5 [shape = 's32[1]{0}', space=sflag, size = 0x4, scoped, tag = 'scoped memory for pedsleep_mae_forward.5']
    #allocation6 [shape = 'u8[131072]{0}', space=vmem, size = 0x20000, scoped, tag = 'input window, operand 23, single buffered']
    %32 = vsyncpa [#allocation3], 0
    %33 = vsyncpa [#allocation5], 0
    loop: start=0, step=1, limit=4
    $region2: #{pedsleep_mae_forward.5} parent=1 // loop_pre_header
      _
    $region3: #{pedsleep_mae_forward.5} parent=1 // loop_header
      %s35 = sphi 0, %s39
      %p36 = scmp.ge.s32.totalorder %s35, 4
      %s45 = sphi 0, %s47
      %s48 = sphi 0, %s45
      %s49 = sphi 0, %s48
      %s65 = sphi 0, %s49
      %s69 = sphi 0, %s69
      %s71 = sphi 0, %s69
      %s72 = sphi 0, %s71
      %s86 = sphi 0, %s72
      %s90 = sphi 0, %s90
      %s92 = sphi 0, %s90
      %s93 = sphi 0, %s92
      %s107 = sphi 0, %s93
      %s111 = sphi 0, %s111
      %s113 = sphi 0, %s111
      %s114 = sphi 0, %s113
      %s128 = sphi 0, %s114
      %s132 = sphi 0, %s132
      %s134 = sphi 0, %s132
      %s135 = sphi 0, %s134
      %s149 = sphi 0, %s135
      %s153 = sphi 0, %s153
      %s155 = sphi 0, %s153
      %s156 = sphi 0, %s155
      %s170 = sphi 0, %s156
      %s174 = sphi 0, %s174
      %s176 = sphi 0, %s174
      %s177 = sphi 0, %s176
      %s191 = sphi 0, %s177
      %s195 = sphi 0, %s195
      %s197 = sphi 0, %s195
      %s198 = sphi 0, %s197
      %s212 = sphi 0, %s198
      %s216 = sphi 0, %s216
      %s218 = sphi 0, %s216
      %s219 = sphi 0, %s218
      %s233 = sphi 0, %s219
      %s237 = sphi 0, %s237
      %s239 = sphi 0, %s237
      %s240 = sphi 0, %s239
      %s254 = sphi 0, %s240
      %s258 = sphi 0, %s258
      %s260 = sphi 0, %s258
      %s261 = sphi 0, %s260
      %s275 = sphi 0, %s261
      %s279 = sphi 0, %s279
      %s281 = sphi 0, %s279
      %s282 = sphi 0, %s281
      %s296 = sphi 0, %s282
      %s300 = sphi 0, %s300
      %s302 = sphi 0, %s300
      %s303 = sphi 0, %s302
      %s317 = sphi 0, %s303
      %s321 = sphi 0, %s321
      %s323 = sphi 0, %s321
      %s324 = sphi 0, %s323
      %s338 = sphi 0, %s324
      %s342 = sphi 0, %s342
      %s344 = sphi 0, %s342
      %s345 = sphi 0, %s344
      %s359 = sphi 0, %s345
      %s363 = sphi 0, %s363
      %s365 = sphi 0, %s363
      %s366 = sphi 0, %s365
      %s380 = sphi 0, %s366
      %s384 = sphi 0, %s384
      %s386 = sphi 0, %s384
      %s387 = sphi 0, %s386
      %s401 = sphi 0, %s387
      %s405 = sphi 0, %s405
      %s407 = sphi 0, %s405
      %s408 = sphi 0, %s407
      %s422 = sphi 0, %s408
      %s426 = sphi 0, %s426
      %s428 = sphi 0, %s426
      %s429 = sphi 0, %s428
      %s443 = sphi 0, %s429
      %s447 = sphi 0, %s447
      %s449 = sphi 0, %s447
      %s450 = sphi 0, %s449
      %s464 = sphi 0, %s450
      %s468 = sphi 0, %s468
      %s470 = sphi 0, %s468
      %s471 = sphi 0, %s470
      %s485 = sphi 0, %s471
      %s489 = sphi 0, %s489
      %s491 = sphi 0, %s489
      %s492 = sphi 0, %s491
      %s506 = sphi 0, %s492
      %s510 = sphi 0, %s510
      %s512 = sphi 0, %s510
      %s513 = sphi 0, %s512
      %s527 = sphi 0, %s513
      %s531 = sphi 0, %s531
      %s533 = sphi 0, %s531
      %s534 = sphi 0, %s533
      %s548 = sphi 0, %s534
      %s552 = sphi 0, %s552
      %s554 = sphi 0, %s552
      %s555 = sphi 0, %s554
      %s569 = sphi 0, %s555
      %s573 = sphi 0, %s573
      %s575 = sphi 0, %s573
      %s576 = sphi 0, %s575
      %s590 = sphi 0, %s576
      %s594 = sphi 0, %s594
      %s596 = sphi 0, %s594
      %s597 = sphi 0, %s596
      %s611 = sphi 0, %s597
      %s617 = sphi 0, %s619
      %s620 = sphi 0, %s617
      %s621 = sphi 0, %s620
      %s637 = sphi 0, %s621
    $region4: #{pedsleep_mae_forward.5} parent=1 // loop_header_branch
      %38 = sbr.rel (%p36) target = $region8
    $region5: #{pedsleep_mae_forward.5} parent=1 // loop_body
      %s40 = ssub.s32 %s35, 1
      %s41 = ssub.s32 %s35, 2
      %s42 = sadd.s32 %s35, 1
      %s43 = ssub.s32 %s35, %s42
      %p44 = scmp.eq.s32.totalorder %s43, 0
      %s46 = sadd.s32 %s45, 1
      %s47 = scalar_select %p44, %s45, %s46
      %p50 = pneg %p44
      %p51 = scmp.eq.s32.totalorder %s35, 1
      %p52 = por %p50, %p51
      %p53 = scmp.ne.s32.totalorder %s45, %s48
      %p54 = scmp.eq.s32.totalorder %s35, 0
      %p55 = por %p53, %p54
      %p56 = scmp.ne.s32.totalorder %s45, %s48
      %p57 = scmp.eq.s32.totalorder %s40, 1
      %p58 = por %p56, %p57
      %p59 = scmp.ne.s32.totalorder %s48, %s49
      %p60 = scmp.eq.s32.totalorder %s40, 0
      %p61 = por %p59, %p60
      %p62 = scmp.ne.s32.totalorder %s48, %s49
      %p63 = scmp.eq.s32.totalorder %s41, 1
      %p64 = por %p62, %p63
      %p66 = scmp.ne.s32.totalorder %s49, %s65
      %p67 = scmp.eq.s32.totalorder %s41, 0
      %p68 = por %p66, %p67
      %s70 = sadd.s32 %s69, 1
      %p73 = scmp.eq.s32.totalorder %s35, 1
      %p74 = scmp.ne.s32.totalorder %s69, %s71
      %p75 = scmp.eq.s32.totalorder %s35, 0
      %p76 = por %p74, %p75
      %p77 = scmp.ne.s32.totalorder %s69, %s71
      %p78 = scmp.eq.s32.totalorder %s40, 1
      %p79 = por %p77, %p78
      %p80 = scmp.ne.s32.totalorder %s71, %s72
      %p81 = scmp.eq.s32.totalorder %s40, 0
      %p82 = por %p80, %p81
      %p83 = scmp.ne.s32.totalorder %s71, %s72
      %p84 = scmp.eq.s32.totalorder %s41, 1
      %p85 = por %p83, %p84
      %p87 = scmp.ne.s32.totalorder %s72, %s86
      %p88 = scmp.eq.s32.totalorder %s41, 0
      %p89 = por %p87, %p88
      %s91 = sadd.s32 %s90, 1
      %p94 = scmp.eq.s32.totalorder %s35, 1
      %p95 = scmp.ne.s32.totalorder %s90, %s92
      %p96 = scmp.eq.s32.totalorder %s35, 0
      %p97 = por %p95, %p96
      %p98 = scmp.ne.s32.totalorder %s90, %s92
      %p99 = scmp.eq.s32.totalorder %s40, 1
      %p100 = por %p98, %p99
      %p101 = scmp.ne.s32.totalorder %s92, %s93
      %p102 = scmp.eq.s32.totalorder %s40, 0
      %p103 = por %p101, %p102
      %p104 = scmp.ne.s32.totalorder %s92, %s93
      %p105 = scmp.eq.s32.totalorder %s41, 1
      %p106 = por %p104, %p105
      %p108 = scmp.ne.s32.totalorder %s93, %s107
      %p109 = scmp.eq.s32.totalorder %s41, 0
      %p110 = por %p108, %p109
      %s112 = sadd.s32 %s111, 1
      %p115 = scmp.eq.s32.totalorder %s35, 1
      %p116 = scmp.ne.s32.totalorder %s111, %s113
      %p117 = scmp.eq.s32.totalorder %s35, 0
      %p118 = por %p116, %p117
      %p119 = scmp.ne.s32.totalorder %s111, %s113
      %p120 = scmp.eq.s32.totalorder %s40, 1
      %p121 = por %p119, %p120
      %p122 = scmp.ne.s32.totalorder %s113, %s114
      %p123 = scmp.eq.s32.totalorder %s40, 0
      %p124 = por %p122, %p123
      %p125 = scmp.ne.s32.totalorder %s113, %s114
      %p126 = scmp.eq.s32.totalorder %s41, 1
      %p127 = por %p125, %p126
      %p129 = scmp.ne.s32.totalorder %s114, %s128
      %p130 = scmp.eq.s32.totalorder %s41, 0
      %p131 = por %p129, %p130
      %s133 = sadd.s32 %s132, 1
      %p136 = scmp.eq.s32.totalorder %s35, 1
      %p137 = scmp.ne.s32.totalorder %s132, %s134
      %p138 = scmp.eq.s32.totalorder %s35, 0
      %p139 = por %p137, %p138
      %p140 = scmp.ne.s32.totalorder %s132, %s134
      %p141 = scmp.eq.s32.totalorder %s40, 1
      %p142 = por %p140, %p141
      %p143 = scmp.ne.s32.totalorder %s134, %s135
      %p144 = scmp.eq.s32.totalorder %s40, 0
      %p145 = por %p143, %p144
      %p146 = scmp.ne.s32.totalorder %s134, %s135
      %p147 = scmp.eq.s32.totalorder %s41, 1
      %p148 = por %p146, %p147
      %p150 = scmp.ne.s32.totalorder %s135, %s149
      %p151 = scmp.eq.s32.totalorder %s41, 0
      %p152 = por %p150, %p151
      %s154 = sadd.s32 %s153, 1
      %p157 = scmp.eq.s32.totalorder %s35, 1
      %p158 = scmp.ne.s32.totalorder %s153, %s155
      %p159 = scmp.eq.s32.totalorder %s35, 0
      %p160 = por %p158, %p159
      %p161 = scmp.ne.s32.totalorder %s153, %s155
      %p162 = scmp.eq.s32.totalorder %s40, 1
      %p163 = por %p161, %p162
      %p164 = scmp.ne.s32.totalorder %s155, %s156
      %p165 = scmp.eq.s32.totalorder %s40, 0
      %p166 = por %p164, %p165
      %p167 = scmp.ne.s32.totalorder %s155, %s156
      %p168 = scmp.eq.s32.totalorder %s41, 1
      %p169 = por %p167, %p168
      %p171 = scmp.ne.s32.totalorder %s156, %s170
      %p172 = scmp.eq.s32.totalorder %s41, 0
      %p173 = por %p171, %p172
      %s175 = sadd.s32 %s174, 1
      %p178 = scmp.eq.s32.totalorder %s35, 1
      %p179 = scmp.ne.s32.totalorder %s174, %s176
      %p180 = scmp.eq.s32.totalorder %s35, 0
      %p181 = por %p179, %p180
      %p182 = scmp.ne.s32.totalorder %s174, %s176
      %p183 = scmp.eq.s32.totalorder %s40, 1
      %p184 = por %p182, %p183
      %p185 = scmp.ne.s32.totalorder %s176, %s177
      %p186 = scmp.eq.s32.totalorder %s40, 0
      %p187 = por %p185, %p186
      %p188 = scmp.ne.s32.totalorder %s176, %s177
      %p189 = scmp.eq.s32.totalorder %s41, 1
      %p190 = por %p188, %p189
      %p192 = scmp.ne.s32.totalorder %s177, %s191
      %p193 = scmp.eq.s32.totalorder %s41, 0
      %p194 = por %p192, %p193
      %s196 = sadd.s32 %s195, 1
      %p199 = scmp.eq.s32.totalorder %s35, 1
      %p200 = scmp.ne.s32.totalorder %s195, %s197
      %p201 = scmp.eq.s32.totalorder %s35, 0
      %p202 = por %p200, %p201
      %p203 = scmp.ne.s32.totalorder %s195, %s197
      %p204 = scmp.eq.s32.totalorder %s40, 1
      %p205 = por %p203, %p204
      %p206 = scmp.ne.s32.totalorder %s197, %s198
      %p207 = scmp.eq.s32.totalorder %s40, 0
      %p208 = por %p206, %p207
      %p209 = scmp.ne.s32.totalorder %s197, %s198
      %p210 = scmp.eq.s32.totalorder %s41, 1
      %p211 = por %p209, %p210
      %p213 = scmp.ne.s32.totalorder %s198, %s212
      %p214 = scmp.eq.s32.totalorder %s41, 0
      %p215 = por %p213, %p214
      %s217 = sadd.s32 %s216, 1
      %p220 = scmp.eq.s32.totalorder %s35, 1
      %p221 = scmp.ne.s32.totalorder %s216, %s218
      %p222 = scmp.eq.s32.totalorder %s35, 0
      %p223 = por %p221, %p222
      %p224 = scmp.ne.s32.totalorder %s216, %s218
      %p225 = scmp.eq.s32.totalorder %s40, 1
      %p226 = por %p224, %p225
      %p227 = scmp.ne.s32.totalorder %s218, %s219
      %p228 = scmp.eq.s32.totalorder %s40, 0
      %p229 = por %p227, %p228
      %p230 = scmp.ne.s32.totalorder %s218, %s219
      %p231 = scmp.eq.s32.totalorder %s41, 1
      %p232 = por %p230, %p231
      %p234 = scmp.ne.s32.totalorder %s219, %s233
      %p235 = scmp.eq.s32.totalorder %s41, 0
      %p236 = por %p234, %p235
      %s238 = sadd.s32 %s237, 1
      %p241 = scmp.eq.s32.totalorder %s35, 1
      %p242 = scmp.ne.s32.totalorder %s237, %s239
      %p243 = scmp.eq.s32.totalorder %s35, 0
      %p244 = por %p242, %p243
      %p245 = scmp.ne.s32.totalorder %s237, %s239
      %p246 = scmp.eq.s32.totalorder %s40, 1
      %p247 = por %p245, %p246
      %p248 = scmp.ne.s32.totalorder %s239, %s240
      %p249 = scmp.eq.s32.totalorder %s40, 0
      %p250 = por %p248, %p249
      %p251 = scmp.ne.s32.totalorder %s239, %s240
      %p252 = scmp.eq.s32.totalorder %s41, 1
      %p253 = por %p251, %p252
      %p255 = scmp.ne.s32.totalorder %s240, %s254
      %p256 = scmp.eq.s32.totalorder %s41, 0
      %p257 = por %p255, %p256
      %s259 = sadd.s32 %s258, 1
      %p262 = scmp.eq.s32.totalorder %s35, 1
      %p263 = scmp.ne.s32.totalorder %s258, %s260
      %p264 = scmp.eq.s32.totalorder %s35, 0
      %p265 = por %p263, %p264
      %p266 = scmp.ne.s32.totalorder %s258, %s260
      %p267 = scmp.eq.s32.totalorder %s40, 1
      %p268 = por %p266, %p267
      %p269 = scmp.ne.s32.totalorder %s260, %s261
      %p270 = scmp.eq.s32.totalorder %s40, 0
      %p271 = por %p269, %p270
      %p272 = scmp.ne.s32.totalorder %s260, %s261
      %p273 = scmp.eq.s32.totalorder %s41, 1
      %p274 = por %p272, %p273
      %p276 = scmp.ne.s32.totalorder %s261, %s275
      %p277 = scmp.eq.s32.totalorder %s41, 0
      %p278 = por %p276, %p277
      %s280 = sadd.s32 %s279, 1
      %p283 = scmp.eq.s32.totalorder %s35, 1
      %p284 = scmp.ne.s32.totalorder %s279, %s281
      %p285 = scmp.eq.s32.totalorder %s35, 0
      %p286 = por %p284, %p285
      %p287 = scmp.ne.s32.totalorder %s279, %s281
      %p288 = scmp.eq.s32.totalorder %s40, 1
      %p289 = por %p287, %p288
      %p290 = scmp.ne.s32.totalorder %s281, %s282
      %p291 = scmp.eq.s32.totalorder %s40, 0
      %p292 = por %p290, %p291
      %p293 = scmp.ne.s32.totalorder %s281, %s282
      %p294 = scmp.eq.s32.totalorder %s41, 1
      %p295 = por %p293, %p294
      %p297 = scmp.ne.s32.totalorder %s282, %s296
      %p298 = scmp.eq.s32.totalorder %s41, 0
      %p299 = por %p297, %p298
      %s301 = sadd.s32 %s300, 1
      %p304 = scmp.eq.s32.totalorder %s35, 1
      %p305 = scmp.ne.s32.totalorder %s300, %s302
      %p306 = scmp.eq.s32.totalorder %s35, 0
      %p307 = por %p305, %p306
      %p308 = scmp.ne.s32.totalorder %s300, %s302
      %p309 = scmp.eq.s32.totalorder %s40, 1
      %p310 = por %p308, %p309
      %p311 = scmp.ne.s32.totalorder %s302, %s303
      %p312 = scmp.eq.s32.totalorder %s40, 0
      %p313 = por %p311, %p312
      %p314 = scmp.ne.s32.totalorder %s302, %s303
      %p315 = scmp.eq.s32.totalorder %s41, 1
      %p316 = por %p314, %p315
      %p318 = scmp.ne.s32.totalorder %s303, %s317
      %p319 = scmp.eq.s32.totalorder %s41, 0
      %p320 = por %p318, %p319
      %s322 = sadd.s32 %s321, 1
      %p325 = scmp.eq.s32.totalorder %s35, 1
      %p326 = scmp.ne.s32.totalorder %s321, %s323
      %p327 = scmp.eq.s32.totalorder %s35, 0
      %p328 = por %p326, %p327
      %p329 = scmp.ne.s32.totalorder %s321, %s323
      %p330 = scmp.eq.s32.totalorder %s40, 1
      %p331 = por %p329, %p330
      %p332 = scmp.ne.s32.totalorder %s323, %s324
      %p333 = scmp.eq.s32.totalorder %s40, 0
      %p334 = por %p332, %p333
      %p335 = scmp.ne.s32.totalorder %s323, %s324
      %p336 = scmp.eq.s32.totalorder %s41, 1
      %p337 = por %p335, %p336
      %p339 = scmp.ne.s32.totalorder %s324, %s338
      %p340 = scmp.eq.s32.totalorder %s41, 0
      %p341 = por %p339, %p340
      %s343 = sadd.s32 %s342, 1
      %p346 = scmp.eq.s32.totalorder %s35, 1
      %p347 = scmp.ne.s32.totalorder %s342, %s344
      %p348 = scmp.eq.s32.totalorder %s35, 0
      %p349 = por %p347, %p348
      %p350 = scmp.ne.s32.totalorder %s342, %s344
      %p351 = scmp.eq.s32.totalorder %s40, 1
      %p352 = por %p350, %p351
      %p353 = scmp.ne.s32.totalorder %s344, %s345
      %p354 = scmp.eq.s32.totalorder %s40, 0
      %p355 = por %p353, %p354
      %p356 = scmp.ne.s32.totalorder %s344, %s345
      %p357 = scmp.eq.s32.totalorder %s41, 1
      %p358 = por %p356, %p357
      %p360 = scmp.ne.s32.totalorder %s345, %s359
      %p361 = scmp.eq.s32.totalorder %s41, 0
      %p362 = por %p360, %p361
      %s364 = sadd.s32 %s363, 1
      %p367 = scmp.eq.s32.totalorder %s35, 1
      %p368 = scmp.ne.s32.totalorder %s363, %s365
      %p369 = scmp.eq.s32.totalorder %s35, 0
      %p370 = por %p368, %p369
      %p371 = scmp.ne.s32.totalorder %s363, %s365
      %p372 = scmp.eq.s32.totalorder %s40, 1
      %p373 = por %p371, %p372
      %p374 = scmp.ne.s32.totalorder %s365, %s366
      %p375 = scmp.eq.s32.totalorder %s40, 0
      %p376 = por %p374, %p375
      %p377 = scmp.ne.s32.totalorder %s365, %s366
      %p378 = scmp.eq.s32.totalorder %s41, 1
      %p379 = por %p377, %p378
      %p381 = scmp.ne.s32.totalorder %s366, %s380
      %p382 = scmp.eq.s32.totalorder %s41, 0
      %p383 = por %p381, %p382
      %s385 = sadd.s32 %s384, 1
      %p388 = scmp.eq.s32.totalorder %s35, 1
      %p389 = scmp.ne.s32.totalorder %s384, %s386
      %p390 = scmp.eq.s32.totalorder %s35, 0
      %p391 = por %p389, %p390
      %p392 = scmp.ne.s32.totalorder %s384, %s386
      %p393 = scmp.eq.s32.totalorder %s40, 1
      %p394 = por %p392, %p393
      %p395 = scmp.ne.s32.totalorder %s386, %s387
      %p396 = scmp.eq.s32.totalorder %s40, 0
      %p397 = por %p395, %p396
      %p398 = scmp.ne.s32.totalorder %s386, %s387
      %p399 = scmp.eq.s32.totalorder %s41, 1
      %p400 = por %p398, %p399
      %p402 = scmp.ne.s32.totalorder %s387, %s401
      %p403 = scmp.eq.s32.totalorder %s41, 0
      %p404 = por %p402, %p403
      %s406 = sadd.s32 %s405, 1
      %p409 = scmp.eq.s32.totalorder %s35, 1
      %p410 = scmp.ne.s32.totalorder %s405, %s407
      %p411 = scmp.eq.s32.totalorder %s35, 0
      %p412 = por %p410, %p411
      %p413 = scmp.ne.s32.totalorder %s405, %s407
      %p414 = scmp.eq.s32.totalorder %s40, 1
      %p415 = por %p413, %p414
      %p416 = scmp.ne.s32.totalorder %s407, %s408
      %p417 = scmp.eq.s32.totalorder %s40, 0
      %p418 = por %p416, %p417
      %p419 = scmp.ne.s32.totalorder %s407, %s408
      %p420 = scmp.eq.s32.totalorder %s41, 1
      %p421 = por %p419, %p420
      %p423 = scmp.ne.s32.totalorder %s408, %s422
      %p424 = scmp.eq.s32.totalorder %s41, 0
      %p425 = por %p423, %p424
      %s427 = sadd.s32 %s426, 1
      %p430 = scmp.eq.s32.totalorder %s35, 1
      %p431 = scmp.ne.s32.totalorder %s426, %s428
      %p432 = scmp.eq.s32.totalorder %s35, 0
      %p433 = por %p431, %p432
      %p434 = scmp.ne.s32.totalorder %s426, %s428
      %p435 = scmp.eq.s32.totalorder %s40, 1
      %p436 = por %p434, %p435
      %p437 = scmp.ne.s32.totalorder %s428, %s429
      %p438 = scmp.eq.s32.totalorder %s40, 0
      %p439 = por %p437, %p438
      %p440 = scmp.ne.s32.totalorder %s428, %s429
      %p441 = scmp.eq.s32.totalorder %s41, 1
      %p442 = por %p440, %p441
      %p444 = scmp.ne.s32.totalorder %s429, %s443
      %p445 = scmp.eq.s32.totalorder %s41, 0
      %p446 = por %p444, %p445
      %s448 = sadd.s32 %s447, 1
      %p451 = scmp.eq.s32.totalorder %s35, 1
      %p452 = scmp.ne.s32.totalorder %s447, %s449
      %p453 = scmp.eq.s32.totalorder %s35, 0
      %p454 = por %p452, %p453
      %p455 = scmp.ne.s32.totalorder %s447, %s449
      %p456 = scmp.eq.s32.totalorder %s40, 1
      %p457 = por %p455, %p456
      %p458 = scmp.ne.s32.totalorder %s449, %s450
      %p459 = scmp.eq.s32.totalorder %s40, 0
      %p460 = por %p458, %p459
      %p461 = scmp.ne.s32.totalorder %s449, %s450
      %p462 = scmp.eq.s32.totalorder %s41, 1
      %p463 = por %p461, %p462
      %p465 = scmp.ne.s32.totalorder %s450, %s464
      %p466 = scmp.eq.s32.totalorder %s41, 0
      %p467 = por %p465, %p466
      %s469 = sadd.s32 %s468, 1
      %p472 = scmp.eq.s32.totalorder %s35, 1
      %p473 = scmp.ne.s32.totalorder %s468, %s470
      %p474 = scmp.eq.s32.totalorder %s35, 0
      %p475 = por %p473, %p474
      %p476 = scmp.ne.s32.totalorder %s468, %s470
      %p477 = scmp.eq.s32.totalorder %s40, 1
      %p478 = por %p476, %p477
      %p479 = scmp.ne.s32.totalorder %s470, %s471
      %p480 = scmp.eq.s32.totalorder %s40, 0
      %p481 = por %p479, %p480
      %p482 = scmp.ne.s32.totalorder %s470, %s471
      %p483 = scmp.eq.s32.totalorder %s41, 1
      %p484 = por %p482, %p483
      %p486 = scmp.ne.s32.totalorder %s471, %s485
      %p487 = scmp.eq.s32.totalorder %s41, 0
      %p488 = por %p486, %p487
      %s490 = sadd.s32 %s489, 1
      %p493 = scmp.eq.s32.totalorder %s35, 1
      %p494 = scmp.ne.s32.totalorder %s489, %s491
      %p495 = scmp.eq.s32.totalorder %s35, 0
      %p496 = por %p494, %p495
      %p497 = scmp.ne.s32.totalorder %s489, %s491
      %p498 = scmp.eq.s32.totalorder %s40, 1
      %p499 = por %p497, %p498
      %p500 = scmp.ne.s32.totalorder %s491, %s492
      %p501 = scmp.eq.s32.totalorder %s40, 0
      %p502 = por %p500, %p501
      %p503 = scmp.ne.s32.totalorder %s491, %s492
      %p504 = scmp.eq.s32.totalorder %s41, 1
      %p505 = por %p503, %p504
      %p507 = scmp.ne.s32.totalorder %s492, %s506
      %p508 = scmp.eq.s32.totalorder %s41, 0
      %p509 = por %p507, %p508
      %s511 = sadd.s32 %s510, 1
      %p514 = scmp.eq.s32.totalorder %s35, 1
      %p515 = scmp.ne.s32.totalorder %s510, %s512
      %p516 = scmp.eq.s32.totalorder %s35, 0
      %p517 = por %p515, %p516
      %p518 = scmp.ne.s32.totalorder %s510, %s512
      %p519 = scmp.eq.s32.totalorder %s40, 1
      %p520 = por %p518, %p519
      %p521 = scmp.ne.s32.totalorder %s512, %s513
      %p522 = scmp.eq.s32.totalorder %s40, 0
      %p523 = por %p521, %p522
      %p524 = scmp.ne.s32.totalorder %s512, %s513
      %p525 = scmp.eq.s32.totalorder %s41, 1
      %p526 = por %p524, %p525
      %p528 = scmp.ne.s32.totalorder %s513, %s527
      %p529 = scmp.eq.s32.totalorder %s41, 0
      %p530 = por %p528, %p529
      %s532 = sadd.s32 %s531, 1
      %p535 = scmp.eq.s32.totalorder %s35, 1
      %p536 = scmp.ne.s32.totalorder %s531, %s533
      %p537 = scmp.eq.s32.totalorder %s35, 0
      %p538 = por %p536, %p537
      %p539 = scmp.ne.s32.totalorder %s531, %s533
      %p540 = scmp.eq.s32.totalorder %s40, 1
      %p541 = por %p539, %p540
      %p542 = scmp.ne.s32.totalorder %s533, %s534
      %p543 = scmp.eq.s32.totalorder %s40, 0
      %p544 = por %p542, %p543
      %p545 = scmp.ne.s32.totalorder %s533, %s534
      %p546 = scmp.eq.s32.totalorder %s41, 1
      %p547 = por %p545, %p546
      %p549 = scmp.ne.s32.totalorder %s534, %s548
      %p550 = scmp.eq.s32.totalorder %s41, 0
      %p551 = por %p549, %p550
      %s553 = sadd.s32 %s552, 1
      %p556 = scmp.eq.s32.totalorder %s35, 1
      %p557 = scmp.ne.s32.totalorder %s552, %s554
      %p558 = scmp.eq.s32.totalorder %s35, 0
      %p559 = por %p557, %p558
      %p560 = scmp.ne.s32.totalorder %s552, %s554
      %p561 = scmp.eq.s32.totalorder %s40, 1
      %p562 = por %p560, %p561
      %p563 = scmp.ne.s32.totalorder %s554, %s555
      %p564 = scmp.eq.s32.totalorder %s40, 0
      %p565 = por %p563, %p564
      %p566 = scmp.ne.s32.totalorder %s554, %s555
      %p567 = scmp.eq.s32.totalorder %s41, 1
      %p568 = por %p566, %p567
      %p570 = scmp.ne.s32.totalorder %s555, %s569
      %p571 = scmp.eq.s32.totalorder %s41, 0
      %p572 = por %p570, %p571
      %s574 = sadd.s32 %s573, 1
      %p577 = scmp.eq.s32.totalorder %s35, 1
      %p578 = scmp.ne.s32.totalorder %s573, %s575
      %p579 = scmp.eq.s32.totalorder %s35, 0
      %p580 = por %p578, %p579
      %p581 = scmp.ne.s32.totalorder %s573, %s575
      %p582 = scmp.eq.s32.totalorder %s40, 1
      %p583 = por %p581, %p582
      %p584 = scmp.ne.s32.totalorder %s575, %s576
      %p585 = scmp.eq.s32.totalorder %s40, 0
      %p586 = por %p584, %p585
      %p587 = scmp.ne.s32.totalorder %s575, %s576
      %p588 = scmp.eq.s32.totalorder %s41, 1
      %p589 = por %p587, %p588
      %p591 = scmp.ne.s32.totalorder %s576, %s590
      %p592 = scmp.eq.s32.totalorder %s41, 0
      %p593 = por %p591, %p592
      %s595 = sadd.s32 %s594, 1
      %p598 = scmp.eq.s32.totalorder %s35, 1
      %p599 = scmp.ne.s32.totalorder %s594, %s596
      %p600 = scmp.eq.s32.totalorder %s35, 0
      %p601 = por %p599, %p600
      %p602 = scmp.ne.s32.totalorder %s594, %s596
      %p603 = scmp.eq.s32.totalorder %s40, 1
      %p604 = por %p602, %p603
      %p605 = scmp.ne.s32.totalorder %s596, %s597
      %p606 = scmp.eq.s32.totalorder %s40, 0
      %p607 = por %p605, %p606
      %p608 = scmp.ne.s32.totalorder %s596, %s597
      %p609 = scmp.eq.s32.totalorder %s41, 1
      %p610 = por %p608, %p609
      %p612 = scmp.ne.s32.totalorder %s597, %s611
      %p613 = scmp.eq.s32.totalorder %s41, 0
      %p614 = por %p612, %p613
      %s615 = ssub.s32 %s35, %s42
      %p616 = scmp.eq.s32.totalorder %s615, 0
      %s618 = sadd.s32 %s617, 1
      %s619 = scalar_select %p616, %s617, %s618
      %p622 = pneg %p616
      %p623 = scmp.eq.s32.totalorder %s35, 1
      %p624 = por %p622, %p623
      %p625 = scmp.ne.s32.totalorder %s617, %s620
      %p626 = scmp.eq.s32.totalorder %s35, 0
      %p627 = por %p625, %p626
      %p628 = scmp.ne.s32.totalorder %s617, %s620
      %p629 = scmp.eq.s32.totalorder %s40, 1
      %p630 = por %p628, %p629
      %p631 = scmp.ne.s32.totalorder %s620, %s621
      %p632 = scmp.eq.s32.totalorder %s40, 0
      %p633 = por %p631, %p632
      %p634 = scmp.ne.s32.totalorder %s620, %s621
      %p635 = scmp.eq.s32.totalorder %s41, 1
      %p636 = por %p634, %p635
      %p638 = scmp.ne.s32.totalorder %s621, %s637
      %p639 = scmp.eq.s32.totalorder %s41, 0
      %p640 = por %p638, %p639
      %p641 = scmp.le.s32.totalorder 1, %s35
      %p642 = scmp.lt.s32.totalorder %s35, 3
      %p643 = pnand %p641, %p642
      %p644 = pneg %p643
      // Predicated region
      $region9: #{pedsleep_mae_forward.5} parent=5 // pred_check
        _
      $region10: #{pedsleep_mae_forward.5} parent=5 // pred_check_branch
        %646 = sbr.rel (%p643) target = $region12
      $region11: #{pedsleep_mae_forward.5} parent=5 // pred_region
        %s647 = ssub.s32 %s35, 1
        // Predicated region
        $region13: #{pedsleep_mae_forward.5} parent=11 // pred_check
          %p648 = pneg %p82
        $region14: #{pedsleep_mae_forward.5} parent=11 // pred_check_branch
          %650 = sbr.rel (%p648) target = $region16
        $region15: #{pedsleep_mae_forward.5} parent=11 // pred_region
          _
        $region16: #{pedsleep_mae_forward.5} parent=11 // pred_fallthru
          _
        // Predicated region
        $region17: #{pedsleep_mae_forward.5} parent=11 // pred_check
          %p651 = pneg %p103
        $region18: #{pedsleep_mae_forward.5} parent=11 // pred_check_branch
          %653 = sbr.rel (%p651) target = $region20
        $region19: #{pedsleep_mae_forward.5} parent=11 // pred_region
          _
        $region20: #{pedsleep_mae_forward.5} parent=11 // pred_fallthru
          _
        // Predicated region
        $region21: #{pedsleep_mae_forward.5} parent=11 // pred_check
          %p654 = pneg %p124
        $region22: #{pedsleep_mae_forward.5} parent=11 // pred_check_branch
          %656 = sbr.rel (%p654) target = $region24
        $region23: #{pedsleep_mae_forward.5} parent=11 // pred_region
          %658 = vsyncadd [#allocation3], 0
          %s659 = sshll.u32 %s3, 4
          %s660 = int_to_ptr.hbm [resolvable:$true] %s659
          %s661 = sshll.u32 [#allocation2], 4
          %s662 = int_to_ptr.vmem [resolvable:$true] %s661
          %667 = dma.hbm_to_vmem [thread:$0]  %s660, 3072, %s662, [#allocation3], 192, 192, 12
        $region24: #{pedsleep_mae_forward.5} parent=11 // pred_fallthru
          _
        // Predicated region
        $region25: #{pedsleep_mae_forward.5} parent=11 // pred_check
          %p668 = pneg %p145
        $region26: #{pedsleep_mae_forward.5} parent=11 // pred_check_branch
          %670 = sbr.rel (%p668) target = $region28
        $region27: #{pedsleep_mae_forward.5} parent=11 // pred_region
          _
        $region28: #{pedsleep_mae_forward.5} parent=11 // pred_fallthru
          _
        // Predicated region
        $region29: #{pedsleep_mae_forward.5} parent=11 // pred_check
          %p671 = pneg %p166
        $region30: #{pedsleep_mae_forward.5} parent=11 // pred_check_branch
          %673 = sbr.rel (%p671) target = $region32
        $region31: #{pedsleep_mae_forward.5} parent=11 // pred_region
          _
        $region32: #{pedsleep_mae_forward.5} parent=11 // pred_fallthru
          _
        // Predicated region
        $region33: #{pedsleep_mae_forward.5} parent=11 // pred_check
          %p674 = pneg %p187
        $region34: #{pedsleep_mae_forward.5} parent=11 // pred_check_branch
          %676 = sbr.rel (%p674) target = $region36
        $region35: #{pedsleep_mae_forward.5} parent=11 // pred_region
          _
        $region36: #{pedsleep_mae_forward.5} parent=11 // pred_fallthru
          _
        // Predicated region
        $region37: #{pedsleep_mae_forward.5} parent=11 // pred_check
          %p677 = pneg %p208
        $region38: #{pedsleep_mae_forward.5} parent=11 // pred_check_branch
          %679 = sbr.rel (%p677) target = $region40
        $region39: #{pedsleep_mae_forward.5} parent=11 // pred_region
          _
        $region40: #{pedsleep_mae_forward.5} parent=11 // pred_fallthru
          _
        // Predicated region
        $region41: #{pedsleep_mae_forward.5} parent=11 // pred_check
          %p680 = pneg %p229
        $region42: #{pedsleep_mae_forward.5} parent=11 // pred_check_branch
          %682 = sbr.rel (%p680) target = $region44
        $region43: #{pedsleep_mae_forward.5} parent=11 // pred_region
          _
        $region44: #{pedsleep_mae_forward.5} parent=11 // pred_fallthru
          _
        // Predicated region
        $region45: #{pedsleep_mae_forward.5} parent=11 // pred_check
          %p683 = pneg %p250
        $region46: #{pedsleep_mae_forward.5} parent=11 // pred_check_branch
          %685 = sbr.rel (%p683) target = $region48
        $region47: #{pedsleep_mae_forward.5} parent=11 // pred_region
          _
        $region48: #{pedsleep_mae_forward.5} parent=11 // pred_fallthru
          _
        // Predicated region
        $region49: #{pedsleep_mae_forward.5} parent=11 // pred_check
          %p686 = pneg %p271
        $region50: #{pedsleep_mae_forward.5} parent=11 // pred_check_branch
          %688 = sbr.rel (%p686) target = $region52
        $region51: #{pedsleep_mae_forward.5} parent=11 // pred_region
          _
        $region52: #{pedsleep_mae_forward.5} parent=11 // pred_fallthru
          _
        // Predicated region
        $region53: #{pedsleep_mae_forward.5} parent=11 // pred_check
          %p689 = pneg %p292
        $region54: #{pedsleep_mae_forward.5} parent=11 // pred_check_branch
          %691 = sbr.rel (%p689) target = $region56
        $region55: #{pedsleep_mae_forward.5} parent=11 // pred_region
          _
        $region56: #{pedsleep_mae_forward.5} parent=11 // pred_fallthru
          _
        // Predicated region
        $region57: #{pedsleep_mae_forward.5} parent=11 // pred_check
          %p692 = pneg %p313
        $region58: #{pedsleep_mae_forward.5} parent=11 // pred_check_branch
          %694 = sbr.rel (%p692) target = $region60
        $region59: #{pedsleep_mae_forward.5} parent=11 // pred_region
          _
        $region60: #{pedsleep_mae_forward.5} parent=11 // pred_fallthru
          _
        // Predicated region
        $region61: #{pedsleep_mae_forward.5} parent=11 // pred_check
          %p695 = pneg %p334
        $region62: #{pedsleep_mae_forward.5} parent=11 // pred_check_branch
          %697 = sbr.rel (%p695) target = $region64
        $region63: #{pedsleep_mae_forward.5} parent=11 // pred_region
          _
        $region64: #{pedsleep_mae_forward.5} parent=11 // pred_fallthru
          _
        // Predicated region
        $region65: #{pedsleep_mae_forward.5} parent=11 // pred_check
          %p698 = pneg %p355
        $region66: #{pedsleep_mae_forward.5} parent=11 // pred_check_branch
          %700 = sbr.rel (%p698) target = $region68
        $region67: #{pedsleep_mae_forward.5} parent=11 // pred_region
          _
        $region68: #{pedsleep_mae_forward.5} parent=11 // pred_fallthru
          _
        // Predicated region
        $region69: #{pedsleep_mae_forward.5} parent=11 // pred_check
          %p701 = pneg %p376
        $region70: #{pedsleep_mae_forward.5} parent=11 // pred_check_branch
          %703 = sbr.rel (%p701) target = $region72
        $region71: #{pedsleep_mae_forward.5} parent=11 // pred_region
          %705 = vsyncadd [#allocation5], 0
          %s706 = sshll.u32 %s15, 4
          %s707 = int_to_ptr.hbm [resolvable:$true] %s706
          %s708 = sshll.u32 [#allocation4], 4
          %s709 = int_to_ptr.vmem [resolvable:$true] %s708
          %714 = dma.hbm_to_vmem [thread:$0]  %s707, 3072, %s709, [#allocation5], 192, 192, 12
        $region72: #{pedsleep_mae_forward.5} parent=11 // pred_fallthru
          _
        // Predicated region
        $region73: #{pedsleep_mae_forward.5} parent=11 // pred_check
          %p715 = pneg %p397
        $region74: #{pedsleep_mae_forward.5} parent=11 // pred_check_branch
          %717 = sbr.rel (%p715) target = $region76
        $region75: #{pedsleep_mae_forward.5} parent=11 // pred_region
          _
        $region76: #{pedsleep_mae_forward.5} parent=11 // pred_fallthru
          _
        // Predicated region
        $region77: #{pedsleep_mae_forward.5} parent=11 // pred_check
          %p718 = pneg %p418
        $region78: #{pedsleep_mae_forward.5} parent=11 // pred_check_branch
          %720 = sbr.rel (%p718) target = $region80
        $region79: #{pedsleep_mae_forward.5} parent=11 // pred_region
          _
        $region80: #{pedsleep_mae_forward.5} parent=11 // pred_fallthru
          _
        // Predicated region
        $region81: #{pedsleep_mae_forward.5} parent=11 // pred_check
          %p721 = pneg %p439
        $region82: #{pedsleep_mae_forward.5} parent=11 // pred_check_branch
          %723 = sbr.rel (%p721) target = $region84
        $region83: #{pedsleep_mae_forward.5} parent=11 // pred_region
          _
        $region84: #{pedsleep_mae_forward.5} parent=11 // pred_fallthru
          _
        // Predicated region
        $region85: #{pedsleep_mae_forward.5} parent=11 // pred_check
          %p724 = pneg %p460
        $region86: #{pedsleep_mae_forward.5} parent=11 // pred_check_branch
          %726 = sbr.rel (%p724) target = $region88
        $region87: #{pedsleep_mae_forward.5} parent=11 // pred_region
          _
        $region88: #{pedsleep_mae_forward.5} parent=11 // pred_fallthru
          _
        // Predicated region
        $region89: #{pedsleep_mae_forward.5} parent=11 // pred_check
          %p727 = pneg %p481
        $region90: #{pedsleep_mae_forward.5} parent=11 // pred_check_branch
          %729 = sbr.rel (%p727) target = $region92
        $region91: #{pedsleep_mae_forward.5} parent=11 // pred_region
          _
        $region92: #{pedsleep_mae_forward.5} parent=11 // pred_fallthru
          _
        // Predicated region
        $region93: #{pedsleep_mae_forward.5} parent=11 // pred_check
          %p730 = pneg %p502
        $region94: #{pedsleep_mae_forward.5} parent=11 // pred_check_branch
          %732 = sbr.rel (%p730) target = $region96
        $region95: #{pedsleep_mae_forward.5} parent=11 // pred_region
          _
        $region96: #{pedsleep_mae_forward.5} parent=11 // pred_fallthru
          _
        // Predicated region
        $region97: #{pedsleep_mae_forward.5} parent=11 // pred_check
          %p733 = pneg %p523
        $region98: #{pedsleep_mae_forward.5} parent=11 // pred_check_branch
          %735 = sbr.rel (%p733) target = $region100
        $region99: #{pedsleep_mae_forward.5} parent=11 // pred_region
          _
        $region100: #{pedsleep_mae_forward.5} parent=11 // pred_fallthru
          _
        // Predicated region
        $region101: #{pedsleep_mae_forward.5} parent=11 // pred_check
          %p736 = pneg %p544
        $region102: #{pedsleep_mae_forward.5} parent=11 // pred_check_branch
          %738 = sbr.rel (%p736) target = $region104
        $region103: #{pedsleep_mae_forward.5} parent=11 // pred_region
          %740 = vsyncadd [#allocation5], 0
          %s741 = sshll.u32 %s23, 4
          %s742 = int_to_ptr.hbm [resolvable:$true] %s741
          %s743 = sshll.u32 [#allocation6], 4
          %s744 = int_to_ptr.vmem [resolvable:$true] %s743
          %749 = dma.hbm_to_vmem [thread:$0]  %s742, 4096, %s744, [#allocation5], 64, 64, 4
        $region104: #{pedsleep_mae_forward.5} parent=11 // pred_fallthru
          _
        // Predicated region
        $region105: #{pedsleep_mae_forward.5} parent=11 // pred_check
          %p750 = pneg %p565
        $region106: #{pedsleep_mae_forward.5} parent=11 // pred_check_branch
          %752 = sbr.rel (%p750) target = $region108
        $region107: #{pedsleep_mae_forward.5} parent=11 // pred_region
          _
        $region108: #{pedsleep_mae_forward.5} parent=11 // pred_fallthru
          _
        // Predicated region
        $region109: #{pedsleep_mae_forward.5} parent=11 // pred_check
          %p753 = pneg %p586
        $region110: #{pedsleep_mae_forward.5} parent=11 // pred_check_branch
          %755 = sbr.rel (%p753) target = $region112
        $region111: #{pedsleep_mae_forward.5} parent=11 // pred_region
          _
        $region112: #{pedsleep_mae_forward.5} parent=11 // pred_fallthru
          _
        // Predicated region
        $region113: #{pedsleep_mae_forward.5} parent=11 // pred_check
          %p756 = pneg %p607
        $region114: #{pedsleep_mae_forward.5} parent=11 // pred_check_branch
          %758 = sbr.rel (%p756) target = $region116
        $region115: #{pedsleep_mae_forward.5} parent=11 // pred_region
          _
        $region116: #{pedsleep_mae_forward.5} parent=11 // pred_fallthru
          _
      $region12: #{pedsleep_mae_forward.5} parent=5 // pred_fallthru
        _
      %p759 = scmp.lt.s32.totalorder %s35, 2
      // Predicated region
      $region117: #{pedsleep_mae_forward.5} parent=5 // pred_check
        %p760 = pneg %p759
      $region118: #{pedsleep_mae_forward.5} parent=5 // pred_check_branch
        %762 = sbr.rel (%p760) target = $region120
      $region119: #{pedsleep_mae_forward.5} parent=5 // pred_region
        // Predicated region
        $region121: #{pedsleep_mae_forward.5} parent=119 // pred_check
          %p763 = pneg %p55
        $region122: #{pedsleep_mae_forward.5} parent=119 // pred_check_branch
          %765 = sbr.rel (%p763) target = $region124
        $region123: #{pedsleep_mae_forward.5} parent=119 // pred_region
          %p766 = scmp.lt.s32.totalorder %s35, 1
          %s767 = scalar_select %p766, %s35, 1
          %s768 = smul.addr %s767, 2
          %s769 = smul.addr %s768, 8
          %s770 = scalar_lea.vmem %s0, %s769
        $region124: #{pedsleep_mae_forward.5} parent=119 // pred_fallthru
          _
      $region120: #{pedsleep_mae_forward.5} parent=5 // pred_fallthru
        _
      %p771 = scmp.le.s32.totalorder 1, %s35
      %p772 = scmp.lt.s32.totalorder %s35, 3
      %p773 = pnand %p771, %p772
      %p774 = pneg %p773
      // Predicated region
      $region125: #{pedsleep_mae_forward.5} parent=5 // pred_check
        _
      $region126: #{pedsleep_mae_forward.5} parent=5 // pred_check_branch
        %776 = sbr.rel (%p773) target = $region128
      $region127: #{pedsleep_mae_forward.5} parent=5 // pred_region
        %s777 = ssub.s32 %s35, 1
        // Predicated region
        $region129: #{pedsleep_mae_forward.5} parent=127 // pred_check
          %p778 = pneg %p124
        $region130: #{pedsleep_mae_forward.5} parent=127 // pred_check_branch
          %780 = sbr.rel (%p778) target = $region132
        $region131: #{pedsleep_mae_forward.5} parent=127 // pred_region
          %782 = dma.done [#allocation3], 3072
        $region132: #{pedsleep_mae_forward.5} parent=127 // pred_fallthru
          _
        // Predicated region
        $region133: #{pedsleep_mae_forward.5} parent=127 // pred_check
          %p783 = pneg %p376
        $region134: #{pedsleep_mae_forward.5} parent=127 // pred_check_branch
          %785 = sbr.rel (%p783) target = $region136
        $region135: #{pedsleep_mae_forward.5} parent=127 // pred_region
          %787 = dma.done [#allocation5], 3072
        $region136: #{pedsleep_mae_forward.5} parent=127 // pred_fallthru
          _
        // Predicated region
        $region137: #{pedsleep_mae_forward.5} parent=127 // pred_check
          %p788 = pneg %p544
        $region138: #{pedsleep_mae_forward.5} parent=127 // pred_check_branch
          %790 = sbr.rel (%p788) target = $region140
        $region139: #{pedsleep_mae_forward.5} parent=127 // pred_region
          %792 = dma.done [#allocation5], 4096
        $region140: #{pedsleep_mae_forward.5} parent=127 // pred_fallthru
          _
        %p793 = scmp.lt.s32.totalorder %s40, 1
        %s794 = scalar_select %p793, %s40, 1
        %s795 = smul.addr %s794, 2
        %s796 = smul.addr %s795, 8
        %s797 = scalar_lea.vmem %s0, %s796
        %p798 = pneg %p61
        %p799 = pneg %p58
        %p800 = pneg %p82
        %p801 = pneg %p79
        %p802 = pneg %p103
        %p803 = pneg %p100
        %p804 = pneg %p124
        %p805 = pneg %p121
        %p806 = pneg %p145
        %p807 = pneg %p142
        %p808 = pneg %p166
        %p809 = pneg %p163
        %p810 = pneg %p187
        %p811 = pneg %p184
        %p812 = pneg %p208
        %p813 = pneg %p205
        %p814 = pneg %p229
        %p815 = pneg %p226
        %p816 = pneg %p250
        %p817 = pneg %p247
        %p818 = pneg %p271
        %p819 = pneg %p268
        %p820 = pneg %p292
        %p821 = pneg %p289
        %p822 = pneg %p313
        %p823 = pneg %p310
        %p824 = pneg %p334
        %p825 = pneg %p331
        %p826 = pneg %p355
        %p827 = pneg %p352
        %p828 = pneg %p376
        %p829 = pneg %p373
        %p830 = pneg %p397
        %p831 = pneg %p394
        %p832 = pneg %p418
        %p833 = pneg %p415
        %p834 = pneg %p439
        %p835 = pneg %p436
        %p836 = pneg %p460
        %p837 = pneg %p457
        %p838 = pneg %p481
        %p839 = pneg %p478
        %p840 = pneg %p502
        %p841 = pneg %p499
        %p842 = pneg %p523
        %p843 = pneg %p520
        %p844 = pneg %p544
        %p845 = pneg %p541
        %p846 = pneg %p565
        %p847 = pneg %p562
        %p848 = pneg %p586
        %p849 = pneg %p583
        %p850 = pneg %p607
        %p851 = pneg %p604
        %p852 = pneg %p633
        %p853 = pneg %p630
        %p854 = scmp.lt.s32.totalorder %s40, 1
        %s855 = scalar_select %p854, %s40, 1
        %s856 = smul.addr %s855, 2
        %s857 = smul.addr %s856, 8
        %s858 = scalar_lea.vmem %s27, %s857
        %p859 = scmp.lt.s32.totalorder %s40, 1
        %s860 = scalar_select %p859, %s40, 1
        %s861 = smul.addr %s860, 2
        %s862 = smul.addr %s861, 8
        %s863 = scalar_lea.vmem %s0, %s862
        %p864 = scmp.lt.s32.totalorder %s40, 1
        %s865 = scalar_select %p864, %s40, 1
        %s866 = smul.addr %s865, 2
        %s867 = smul.addr %s866, 8
        %s868 = scalar_lea.vmem %s27, %s867
        %v870 = vld [vmem:[%s863] sm:$0xff]
        %v871 = vld [vmem:[%s863 + $0x8] sm:$0x1]
        %v872 = vld [vmem:[%s1] sm:$0x1]
        %v873 = vld [vmem:[%s2] sm:$0x1]
        %874 = vadd.xlane.f32.xlu0 %v870
        %v875 = vpop.xlane.xlu0 %874
        %vm876 = vcmask 1040384
        %v877 = vsel %vm876, %v871, 0.0
        %878 = vadd.xlane.f32.xlu0 %v877
        %v879 = vpop.xlane.xlu0 %878
        %v880 = vrcp.pop 128.0
        %v881 = vmul.f32 128.0, %v880
        %v882 = vsub.f32 1.0, %v881
        %v883 = vmul.f32 %v880, %v882
        %v884 = vadd.f32 %v880, %v883
        %vm885 = vweird.f32 %v880
        %v886 = vsel %vm885, %v880, %v884
        %v887 = vmul.f32 %v875, %v886
        %v888 = vmul.f32 %v879, %v886
        %v889 = vsub.f32 %v870, %v887
        %v890 = vsub.f32 %v871, %v888
        %v891 = vmul.f32 %v889, %v889
        %v892 = vmul.f32 %v890, %v890
        %893 = vadd.xlane.f32.xlu0 %v891
        %v894 = vpop.xlane.xlu0 %893
        %v895 = vsel %vm876, %v892, 0.0
        %896 = vadd.xlane.f32.xlu0 %v895
        %v897 = vpop.xlane.xlu0 %896
        %v898 = vmul.f32 %v894, %v886
        %v899 = vmul.f32 %v897, %v886
        %v900 = vadd.f32 %v898, 1e-05
        %v901 = vadd.f32 %v899, 1e-05
        %v902 = vrsqrt.pop %v900
        %v903 = vmul.f32 %v902, %v900
        %v904 = vmul.f32 %v903, %v902
        %v905 = vmul.f32 0.5, %v904
        %v906 = vsub.f32 1.5, %v905
        %v907 = vmul.f32 %v902, %v906
        %vm908 = vweird.f32 %v900
        %vm909 = vweird.f32 %v902
        %vm910 = vmor %vm908, %vm909
        %v911 = vsel %vm910, %v902, %v907
        %v912 = vrsqrt.pop %v901
        %v913 = vmul.f32 %v912, %v901
        %v914 = vmul.f32 %v913, %v912
        %v915 = vmul.f32 0.5, %v914
        %v916 = vsub.f32 1.5, %v915
        %v917 = vmul.f32 %v912, %v916
        %vm918 = vweird.f32 %v901
        %vm919 = vweird.f32 %v912
        %vm920 = vmor %vm918, %vm919
        %v921 = vsel %vm920, %v912, %v917
        %v922 = vmul.f32 %v889, %v911
        %v923 = vmul.f32 %v890, %v921
        %v925 = vperm.slane %v872, 0
        %v927 = vmul.f32 %v922, %v925
        %v928 = vmul.f32 %v923, %v925
        %v930 = vperm.slane %v873, 0
        %v932 = vadd.f32 %v927, %v930
        %v933 = vadd.f32 %v928, %v930
        %v934 = vpack.c.bf16 %v933, %v932
        %v935 = vld [vmem:[#allocation2] sm:$0xff]
        %v936 = vld [vmem:[#allocation2 + $0x8] sm:$0xf]
        %v937 = vld [vmem:[#allocation2 + $0xc] sm:$0xff]
        %v938 = vld [vmem:[#allocation2 + $0x14] sm:$0xf]
        %v939 = vld [vmem:[#allocation2 + $0x18] sm:$0xff]
        %v940 = vld [vmem:[#allocation2 + $0x20] sm:$0xf]
        %v941 = vld [vmem:[#allocation2 + $0x24] sm:$0xff]
        %v942 = vld [vmem:[#allocation2 + $0x2c] sm:$0xf]
        %v943 = vld [vmem:[#allocation2 + $0x30] sm:$0xff]
        %v944 = vld [vmem:[#allocation2 + $0x38] sm:$0xf]
        %v945 = vld [vmem:[#allocation2 + $0x3c] sm:$0xff]
        %v946 = vld [vmem:[#allocation2 + $0x44] sm:$0xf]
        %v947 = vld [vmem:[#allocation2 + $0x48] sm:$0xff]
        %v948 = vld [vmem:[#allocation2 + $0x50] sm:$0xf]
        %v949 = vld [vmem:[#allocation2 + $0x54] sm:$0xff]
        %v950 = vld [vmem:[#allocation2 + $0x5c] sm:$0xf]
        %v951 = vld [vmem:[#allocation2 + $0x60] sm:$0xff]
        %v952 = vld [vmem:[#allocation2 + $0x68] sm:$0xf]
        %v953 = vld [vmem:[#allocation2 + $0x6c] sm:$0xff]
        %v954 = vld [vmem:[#allocation2 + $0x74] sm:$0xf]
        %v955 = vld [vmem:[#allocation2 + $0x78] sm:$0xff]
        %v956 = vld [vmem:[#allocation2 + $0x80] sm:$0xf]
        %v957 = vld [vmem:[#allocation2 + $0x84] sm:$0xff]
        %v958 = vld [vmem:[#allocation2 + $0x8c] sm:$0xf]
        %v959 = vld [vmem:[#allocation2 + $0x90] sm:$0xff]
        %v960 = vld [vmem:[#allocation2 + $0x98] sm:$0xf]
        %v961 = vld [vmem:[#allocation2 + $0x9c] sm:$0xff]
        %v962 = vld [vmem:[#allocation2 + $0xa4] sm:$0xf]
        %v963 = vld [vmem:[#allocation2 + $0xa8] sm:$0xff]
        %v964 = vld [vmem:[#allocation2 + $0xb0] sm:$0xf]
        %v965 = vld [vmem:[#allocation2 + $0xb4] sm:$0xff]
        %v966 = vld [vmem:[#allocation2 + $0xbc] sm:$0xf]
        %v967 = vld [vmem:[%s4] sm:$0x7]
        %v969 = vperm.slane %v967, 0
        %v970 = vperm.slane %v967, 1
        %v971 = vperm.slane %v967, 2
        %v1007 = vunpack.c.l.b16 %v935
        %v1008 = vunpack.c.h.b16 %v935
        %v1009 = vunpack.c.l.b16 %v936
        %v1010 = vunpack.c.l.b16 %v937
        %v1011 = vunpack.c.h.b16 %v937
        %v1012 = vunpack.c.l.b16 %v938
        %v1013 = vunpack.c.l.b16 %v939
        %v1014 = vunpack.c.h.b16 %v939
        %v1015 = vunpack.c.l.b16 %v940
        %v1016 = vunpack.c.l.b16 %v941
        %v1017 = vunpack.c.h.b16 %v941
        %v1018 = vunpack.c.l.b16 %v942
        %v1019 = vunpack.c.l.b16 %v943
        %v1020 = vunpack.c.h.b16 %v943
        %v1021 = vunpack.c.l.b16 %v944
        %v1022 = vunpack.c.l.b16 %v945
        %v1023 = vunpack.c.h.b16 %v945
        %v1024 = vunpack.c.l.b16 %v946
        %v1025 = vunpack.c.l.b16 %v947
        %v1026 = vunpack.c.h.b16 %v947
        %v1027 = vunpack.c.l.b16 %v948
        %v1028 = vunpack.c.l.b16 %v949
        %v1029 = vunpack.c.h.b16 %v949
        %v1030 = vunpack.c.l.b16 %v950
        %v1031 = vunpack.c.l.b16 %v951
        %v1032 = vunpack.c.h.b16 %v951
        %v1033 = vunpack.c.l.b16 %v952
        %v1034 = vunpack.c.l.b16 %v953
        %v1035 = vunpack.c.h.b16 %v953
        %v1036 = vunpack.c.l.b16 %v954
        %v1037 = vunpack.c.l.b16 %v955
        %v1038 = vunpack.c.h.b16 %v955
        %v1039 = vunpack.c.l.b16 %v956
        %v1040 = vunpack.c.l.b16 %v957
        %v1041 = vunpack.c.h.b16 %v957
        %v1042 = vunpack.c.l.b16 %v958
        %v1043 = vunpack.c.l.b16 %v959
        %v1044 = vunpack.c.h.b16 %v959
        %v1045 = vunpack.c.l.b16 %v960
        %v1046 = vunpack.c.l.b16 %v961
        %v1047 = vunpack.c.h.b16 %v961
        %v1048 = vunpack.c.l.b16 %v962
        %v1049 = vunpack.c.l.b16 %v963
        %v1050 = vunpack.c.h.b16 %v963
        %v1051 = vunpack.c.l.b16 %v964
        %v1052 = vunpack.c.l.b16 %v965
        %v1053 = vunpack.c.h.b16 %v965
        %v1054 = vunpack.c.l.b16 %v966
        %v1055 = vpack.c.b16 %v1010, %v1007
        %v1056 = vpack.c.b16 %v1011, %v1008
        %v1057 = vpack.c.b16 %v1012, %v1009
        %v1058 = vpack.c.b16 %v1016, %v1013
        %v1059 = vpack.c.b16 %v1017, %v1014
        %v1060 = vpack.c.b16 %v1018, %v1015
        %v1061 = vpack.c.b16 %v1022, %v1019
        %v1062 = vpack.c.b16 %v1023, %v1020
        %v1063 = vpack.c.b16 %v1024, %v1021
        %v1064 = vpack.c.b16 %v1028, %v1025
        %v1065 = vpack.c.b16 %v1029, %v1026
        %v1066 = vpack.c.b16 %v1030, %v1027
        %v1067 = vpack.c.b16 %v1034, %v1031
        %v1068 = vpack.c.b16 %v1035, %v1032
        %v1069 = vpack.c.b16 %v1036, %v1033
        %v1070 = vpack.c.b16 %v1040, %v1037
        %v1071 = vpack.c.b16 %v1041, %v1038
        %v1072 = vpack.c.b16 %v1042, %v1039
        %v1073 = vpack.c.b16 %v1046, %v1043
        %v1074 = vpack.c.b16 %v1047, %v1044
        %v1075 = vpack.c.b16 %v1048, %v1045
        %v1076 = vpack.c.b16 %v1052, %v1049
        %v1077 = vpack.c.b16 %v1053, %v1050
        %v1078 = vpack.c.b16 %v1054, %v1051
        %1103 = vmatpush.bf16.msra.mxu0 %v1076
        %1104 = vmatpush.bf16.msra.mxu0 %v1073
        %1105 = vmatpush.bf16.msra.mxu0 %v1070
        %1106 = vmatpush.bf16.msra.mxu0 %v1067
        %1107 = vmatpush.bf16.msra.mxu0 %v1064
        %1108 = vmatpush.bf16.msra.mxu0 %v1061
        %1109 = vmatpush.bf16.msra.mxu0 %v1058
        %1110 = vmatpush.bf16.msra.mxu0 %v1055
        %1111 = vmatmul.bf16.gmra.mxu0 %v934
        %v1112 = vpop.f32.mrf.mxu0
        %v1113 = vadd.f32 %v969, %v1112
        %v1114 = vpop.f32.mrf.mxu0
        %v1115 = vadd.f32 %v969, %v1114
        %1116 = vdwg.mxu0
        %1117 = vmatpush.bf16.msra.mxu0 %v1077
        %1118 = vmatpush.bf16.msra.mxu0 %v1074
        %1119 = vmatpush.bf16.msra.mxu0 %v1071
        %1120 = vmatpush.bf16.msra.mxu0 %v1068
        %1121 = vmatpush.bf16.msra.mxu0 %v1065
        %1122 = vmatpush.bf16.msra.mxu0 %v1062
        %1123 = vmatpush.bf16.msra.mxu0 %v1059
        %1124 = vmatpush.bf16.msra.mxu0 %v1056
        %1125 = vmatmul.bf16.gmra.mxu0 %v934
        %v1126 = vpop.f32.mrf.mxu0
        %v1127 = vadd.f32 %v970, %v1126
        %v1128 = vpop.f32.mrf.mxu0
        %v1129 = vadd.f32 %v970, %v1128
        %1130 = vdwg.mxu0
        %1131 = vmatpush.bf16.msra.mxu0 %v1078
        %1132 = vmatpush.bf16.msra.mxu0 %v1075
        %1133 = vmatpush.bf16.msra.mxu0 %v1072
        %1134 = vmatpush.bf16.msra.mxu0 %v1069
        %1135 = vmatpush.bf16.msra.mxu0 %v1066
        %1136 = vmatpush.bf16.msra.mxu0 %v1063
        %1137 = vmatpush.bf16.msra.mxu0 %v1060
        %1138 = vmatpush.bf16.msra.mxu0 %v1057
        %1139 = vmatmul.bf16.gmra.mxu0 %v934
        %v1140 = vpop.f32.mrf.mxu0
        %v1141 = vadd.f32 %v971, %v1140
        %v1142 = vpop.f32.mrf.mxu0
        %v1143 = vadd.f32 %v971, %v1142
        %1144 = vdwg.mxu0
        %v1145 = vmul.f32 %v1113, 0.17677669
        %v1146 = vmul.f32 %v1115, 0.17677669
        %v1147 = vpack.c.bf16 %v1145, %v1145
        %v1148 = vpack.c.bf16 %v1146, %v1146
        %v1149 = vpack.c.bf16 %v1127, %v1127
        %v1150 = vpack.c.bf16 %v1129, %v1129
        %v1151 = vpack.c.bf16 %v1141, %v1141
        %v1152 = vpack.c.bf16 %v1143, %v1143
        %v1155 = vunpack.c.l.b16 %v1147
        %v1156 = vunpack.c.l.b16 %v1148
        %v1157 = vpack.c.b16 %v1156, %v1155
        %v1160 = vunpack.c.l.b16 %v1149
        %v1161 = vunpack.c.l.b16 %v1150
        %v1162 = vpack.c.b16 %v1161, %v1160
        %vm1163 = vcmask 261120
        %v1165 = vsel %vm1163, %v1157, 0
        %v1168 = vsel %vm1163, %v1162, 0
        %1170 = vmatpush.bf16.xpose.msra.mxu0 0
        %1171 = vmatpush.bf16.xpose.msra.mxu0 0
        %1172 = vmatpush.bf16.xpose.msra.mxu0 0
        %1173 = vmatpush.bf16.xpose.msra.mxu0 0
        %1174 = vmatpush.bf16.xpose.msra.mxu0 0
        %1175 = vmatpush.bf16.xpose.msra.mxu0 0
        %1176 = vmatpush.bf16.xpose.msra.mxu0 0
        %1177 = vmatpush.bf16.xpose.msra.mxu0 %v1168
        %1178 = vmatmul.bf16.gmra.mxu0 %v1165
        %v1179 = vpop.f32.mrf.mxu0
        %v1180 = vadd.f32 0.0, %v1179
        %v1181 = vpop.f32.mrf.mxu0
        %v1182 = vadd.f32 0.0, %v1181
        %1183 = vdwg.mxu0
        %vm1184 = vcmask 72704
        %v1185 = vsel %vm1184, %v1180, -inf
        %1186 = vmax.xlane.f32.xlu0 %v1185
        %v1187 = vpop.xlane.xlu0 %1186
        %vm1188 = vcmask 65536
        %v1189 = vsel %vm1188, %v1182, -inf
        %1190 = vmax.xlane.f32.xlu0 %v1189
        %v1191 = vpop.xlane.xlu0 %1190
        %v1192 = vsub.f32 %v1180, %v1187
        %v1193 = vsub.f32 %v1182, %v1191
        %v1194 = vmul.f32 %v1192, 1.442695
        %v1195 = vpow.pop %v1194
        %v1196 = vmul.f32 %v1193, 1.442695
        %v1197 = vpow.pop %v1196
        %v1198 = vsel %vm1184, %v1195, 0.0
        %1199 = vadd.xlane.f32.xlu0 %v1198
        %v1200 = vpop.xlane.xlu0 %1199
        %v1201 = vsel %vm1188, %v1197, 0.0
        %1202 = vadd.xlane.f32.xlu0 %v1201
        %v1203 = vpop.xlane.xlu0 %1202
        %v1204 = vrcp.pop %v1200
        %v1205 = vrcp.pop %v1203
        %v1206 = vmul.f32 %v1195, %v1204
        %v1207 = vmul.f32 %v1197, %v1205
        %v1208 = vpack.c.bf16 %v1207, %v1206
        %v1211 = vunpack.c.l.b16 %v1151
        %v1212 = vunpack.c.l.b16 %v1152
        %v1213 = vpack.c.b16 %v1212, %v1211
        %v1215 = vsel %vm1184, %v1208, 0
        %vm1217 = vcmask 1043456
        %vm1218 = vcmask 1044480
        %v1219 = vsel %vm1217, 4294967295, 65535
        %v1220 = vsel %vm1218, %v1219, 0
        %v1222 = vand.u32 %v1213, %v1220
        %1224 = vmatpush.bf16.msra.mxu0 0
        %1225 = vmatpush.bf16.msra.mxu0 0
        %1226 = vmatpush.bf16.msra.mxu0 0
        %1227 = vmatpush.bf16.msra.mxu0 0
        %1228 = vmatpush.bf16.msra.mxu0 0
        %1229 = vmatpush.bf16.msra.mxu0 0
        %1230 = vmatpush.bf16.msra.mxu0 0
        %1231 = vmatpush.bf16.msra.mxu0 %v1222
        %1232 = vmatmul.bf16.gmra.mxu0 %v1215
        %v1233 = vpop.f32.mrf.mxu0
        %v1234 = vadd.f32 0.0, %v1233
        %v1235 = vpop.f32.mrf.mxu0
        %v1236 = vadd.f32 0.0, %v1235
        %1237 = vdwg.mxu0
        %1238 = vrot.lane.b32.xlu0 %v1157, 96
        %v1239 = vpop.permute.xlu0 %1238
        %1240 = vrot.lane.b32.xlu0 %v1162, 96
        %v1241 = vpop.permute.xlu0 %1240
        %v1243 = vsel %vm1163, %v1239, 0
        %v1246 = vsel %vm1163, %v1241, 0
        %1248 = vmatpush.bf16.xpose.msra.mxu0 0
        %1249 = vmatpush.bf16.xpose.msra.mxu0 0
        %1250 = vmatpush.bf16.xpose.msra.mxu0 0
        %1251 = vmatpush.bf16.xpose.msra.mxu0 0
        %1252 = vmatpush.bf16.xpose.msra.mxu0 0
        %1253 = vmatpush.bf16.xpose.msra.mxu0 0
        %1254 = vmatpush.bf16.xpose.msra.mxu0 0
        %1255 = vmatpush.bf16.xpose.msra.mxu0 %v1246
        %1256 = vmatmul.bf16.gmra.mxu0 %v1243
        %v1257 = vpop.f32.mrf.mxu0
        %v1258 = vadd.f32 0.0, %v1257
        %v1259 = vpop.f32.mrf.mxu0
        %v1260 = vadd.f32 0.0, %v1259
        %1261 = vdwg.mxu0
        %v1262 = vsel %vm1184, %v1258, -inf
        %1263 = vmax.xlane.f32.xlu0 %v1262
        %v1264 = vpop.xlane.xlu0 %1263
        %v1265 = vsel %vm1188, %v1260, -inf
        %1266 = vmax.xlane.f32.xlu0 %v1265
        %v1267 = vpop.xlane.xlu0 %1266
        %v1268 = vsub.f32 %v1258, %v1264
        %v1269 = vsub.f32 %v1260, %v1267
        %v1270 = vmul.f32 %v1268, 1.442695
        %v1271 = vpow.pop %v1270
        %v1272 = vmul.f32 %v1269, 1.442695
        %v1273 = vpow.pop %v1272
        %v1274 = vsel %vm1184, %v1271, 0.0
        %1275 = vadd.xlane.f32.xlu0 %v1274
        %v1276 = vpop.xlane.xlu0 %1275
        %v1277 = vsel %vm1188, %v1273, 0.0
        %1278 = vadd.xlane.f32.xlu0 %v1277
        %v1279 = vpop.xlane.xlu0 %1278
        %v1280 = vrcp.pop %v1276
        %v1281 = vrcp.pop %v1279
        %v1282 = vmul.f32 %v1271, %v1280
        %v1283 = vmul.f32 %v1273, %v1281
        %v1284 = vpack.c.bf16 %v1283, %v1282
        %1285 = vrot.lane.b32.xlu0 %v1213, 96
        %v1286 = vpop.permute.xlu0 %1285
        %v1288 = vsel %vm1184, %v1284, 0
        %v1291 = vand.u32 %v1286, %v1220
        %1293 = vmatpush.bf16.msra.mxu0 0
        %1294 = vmatpush.bf16.msra.mxu0 0
        %1295 = vmatpush.bf16.msra.mxu0 0
        %1296 = vmatpush.bf16.msra.mxu0 0
        %1297 = vmatpush.bf16.msra.mxu0 0
        %1298 = vmatpush.bf16.msra.mxu0 0
        %1299 = vmatpush.bf16.msra.mxu0 0
        %1300 = vmatpush.bf16.msra.mxu0 %v1291
        %1301 = vmatmul.bf16.gmra.mxu0 %v1288
        %v1302 = vpop.f32.mrf.mxu0
        %v1303 = vadd.f32 0.0, %v1302
        %v1304 = vpop.f32.mrf.mxu0
        %v1305 = vadd.f32 0.0, %v1304
        %1306 = vdwg.mxu0
        %1307 = vrot.lane.b32.xlu0 %v1157, 64
        %v1308 = vpop.permute.xlu0 %1307
        %1309 = vrot.lane.b32.xlu0 %v1162, 64
        %v1310 = vpop.permute.xlu0 %1309
        %v1312 = vsel %vm1163, %v1308, 0
        %v1315 = vsel %vm1163, %v1310, 0
        %1317 = vmatpush.bf16.xpose.msra.mxu0 0
        %1318 = vmatpush.bf16.xpose.msra.mxu0 0
        %1319 = vmatpush.bf16.xpose.msra.mxu0 0
        %1320 = vmatpush.bf16.xpose.msra.mxu0 0
        %1321 = vmatpush.bf16.xpose.msra.mxu0 0
        %1322 = vmatpush.bf16.xpose.msra.mxu0 0
        %1323 = vmatpush.bf16.xpose.msra.mxu0 0
        %1324 = vmatpush.bf16.xpose.msra.mxu0 %v1315
        %1325 = vmatmul.bf16.gmra.mxu0 %v1312
        %v1326 = vpop.f32.mrf.mxu0
        %v1327 = vadd.f32 0.0, %v1326
        %v1328 = vpop.f32.mrf.mxu0
        %v1329 = vadd.f32 0.0, %v1328
        %1330 = vdwg.mxu0
        %v1331 = vsel %vm1184, %v1327, -inf
        %1332 = vmax.xlane.f32.xlu0 %v1331
        %v1333 = vpop.xlane.xlu0 %1332
        %v1334 = vsel %vm1188, %v1329, -inf
        %1335 = vmax.xlane.f32.xlu0 %v1334
        %v1336 = vpop.xlane.xlu0 %1335
        %v1337 = vsub.f32 %v1327, %v1333
        %v1338 = vsub.f32 %v1329, %v1336
        %v1339 = vmul.f32 %v1337, 1.442695
        %v1340 = vpow.pop %v1339
        %v1341 = vmul.f32 %v1338, 1.442695
        %v1342 = vpow.pop %v1341
        %v1343 = vsel %vm1184, %v1340, 0.0
        %1344 = vadd.xlane.f32.xlu0 %v1343
        %v1345 = vpop.xlane.xlu0 %1344
        %v1346 = vsel %vm1188, %v1342, 0.0
        %1347 = vadd.xlane.f32.xlu0 %v1346
        %v1348 = vpop.xlane.xlu0 %1347
        %v1349 = vrcp.pop %v1345
        %v1350 = vrcp.pop %v1348
        %v1351 = vmul.f32 %v1340, %v1349
        %v1352 = vmul.f32 %v1342, %v1350
        %v1353 = vpack.c.bf16 %v1352, %v1351
        %1354 = vrot.lane.b32.xlu0 %v1213, 64
        %v1355 = vpop.permute.xlu0 %1354
        %v1357 = vsel %vm1184, %v1353, 0
        %v1360 = vand.u32 %v1355, %v1220
        %1362 = vmatpush.bf16.msra.mxu0 0
        %1363 = vmatpush.bf16.msra.mxu0 0
        %1364 = vmatpush.bf16.msra.mxu0 0
        %1365 = vmatpush.bf16.msra.mxu0 0
        %1366 = vmatpush.bf16.msra.mxu0 0
        %1367 = vmatpush.bf16.msra.mxu0 0
        %1368 = vmatpush.bf16.msra.mxu0 0
        %1369 = vmatpush.bf16.msra.mxu0 %v1360
        %1370 = vmatmul.bf16.gmra.mxu0 %v1357
        %v1371 = vpop.f32.mrf.mxu0
        %v1372 = vadd.f32 0.0, %v1371
        %v1373 = vpop.f32.mrf.mxu0
        %v1374 = vadd.f32 0.0, %v1373
        %1375 = vdwg.mxu0
        %1376 = vrot.lane.b32.xlu0 %v1157, 32
        %v1377 = vpop.permute.xlu0 %1376
        %1378 = vrot.lane.b32.xlu0 %v1162, 32
        %v1379 = vpop.permute.xlu0 %1378
        %v1381 = vsel %vm1163, %v1377, 0
        %v1384 = vsel %vm1163, %v1379, 0
        %1386 = vmatpush.bf16.xpose.msra.mxu0 0
        %1387 = vmatpush.bf16.xpose.msra.mxu0 0
        %1388 = vmatpush.bf16.xpose.msra.mxu0 0
        %1389 = vmatpush.bf16.xpose.msra.mxu0 0
        %1390 = vmatpush.bf16.xpose.msra.mxu0 0
        %1391 = vmatpush.bf16.xpose.msra.mxu0 0
        %1392 = vmatpush.bf16.xpose.msra.mxu0 0
        %1393 = vmatpush.bf16.xpose.msra.mxu0 %v1384
        %1394 = vmatmul.bf16.gmra.mxu0 %v1381
        %v1395 = vpop.f32.mrf.mxu0
        %v1396 = vadd.f32 0.0, %v1395
        %v1397 = vpop.f32.mrf.mxu0
        %v1398 = vadd.f32 0.0, %v1397
        %1399 = vdwg.mxu0
        %v1400 = vsel %vm1184, %v1396, -inf
        %1401 = vmax.xlane.f32.xlu0 %v1400
        %v1402 = vpop.xlane.xlu0 %1401
        %v1403 = vsel %vm1188, %v1398, -inf
        %1404 = vmax.xlane.f32.xlu0 %v1403
        %v1405 = vpop.xlane.xlu0 %1404
        %v1406 = vsub.f32 %v1396, %v1402
        %v1407 = vsub.f32 %v1398, %v1405
        %v1408 = vmul.f32 %v1406, 1.442695
        %v1409 = vpow.pop %v1408
        %v1410 = vmul.f32 %v1407, 1.442695
        %v1411 = vpow.pop %v1410
        %v1412 = vsel %vm1184, %v1409, 0.0
        %1413 = vadd.xlane.f32.xlu0 %v1412
        %v1414 = vpop.xlane.xlu0 %1413
        %v1415 = vsel %vm1188, %v1411, 0.0
        %1416 = vadd.xlane.f32.xlu0 %v1415
        %v1417 = vpop.xlane.xlu0 %1416
        %v1418 = vrcp.pop %v1414
        %v1419 = vrcp.pop %v1417
        %v1420 = vmul.f32 %v1409, %v1418
        %v1421 = vmul.f32 %v1411, %v1419
        %v1422 = vpack.c.bf16 %v1421, %v1420
        %1423 = vrot.lane.b32.xlu0 %v1213, 32
        %v1424 = vpop.permute.xlu0 %1423
        %v1426 = vsel %vm1184, %v1422, 0
        %v1429 = vand.u32 %v1424, %v1220
        %1431 = vmatpush.bf16.msra.mxu0 0
        %1432 = vmatpush.bf16.msra.mxu0 0
        %1433 = vmatpush.bf16.msra.mxu0 0
        %1434 = vmatpush.bf16.msra.mxu0 0
        %1435 = vmatpush.bf16.msra.mxu0 0
        %1436 = vmatpush.bf16.msra.mxu0 0
        %1437 = vmatpush.bf16.msra.mxu0 0
        %1438 = vmatpush.bf16.msra.mxu0 %v1429
        %1439 = vmatmul.bf16.gmra.mxu0 %v1426
        %v1440 = vpop.f32.mrf.mxu0
        %v1441 = vadd.f32 0.0, %v1440
        %v1442 = vpop.f32.mrf.mxu0
        %v1443 = vadd.f32 0.0, %v1442
        %1444 = vdwg.mxu0
        %1447 = vrot.lane.b32.xlu0 %v1303, 32
        %v1448 = vpop.permute.xlu0 %1447
        %1449 = vrot.lane.b32.xlu0 %v1305, 32
        %v1450 = vpop.permute.xlu0 %1449
        %1455 = vrot.lane.b32.xlu0 %v1372, 64
        %v1456 = vpop.permute.xlu0 %1455
        %1457 = vrot.lane.b32.xlu0 %v1374, 64
        %v1458 = vpop.permute.xlu0 %1457
        %1463 = vrot.lane.b32.xlu0 %v1441, 96
        %v1464 = vpop.permute.xlu0 %1463
        %1465 = vrot.lane.b32.xlu0 %v1443, 96
        %v1466 = vpop.permute.xlu0 %1465
        %v1469 = vsel %vm1163, %v1234, %v1448
        %v1470 = vsel %vm1163, %v1236, %v1450
        %vm1471 = vcmask 523264
        %v1472 = vsel %vm1471, %v1469, %v1456
        %v1473 = vsel %vm1471, %v1470, %v1458
        %vm1474 = vcmask 785408
        %v1475 = vsel %vm1474, %v1472, %v1464
        %v1476 = vsel %vm1474, %v1473, %v1466
        %v1477 = vpack.c.bf16 %v1476, %v1475
        %v1478 = vld [vmem:[%s5] sm:$0xf]
        %v1479 = vld [vmem:[%s5 + $0x4] sm:$0xf]
        %v1480 = vld [vmem:[%s5 + $0x8] sm:$0xf]
        %v1481 = vld [vmem:[%s5 + $0xc] sm:$0xf]
        %v1482 = vld [vmem:[%s5 + $0x10] sm:$0xf]
        %v1483 = vld [vmem:[%s5 + $0x14] sm:$0xf]
        %v1484 = vld [vmem:[%s5 + $0x18] sm:$0xf]
        %v1485 = vld [vmem:[%s5 + $0x1c] sm:$0xf]
        %v1486 = vld [vmem:[%s5 + $0x20] sm:$0xf]
        %v1487 = vld [vmem:[%s5 + $0x24] sm:$0xf]
        %v1488 = vld [vmem:[%s5 + $0x28] sm:$0xf]
        %v1489 = vld [vmem:[%s5 + $0x2c] sm:$0xf]
        %v1490 = vld [vmem:[%s5 + $0x30] sm:$0xf]
        %v1491 = vld [vmem:[%s5 + $0x34] sm:$0xf]
        %v1492 = vld [vmem:[%s5 + $0x38] sm:$0xf]
        %v1493 = vld [vmem:[%s5 + $0x3c] sm:$0xf]
        %v1494 = vld [vmem:[%s6] sm:$0x1]
        %v1496 = vperm.slane %v1494, 0
        %v1514 = vunpack.c.l.b16 %v1478
        %v1515 = vunpack.c.l.b16 %v1479
        %v1516 = vunpack.c.l.b16 %v1480
        %v1517 = vunpack.c.l.b16 %v1481
        %v1518 = vunpack.c.l.b16 %v1482
        %v1519 = vunpack.c.l.b16 %v1483
        %v1520 = vunpack.c.l.b16 %v1484
        %v1521 = vunpack.c.l.b16 %v1485
        %v1522 = vunpack.c.l.b16 %v1486
        %v1523 = vunpack.c.l.b16 %v1487
        %v1524 = vunpack.c.l.b16 %v1488
        %v1525 = vunpack.c.l.b16 %v1489
        %v1526 = vunpack.c.l.b16 %v1490
        %v1527 = vunpack.c.l.b16 %v1491
        %v1528 = vunpack.c.l.b16 %v1492
        %v1529 = vunpack.c.l.b16 %v1493
        %v1530 = vpack.c.b16 %v1515, %v1514
        %v1531 = vpack.c.b16 %v1517, %v1516
        %v1532 = vpack.c.b16 %v1519, %v1518
        %v1533 = vpack.c.b16 %v1521, %v1520
        %v1534 = vpack.c.b16 %v1523, %v1522
        %v1535 = vpack.c.b16 %v1525, %v1524
        %v1536 = vpack.c.b16 %v1527, %v1526
        %v1537 = vpack.c.b16 %v1529, %v1528
        %1546 = vmatpush.bf16.msra.mxu0 %v1537
        %1547 = vmatpush.bf16.msra.mxu0 %v1536
        %1548 = vmatpush.bf16.msra.mxu0 %v1535
        %1549 = vmatpush.bf16.msra.mxu0 %v1534
        %1550 = vmatpush.bf16.msra.mxu0 %v1533
        %1551 = vmatpush.bf16.msra.mxu0 %v1532
        %1552 = vmatpush.bf16.msra.mxu0 %v1531
        %1553 = vmatpush.bf16.msra.mxu0 %v1530
        %1554 = vmatmul.bf16.gmra.mxu0 %v1477
        %v1555 = vpop.f32.mrf.mxu0
        %v1556 = vadd.f32 %v1496, %v1555
        %v1557 = vpop.f32.mrf.mxu0
        %v1558 = vadd.f32 %v1496, %v1557
        %1559 = vdwg.mxu0
        %v1560 = vadd.f32 %v870, %v1556
        %v1561 = vadd.f32 %v871, %v1558
        %v1562 = vld [vmem:[%s7] sm:$0x1]
        %v1563 = vld [vmem:[%s8] sm:$0x1]
        %1564 = vadd.xlane.f32.xlu0 %v1560
        %v1565 = vpop.xlane.xlu0 %1564
        %v1566 = vsel %vm876, %v1561, 0.0
        %1567 = vadd.xlane.f32.xlu0 %v1566
        %v1568 = vpop.xlane.xlu0 %1567
        %v1569 = vmul.f32 %v1565, %v886
        %v1570 = vmul.f32 %v1568, %v886
        %v1571 = vsub.f32 %v1560, %v1569
        %v1572 = vsub.f32 %v1561, %v1570
        %v1573 = vmul.f32 %v1571, %v1571
        %v1574 = vmul.f32 %v1572, %v1572
        %1575 = vadd.xlane.f32.xlu0 %v1573
        %v1576 = vpop.xlane.xlu0 %1575
        %v1577 = vsel %vm876, %v1574, 0.0
        %1578 = vadd.xlane.f32.xlu0 %v1577
        %v1579 = vpop.xlane.xlu0 %1578
        %v1580 = vmul.f32 %v1576, %v886
        %v1581 = vmul.f32 %v1579, %v886
        %v1582 = vadd.f32 %v1580, 1e-05
        %v1583 = vadd.f32 %v1581, 1e-05
        %v1584 = vrsqrt.pop %v1582
        %v1585 = vmul.f32 %v1584, %v1582
        %v1586 = vmul.f32 %v1585, %v1584
        %v1587 = vmul.f32 0.5, %v1586
        %v1588 = vsub.f32 1.5, %v1587
        %v1589 = vmul.f32 %v1584, %v1588
        %vm1590 = vweird.f32 %v1582
        %vm1591 = vweird.f32 %v1584
        %vm1592 = vmor %vm1590, %vm1591
        %v1593 = vsel %vm1592, %v1584, %v1589
        %v1594 = vrsqrt.pop %v1583
        %v1595 = vmul.f32 %v1594, %v1583
        %v1596 = vmul.f32 %v1595, %v1594
        %v1597 = vmul.f32 0.5, %v1596
        %v1598 = vsub.f32 1.5, %v1597
        %v1599 = vmul.f32 %v1594, %v1598
        %vm1600 = vweird.f32 %v1583
        %vm1601 = vweird.f32 %v1594
        %vm1602 = vmor %vm1600, %vm1601
        %v1603 = vsel %vm1602, %v1594, %v1599
        %v1604 = vmul.f32 %v1571, %v1593
        %v1605 = vmul.f32 %v1572, %v1603
        %v1607 = vperm.slane %v1562, 0
        %v1609 = vmul.f32 %v1604, %v1607
        %v1610 = vmul.f32 %v1605, %v1607
        %v1612 = vperm.slane %v1563, 0
        %v1614 = vadd.f32 %v1609, %v1612
        %v1615 = vadd.f32 %v1610, %v1612
        %v1616 = vpack.c.bf16 %v1615, %v1614
        %v1617 = vld [vmem:[%s9] sm:$0xff]
        %v1618 = vld [vmem:[%s9 + $0x8] sm:$0xff]
        %v1619 = vld [vmem:[%s9 + $0x10] sm:$0xff]
        %v1620 = vld [vmem:[%s9 + $0x18] sm:$0xff]
        %v1621 = vld [vmem:[%s9 + $0x20] sm:$0xff]
        %v1622 = vld [vmem:[%s9 + $0x28] sm:$0xff]
        %v1623 = vld [vmem:[%s9 + $0x30] sm:$0xff]
        %v1624 = vld [vmem:[%s9 + $0x38] sm:$0xff]
        %v1625 = vld [vmem:[%s9 + $0x40] sm:$0xff]
        %v1626 = vld [vmem:[%s9 + $0x48] sm:$0xff]
        %v1627 = vld [vmem:[%s9 + $0x50] sm:$0xff]
        %v1628 = vld [vmem:[%s9 + $0x58] sm:$0xff]
        %v1629 = vld [vmem:[%s9 + $0x60] sm:$0xff]
        %v1630 = vld [vmem:[%s9 + $0x68] sm:$0xff]
        %v1631 = vld [vmem:[%s9 + $0x70] sm:$0xff]
        %v1632 = vld [vmem:[%s9 + $0x78] sm:$0xff]
        %v1633 = vld [vmem:[%s9 + $0x80] sm:$0xff]
        %v1634 = vld [vmem:[%s9 + $0x88] sm:$0xff]
        %v1635 = vld [vmem:[%s9 + $0x90] sm:$0xff]
        %v1636 = vld [vmem:[%s9 + $0x98] sm:$0xff]
        %v1637 = vld [vmem:[%s9 + $0xa0] sm:$0xff]
        %v1638 = vld [vmem:[%s9 + $0xa8] sm:$0xff]
        %v1639 = vld [vmem:[%s9 + $0xb0] sm:$0xff]
        %v1640 = vld [vmem:[%s9 + $0xb8] sm:$0xff]
        %v1641 = vld [vmem:[%s9 + $0xc0] sm:$0xff]
        %v1642 = vld [vmem:[%s9 + $0xc8] sm:$0xff]
        %v1643 = vld [vmem:[%s9 + $0xd0] sm:$0xff]
        %v1644 = vld [vmem:[%s9 + $0xd8] sm:$0xff]
        %v1645 = vld [vmem:[%s9 + $0xe0] sm:$0xff]
        %v1646 = vld [vmem:[%s9 + $0xe8] sm:$0xff]
        %v1647 = vld [vmem:[%s9 + $0xf0] sm:$0xff]
        %v1648 = vld [vmem:[%s9 + $0xf8] sm:$0xff]
        %v1649 = vld [vmem:[%s10] sm:$0xf]
        %v1651 = vperm.slane %v1649, 0
        %v1652 = vperm.slane %v1649, 1
        %v1653 = vperm.slane %v1649, 2
        %v1654 = vperm.slane %v1649, 3
        %v1691 = vunpack.c.l.b16 %v1617
        %v1692 = vunpack.c.h.b16 %v1617
        %v1693 = vunpack.c.l.b16 %v1618
        %v1694 = vunpack.c.h.b16 %v1618
        %v1695 = vunpack.c.l.b16 %v1619
        %v1696 = vunpack.c.h.b16 %v1619
        %v1697 = vunpack.c.l.b16 %v1620
        %v1698 = vunpack.c.h.b16 %v1620
        %v1699 = vunpack.c.l.b16 %v1621
        %v1700 = vunpack.c.h.b16 %v1621
        %v1701 = vunpack.c.l.b16 %v1622
        %v1702 = vunpack.c.h.b16 %v1622
        %v1703 = vunpack.c.l.b16 %v1623
        %v1704 = vunpack.c.h.b16 %v1623
        %v1705 = vunpack.c.l.b16 %v1624
        %v1706 = vunpack.c.h.b16 %v1624
        %v1707 = vunpack.c.l.b16 %v1625
        %v1708 = vunpack.c.h.b16 %v1625
        %v1709 = vunpack.c.l.b16 %v1626
        %v1710 = vunpack.c.h.b16 %v1626
        %v1711 = vunpack.c.l.b16 %v1627
        %v1712 = vunpack.c.h.b16 %v1627
        %v1713 = vunpack.c.l.b16 %v1628
        %v1714 = vunpack.c.h.b16 %v1628
        %v1715 = vunpack.c.l.b16 %v1629
        %v1716 = vunpack.c.h.b16 %v1629
        %v1717 = vunpack.c.l.b16 %v1630
        %v1718 = vunpack.c.h.b16 %v1630
        %v1719 = vunpack.c.l.b16 %v1631
        %v1720 = vunpack.c.h.b16 %v1631
        %v1721 = vunpack.c.l.b16 %v1632
        %v1722 = vunpack.c.h.b16 %v1632
        %v1723 = vunpack.c.l.b16 %v1633
        %v1724 = vunpack.c.h.b16 %v1633
        %v1725 = vunpack.c.l.b16 %v1634
        %v1726 = vunpack.c.h.b16 %v1634
        %v1727 = vunpack.c.l.b16 %v1635
        %v1728 = vunpack.c.h.b16 %v1635
        %v1729 = vunpack.c.l.b16 %v1636
        %v1730 = vunpack.c.h.b16 %v1636
        %v1731 = vunpack.c.l.b16 %v1637
        %v1732 = vunpack.c.h.b16 %v1637
        %v1733 = vunpack.c.l.b16 %v1638
        %v1734 = vunpack.c.h.b16 %v1638
        %v1735 = vunpack.c.l.b16 %v1639
        %v1736 = vunpack.c.h.b16 %v1639
        %v1737 = vunpack.c.l.b16 %v1640
        %v1738 = vunpack.c.h.b16 %v1640
        %v1739 = vunpack.c.l.b16 %v1641
        %v1740 = vunpack.c.h.b16 %v1641
        %v1741 = vunpack.c.l.b16 %v1642
        %v1742 = vunpack.c.h.b16 %v1642
        %v1743 = vunpack.c.l.b16 %v1643
        %v1744 = vunpack.c.h.b16 %v1643
        %v1745 = vunpack.c.l.b16 %v1644
        %v1746 = vunpack.c.h.b16 %v1644
        %v1747 = vunpack.c.l.b16 %v1645
        %v1748 = vunpack.c.h.b16 %v1645
        %v1749 = vunpack.c.l.b16 %v1646
        %v1750 = vunpack.c.h.b16 %v1646
        %v1751 = vunpack.c.l.b16 %v1647
        %v1752 = vunpack.c.h.b16 %v1647
        %v1753 = vunpack.c.l.b16 %v1648
        %v1754 = vunpack.c.h.b16 %v1648
        %v1755 = vpack.c.b16 %v1695, %v1691
        %v1756 = vpack.c.b16 %v1696, %v1692
        %v1757 = vpack.c.b16 %v1697, %v1693
        %v1758 = vpack.c.b16 %v1698, %v1694
        %v1759 = vpack.c.b16 %v1703, %v1699
        %v1760 = vpack.c.b16 %v1704, %v1700
        %v1761 = vpack.c.b16 %v1705, %v1701
        %v1762 = vpack.c.b16 %v1706, %v1702
        %v1763 = vpack.c.b16 %v1711, %v1707
        %v1764 = vpack.c.b16 %v1712, %v1708
        %v1765 = vpack.c.b16 %v1713, %v1709
        %v1766 = vpack.c.b16 %v1714, %v1710
        %v1767 = vpack.c.b16 %v1719, %v1715
        %v1768 = vpack.c.b16 %v1720, %v1716
        %v1769 = vpack.c.b16 %v1721, %v1717
        %v1770 = vpack.c.b16 %v1722, %v1718
        %v1771 = vpack.c.b16 %v1727, %v1723
        %v1772 = vpack.c.b16 %v1728, %v1724
        %v1773 = vpack.c.b16 %v1729, %v1725
        %v1774 = vpack.c.b16 %v1730, %v1726
        %v1775 = vpack.c.b16 %v1735, %v1731
        %v1776 = vpack.c.b16 %v1736, %v1732
        %v1777 = vpack.c.b16 %v1737, %v1733
        %v1778 = vpack.c.b16 %v1738, %v1734
        %v1779 = vpack.c.b16 %v1743, %v1739
        %v1780 = vpack.c.b16 %v1744, %v1740
        %v1781 = vpack.c.b16 %v1745, %v1741
        %v1782 = vpack.c.b16 %v1746, %v1742
        %v1783 = vpack.c.b16 %v1751, %v1747
        %v1784 = vpack.c.b16 %v1752, %v1748
        %v1785 = vpack.c.b16 %v1753, %v1749
        %v1786 = vpack.c.b16 %v1754, %v1750
        %1819 = vmatpush.bf16.msra.mxu0 %v1783
        %1820 = vmatpush.bf16.msra.mxu0 %v1779
        %1821 = vmatpush.bf16.msra.mxu0 %v1775
        %1822 = vmatpush.bf16.msra.mxu0 %v1771
        %1823 = vmatpush.bf16.msra.mxu0 %v1767
        %1824 = vmatpush.bf16.msra.mxu0 %v1763
        %1825 = vmatpush.bf16.msra.mxu0 %v1759
        %1826 = vmatpush.bf16.msra.mxu0 %v1755
        %1827 = vmatmul.bf16.gmra.mxu0 %v1616
        %v1828 = vpop.f32.mrf.mxu0
        %v1829 = vadd.f32 %v1651, %v1828
        %v1830 = vpop.f32.mrf.mxu0
        %v1831 = vadd.f32 %v1651, %v1830
        %1832 = vdwg.mxu0
        %1833 = vmatpush.bf16.msra.mxu0 %v1784
        %1834 = vmatpush.bf16.msra.mxu0 %v1780
        %1835 = vmatpush.bf16.msra.mxu0 %v1776
        %1836 = vmatpush.bf16.msra.mxu0 %v1772
        %1837 = vmatpush.bf16.msra.mxu0 %v1768
        %1838 = vmatpush.bf16.msra.mxu0 %v1764
        %1839 = vmatpush.bf16.msra.mxu0 %v1760
        %1840 = vmatpush.bf16.msra.mxu0 %v1756
        %1841 = vmatmul.bf16.gmra.mxu0 %v1616
        %v1842 = vpop.f32.mrf.mxu0
        %v1843 = vadd.f32 %v1652, %v1842
        %v1844 = vpop.f32.mrf.mxu0
        %v1845 = vadd.f32 %v1652, %v1844
        %1846 = vdwg.mxu0
        %1847 = vmatpush.bf16.msra.mxu0 %v1785
        %1848 = vmatpush.bf16.msra.mxu0 %v1781
        %1849 = vmatpush.bf16.msra.mxu0 %v1777
        %1850 = vmatpush.bf16.msra.mxu0 %v1773
        %1851 = vmatpush.bf16.msra.mxu0 %v1769
        %1852 = vmatpush.bf16.msra.mxu0 %v1765
        %1853 = vmatpush.bf16.msra.mxu0 %v1761
        %1854 = vmatpush.bf16.msra.mxu0 %v1757
        %1855 = vmatmul.bf16.gmra.mxu0 %v1616
        %v1856 = vpop.f32.mrf.mxu0
        %v1857 = vadd.f32 %v1653, %v1856
        %v1858 = vpop.f32.mrf.mxu0
        %v1859 = vadd.f32 %v1653, %v1858
        %1860 = vdwg.mxu0
        %1861 = vmatpush.bf16.msra.mxu0 %v1786
        %1862 = vmatpush.bf16.msra.mxu0 %v1782
        %1863 = vmatpush.bf16.msra.mxu0 %v1778
        %1864 = vmatpush.bf16.msra.mxu0 %v1774
        %1865 = vmatpush.bf16.msra.mxu0 %v1770
        %1866 = vmatpush.bf16.msra.mxu0 %v1766
        %1867 = vmatpush.bf16.msra.mxu0 %v1762
        %1868 = vmatpush.bf16.msra.mxu0 %v1758
        %1869 = vmatmul.bf16.gmra.mxu0 %v1616
        %v1870 = vpop.f32.mrf.mxu0
        %v1871 = vadd.f32 %v1654, %v1870
        %v1872 = vpop.f32.mrf.mxu0
        %v1873 = vadd.f32 %v1654, %v1872
        %1874 = vdwg.mxu0
        %v1875 = vmul.f32 %v1829, %v1829
        %v1876 = vmul.f32 %v1843, %v1843
        %v1877 = vmul.f32 %v1857, %v1857
        %v1878 = vmul.f32 %v1871, %v1871
        %v1879 = vmul.f32 %v1831, %v1831
        %v1880 = vmul.f32 %v1845, %v1845
        %v1881 = vmul.f32 %v1859, %v1859
        %v1882 = vmul.f32 %v1873, %v1873
        %v1883 = vmul.f32 %v1829, %v1875
        %v1884 = vmul.f32 %v1843, %v1876
        %v1885 = vmul.f32 %v1857, %v1877
        %v1886 = vmul.f32 %v1871, %v1878
        %v1887 = vmul.f32 %v1831, %v1879
        %v1888 = vmul.f32 %v1845, %v1880
        %v1889 = vmul.f32 %v1859, %v1881
        %v1890 = vmul.f32 %v1873, %v1882
        %v1891 = vmul.f32 %v1883, 0.044715
        %v1892 = vmul.f32 %v1884, 0.044715
        %v1893 = vmul.f32 %v1885, 0.044715
        %v1894 = vmul.f32 %v1886, 0.044715
        %v1895 = vmul.f32 %v1887, 0.044715
        %v1896 = vmul.f32 %v1888, 0.044715
        %v1897 = vmul.f32 %v1889, 0.044715
        %v1898 = vmul.f32 %v1890, 0.044715
        %v1899 = vadd.f32 %v1829, %v1891
        %v1900 = vadd.f32 %v1843, %v1892
        %v1901 = vadd.f32 %v1857, %v1893
        %v1902 = vadd.f32 %v1871, %v1894
        %v1903 = vadd.f32 %v1831, %v1895
        %v1904 = vadd.f32 %v1845, %v1896
        %v1905 = vadd.f32 %v1859, %v1897
        %v1906 = vadd.f32 %v1873, %v1898
        %v1907 = vmul.f32 %v1899, 0.7978846
        %v1908 = vmul.f32 %v1900, 0.7978846
        %v1909 = vmul.f32 %v1901, 0.7978846
        %v1910 = vmul.f32 %v1902, 0.7978846
        %v1911 = vmul.f32 %v1903, 0.7978846
        %v1912 = vmul.f32 %v1904, 0.7978846
        %v1913 = vmul.f32 %v1905, 0.7978846
        %v1914 = vmul.f32 %v1906, 0.7978846
        %v1915 = vtanh.pop %v1907
        %v1916 = vtanh.pop %v1908
        %v1917 = vtanh.pop %v1909
        %v1918 = vtanh.pop %v1910
        %v1919 = vtanh.pop %v1911
        %v1920 = vtanh.pop %v1912
        %v1921 = vtanh.pop %v1913
        %v1922 = vtanh.pop %v1914
        %v1923 = vadd.f32 %v1915, 1.0
        %v1924 = vadd.f32 %v1916, 1.0
        %v1925 = vadd.f32 %v1917, 1.0
        %v1926 = vadd.f32 %v1918, 1.0
        %v1927 = vadd.f32 %v1919, 1.0
        %v1928 = vadd.f32 %v1920, 1.0
        %v1929 = vadd.f32 %v1921, 1.0
        %v1930 = vadd.f32 %v1922, 1.0
        %v1931 = vmul.f32 %v1923, 0.5
        %v1932 = vmul.f32 %v1924, 0.5
        %v1933 = vmul.f32 %v1925, 0.5
        %v1934 = vmul.f32 %v1926, 0.5
        %v1935 = vmul.f32 %v1927, 0.5
        %v1936 = vmul.f32 %v1928, 0.5
        %v1937 = vmul.f32 %v1929, 0.5
        %v1938 = vmul.f32 %v1930, 0.5
        %v1939 = vmul.f32 %v1829, %v1931
        %v1940 = vmul.f32 %v1843, %v1932
        %v1941 = vmul.f32 %v1857, %v1933
        %v1942 = vmul.f32 %v1871, %v1934
        %v1943 = vmul.f32 %v1831, %v1935
        %v1944 = vmul.f32 %v1845, %v1936
        %v1945 = vmul.f32 %v1859, %v1937
        %v1946 = vmul.f32 %v1873, %v1938
        %v1947 = vpack.c.bf16 %v1943, %v1939
        %v1948 = vpack.c.bf16 %v1944, %v1940
        %v1949 = vpack.c.bf16 %v1945, %v1941
        %v1950 = vpack.c.bf16 %v1946, %v1942
        %v1951 = vld [vmem:[%s11] sm:$0xf]
        %v1952 = vld [vmem:[%s11 + $0x4] sm:$0xf]
        %v1953 = vld [vmem:[%s11 + $0x8] sm:$0xf]
        %v1954 = vld [vmem:[%s11 + $0xc] sm:$0xf]
        %v1955 = vld [vmem:[%s11 + $0x10] sm:$0xf]
        %v1956 = vld [vmem:[%s11 + $0x14] sm:$0xf]
        %v1957 = vld [vmem:[%s11 + $0x18] sm:$0xf]
        %v1958 = vld [vmem:[%s11 + $0x1c] sm:$0xf]
        %v1959 = vld [vmem:[%s11 + $0x20] sm:$0xf]
        %v1960 = vld [vmem:[%s11 + $0x24] sm:$0xf]
        %v1961 = vld [vmem:[%s11 + $0x28] sm:$0xf]
        %v1962 = vld [vmem:[%s11 + $0x2c] sm:$0xf]
        %v1963 = vld [vmem:[%s11 + $0x30] sm:$0xf]
        %v1964 = vld [vmem:[%s11 + $0x34] sm:$0xf]
        %v1965 = vld [vmem:[%s11 + $0x38] sm:$0xf]
        %v1966 = vld [vmem:[%s11 + $0x3c] sm:$0xf]
        %v1967 = vld [vmem:[%s11 + $0x40] sm:$0xf]
        %v1968 = vld [vmem:[%s11 + $0x44] sm:$0xf]
        %v1969 = vld [vmem:[%s11 + $0x48] sm:$0xf]
        %v1970 = vld [vmem:[%s11 + $0x4c] sm:$0xf]
        %v1971 = vld [vmem:[%s11 + $0x50] sm:$0xf]
        %v1972 = vld [vmem:[%s11 + $0x54] sm:$0xf]
        %v1973 = vld [vmem:[%s11 + $0x58] sm:$0xf]
        %v1974 = vld [vmem:[%s11 + $0x5c] sm:$0xf]
        %v1975 = vld [vmem:[%s11 + $0x60] sm:$0xf]
        %v1976 = vld [vmem:[%s11 + $0x64] sm:$0xf]
        %v1977 = vld [vmem:[%s11 + $0x68] sm:$0xf]
        %v1978 = vld [vmem:[%s11 + $0x6c] sm:$0xf]
        %v1979 = vld [vmem:[%s11 + $0x70] sm:$0xf]
        %v1980 = vld [vmem:[%s11 + $0x74] sm:$0xf]
        %v1981 = vld [vmem:[%s11 + $0x78] sm:$0xf]
        %v1982 = vld [vmem:[%s11 + $0x7c] sm:$0xf]
        %v1983 = vld [vmem:[%s11 + $0x80] sm:$0xf]
        %v1984 = vld [vmem:[%s11 + $0x84] sm:$0xf]
        %v1985 = vld [vmem:[%s11 + $0x88] sm:$0xf]
        %v1986 = vld [vmem:[%s11 + $0x8c] sm:$0xf]
        %v1987 = vld [vmem:[%s11 + $0x90] sm:$0xf]
        %v1988 = vld [vmem:[%s11 + $0x94] sm:$0xf]
        %v1989 = vld [vmem:[%s11 + $0x98] sm:$0xf]
        %v1990 = vld [vmem:[%s11 + $0x9c] sm:$0xf]
        %v1991 = vld [vmem:[%s11 + $0xa0] sm:$0xf]
        %v1992 = vld [vmem:[%s11 + $0xa4] sm:$0xf]
        %v1993 = vld [vmem:[%s11 + $0xa8] sm:$0xf]
        %v1994 = vld [vmem:[%s11 + $0xac] sm:$0xf]
        %v1995 = vld [vmem:[%s11 + $0xb0] sm:$0xf]
        %v1996 = vld [vmem:[%s11 + $0xb4] sm:$0xf]
        %v1997 = vld [vmem:[%s11 + $0xb8] sm:$0xf]
        %v1998 = vld [vmem:[%s11 + $0xbc] sm:$0xf]
        %v1999 = vld [vmem:[%s11 + $0xc0] sm:$0xf]
        %v2000 = vld [vmem:[%s11 + $0xc4] sm:$0xf]
        %v2001 = vld [vmem:[%s11 + $0xc8] sm:$0xf]
        %v2002 = vld [vmem:[%s11 + $0xcc] sm:$0xf]
        %v2003 = vld [vmem:[%s11 + $0xd0] sm:$0xf]
        %v2004 = vld [vmem:[%s11 + $0xd4] sm:$0xf]
        %v2005 = vld [vmem:[%s11 + $0xd8] sm:$0xf]
        %v2006 = vld [vmem:[%s11 + $0xdc] sm:$0xf]
        %v2007 = vld [vmem:[%s11 + $0xe0] sm:$0xf]
        %v2008 = vld [vmem:[%s11 + $0xe4] sm:$0xf]
        %v2009 = vld [vmem:[%s11 + $0xe8] sm:$0xf]
        %v2010 = vld [vmem:[%s11 + $0xec] sm:$0xf]
        %v2011 = vld [vmem:[%s11 + $0xf0] sm:$0xf]
        %v2012 = vld [vmem:[%s11 + $0xf4] sm:$0xf]
        %v2013 = vld [vmem:[%s11 + $0xf8] sm:$0xf]
        %v2014 = vld [vmem:[%s11 + $0xfc] sm:$0xf]
        %v2079 = vunpack.c.l.b16 %v1951
        %v2080 = vunpack.c.l.b16 %v1952
        %v2081 = vunpack.c.l.b16 %v1953
        %v2082 = vunpack.c.l.b16 %v1954
        %v2083 = vunpack.c.l.b16 %v1955
        %v2084 = vunpack.c.l.b16 %v1956
        %v2085 = vunpack.c.l.b16 %v1957
        %v2086 = vunpack.c.l.b16 %v1958
        %v2087 = vunpack.c.l.b16 %v1959
        %v2088 = vunpack.c.l.b16 %v1960
        %v2089 = vunpack.c.l.b16 %v1961
        %v2090 = vunpack.c.l.b16 %v1962
        %v2091 = vunpack.c.l.b16 %v1963
        %v2092 = vunpack.c.l.b16 %v1964
        %v2093 = vunpack.c.l.b16 %v1965
        %v2094 = vunpack.c.l.b16 %v1966
        %v2095 = vunpack.c.l.b16 %v1967
        %v2096 = vunpack.c.l.b16 %v1968
        %v2097 = vunpack.c.l.b16 %v1969
        %v2098 = vunpack.c.l.b16 %v1970
        %v2099 = vunpack.c.l.b16 %v1971
        %v2100 = vunpack.c.l.b16 %v1972
        %v2101 = vunpack.c.l.b16 %v1973
        %v2102 = vunpack.c.l.b16 %v1974
        %v2103 = vunpack.c.l.b16 %v1975
        %v2104 = vunpack.c.l.b16 %v1976
        %v2105 = vunpack.c.l.b16 %v1977
        %v2106 = vunpack.c.l.b16 %v1978
        %v2107 = vunpack.c.l.b16 %v1979
        %v2108 = vunpack.c.l.b16 %v1980
        %v2109 = vunpack.c.l.b16 %v1981
        %v2110 = vunpack.c.l.b16 %v1982
        %v2111 = vunpack.c.l.b16 %v1983
        %v2112 = vunpack.c.l.b16 %v1984
        %v2113 = vunpack.c.l.b16 %v1985
        %v2114 = vunpack.c.l.b16 %v1986
        %v2115 = vunpack.c.l.b16 %v1987
        %v2116 = vunpack.c.l.b16 %v1988
        %v2117 = vunpack.c.l.b16 %v1989
        %v2118 = vunpack.c.l.b16 %v1990
        %v2119 = vunpack.c.l.b16 %v1991
        %v2120 = vunpack.c.l.b16 %v1992
        %v2121 = vunpack.c.l.b16 %v1993
        %v2122 = vunpack.c.l.b16 %v1994
        %v2123 = vunpack.c.l.b16 %v1995
        %v2124 = vunpack.c.l.b16 %v1996
        %v2125 = vunpack.c.l.b16 %v1997
        %v2126 = vunpack.c.l.b16 %v1998
        %v2127 = vunpack.c.l.b16 %v1999
        %v2128 = vunpack.c.l.b16 %v2000
        %v2129 = vunpack.c.l.b16 %v2001
        %v2130 = vunpack.c.l.b16 %v2002
        %v2131 = vunpack.c.l.b16 %v2003
        %v2132 = vunpack.c.l.b16 %v2004
        %v2133 = vunpack.c.l.b16 %v2005
        %v2134 = vunpack.c.l.b16 %v2006
        %v2135 = vunpack.c.l.b16 %v2007
        %v2136 = vunpack.c.l.b16 %v2008
        %v2137 = vunpack.c.l.b16 %v2009
        %v2138 = vunpack.c.l.b16 %v2010
        %v2139 = vunpack.c.l.b16 %v2011
        %v2140 = vunpack.c.l.b16 %v2012
        %v2141 = vunpack.c.l.b16 %v2013
        %v2142 = vunpack.c.l.b16 %v2014
        %v2143 = vpack.c.b16 %v2080, %v2079
        %v2144 = vpack.c.b16 %v2082, %v2081
        %v2145 = vpack.c.b16 %v2084, %v2083
        %v2146 = vpack.c.b16 %v2086, %v2085
        %v2147 = vpack.c.b16 %v2088, %v2087
        %v2148 = vpack.c.b16 %v2090, %v2089
        %v2149 = vpack.c.b16 %v2092, %v2091
        %v2150 = vpack.c.b16 %v2094, %v2093
        %v2151 = vpack.c.b16 %v2096, %v2095
        %v2152 = vpack.c.b16 %v2098, %v2097
        %v2153 = vpack.c.b16 %v2100, %v2099
        %v2154 = vpack.c.b16 %v2102, %v2101
        %v2155 = vpack.c.b16 %v2104, %v2103
        %v2156 = vpack.c.b16 %v2106, %v2105
        %v2157 = vpack.c.b16 %v2108, %v2107
        %v2158 = vpack.c.b16 %v2110, %v2109
        %v2159 = vpack.c.b16 %v2112, %v2111
        %v2160 = vpack.c.b16 %v2114, %v2113
        %v2161 = vpack.c.b16 %v2116, %v2115
        %v2162 = vpack.c.b16 %v2118, %v2117
        %v2163 = vpack.c.b16 %v2120, %v2119
        %v2164 = vpack.c.b16 %v2122, %v2121
        %v2165 = vpack.c.b16 %v2124, %v2123
        %v2166 = vpack.c.b16 %v2126, %v2125
        %v2167 = vpack.c.b16 %v2128, %v2127
        %v2168 = vpack.c.b16 %v2130, %v2129
        %v2169 = vpack.c.b16 %v2132, %v2131
        %v2170 = vpack.c.b16 %v2134, %v2133
        %v2171 = vpack.c.b16 %v2136, %v2135
        %v2172 = vpack.c.b16 %v2138, %v2137
        %v2173 = vpack.c.b16 %v2140, %v2139
        %v2174 = vpack.c.b16 %v2142, %v2141
        %2207 = vmatpush.bf16.msra.mxu0 %v2150
        %2208 = vmatpush.bf16.msra.mxu0 %v2149
        %2209 = vmatpush.bf16.msra.mxu0 %v2148
        %2210 = vmatpush.bf16.msra.mxu0 %v2147
        %2211 = vmatpush.bf16.msra.mxu0 %v2146
        %2212 = vmatpush.bf16.msra.mxu0 %v2145
        %2213 = vmatpush.bf16.msra.mxu0 %v2144
        %2214 = vmatpush.bf16.msra.mxu0 %v2143
        %2215 = vmatmul.bf16.gmra.mxu0 %v1947
        %v2216 = vpop.f32.mrf.mxu0
        %v2217 = vadd.f32 0.0, %v2216
        %v2218 = vpop.f32.mrf.mxu0
        %v2219 = vadd.f32 0.0, %v2218
        %2220 = vdwg.mxu0
        %2221 = vmatpush.bf16.msra.mxu0 %v2158
        %2222 = vmatpush.bf16.msra.mxu0 %v2157
        %2223 = vmatpush.bf16.msra.mxu0 %v2156
        %2224 = vmatpush.bf16.msra.mxu0 %v2155
        %2225 = vmatpush.bf16.msra.mxu0 %v2154
        %2226 = vmatpush.bf16.msra.mxu0 %v2153
        %2227 = vmatpush.bf16.msra.mxu0 %v2152
        %2228 = vmatpush.bf16.msra.mxu0 %v2151
        %2229 = vmatmul.bf16.gmra.mxu0 %v1948
        %v2230 = vpop.f32.mrf.mxu0
        %v2231 = vadd.f32 %v2217, %v2230
        %v2232 = vpop.f32.mrf.mxu0
        %v2233 = vadd.f32 %v2219, %v2232
        %2234 = vdwg.mxu0
        %2235 = vmatpush.bf16.msra.mxu0 %v2166
        %2236 = vmatpush.bf16.msra.mxu0 %v2165
        %2237 = vmatpush.bf16.msra.mxu0 %v2164
        %2238 = vmatpush.bf16.msra.mxu0 %v2163
        %2239 = vmatpush.bf16.msra.mxu0 %v2162
        %2240 = vmatpush.bf16.msra.mxu0 %v2161
        %2241 = vmatpush.bf16.msra.mxu0 %v2160
        %2242 = vmatpush.bf16.msra.mxu0 %v2159
        %2243 = vmatmul.bf16.gmra.mxu0 %v1949
        %v2244 = vpop.f32.mrf.mxu0
        %v2245 = vadd.f32 %v2231, %v2244
        %v2246 = vpop.f32.mrf.mxu0
        %v2247 = vadd.f32 %v2233, %v2246
        %2248 = vdwg.mxu0
        %2249 = vmatpush.bf16.msra.mxu0 %v2174
        %2250 = vmatpush.bf16.msra.mxu0 %v2173
        %2251 = vmatpush.bf16.msra.mxu0 %v2172
        %2252 = vmatpush.bf16.msra.mxu0 %v2171
        %2253 = vmatpush.bf16.msra.mxu0 %v2170
        %2254 = vmatpush.bf16.msra.mxu0 %v2169
        %2255 = vmatpush.bf16.msra.mxu0 %v2168
        %2256 = vmatpush.bf16.msra.mxu0 %v2167
        %2257 = vmatmul.bf16.gmra.mxu0 %v1950
        %v2258 = vpop.f32.mrf.mxu0
        %v2259 = vadd.f32 %v2245, %v2258
        %v2260 = vpop.f32.mrf.mxu0
        %v2261 = vadd.f32 %v2247, %v2260
        %2262 = vdwg.mxu0
        %v2263 = vadd.f32 %v1560, %v2259
        %v2264 = vadd.f32 %v1561, %v2261
        %v2265 = vld [vmem:[%s12] sm:$0x1]
        %v2267 = vperm.slane %v2265, 0
        %v2269 = vadd.f32 %v2263, %v2267
        %v2270 = vadd.f32 %v2264, %v2267
        %v2271 = vld [vmem:[%s13] sm:$0x1]
        %v2272 = vld [vmem:[%s14] sm:$0x1]
        %2273 = vadd.xlane.f32.xlu0 %v2269
        %v2274 = vpop.xlane.xlu0 %2273
        %v2275 = vsel %vm876, %v2270, 0.0
        %2276 = vadd.xlane.f32.xlu0 %v2275
        %v2277 = vpop.xlane.xlu0 %2276
        %v2278 = vmul.f32 %v2274, %v886
        %v2279 = vmul.f32 %v2277, %v886
        %v2280 = vsub.f32 %v2269, %v2278
        %v2281 = vsub.f32 %v2270, %v2279
        %v2282 = vmul.f32 %v2280, %v2280
        %v2283 = vmul.f32 %v2281, %v2281
        %2284 = vadd.xlane.f32.xlu0 %v2282
        %v2285 = vpop.xlane.xlu0 %2284
        %v2286 = vsel %vm876, %v2283, 0.0
        %2287 = vadd.xlane.f32.xlu0 %v2286
        %v2288 = vpop.xlane.xlu0 %2287
        %v2289 = vmul.f32 %v2285, %v886
        %v2290 = vmul.f32 %v2288, %v886
        %v2291 = vadd.f32 %v2289, 1e-05
        %v2292 = vadd.f32 %v2290, 1e-05
        %v2293 = vrsqrt.pop %v2291
        %v2294 = vmul.f32 %v2293, %v2291
        %v2295 = vmul.f32 %v2294, %v2293
        %v2296 = vmul.f32 0.5, %v2295
        %v2297 = vsub.f32 1.5, %v2296
        %v2298 = vmul.f32 %v2293, %v2297
        %vm2299 = vweird.f32 %v2291
        %vm2300 = vweird.f32 %v2293
        %vm2301 = vmor %vm2299, %vm2300
        %v2302 = vsel %vm2301, %v2293, %v2298
        %v2303 = vrsqrt.pop %v2292
        %v2304 = vmul.f32 %v2303, %v2292
        %v2305 = vmul.f32 %v2304, %v2303
        %v2306 = vmul.f32 0.5, %v2305
        %v2307 = vsub.f32 1.5, %v2306
        %v2308 = vmul.f32 %v2303, %v2307
        %vm2309 = vweird.f32 %v2292
        %vm2310 = vweird.f32 %v2303
        %vm2311 = vmor %vm2309, %vm2310
        %v2312 = vsel %vm2311, %v2303, %v2308
        %v2313 = vmul.f32 %v2280, %v2302
        %v2314 = vmul.f32 %v2281, %v2312
        %v2316 = vperm.slane %v2271, 0
        %v2318 = vmul.f32 %v2313, %v2316
        %v2319 = vmul.f32 %v2314, %v2316
        %v2321 = vperm.slane %v2272, 0
        %v2323 = vadd.f32 %v2318, %v2321
        %v2324 = vadd.f32 %v2319, %v2321
        %v2325 = vpack.c.bf16 %v2324, %v2323
        %v2326 = vld [vmem:[#allocation4] sm:$0xff]
        %v2327 = vld [vmem:[#allocation4 + $0x8] sm:$0xf]
        %v2328 = vld [vmem:[#allocation4 + $0xc] sm:$0xff]
        %v2329 = vld [vmem:[#allocation4 + $0x14] sm:$0xf]
        %v2330 = vld [vmem:[#allocation4 + $0x18] sm:$0xff]
        %v2331 = vld [vmem:[#allocation4 + $0x20] sm:$0xf]
        %v2332 = vld [vmem:[#allocation4 + $0x24] sm:$0xff]
        %v2333 = vld [vmem:[#allocation4 + $0x2c] sm:$0xf]
        %v2334 = vld [vmem:[#allocation4 + $0x30] sm:$0xff]
        %v2335 = vld [vmem:[#allocation4 + $0x38] sm:$0xf]
        %v2336 = vld [vmem:[#allocation4 + $0x3c] sm:$0xff]
        %v2337 = vld [vmem:[#allocation4 + $0x44] sm:$0xf]
        %v2338 = vld [vmem:[#allocation4 + $0x48] sm:$0xff]
        %v2339 = vld [vmem:[#allocation4 + $0x50] sm:$0xf]
        %v2340 = vld [vmem:[#allocation4 + $0x54] sm:$0xff]
        %v2341 = vld [vmem:[#allocation4 + $0x5c] sm:$0xf]
        %v2342 = vld [vmem:[#allocation4 + $0x60] sm:$0xff]
        %v2343 = vld [vmem:[#allocation4 + $0x68] sm:$0xf]
        %v2344 = vld [vmem:[#allocation4 + $0x6c] sm:$0xff]
        %v2345 = vld [vmem:[#allocation4 + $0x74] sm:$0xf]
        %v2346 = vld [vmem:[#allocation4 + $0x78] sm:$0xff]
        %v2347 = vld [vmem:[#allocation4 + $0x80] sm:$0xf]
        %v2348 = vld [vmem:[#allocation4 + $0x84] sm:$0xff]
        %v2349 = vld [vmem:[#allocation4 + $0x8c] sm:$0xf]
        %v2350 = vld [vmem:[#allocation4 + $0x90] sm:$0xff]
        %v2351 = vld [vmem:[#allocation4 + $0x98] sm:$0xf]
        %v2352 = vld [vmem:[#allocation4 + $0x9c] sm:$0xff]
        %v2353 = vld [vmem:[#allocation4 + $0xa4] sm:$0xf]
        %v2354 = vld [vmem:[#allocation4 + $0xa8] sm:$0xff]
        %v2355 = vld [vmem:[#allocation4 + $0xb0] sm:$0xf]
        %v2356 = vld [vmem:[#allocation4 + $0xb4] sm:$0xff]
        %v2357 = vld [vmem:[#allocation4 + $0xbc] sm:$0xf]
        %v2358 = vld [vmem:[%s16] sm:$0x7]
        %v2360 = vperm.slane %v2358, 0
        %v2361 = vperm.slane %v2358, 1
        %v2362 = vperm.slane %v2358, 2
        %v2398 = vunpack.c.l.b16 %v2326
        %v2399 = vunpack.c.h.b16 %v2326
        %v2400 = vunpack.c.l.b16 %v2327
        %v2401 = vunpack.c.l.b16 %v2328
        %v2402 = vunpack.c.h.b16 %v2328
        %v2403 = vunpack.c.l.b16 %v2329
        %v2404 = vunpack.c.l.b16 %v2330
        %v2405 = vunpack.c.h.b16 %v2330
        %v2406 = vunpack.c.l.b16 %v2331
        %v2407 = vunpack.c.l.b16 %v2332
        %v2408 = vunpack.c.h.b16 %v2332
        %v2409 = vunpack.c.l.b16 %v2333
        %v2410 = vunpack.c.l.b16 %v2334
        %v2411 = vunpack.c.h.b16 %v2334
        %v2412 = vunpack.c.l.b16 %v2335
        %v2413 = vunpack.c.l.b16 %v2336
        %v2414 = vunpack.c.h.b16 %v2336
        %v2415 = vunpack.c.l.b16 %v2337
        %v2416 = vunpack.c.l.b16 %v2338
        %v2417 = vunpack.c.h.b16 %v2338
        %v2418 = vunpack.c.l.b16 %v2339
        %v2419 = vunpack.c.l.b16 %v2340
        %v2420 = vunpack.c.h.b16 %v2340
        %v2421 = vunpack.c.l.b16 %v2341
        %v2422 = vunpack.c.l.b16 %v2342
        %v2423 = vunpack.c.h.b16 %v2342
        %v2424 = vunpack.c.l.b16 %v2343
        %v2425 = vunpack.c.l.b16 %v2344
        %v2426 = vunpack.c.h.b16 %v2344
        %v2427 = vunpack.c.l.b16 %v2345
        %v2428 = vunpack.c.l.b16 %v2346
        %v2429 = vunpack.c.h.b16 %v2346
        %v2430 = vunpack.c.l.b16 %v2347
        %v2431 = vunpack.c.l.b16 %v2348
        %v2432 = vunpack.c.h.b16 %v2348
        %v2433 = vunpack.c.l.b16 %v2349
        %v2434 = vunpack.c.l.b16 %v2350
        %v2435 = vunpack.c.h.b16 %v2350
        %v2436 = vunpack.c.l.b16 %v2351
        %v2437 = vunpack.c.l.b16 %v2352
        %v2438 = vunpack.c.h.b16 %v2352
        %v2439 = vunpack.c.l.b16 %v2353
        %v2440 = vunpack.c.l.b16 %v2354
        %v2441 = vunpack.c.h.b16 %v2354
        %v2442 = vunpack.c.l.b16 %v2355
        %v2443 = vunpack.c.l.b16 %v2356
        %v2444 = vunpack.c.h.b16 %v2356
        %v2445 = vunpack.c.l.b16 %v2357
        %v2446 = vpack.c.b16 %v2401, %v2398
        %v2447 = vpack.c.b16 %v2402, %v2399
        %v2448 = vpack.c.b16 %v2403, %v2400
        %v2449 = vpack.c.b16 %v2407, %v2404
        %v2450 = vpack.c.b16 %v2408, %v2405
        %v2451 = vpack.c.b16 %v2409, %v2406
        %v2452 = vpack.c.b16 %v2413, %v2410
        %v2453 = vpack.c.b16 %v2414, %v2411
        %v2454 = vpack.c.b16 %v2415, %v2412
        %v2455 = vpack.c.b16 %v2419, %v2416
        %v2456 = vpack.c.b16 %v2420, %v2417
        %v2457 = vpack.c.b16 %v2421, %v2418
        %v2458 = vpack.c.b16 %v2425, %v2422
        %v2459 = vpack.c.b16 %v2426, %v2423
        %v2460 = vpack.c.b16 %v2427, %v2424
        %v2461 = vpack.c.b16 %v2431, %v2428
        %v2462 = vpack.c.b16 %v2432, %v2429
        %v2463 = vpack.c.b16 %v2433, %v2430
        %v2464 = vpack.c.b16 %v2437, %v2434
        %v2465 = vpack.c.b16 %v2438, %v2435
        %v2466 = vpack.c.b16 %v2439, %v2436
        %v2467 = vpack.c.b16 %v2443, %v2440
        %v2468 = vpack.c.b16 %v2444, %v2441
        %v2469 = vpack.c.b16 %v2445, %v2442
        %2494 = vmatpush.bf16.msra.mxu0 %v2467
        %2495 = vmatpush.bf16.msra.mxu0 %v2464
        %2496 = vmatpush.bf16.msra.mxu0 %v2461
        %2497 = vmatpush.bf16.msra.mxu0 %v2458
        %2498 = vmatpush.bf16.msra.mxu0 %v2455
        %2499 = vmatpush.bf16.msra.mxu0 %v2452
        %2500 = vmatpush.bf16.msra.mxu0 %v2449
        %2501 = vmatpush.bf16.msra.mxu0 %v2446
        %2502 = vmatmul.bf16.gmra.mxu0 %v2325
        %v2503 = vpop.f32.mrf.mxu0
        %v2504 = vadd.f32 %v2360, %v2503
        %v2505 = vpop.f32.mrf.mxu0
        %v2506 = vadd.f32 %v2360, %v2505
        %2507 = vdwg.mxu0
        %2508 = vmatpush.bf16.msra.mxu0 %v2468
        %2509 = vmatpush.bf16.msra.mxu0 %v2465
        %2510 = vmatpush.bf16.msra.mxu0 %v2462
        %2511 = vmatpush.bf16.msra.mxu0 %v2459
        %2512 = vmatpush.bf16.msra.mxu0 %v2456
        %2513 = vmatpush.bf16.msra.mxu0 %v2453
        %2514 = vmatpush.bf16.msra.mxu0 %v2450
        %2515 = vmatpush.bf16.msra.mxu0 %v2447
        %2516 = vmatmul.bf16.gmra.mxu0 %v2325
        %v2517 = vpop.f32.mrf.mxu0
        %v2518 = vadd.f32 %v2361, %v2517
        %v2519 = vpop.f32.mrf.mxu0
        %v2520 = vadd.f32 %v2361, %v2519
        %2521 = vdwg.mxu0
        %2522 = vmatpush.bf16.msra.mxu0 %v2469
        %2523 = vmatpush.bf16.msra.mxu0 %v2466
        %2524 = vmatpush.bf16.msra.mxu0 %v2463
        %2525 = vmatpush.bf16.msra.mxu0 %v2460
        %2526 = vmatpush.bf16.msra.mxu0 %v2457
        %2527 = vmatpush.bf16.msra.mxu0 %v2454
        %2528 = vmatpush.bf16.msra.mxu0 %v2451
        %2529 = vmatpush.bf16.msra.mxu0 %v2448
        %2530 = vmatmul.bf16.gmra.mxu0 %v2325
        %v2531 = vpop.f32.mrf.mxu0
        %v2532 = vadd.f32 %v2362, %v2531
        %v2533 = vpop.f32.mrf.mxu0
        %v2534 = vadd.f32 %v2362, %v2533
        %2535 = vdwg.mxu0
        %v2536 = vmul.f32 %v2504, 0.17677669
        %v2537 = vmul.f32 %v2506, 0.17677669
        %v2538 = vpack.c.bf16 %v2536, %v2536
        %v2539 = vpack.c.bf16 %v2537, %v2537
        %v2540 = vpack.c.bf16 %v2518, %v2518
        %v2541 = vpack.c.bf16 %v2520, %v2520
        %v2542 = vpack.c.bf16 %v2532, %v2532
        %v2543 = vpack.c.bf16 %v2534, %v2534
        %v2546 = vunpack.c.l.b16 %v2538
        %v2547 = vunpack.c.l.b16 %v2539
        %v2548 = vpack.c.b16 %v2547, %v2546
        %v2551 = vunpack.c.l.b16 %v2540
        %v2552 = vunpack.c.l.b16 %v2541
        %v2553 = vpack.c.b16 %v2552, %v2551
        %v2555 = vsel %vm1163, %v2548, 0
        %v2558 = vsel %vm1163, %v2553, 0
        %2560 = vmatpush.bf16.xpose.msra.mxu0 0
        %2561 = vmatpush.bf16.xpose.msra.mxu0 0
        %2562 = vmatpush.bf16.xpose.msra.mxu0 0
        %2563 = vmatpush.bf16.xpose.msra.mxu0 0
        %2564 = vmatpush.bf16.xpose.msra.mxu0 0
        %2565 = vmatpush.bf16.xpose.msra.mxu0 0
        %2566 = vmatpush.bf16.xpose.msra.mxu0 0
        %2567 = vmatpush.bf16.xpose.msra.mxu0 %v2558
        %2568 = vmatmul.bf16.gmra.mxu0 %v2555
        %v2569 = vpop.f32.mrf.mxu0
        %v2570 = vadd.f32 0.0, %v2569
        %v2571 = vpop.f32.mrf.mxu0
        %v2572 = vadd.f32 0.0, %v2571
        %2573 = vdwg.mxu0
        %v2574 = vsel %vm1184, %v2570, -inf
        %2575 = vmax.xlane.f32.xlu0 %v2574
        %v2576 = vpop.xlane.xlu0 %2575
        %v2577 = vsel %vm1188, %v2572, -inf
        %2578 = vmax.xlane.f32.xlu0 %v2577
        %v2579 = vpop.xlane.xlu0 %2578
        %v2580 = vsub.f32 %v2570, %v2576
        %v2581 = vsub.f32 %v2572, %v2579
        %v2582 = vmul.f32 %v2580, 1.442695
        %v2583 = vpow.pop %v2582
        %v2584 = vmul.f32 %v2581, 1.442695
        %v2585 = vpow.pop %v2584
        %v2586 = vsel %vm1184, %v2583, 0.0
        %2587 = vadd.xlane.f32.xlu0 %v2586
        %v2588 = vpop.xlane.xlu0 %2587
        %v2589 = vsel %vm1188, %v2585, 0.0
        %2590 = vadd.xlane.f32.xlu0 %v2589
        %v2591 = vpop.xlane.xlu0 %2590
        %v2592 = vrcp.pop %v2588
        %v2593 = vrcp.pop %v2591
        %v2594 = vmul.f32 %v2583, %v2592
        %v2595 = vmul.f32 %v2585, %v2593
        %v2596 = vpack.c.bf16 %v2595, %v2594
        %v2599 = vunpack.c.l.b16 %v2542
        %v2600 = vunpack.c.l.b16 %v2543
        %v2601 = vpack.c.b16 %v2600, %v2599
        %v2603 = vsel %vm1184, %v2596, 0
        %v2606 = vand.u32 %v2601, %v1220
        %2608 = vmatpush.bf16.msra.mxu0 0
        %2609 = vmatpush.bf16.msra.mxu0 0
        %2610 = vmatpush.bf16.msra.mxu0 0
        %2611 = vmatpush.bf16.msra.mxu0 0
        %2612 = vmatpush.bf16.msra.mxu0 0
        %2613 = vmatpush.bf16.msra.mxu0 0
        %2614 = vmatpush.bf16.msra.mxu0 0
        %2615 = vmatpush.bf16.msra.mxu0 %v2606
        %2616 = vmatmul.bf16.gmra.mxu0 %v2603
        %v2617 = vpop.f32.mrf.mxu0
        %v2618 = vadd.f32 0.0, %v2617
        %v2619 = vpop.f32.mrf.mxu0
        %v2620 = vadd.f32 0.0, %v2619
        %2621 = vdwg.mxu0
        %2622 = vrot.lane.b32.xlu0 %v2548, 96
        %v2623 = vpop.permute.xlu0 %2622
        %2624 = vrot.lane.b32.xlu0 %v2553, 96
        %v2625 = vpop.permute.xlu0 %2624
        %v2627 = vsel %vm1163, %v2623, 0
        %v2630 = vsel %vm1163, %v2625, 0
        %2632 = vmatpush.bf16.xpose.msra.mxu0 0
        %2633 = vmatpush.bf16.xpose.msra.mxu0 0
        %2634 = vmatpush.bf16.xpose.msra.mxu0 0
        %2635 = vmatpush.bf16.xpose.msra.mxu0 0
        %2636 = vmatpush.bf16.xpose.msra.mxu0 0
        %2637 = vmatpush.bf16.xpose.msra.mxu0 0
        %2638 = vmatpush.bf16.xpose.msra.mxu0 0
        %2639 = vmatpush.bf16.xpose.msra.mxu0 %v2630
        %2640 = vmatmul.bf16.gmra.mxu0 %v2627
        %v2641 = vpop.f32.mrf.mxu0
        %v2642 = vadd.f32 0.0, %v2641
        %v2643 = vpop.f32.mrf.mxu0
        %v2644 = vadd.f32 0.0, %v2643
        %2645 = vdwg.mxu0
        %v2646 = vsel %vm1184, %v2642, -inf
        %2647 = vmax.xlane.f32.xlu0 %v2646
        %v2648 = vpop.xlane.xlu0 %2647
        %v2649 = vsel %vm1188, %v2644, -inf
        %2650 = vmax.xlane.f32.xlu0 %v2649
        %v2651 = vpop.xlane.xlu0 %2650
        %v2652 = vsub.f32 %v2642, %v2648
        %v2653 = vsub.f32 %v2644, %v2651
        %v2654 = vmul.f32 %v2652, 1.442695
        %v2655 = vpow.pop %v2654
        %v2656 = vmul.f32 %v2653, 1.442695
        %v2657 = vpow.pop %v2656
        %v2658 = vsel %vm1184, %v2655, 0.0
        %2659 = vadd.xlane.f32.xlu0 %v2658
        %v2660 = vpop.xlane.xlu0 %2659
        %v2661 = vsel %vm1188, %v2657, 0.0
        %2662 = vadd.xlane.f32.xlu0 %v2661
        %v2663 = vpop.xlane.xlu0 %2662
        %v2664 = vrcp.pop %v2660
        %v2665 = vrcp.pop %v2663
        %v2666 = vmul.f32 %v2655, %v2664
        %v2667 = vmul.f32 %v2657, %v2665
        %v2668 = vpack.c.bf16 %v2667, %v2666
        %2669 = vrot.lane.b32.xlu0 %v2601, 96
        %v2670 = vpop.permute.xlu0 %2669
        %v2672 = vsel %vm1184, %v2668, 0
        %v2675 = vand.u32 %v2670, %v1220
        %2677 = vmatpush.bf16.msra.mxu0 0
        %2678 = vmatpush.bf16.msra.mxu0 0
        %2679 = vmatpush.bf16.msra.mxu0 0
        %2680 = vmatpush.bf16.msra.mxu0 0
        %2681 = vmatpush.bf16.msra.mxu0 0
        %2682 = vmatpush.bf16.msra.mxu0 0
        %2683 = vmatpush.bf16.msra.mxu0 0
        %2684 = vmatpush.bf16.msra.mxu0 %v2675
        %2685 = vmatmul.bf16.gmra.mxu0 %v2672
        %v2686 = vpop.f32.mrf.mxu0
        %v2687 = vadd.f32 0.0, %v2686
        %v2688 = vpop.f32.mrf.mxu0
        %v2689 = vadd.f32 0.0, %v2688
        %2690 = vdwg.mxu0
        %2691 = vrot.lane.b32.xlu0 %v2548, 64
        %v2692 = vpop.permute.xlu0 %2691
        %2693 = vrot.lane.b32.xlu0 %v2553, 64
        %v2694 = vpop.permute.xlu0 %2693
        %v2696 = vsel %vm1163, %v2692, 0
        %v2699 = vsel %vm1163, %v2694, 0
        %2701 = vmatpush.bf16.xpose.msra.mxu0 0
        %2702 = vmatpush.bf16.xpose.msra.mxu0 0
        %2703 = vmatpush.bf16.xpose.msra.mxu0 0
        %2704 = vmatpush.bf16.xpose.msra.mxu0 0
        %2705 = vmatpush.bf16.xpose.msra.mxu0 0
        %2706 = vmatpush.bf16.xpose.msra.mxu0 0
        %2707 = vmatpush.bf16.xpose.msra.mxu0 0
        %2708 = vmatpush.bf16.xpose.msra.mxu0 %v2699
        %2709 = vmatmul.bf16.gmra.mxu0 %v2696
        %v2710 = vpop.f32.mrf.mxu0
        %v2711 = vadd.f32 0.0, %v2710
        %v2712 = vpop.f32.mrf.mxu0
        %v2713 = vadd.f32 0.0, %v2712
        %2714 = vdwg.mxu0
        %v2715 = vsel %vm1184, %v2711, -inf
        %2716 = vmax.xlane.f32.xlu0 %v2715
        %v2717 = vpop.xlane.xlu0 %2716
        %v2718 = vsel %vm1188, %v2713, -inf
        %2719 = vmax.xlane.f32.xlu0 %v2718
        %v2720 = vpop.xlane.xlu0 %2719
        %v2721 = vsub.f32 %v2711, %v2717
        %v2722 = vsub.f32 %v2713, %v2720
        %v2723 = vmul.f32 %v2721, 1.442695
        %v2724 = vpow.pop %v2723
        %v2725 = vmul.f32 %v2722, 1.442695
        %v2726 = vpow.pop %v2725
        %v2727 = vsel %vm1184, %v2724, 0.0
        %2728 = vadd.xlane.f32.xlu0 %v2727
        %v2729 = vpop.xlane.xlu0 %2728
        %v2730 = vsel %vm1188, %v2726, 0.0
        %2731 = vadd.xlane.f32.xlu0 %v2730
        %v2732 = vpop.xlane.xlu0 %2731
        %v2733 = vrcp.pop %v2729
        %v2734 = vrcp.pop %v2732
        %v2735 = vmul.f32 %v2724, %v2733
        %v2736 = vmul.f32 %v2726, %v2734
        %v2737 = vpack.c.bf16 %v2736, %v2735
        %2738 = vrot.lane.b32.xlu0 %v2601, 64
        %v2739 = vpop.permute.xlu0 %2738
        %v2741 = vsel %vm1184, %v2737, 0
        %v2744 = vand.u32 %v2739, %v1220
        %2746 = vmatpush.bf16.msra.mxu0 0
        %2747 = vmatpush.bf16.msra.mxu0 0
        %2748 = vmatpush.bf16.msra.mxu0 0
        %2749 = vmatpush.bf16.msra.mxu0 0
        %2750 = vmatpush.bf16.msra.mxu0 0
        %2751 = vmatpush.bf16.msra.mxu0 0
        %2752 = vmatpush.bf16.msra.mxu0 0
        %2753 = vmatpush.bf16.msra.mxu0 %v2744
        %2754 = vmatmul.bf16.gmra.mxu0 %v2741
        %v2755 = vpop.f32.mrf.mxu0
        %v2756 = vadd.f32 0.0, %v2755
        %v2757 = vpop.f32.mrf.mxu0
        %v2758 = vadd.f32 0.0, %v2757
        %2759 = vdwg.mxu0
        %2760 = vrot.lane.b32.xlu0 %v2548, 32
        %v2761 = vpop.permute.xlu0 %2760
        %2762 = vrot.lane.b32.xlu0 %v2553, 32
        %v2763 = vpop.permute.xlu0 %2762
        %v2765 = vsel %vm1163, %v2761, 0
        %v2768 = vsel %vm1163, %v2763, 0
        %2770 = vmatpush.bf16.xpose.msra.mxu0 0
        %2771 = vmatpush.bf16.xpose.msra.mxu0 0
        %2772 = vmatpush.bf16.xpose.msra.mxu0 0
        %2773 = vmatpush.bf16.xpose.msra.mxu0 0
        %2774 = vmatpush.bf16.xpose.msra.mxu0 0
        %2775 = vmatpush.bf16.xpose.msra.mxu0 0
        %2776 = vmatpush.bf16.xpose.msra.mxu0 0
        %2777 = vmatpush.bf16.xpose.msra.mxu0 %v2768
        %2778 = vmatmul.bf16.gmra.mxu0 %v2765
        %v2779 = vpop.f32.mrf.mxu0
        %v2780 = vadd.f32 0.0, %v2779
        %v2781 = vpop.f32.mrf.mxu0
        %v2782 = vadd.f32 0.0, %v2781
        %2783 = vdwg.mxu0
        %v2784 = vsel %vm1184, %v2780, -inf
        %2785 = vmax.xlane.f32.xlu0 %v2784
        %v2786 = vpop.xlane.xlu0 %2785
        %v2787 = vsel %vm1188, %v2782, -inf
        %2788 = vmax.xlane.f32.xlu0 %v2787
        %v2789 = vpop.xlane.xlu0 %2788
        %v2790 = vsub.f32 %v2780, %v2786
        %v2791 = vsub.f32 %v2782, %v2789
        %v2792 = vmul.f32 %v2790, 1.442695
        %v2793 = vpow.pop %v2792
        %v2794 = vmul.f32 %v2791, 1.442695
        %v2795 = vpow.pop %v2794
        %v2796 = vsel %vm1184, %v2793, 0.0
        %2797 = vadd.xlane.f32.xlu0 %v2796
        %v2798 = vpop.xlane.xlu0 %2797
        %v2799 = vsel %vm1188, %v2795, 0.0
        %2800 = vadd.xlane.f32.xlu0 %v2799
        %v2801 = vpop.xlane.xlu0 %2800
        %v2802 = vrcp.pop %v2798
        %v2803 = vrcp.pop %v2801
        %v2804 = vmul.f32 %v2793, %v2802
        %v2805 = vmul.f32 %v2795, %v2803
        %v2806 = vpack.c.bf16 %v2805, %v2804
        %2807 = vrot.lane.b32.xlu0 %v2601, 32
        %v2808 = vpop.permute.xlu0 %2807
        %v2810 = vsel %vm1184, %v2806, 0
        %v2813 = vand.u32 %v2808, %v1220
        %2815 = vmatpush.bf16.msra.mxu0 0
        %2816 = vmatpush.bf16.msra.mxu0 0
        %2817 = vmatpush.bf16.msra.mxu0 0
        %2818 = vmatpush.bf16.msra.mxu0 0
        %2819 = vmatpush.bf16.msra.mxu0 0
        %2820 = vmatpush.bf16.msra.mxu0 0
        %2821 = vmatpush.bf16.msra.mxu0 0
        %2822 = vmatpush.bf16.msra.mxu0 %v2813
        %2823 = vmatmul.bf16.gmra.mxu0 %v2810
        %v2824 = vpop.f32.mrf.mxu0
        %v2825 = vadd.f32 0.0, %v2824
        %v2826 = vpop.f32.mrf.mxu0
        %v2827 = vadd.f32 0.0, %v2826
        %2828 = vdwg.mxu0
        %2831 = vrot.lane.b32.xlu0 %v2687, 32
        %v2832 = vpop.permute.xlu0 %2831
        %2833 = vrot.lane.b32.xlu0 %v2689, 32
        %v2834 = vpop.permute.xlu0 %2833
        %2839 = vrot.lane.b32.xlu0 %v2756, 64
        %v2840 = vpop.permute.xlu0 %2839
        %2841 = vrot.lane.b32.xlu0 %v2758, 64
        %v2842 = vpop.permute.xlu0 %2841
        %2847 = vrot.lane.b32.xlu0 %v2825, 96
        %v2848 = vpop.permute.xlu0 %2847
        %2849 = vrot.lane.b32.xlu0 %v2827, 96
        %v2850 = vpop.permute.xlu0 %2849
        %v2853 = vsel %vm1163, %v2618, %v2832
        %v2854 = vsel %vm1163, %v2620, %v2834
        %v2855 = vsel %vm1471, %v2853, %v2840
        %v2856 = vsel %vm1471, %v2854, %v2842
        %v2857 = vsel %vm1474, %v2855, %v2848
        %v2858 = vsel %vm1474, %v2856, %v2850
        %v2859 = vpack.c.bf16 %v2858, %v2857
        %v2860 = vld [vmem:[%s17] sm:$0xf]
        %v2861 = vld [vmem:[%s17 + $0x4] sm:$0xf]
        %v2862 = vld [vmem:[%s17 + $0x8] sm:$0xf]
        %v2863 = vld [vmem:[%s17 + $0xc] sm:$0xf]
        %v2864 = vld [vmem:[%s17 + $0x10] sm:$0xf]
        %v2865 = vld [vmem:[%s17 + $0x14] sm:$0xf]
        %v2866 = vld [vmem:[%s17 + $0x18] sm:$0xf]
        %v2867 = vld [vmem:[%s17 + $0x1c] sm:$0xf]
        %v2868 = vld [vmem:[%s17 + $0x20] sm:$0xf]
        %v2869 = vld [vmem:[%s17 + $0x24] sm:$0xf]
        %v2870 = vld [vmem:[%s17 + $0x28] sm:$0xf]
        %v2871 = vld [vmem:[%s17 + $0x2c] sm:$0xf]
        %v2872 = vld [vmem:[%s17 + $0x30] sm:$0xf]
        %v2873 = vld [vmem:[%s17 + $0x34] sm:$0xf]
        %v2874 = vld [vmem:[%s17 + $0x38] sm:$0xf]
        %v2875 = vld [vmem:[%s17 + $0x3c] sm:$0xf]
        %v2876 = vld [vmem:[%s18] sm:$0x1]
        %v2878 = vperm.slane %v2876, 0
        %v2896 = vunpack.c.l.b16 %v2860
        %v2897 = vunpack.c.l.b16 %v2861
        %v2898 = vunpack.c.l.b16 %v2862
        %v2899 = vunpack.c.l.b16 %v2863
        %v2900 = vunpack.c.l.b16 %v2864
        %v2901 = vunpack.c.l.b16 %v2865
        %v2902 = vunpack.c.l.b16 %v2866
        %v2903 = vunpack.c.l.b16 %v2867
        %v2904 = vunpack.c.l.b16 %v2868
        %v2905 = vunpack.c.l.b16 %v2869
        %v2906 = vunpack.c.l.b16 %v2870
        %v2907 = vunpack.c.l.b16 %v2871
        %v2908 = vunpack.c.l.b16 %v2872
        %v2909 = vunpack.c.l.b16 %v2873
        %v2910 = vunpack.c.l.b16 %v2874
        %v2911 = vunpack.c.l.b16 %v2875
        %v2912 = vpack.c.b16 %v2897, %v2896
        %v2913 = vpack.c.b16 %v2899, %v2898
        %v2914 = vpack.c.b16 %v2901, %v2900
        %v2915 = vpack.c.b16 %v2903, %v2902
        %v2916 = vpack.c.b16 %v2905, %v2904
        %v2917 = vpack.c.b16 %v2907, %v2906
        %v2918 = vpack.c.b16 %v2909, %v2908
        %v2919 = vpack.c.b16 %v2911, %v2910
        %2928 = vmatpush.bf16.msra.mxu0 %v2919
        %2929 = vmatpush.bf16.msra.mxu0 %v2918
        %2930 = vmatpush.bf16.msra.mxu0 %v2917
        %2931 = vmatpush.bf16.msra.mxu0 %v2916
        %2932 = vmatpush.bf16.msra.mxu0 %v2915
        %2933 = vmatpush.bf16.msra.mxu0 %v2914
        %2934 = vmatpush.bf16.msra.mxu0 %v2913
        %2935 = vmatpush.bf16.msra.mxu0 %v2912
        %2936 = vmatmul.bf16.gmra.mxu0 %v2859
        %v2937 = vpop.f32.mrf.mxu0
        %v2938 = vadd.f32 %v2878, %v2937
        %v2939 = vpop.f32.mrf.mxu0
        %v2940 = vadd.f32 %v2878, %v2939
        %2941 = vdwg.mxu0
        %v2942 = vadd.f32 %v2269, %v2938
        %v2943 = vadd.f32 %v2270, %v2940
        %v2944 = vld [vmem:[%s19] sm:$0x1]
        %v2945 = vld [vmem:[%s20] sm:$0x1]
        %2946 = vadd.xlane.f32.xlu0 %v2942
        %v2947 = vpop.xlane.xlu0 %2946
        %v2948 = vsel %vm876, %v2943, 0.0
        %2949 = vadd.xlane.f32.xlu0 %v2948
        %v2950 = vpop.xlane.xlu0 %2949
        %v2951 = vmul.f32 %v2947, %v886
        %v2952 = vmul.f32 %v2950, %v886
        %v2953 = vsub.f32 %v2942, %v2951
        %v2954 = vsub.f32 %v2943, %v2952
        %v2955 = vmul.f32 %v2953, %v2953
        %v2956 = vmul.f32 %v2954, %v2954
        %2957 = vadd.xlane.f32.xlu0 %v2955
        %v2958 = vpop.xlane.xlu0 %2957
        %v2959 = vsel %vm876, %v2956, 0.0
        %2960 = vadd.xlane.f32.xlu0 %v2959
        %v2961 = vpop.xlane.xlu0 %2960
        %v2962 = vmul.f32 %v2958, %v886
        %v2963 = vmul.f32 %v2961, %v886
        %v2964 = vadd.f32 %v2962, 1e-05
        %v2965 = vadd.f32 %v2963, 1e-05
        %v2966 = vrsqrt.pop %v2964
        %v2967 = vmul.f32 %v2966, %v2964
        %v2968 = vmul.f32 %v2967, %v2966
        %v2969 = vmul.f32 0.5, %v2968
        %v2970 = vsub.f32 1.5, %v2969
        %v2971 = vmul.f32 %v2966, %v2970
        %vm2972 = vweird.f32 %v2964
        %vm2973 = vweird.f32 %v2966
        %vm2974 = vmor %vm2972, %vm2973
        %v2975 = vsel %vm2974, %v2966, %v2971
        %v2976 = vrsqrt.pop %v2965
        %v2977 = vmul.f32 %v2976, %v2965
        %v2978 = vmul.f32 %v2977, %v2976
        %v2979 = vmul.f32 0.5, %v2978
        %v2980 = vsub.f32 1.5, %v2979
        %v2981 = vmul.f32 %v2976, %v2980
        %vm2982 = vweird.f32 %v2965
        %vm2983 = vweird.f32 %v2976
        %vm2984 = vmor %vm2982, %vm2983
        %v2985 = vsel %vm2984, %v2976, %v2981
        %v2986 = vmul.f32 %v2953, %v2975
        %v2987 = vmul.f32 %v2954, %v2985
        %v2989 = vperm.slane %v2944, 0
        %v2991 = vmul.f32 %v2986, %v2989
        %v2992 = vmul.f32 %v2987, %v2989
        %v2994 = vperm.slane %v2945, 0
        %v2996 = vadd.f32 %v2991, %v2994
        %v2997 = vadd.f32 %v2992, %v2994
        %v2998 = vpack.c.bf16 %v2997, %v2996
        %v2999 = vld [vmem:[%s21] sm:$0xff]
        %v3000 = vld [vmem:[%s21 + $0x8] sm:$0xff]
        %v3001 = vld [vmem:[%s21 + $0x10] sm:$0xff]
        %v3002 = vld [vmem:[%s21 + $0x18] sm:$0xff]
        %v3003 = vld [vmem:[%s21 + $0x20] sm:$0xff]
        %v3004 = vld [vmem:[%s21 + $0x28] sm:$0xff]
        %v3005 = vld [vmem:[%s21 + $0x30] sm:$0xff]
        %v3006 = vld [vmem:[%s21 + $0x38] sm:$0xff]
        %v3007 = vld [vmem:[%s21 + $0x40] sm:$0xff]
        %v3008 = vld [vmem:[%s21 + $0x48] sm:$0xff]
        %v3009 = vld [vmem:[%s21 + $0x50] sm:$0xff]
        %v3010 = vld [vmem:[%s21 + $0x58] sm:$0xff]
        %v3011 = vld [vmem:[%s21 + $0x60] sm:$0xff]
        %v3012 = vld [vmem:[%s21 + $0x68] sm:$0xff]
        %v3013 = vld [vmem:[%s21 + $0x70] sm:$0xff]
        %v3014 = vld [vmem:[%s21 + $0x78] sm:$0xff]
        %v3015 = vld [vmem:[%s21 + $0x80] sm:$0xff]
        %v3016 = vld [vmem:[%s21 + $0x88] sm:$0xff]
        %v3017 = vld [vmem:[%s21 + $0x90] sm:$0xff]
        %v3018 = vld [vmem:[%s21 + $0x98] sm:$0xff]
        %v3019 = vld [vmem:[%s21 + $0xa0] sm:$0xff]
        %v3020 = vld [vmem:[%s21 + $0xa8] sm:$0xff]
        %v3021 = vld [vmem:[%s21 + $0xb0] sm:$0xff]
        %v3022 = vld [vmem:[%s21 + $0xb8] sm:$0xff]
        %v3023 = vld [vmem:[%s21 + $0xc0] sm:$0xff]
        %v3024 = vld [vmem:[%s21 + $0xc8] sm:$0xff]
        %v3025 = vld [vmem:[%s21 + $0xd0] sm:$0xff]
        %v3026 = vld [vmem:[%s21 + $0xd8] sm:$0xff]
        %v3027 = vld [vmem:[%s21 + $0xe0] sm:$0xff]
        %v3028 = vld [vmem:[%s21 + $0xe8] sm:$0xff]
        %v3029 = vld [vmem:[%s21 + $0xf0] sm:$0xff]
        %v3030 = vld [vmem:[%s21 + $0xf8] sm:$0xff]
        %v3031 = vld [vmem:[%s22] sm:$0xf]
        %v3033 = vperm.slane %v3031, 0
        %v3034 = vperm.slane %v3031, 1
        %v3035 = vperm.slane %v3031, 2
        %v3036 = vperm.slane %v3031, 3
        %v3073 = vunpack.c.l.b16 %v2999
        %v3074 = vunpack.c.h.b16 %v2999
        %v3075 = vunpack.c.l.b16 %v3000
        %v3076 = vunpack.c.h.b16 %v3000
        %v3077 = vunpack.c.l.b16 %v3001
        %v3078 = vunpack.c.h.b16 %v3001
        %v3079 = vunpack.c.l.b16 %v3002
        %v3080 = vunpack.c.h.b16 %v3002
        %v3081 = vunpack.c.l.b16 %v3003
        %v3082 = vunpack.c.h.b16 %v3003
        %v3083 = vunpack.c.l.b16 %v3004
        %v3084 = vunpack.c.h.b16 %v3004
        %v3085 = vunpack.c.l.b16 %v3005
        %v3086 = vunpack.c.h.b16 %v3005
        %v3087 = vunpack.c.l.b16 %v3006
        %v3088 = vunpack.c.h.b16 %v3006
        %v3089 = vunpack.c.l.b16 %v3007
        %v3090 = vunpack.c.h.b16 %v3007
        %v3091 = vunpack.c.l.b16 %v3008
        %v3092 = vunpack.c.h.b16 %v3008
        %v3093 = vunpack.c.l.b16 %v3009
        %v3094 = vunpack.c.h.b16 %v3009
        %v3095 = vunpack.c.l.b16 %v3010
        %v3096 = vunpack.c.h.b16 %v3010
        %v3097 = vunpack.c.l.b16 %v3011
        %v3098 = vunpack.c.h.b16 %v3011
        %v3099 = vunpack.c.l.b16 %v3012
        %v3100 = vunpack.c.h.b16 %v3012
        %v3101 = vunpack.c.l.b16 %v3013
        %v3102 = vunpack.c.h.b16 %v3013
        %v3103 = vunpack.c.l.b16 %v3014
        %v3104 = vunpack.c.h.b16 %v3014
        %v3105 = vunpack.c.l.b16 %v3015
        %v3106 = vunpack.c.h.b16 %v3015
        %v3107 = vunpack.c.l.b16 %v3016
        %v3108 = vunpack.c.h.b16 %v3016
        %v3109 = vunpack.c.l.b16 %v3017
        %v3110 = vunpack.c.h.b16 %v3017
        %v3111 = vunpack.c.l.b16 %v3018
        %v3112 = vunpack.c.h.b16 %v3018
        %v3113 = vunpack.c.l.b16 %v3019
        %v3114 = vunpack.c.h.b16 %v3019
        %v3115 = vunpack.c.l.b16 %v3020
        %v3116 = vunpack.c.h.b16 %v3020
        %v3117 = vunpack.c.l.b16 %v3021
        %v3118 = vunpack.c.h.b16 %v3021
        %v3119 = vunpack.c.l.b16 %v3022
        %v3120 = vunpack.c.h.b16 %v3022
        %v3121 = vunpack.c.l.b16 %v3023
        %v3122 = vunpack.c.h.b16 %v3023
        %v3123 = vunpack.c.l.b16 %v3024
        %v3124 = vunpack.c.h.b16 %v3024
        %v3125 = vunpack.c.l.b16 %v3025
        %v3126 = vunpack.c.h.b16 %v3025
        %v3127 = vunpack.c.l.b16 %v3026
        %v3128 = vunpack.c.h.b16 %v3026
        %v3129 = vunpack.c.l.b16 %v3027
        %v3130 = vunpack.c.h.b16 %v3027
        %v3131 = vunpack.c.l.b16 %v3028
        %v3132 = vunpack.c.h.b16 %v3028
        %v3133 = vunpack.c.l.b16 %v3029
        %v3134 = vunpack.c.h.b16 %v3029
        %v3135 = vunpack.c.l.b16 %v3030
        %v3136 = vunpack.c.h.b16 %v3030
        %v3137 = vpack.c.b16 %v3077, %v3073
        %v3138 = vpack.c.b16 %v3078, %v3074
        %v3139 = vpack.c.b16 %v3079, %v3075
        %v3140 = vpack.c.b16 %v3080, %v3076
        %v3141 = vpack.c.b16 %v3085, %v3081
        %v3142 = vpack.c.b16 %v3086, %v3082
        %v3143 = vpack.c.b16 %v3087, %v3083
        %v3144 = vpack.c.b16 %v3088, %v3084
        %v3145 = vpack.c.b16 %v3093, %v3089
        %v3146 = vpack.c.b16 %v3094, %v3090
        %v3147 = vpack.c.b16 %v3095, %v3091
        %v3148 = vpack.c.b16 %v3096, %v3092
        %v3149 = vpack.c.b16 %v3101, %v3097
        %v3150 = vpack.c.b16 %v3102, %v3098
        %v3151 = vpack.c.b16 %v3103, %v3099
        %v3152 = vpack.c.b16 %v3104, %v3100
        %v3153 = vpack.c.b16 %v3109, %v3105
        %v3154 = vpack.c.b16 %v3110, %v3106
        %v3155 = vpack.c.b16 %v3111, %v3107
        %v3156 = vpack.c.b16 %v3112, %v3108
        %v3157 = vpack.c.b16 %v3117, %v3113
        %v3158 = vpack.c.b16 %v3118, %v3114
        %v3159 = vpack.c.b16 %v3119, %v3115
        %v3160 = vpack.c.b16 %v3120, %v3116
        %v3161 = vpack.c.b16 %v3125, %v3121
        %v3162 = vpack.c.b16 %v3126, %v3122
        %v3163 = vpack.c.b16 %v3127, %v3123
        %v3164 = vpack.c.b16 %v3128, %v3124
        %v3165 = vpack.c.b16 %v3133, %v3129
        %v3166 = vpack.c.b16 %v3134, %v3130
        %v3167 = vpack.c.b16 %v3135, %v3131
        %v3168 = vpack.c.b16 %v3136, %v3132
        %3201 = vmatpush.bf16.msra.mxu0 %v3165
        %3202 = vmatpush.bf16.msra.mxu0 %v3161
        %3203 = vmatpush.bf16.msra.mxu0 %v3157
        %3204 = vmatpush.bf16.msra.mxu0 %v3153
        %3205 = vmatpush.bf16.msra.mxu0 %v3149
        %3206 = vmatpush.bf16.msra.mxu0 %v3145
        %3207 = vmatpush.bf16.msra.mxu0 %v3141
        %3208 = vmatpush.bf16.msra.mxu0 %v3137
        %3209 = vmatmul.bf16.gmra.mxu0 %v2998
        %v3210 = vpop.f32.mrf.mxu0
        %v3211 = vadd.f32 %v3033, %v3210
        %v3212 = vpop.f32.mrf.mxu0
        %v3213 = vadd.f32 %v3033, %v3212
        %3214 = vdwg.mxu0
        %3215 = vmatpush.bf16.msra.mxu0 %v3166
        %3216 = vmatpush.bf16.msra.mxu0 %v3162
        %3217 = vmatpush.bf16.msra.mxu0 %v3158
        %3218 = vmatpush.bf16.msra.mxu0 %v3154
        %3219 = vmatpush.bf16.msra.mxu0 %v3150
        %3220 = vmatpush.bf16.msra.mxu0 %v3146
        %3221 = vmatpush.bf16.msra.mxu0 %v3142
        %3222 = vmatpush.bf16.msra.mxu0 %v3138
        %3223 = vmatmul.bf16.gmra.mxu0 %v2998
        %v3224 = vpop.f32.mrf.mxu0
        %v3225 = vadd.f32 %v3034, %v3224
        %v3226 = vpop.f32.mrf.mxu0
        %v3227 = vadd.f32 %v3034, %v3226
        %3228 = vdwg.mxu0
        %3229 = vmatpush.bf16.msra.mxu0 %v3167
        %3230 = vmatpush.bf16.msra.mxu0 %v3163
        %3231 = vmatpush.bf16.msra.mxu0 %v3159
        %3232 = vmatpush.bf16.msra.mxu0 %v3155
        %3233 = vmatpush.bf16.msra.mxu0 %v3151
        %3234 = vmatpush.bf16.msra.mxu0 %v3147
        %3235 = vmatpush.bf16.msra.mxu0 %v3143
        %3236 = vmatpush.bf16.msra.mxu0 %v3139
        %3237 = vmatmul.bf16.gmra.mxu0 %v2998
        %v3238 = vpop.f32.mrf.mxu0
        %v3239 = vadd.f32 %v3035, %v3238
        %v3240 = vpop.f32.mrf.mxu0
        %v3241 = vadd.f32 %v3035, %v3240
        %3242 = vdwg.mxu0
        %3243 = vmatpush.bf16.msra.mxu0 %v3168
        %3244 = vmatpush.bf16.msra.mxu0 %v3164
        %3245 = vmatpush.bf16.msra.mxu0 %v3160
        %3246 = vmatpush.bf16.msra.mxu0 %v3156
        %3247 = vmatpush.bf16.msra.mxu0 %v3152
        %3248 = vmatpush.bf16.msra.mxu0 %v3148
        %3249 = vmatpush.bf16.msra.mxu0 %v3144
        %3250 = vmatpush.bf16.msra.mxu0 %v3140
        %3251 = vmatmul.bf16.gmra.mxu0 %v2998
        %v3252 = vpop.f32.mrf.mxu0
        %v3253 = vadd.f32 %v3036, %v3252
        %v3254 = vpop.f32.mrf.mxu0
        %v3255 = vadd.f32 %v3036, %v3254
        %3256 = vdwg.mxu0
        %v3257 = vmul.f32 %v3211, %v3211
        %v3258 = vmul.f32 %v3225, %v3225
        %v3259 = vmul.f32 %v3239, %v3239
        %v3260 = vmul.f32 %v3253, %v3253
        %v3261 = vmul.f32 %v3213, %v3213
        %v3262 = vmul.f32 %v3227, %v3227
        %v3263 = vmul.f32 %v3241, %v3241
        %v3264 = vmul.f32 %v3255, %v3255
        %v3265 = vmul.f32 %v3211, %v3257
        %v3266 = vmul.f32 %v3225, %v3258
        %v3267 = vmul.f32 %v3239, %v3259
        %v3268 = vmul.f32 %v3253, %v3260
        %v3269 = vmul.f32 %v3213, %v3261
        %v3270 = vmul.f32 %v3227, %v3262
        %v3271 = vmul.f32 %v3241, %v3263
        %v3272 = vmul.f32 %v3255, %v3264
        %v3273 = vmul.f32 %v3265, 0.044715
        %v3274 = vmul.f32 %v3266, 0.044715
        %v3275 = vmul.f32 %v3267, 0.044715
        %v3276 = vmul.f32 %v3268, 0.044715
        %v3277 = vmul.f32 %v3269, 0.044715
        %v3278 = vmul.f32 %v3270, 0.044715
        %v3279 = vmul.f32 %v3271, 0.044715
        %v3280 = vmul.f32 %v3272, 0.044715
        %v3281 = vadd.f32 %v3211, %v3273
        %v3282 = vadd.f32 %v3225, %v3274
        %v3283 = vadd.f32 %v3239, %v3275
        %v3284 = vadd.f32 %v3253, %v3276
        %v3285 = vadd.f32 %v3213, %v3277
        %v3286 = vadd.f32 %v3227, %v3278
        %v3287 = vadd.f32 %v3241, %v3279
        %v3288 = vadd.f32 %v3255, %v3280
        %v3289 = vmul.f32 %v3281, 0.7978846
        %v3290 = vmul.f32 %v3282, 0.7978846
        %v3291 = vmul.f32 %v3283, 0.7978846
        %v3292 = vmul.f32 %v3284, 0.7978846
        %v3293 = vmul.f32 %v3285, 0.7978846
        %v3294 = vmul.f32 %v3286, 0.7978846
        %v3295 = vmul.f32 %v3287, 0.7978846
        %v3296 = vmul.f32 %v3288, 0.7978846
        %v3297 = vtanh.pop %v3289
        %v3298 = vtanh.pop %v3290
        %v3299 = vtanh.pop %v3291
        %v3300 = vtanh.pop %v3292
        %v3301 = vtanh.pop %v3293
        %v3302 = vtanh.pop %v3294
        %v3303 = vtanh.pop %v3295
        %v3304 = vtanh.pop %v3296
        %v3305 = vadd.f32 %v3297, 1.0
        %v3306 = vadd.f32 %v3298, 1.0
        %v3307 = vadd.f32 %v3299, 1.0
        %v3308 = vadd.f32 %v3300, 1.0
        %v3309 = vadd.f32 %v3301, 1.0
        %v3310 = vadd.f32 %v3302, 1.0
        %v3311 = vadd.f32 %v3303, 1.0
        %v3312 = vadd.f32 %v3304, 1.0
        %v3313 = vmul.f32 %v3305, 0.5
        %v3314 = vmul.f32 %v3306, 0.5
        %v3315 = vmul.f32 %v3307, 0.5
        %v3316 = vmul.f32 %v3308, 0.5
        %v3317 = vmul.f32 %v3309, 0.5
        %v3318 = vmul.f32 %v3310, 0.5
        %v3319 = vmul.f32 %v3311, 0.5
        %v3320 = vmul.f32 %v3312, 0.5
        %v3321 = vmul.f32 %v3211, %v3313
        %v3322 = vmul.f32 %v3225, %v3314
        %v3323 = vmul.f32 %v3239, %v3315
        %v3324 = vmul.f32 %v3253, %v3316
        %v3325 = vmul.f32 %v3213, %v3317
        %v3326 = vmul.f32 %v3227, %v3318
        %v3327 = vmul.f32 %v3241, %v3319
        %v3328 = vmul.f32 %v3255, %v3320
        %v3329 = vpack.c.bf16 %v3325, %v3321
        %v3330 = vpack.c.bf16 %v3326, %v3322
        %v3331 = vpack.c.bf16 %v3327, %v3323
        %v3332 = vpack.c.bf16 %v3328, %v3324
        %v3333 = vld [vmem:[#allocation6] sm:$0xf]
        %v3334 = vld [vmem:[#allocation6 + $0x4] sm:$0xf]
        %v3335 = vld [vmem:[#allocation6 + $0x8] sm:$0xf]
        %v3336 = vld [vmem:[#allocation6 + $0xc] sm:$0xf]
        %v3337 = vld [vmem:[#allocation6 + $0x10] sm:$0xf]
        %v3338 = vld [vmem:[#allocation6 + $0x14] sm:$0xf]
        %v3339 = vld [vmem:[#allocation6 + $0x18] sm:$0xf]
        %v3340 = vld [vmem:[#allocation6 + $0x1c] sm:$0xf]
        %v3341 = vld [vmem:[#allocation6 + $0x20] sm:$0xf]
        %v3342 = vld [vmem:[#allocation6 + $0x24] sm:$0xf]
        %v3343 = vld [vmem:[#allocation6 + $0x28] sm:$0xf]
        %v3344 = vld [vmem:[#allocation6 + $0x2c] sm:$0xf]
        %v3345 = vld [vmem:[#allocation6 + $0x30] sm:$0xf]
        %v3346 = vld [vmem:[#allocation6 + $0x34] sm:$0xf]
        %v3347 = vld [vmem:[#allocation6 + $0x38] sm:$0xf]
        %v3348 = vld [vmem:[#allocation6 + $0x3c] sm:$0xf]
        %v3349 = vld [vmem:[#allocation6 + $0x40] sm:$0xf]
        %v3350 = vld [vmem:[#allocation6 + $0x44] sm:$0xf]
        %v3351 = vld [vmem:[#allocation6 + $0x48] sm:$0xf]
        %v3352 = vld [vmem:[#allocation6 + $0x4c] sm:$0xf]
        %v3353 = vld [vmem:[#allocation6 + $0x50] sm:$0xf]
        %v3354 = vld [vmem:[#allocation6 + $0x54] sm:$0xf]
        %v3355 = vld [vmem:[#allocation6 + $0x58] sm:$0xf]
        %v3356 = vld [vmem:[#allocation6 + $0x5c] sm:$0xf]
        %v3357 = vld [vmem:[#allocation6 + $0x60] sm:$0xf]
        %v3358 = vld [vmem:[#allocation6 + $0x64] sm:$0xf]
        %v3359 = vld [vmem:[#allocation6 + $0x68] sm:$0xf]
        %v3360 = vld [vmem:[#allocation6 + $0x6c] sm:$0xf]
        %v3361 = vld [vmem:[#allocation6 + $0x70] sm:$0xf]
        %v3362 = vld [vmem:[#allocation6 + $0x74] sm:$0xf]
        %v3363 = vld [vmem:[#allocation6 + $0x78] sm:$0xf]
        %v3364 = vld [vmem:[#allocation6 + $0x7c] sm:$0xf]
        %v3365 = vld [vmem:[#allocation6 + $0x80] sm:$0xf]
        %v3366 = vld [vmem:[#allocation6 + $0x84] sm:$0xf]
        %v3367 = vld [vmem:[#allocation6 + $0x88] sm:$0xf]
        %v3368 = vld [vmem:[#allocation6 + $0x8c] sm:$0xf]
        %v3369 = vld [vmem:[#allocation6 + $0x90] sm:$0xf]
        %v3370 = vld [vmem:[#allocation6 + $0x94] sm:$0xf]
        %v3371 = vld [vmem:[#allocation6 + $0x98] sm:$0xf]
        %v3372 = vld [vmem:[#allocation6 + $0x9c] sm:$0xf]
        %v3373 = vld [vmem:[#allocation6 + $0xa0] sm:$0xf]
        %v3374 = vld [vmem:[#allocation6 + $0xa4] sm:$0xf]
        %v3375 = vld [vmem:[#allocation6 + $0xa8] sm:$0xf]
        %v3376 = vld [vmem:[#allocation6 + $0xac] sm:$0xf]
        %v3377 = vld [vmem:[#allocation6 + $0xb0] sm:$0xf]
        %v3378 = vld [vmem:[#allocation6 + $0xb4] sm:$0xf]
        %v3379 = vld [vmem:[#allocation6 + $0xb8] sm:$0xf]
        %v3380 = vld [vmem:[#allocation6 + $0xbc] sm:$0xf]
        %v3381 = vld [vmem:[#allocation6 + $0xc0] sm:$0xf]
        %v3382 = vld [vmem:[#allocation6 + $0xc4] sm:$0xf]
        %v3383 = vld [vmem:[#allocation6 + $0xc8] sm:$0xf]
        %v3384 = vld [vmem:[#allocation6 + $0xcc] sm:$0xf]
        %v3385 = vld [vmem:[#allocation6 + $0xd0] sm:$0xf]
        %v3386 = vld [vmem:[#allocation6 + $0xd4] sm:$0xf]
        %v3387 = vld [vmem:[#allocation6 + $0xd8] sm:$0xf]
        %v3388 = vld [vmem:[#allocation6 + $0xdc] sm:$0xf]
        %v3389 = vld [vmem:[#allocation6 + $0xe0] sm:$0xf]
        %v3390 = vld [vmem:[#allocation6 + $0xe4] sm:$0xf]
        %v3391 = vld [vmem:[#allocation6 + $0xe8] sm:$0xf]
        %v3392 = vld [vmem:[#allocation6 + $0xec] sm:$0xf]
        %v3393 = vld [vmem:[#allocation6 + $0xf0] sm:$0xf]
        %v3394 = vld [vmem:[#allocation6 + $0xf4] sm:$0xf]
        %v3395 = vld [vmem:[#allocation6 + $0xf8] sm:$0xf]
        %v3396 = vld [vmem:[#allocation6 + $0xfc] sm:$0xf]
        %v3461 = vunpack.c.l.b16 %v3333
        %v3462 = vunpack.c.l.b16 %v3334
        %v3463 = vunpack.c.l.b16 %v3335
        %v3464 = vunpack.c.l.b16 %v3336
        %v3465 = vunpack.c.l.b16 %v3337
        %v3466 = vunpack.c.l.b16 %v3338
        %v3467 = vunpack.c.l.b16 %v3339
        %v3468 = vunpack.c.l.b16 %v3340
        %v3469 = vunpack.c.l.b16 %v3341
        %v3470 = vunpack.c.l.b16 %v3342
        %v3471 = vunpack.c.l.b16 %v3343
        %v3472 = vunpack.c.l.b16 %v3344
        %v3473 = vunpack.c.l.b16 %v3345
        %v3474 = vunpack.c.l.b16 %v3346
        %v3475 = vunpack.c.l.b16 %v3347
        %v3476 = vunpack.c.l.b16 %v3348
        %v3477 = vunpack.c.l.b16 %v3349
        %v3478 = vunpack.c.l.b16 %v3350
        %v3479 = vunpack.c.l.b16 %v3351
        %v3480 = vunpack.c.l.b16 %v3352
        %v3481 = vunpack.c.l.b16 %v3353
        %v3482 = vunpack.c.l.b16 %v3354
        %v3483 = vunpack.c.l.b16 %v3355
        %v3484 = vunpack.c.l.b16 %v3356
        %v3485 = vunpack.c.l.b16 %v3357
        %v3486 = vunpack.c.l.b16 %v3358
        %v3487 = vunpack.c.l.b16 %v3359
        %v3488 = vunpack.c.l.b16 %v3360
        %v3489 = vunpack.c.l.b16 %v3361
        %v3490 = vunpack.c.l.b16 %v3362
        %v3491 = vunpack.c.l.b16 %v3363
        %v3492 = vunpack.c.l.b16 %v3364
        %v3493 = vunpack.c.l.b16 %v3365
        %v3494 = vunpack.c.l.b16 %v3366
        %v3495 = vunpack.c.l.b16 %v3367
        %v3496 = vunpack.c.l.b16 %v3368
        %v3497 = vunpack.c.l.b16 %v3369
        %v3498 = vunpack.c.l.b16 %v3370
        %v3499 = vunpack.c.l.b16 %v3371
        %v3500 = vunpack.c.l.b16 %v3372
        %v3501 = vunpack.c.l.b16 %v3373
        %v3502 = vunpack.c.l.b16 %v3374
        %v3503 = vunpack.c.l.b16 %v3375
        %v3504 = vunpack.c.l.b16 %v3376
        %v3505 = vunpack.c.l.b16 %v3377
        %v3506 = vunpack.c.l.b16 %v3378
        %v3507 = vunpack.c.l.b16 %v3379
        %v3508 = vunpack.c.l.b16 %v3380
        %v3509 = vunpack.c.l.b16 %v3381
        %v3510 = vunpack.c.l.b16 %v3382
        %v3511 = vunpack.c.l.b16 %v3383
        %v3512 = vunpack.c.l.b16 %v3384
        %v3513 = vunpack.c.l.b16 %v3385
        %v3514 = vunpack.c.l.b16 %v3386
        %v3515 = vunpack.c.l.b16 %v3387
        %v3516 = vunpack.c.l.b16 %v3388
        %v3517 = vunpack.c.l.b16 %v3389
        %v3518 = vunpack.c.l.b16 %v3390
        %v3519 = vunpack.c.l.b16 %v3391
        %v3520 = vunpack.c.l.b16 %v3392
        %v3521 = vunpack.c.l.b16 %v3393
        %v3522 = vunpack.c.l.b16 %v3394
        %v3523 = vunpack.c.l.b16 %v3395
        %v3524 = vunpack.c.l.b16 %v3396
        %v3525 = vpack.c.b16 %v3462, %v3461
        %v3526 = vpack.c.b16 %v3464, %v3463
        %v3527 = vpack.c.b16 %v3466, %v3465
        %v3528 = vpack.c.b16 %v3468, %v3467
        %v3529 = vpack.c.b16 %v3470, %v3469
        %v3530 = vpack.c.b16 %v3472, %v3471
        %v3531 = vpack.c.b16 %v3474, %v3473
        %v3532 = vpack.c.b16 %v3476, %v3475
        %v3533 = vpack.c.b16 %v3478, %v3477
        %v3534 = vpack.c.b16 %v3480, %v3479
        %v3535 = vpack.c.b16 %v3482, %v3481
        %v3536 = vpack.c.b16 %v3484, %v3483
        %v3537 = vpack.c.b16 %v3486, %v3485
        %v3538 = vpack.c.b16 %v3488, %v3487
        %v3539 = vpack.c.b16 %v3490, %v3489
        %v3540 = vpack.c.b16 %v3492, %v3491
        %v3541 = vpack.c.b16 %v3494, %v3493
        %v3542 = vpack.c.b16 %v3496, %v3495
        %v3543 = vpack.c.b16 %v3498, %v3497
        %v3544 = vpack.c.b16 %v3500, %v3499
        %v3545 = vpack.c.b16 %v3502, %v3501
        %v3546 = vpack.c.b16 %v3504, %v3503
        %v3547 = vpack.c.b16 %v3506, %v3505
        %v3548 = vpack.c.b16 %v3508, %v3507
        %v3549 = vpack.c.b16 %v3510, %v3509
        %v3550 = vpack.c.b16 %v3512, %v3511
        %v3551 = vpack.c.b16 %v3514, %v3513
        %v3552 = vpack.c.b16 %v3516, %v3515
        %v3553 = vpack.c.b16 %v3518, %v3517
        %v3554 = vpack.c.b16 %v3520, %v3519
        %v3555 = vpack.c.b16 %v3522, %v3521
        %v3556 = vpack.c.b16 %v3524, %v3523
        %3589 = vmatpush.bf16.msra.mxu0 %v3532
        %3590 = vmatpush.bf16.msra.mxu0 %v3531
        %3591 = vmatpush.bf16.msra.mxu0 %v3530
        %3592 = vmatpush.bf16.msra.mxu0 %v3529
        %3593 = vmatpush.bf16.msra.mxu0 %v3528
        %3594 = vmatpush.bf16.msra.mxu0 %v3527
        %3595 = vmatpush.bf16.msra.mxu0 %v3526
        %3596 = vmatpush.bf16.msra.mxu0 %v3525
        %3597 = vmatmul.bf16.gmra.mxu0 %v3329
        %v3598 = vpop.f32.mrf.mxu0
        %v3599 = vadd.f32 0.0, %v3598
        %v3600 = vpop.f32.mrf.mxu0
        %v3601 = vadd.f32 0.0, %v3600
        %3602 = vdwg.mxu0
        %3603 = vmatpush.bf16.msra.mxu0 %v3540
        %3604 = vmatpush.bf16.msra.mxu0 %v3539
        %3605 = vmatpush.bf16.msra.mxu0 %v3538
        %3606 = vmatpush.bf16.msra.mxu0 %v3537
        %3607 = vmatpush.bf16.msra.mxu0 %v3536
        %3608 = vmatpush.bf16.msra.mxu0 %v3535
        %3609 = vmatpush.bf16.msra.mxu0 %v3534
        %3610 = vmatpush.bf16.msra.mxu0 %v3533
        %3611 = vmatmul.bf16.gmra.mxu0 %v3330
        %v3612 = vpop.f32.mrf.mxu0
        %v3613 = vadd.f32 %v3599, %v3612
        %v3614 = vpop.f32.mrf.mxu0
        %v3615 = vadd.f32 %v3601, %v3614
        %3616 = vdwg.mxu0
        %3617 = vmatpush.bf16.msra.mxu0 %v3548
        %3618 = vmatpush.bf16.msra.mxu0 %v3547
        %3619 = vmatpush.bf16.msra.mxu0 %v3546
        %3620 = vmatpush.bf16.msra.mxu0 %v3545
        %3621 = vmatpush.bf16.msra.mxu0 %v3544
        %3622 = vmatpush.bf16.msra.mxu0 %v3543
        %3623 = vmatpush.bf16.msra.mxu0 %v3542
        %3624 = vmatpush.bf16.msra.mxu0 %v3541
        %3625 = vmatmul.bf16.gmra.mxu0 %v3331
        %v3626 = vpop.f32.mrf.mxu0
        %v3627 = vadd.f32 %v3613, %v3626
        %v3628 = vpop.f32.mrf.mxu0
        %v3629 = vadd.f32 %v3615, %v3628
        %3630 = vdwg.mxu0
        %3631 = vmatpush.bf16.msra.mxu0 %v3556
        %3632 = vmatpush.bf16.msra.mxu0 %v3555
        %3633 = vmatpush.bf16.msra.mxu0 %v3554
        %3634 = vmatpush.bf16.msra.mxu0 %v3553
        %3635 = vmatpush.bf16.msra.mxu0 %v3552
        %3636 = vmatpush.bf16.msra.mxu0 %v3551
        %3637 = vmatpush.bf16.msra.mxu0 %v3550
        %3638 = vmatpush.bf16.msra.mxu0 %v3549
        %3639 = vmatmul.bf16.gmra.mxu0 %v3332
        %v3640 = vpop.f32.mrf.mxu0
        %v3641 = vadd.f32 %v3627, %v3640
        %v3642 = vpop.f32.mrf.mxu0
        %v3643 = vadd.f32 %v3629, %v3642
        %3644 = vdwg.mxu0
        %v3645 = vadd.f32 %v2942, %v3641
        %v3646 = vadd.f32 %v2943, %v3643
        %v3647 = vld [vmem:[%s24] sm:$0x1]
        %v3649 = vperm.slane %v3647, 0
        %v3651 = vadd.f32 %v3645, %v3649
        %v3652 = vadd.f32 %v3646, %v3649
        %v3653 = vld [vmem:[%s25] sm:$0x1]
        %v3654 = vld [vmem:[%s26] sm:$0x1]
        %3655 = vadd.xlane.f32.xlu0 %v3651
        %v3656 = vpop.xlane.xlu0 %3655
        %v3657 = vsel %vm876, %v3652, 0.0
        %3658 = vadd.xlane.f32.xlu0 %v3657
        %v3659 = vpop.xlane.xlu0 %3658
        %v3660 = vmul.f32 %v3656, %v886
        %v3661 = vmul.f32 %v3659, %v886
        %v3662 = vsub.f32 %v3651, %v3660
        %v3663 = vsub.f32 %v3652, %v3661
        %v3664 = vmul.f32 %v3662, %v3662
        %v3665 = vmul.f32 %v3663, %v3663
        %3666 = vadd.xlane.f32.xlu0 %v3664
        %v3667 = vpop.xlane.xlu0 %3666
        %v3668 = vsel %vm876, %v3665, 0.0
        %3669 = vadd.xlane.f32.xlu0 %v3668
        %v3670 = vpop.xlane.xlu0 %3669
        %v3671 = vmul.f32 %v3667, %v886
        %v3672 = vmul.f32 %v3670, %v886
        %v3673 = vadd.f32 %v3671, 1e-05
        %v3674 = vadd.f32 %v3672, 1e-05
        %v3675 = vrsqrt.pop %v3673
        %v3676 = vmul.f32 %v3675, %v3673
        %v3677 = vmul.f32 %v3676, %v3675
        %v3678 = vmul.f32 0.5, %v3677
        %v3679 = vsub.f32 1.5, %v3678
        %v3680 = vmul.f32 %v3675, %v3679
        %vm3681 = vweird.f32 %v3673
        %vm3682 = vweird.f32 %v3675
        %vm3683 = vmor %vm3681, %vm3682
        %v3684 = vsel %vm3683, %v3675, %v3680
        %v3685 = vrsqrt.pop %v3674
        %v3686 = vmul.f32 %v3685, %v3674
        %v3687 = vmul.f32 %v3686, %v3685
        %v3688 = vmul.f32 0.5, %v3687
        %v3689 = vsub.f32 1.5, %v3688
        %v3690 = vmul.f32 %v3685, %v3689
        %vm3691 = vweird.f32 %v3674
        %vm3692 = vweird.f32 %v3685
        %vm3693 = vmor %vm3691, %vm3692
        %v3694 = vsel %vm3693, %v3685, %v3690
        %v3695 = vmul.f32 %v3662, %v3684
        %v3696 = vmul.f32 %v3663, %v3694
        %v3698 = vperm.slane %v3653, 0
        %v3700 = vmul.f32 %v3695, %v3698
        %v3701 = vmul.f32 %v3696, %v3698
        %v3703 = vperm.slane %v3654, 0
        %v3705 = vadd.f32 %v3700, %v3703
        %v3706 = vadd.f32 %v3701, %v3703
        %3707 = vst [vmem:[%s868] sm:$0xff] %v3705
        %3708 = vst [vmem:[%s868 + $0x8] sm:$0x1] %v3706
        %p3709 = scmp.lt.s32.totalorder %s40, 1
        %s3710 = scalar_select %p3709, %s40, 1
        %s3711 = smul.addr %s3710, 2
        %s3712 = smul.addr %s3711, 8
        %s3713 = scalar_lea.vmem %s27, %s3712
        // Predicated region
        $region141: #{pedsleep_mae_forward.5} parent=127 // pred_check
          %p3714 = pneg %p630
        $region142: #{pedsleep_mae_forward.5} parent=127 // pred_check_branch
          %3716 = sbr.rel (%p3714) target = $region144
        $region143: #{pedsleep_mae_forward.5} parent=127 // pred_region
          _
        $region144: #{pedsleep_mae_forward.5} parent=127 // pred_fallthru
          _
      $region128: #{pedsleep_mae_forward.5} parent=5 // pred_fallthru
        _
      %p3717 = scmp.le.s32.totalorder 2, %s35
      // Predicated region
      $region145: #{pedsleep_mae_forward.5} parent=5 // pred_check
        %p3718 = pneg %p3717
      $region146: #{pedsleep_mae_forward.5} parent=5 // pred_check_branch
        %3720 = sbr.rel (%p3718) target = $region148
      $region147: #{pedsleep_mae_forward.5} parent=5 // pred_region
        %s3721 = ssub.s32 %s35, 2
        // Predicated region
        $region149: #{pedsleep_mae_forward.5} parent=147 // pred_check
          %p3722 = pneg %p636
        $region150: #{pedsleep_mae_forward.5} parent=147 // pred_check_branch
          %3724 = sbr.rel (%p3722) target = $region152
        $region151: #{pedsleep_mae_forward.5} parent=147 // pred_region
          %p3725 = scmp.lt.s32.totalorder %s41, 1
          %s3726 = scalar_select %p3725, %s41, 1
          %s3727 = smul.addr %s3726, 2
          %s3728 = smul.addr %s3727, 8
          %s3729 = scalar_lea.vmem %s27, %s3728
        $region152: #{pedsleep_mae_forward.5} parent=147 // pred_fallthru
          _
      $region148: #{pedsleep_mae_forward.5} parent=5 // pred_fallthru
        _
    $region6: #{pedsleep_mae_forward.5} parent=1 // loop_footer
      %s39 = sadd.s32 1, %s35
    $region7: #{pedsleep_mae_forward.5} parent=1 // loop_footer_branch
      %34 = sbr.rel target = $region3
    $region8: #{pedsleep_mae_forward.5} parent=1 // loop_exit
      _
    %3730 = vsyncpa [#allocation3], 1
    %s3731 = scalar_lea.sflag [#allocation3], 1
    %3732 = vsyncpa %s3731, 1
    %3733 = vsyncpa [#allocation5], 1

// kernel: pedsleep_mae_forward.6
$region0: #{pedsleep_mae_forward.6}
  #allocation0 [shape = 'u32[]', space=smem, size = 0x4, offset = 0x4, fixed_abs, tag = 'smem constant byte address 0x4 - core index']
  #allocation1 [shape = 'u32[72,128]{1,0:T(1,128)}', space=vmem, size = 0x9000, scoped, tag = 'internal scratch']
  %s0 = inlined_call_operand.vmem [shape: f32[2,9,128], index: 0, kind: input, shape index: {}]
  %s1 = inlined_call_operand.vmem [shape: f32[9,128], index: 1, kind: input, shape index: {}]
  %s2 = inlined_call_operand.vmem [shape: f32[1,128], index: 2, kind: input, shape index: {}]
  %s3 = inlined_call_operand.hbm [shape: f32[1,128], index: 3, kind: input, shape index: {}]
  %s4 = inlined_call_operand.hbm [shape: bf16[128,384], index: 4, kind: input, shape index: {}]
  %s5 = inlined_call_operand.hbm [shape: f32[1,384], index: 5, kind: input, shape index: {}]
  %s6 = inlined_call_operand.hbm [shape: bf16[128,128], index: 6, kind: input, shape index: {}]
  %s7 = inlined_call_operand.hbm [shape: f32[1,128], index: 7, kind: input, shape index: {}]
  %s8 = inlined_call_operand.hbm [shape: f32[1,128], index: 8, kind: input, shape index: {}]
  %s9 = inlined_call_operand.hbm [shape: f32[1,128], index: 9, kind: input, shape index: {}]
  %s10 = inlined_call_operand.hbm [shape: bf16[128,512], index: 10, kind: input, shape index: {}]
  %s11 = inlined_call_operand.vmem [shape: f32[1,512], index: 11, kind: input, shape index: {}]
  %s12 = inlined_call_operand.hbm [shape: bf16[512,128], index: 12, kind: input, shape index: {}]
  %s13 = inlined_call_operand.hbm [shape: f32[1,128], index: 13, kind: input, shape index: {}]
  %s14 = inlined_call_operand.hbm [shape: f32[1,128], index: 14, kind: input, shape index: {}]
  %s15 = inlined_call_operand.hbm [shape: f32[1,128], index: 15, kind: input, shape index: {}]
  %s16 = inlined_call_operand.hbm [shape: bf16[128,384], index: 16, kind: input, shape index: {}]
  %s17 = inlined_call_operand.hbm [shape: f32[1,384], index: 17, kind: input, shape index: {}]
  %s18 = inlined_call_operand.hbm [shape: bf16[128,128], index: 18, kind: input, shape index: {}]
  %s19 = inlined_call_operand.hbm [shape: f32[1,128], index: 19, kind: input, shape index: {}]
  %s20 = inlined_call_operand.hbm [shape: f32[1,128], index: 20, kind: input, shape index: {}]
  %s21 = inlined_call_operand.hbm [shape: f32[1,128], index: 21, kind: input, shape index: {}]
  %s22 = inlined_call_operand.hbm [shape: bf16[128,512], index: 22, kind: input, shape index: {}]
  %s23 = inlined_call_operand.vmem [shape: f32[1,512], index: 23, kind: input, shape index: {}]
  %s24 = inlined_call_operand.hbm [shape: bf16[512,128], index: 24, kind: input, shape index: {}]
  %s25 = inlined_call_operand.hbm [shape: f32[1,128], index: 25, kind: input, shape index: {}]
  %s26 = inlined_call_operand.vmem [shape: f32[2,9,128], index: 26, kind: output, shape index: {}]
  %s27 = sld [smem:[#allocation0]]
  $region221: #{pedsleep_mae_forward.6} parent=0
    _
  %s29 = ssub.s32 1, %s27
  %s30 = scalar_select 0, %s29, %s27
  $region1: #{pedsleep_mae_forward.6} parent=0
    #allocation2 [shape = 'u8[512]{0}', space=vmem, size = 0x400, scoped, tag = 'input window, operand 3, single buffered']
    #allocation3 [shape = 's32[2]{0}', space=sflag, size = 0x8, scoped, tag = 'scoped memory for pedsleep_mae_forward.6']
    #allocation4 [shape = 'u8[98304]{0}', space=vmem, size = 0x18000, scoped, tag = 'input window, operand 4, single buffered']
    #allocation5 [shape = 's32[1]{0}', space=sflag, size = 0x4, scoped, tag = 'scoped memory for pedsleep_mae_forward.6']
    #allocation6 [shape = 'u8[1536]{0}', space=vmem, size = 0x800, scoped, tag = 'input window, operand 5, single buffered']
    #allocation7 [shape = 'u8[32768]{0}', space=vmem, size = 0x8000, scoped, tag = 'input window, operand 6, single buffered']
    #allocation8 [shape = 's32[1]{0}', space=sflag, size = 0x4, scoped, tag = 'scoped memory for pedsleep_mae_forward.6']
    #allocation9 [shape = 'u8[512]{0}', space=vmem, size = 0x400, scoped, tag = 'input window, operand 7, single buffered']
    #allocation10 [shape = 'u8[512]{0}', space=vmem, size = 0x400, scoped, tag = 'input window, operand 8, single buffered']
    #allocation11 [shape = 's32[1]{0}', space=sflag, size = 0x4, scoped, tag = 'scoped memory for pedsleep_mae_forward.6']
    #allocation12 [shape = 'u8[512]{0}', space=vmem, size = 0x400, scoped, tag = 'input window, operand 9, single buffered']
    #allocation13 [shape = 'u8[131072]{0}', space=vmem, size = 0x20000, scoped, tag = 'input window, operand 10, single buffered']
    #allocation14 [shape = 's32[1]{0}', space=sflag, size = 0x4, scoped, tag = 'scoped memory for pedsleep_mae_forward.6']
    #allocation15 [shape = 'u8[131072]{0}', space=vmem, size = 0x20000, scoped, tag = 'input window, operand 12, single buffered']
    #allocation16 [shape = 'u8[512]{0}', space=vmem, size = 0x400, scoped, tag = 'input window, operand 13, single buffered']
    #allocation17 [shape = 's32[1]{0}', space=sflag, size = 0x4, scoped, tag = 'scoped memory for pedsleep_mae_forward.6']
    #allocation18 [shape = 'u8[512]{0}', space=vmem, size = 0x400, scoped, tag = 'input window, operand 14, single buffered']
    #allocation19 [shape = 'u8[512]{0}', space=vmem, size = 0x400, scoped, tag = 'input window, operand 15, single buffered']
    #allocation20 [shape = 's32[1]{0}', space=sflag, size = 0x4, scoped, tag = 'scoped memory for pedsleep_mae_forward.6']
    #allocation21 [shape = 'u8[98304]{0}', space=vmem, size = 0x18000, scoped, tag = 'input window, operand 16, single buffered']
    #allocation22 [shape = 'u8[1536]{0}', space=vmem, size = 0x800, scoped, tag = 'input window, operand 17, single buffered']
    #allocation23 [shape = 's32[1]{0}', space=sflag, size = 0x4, scoped, tag = 'scoped memory for pedsleep_mae_forward.6']
    #allocation24 [shape = 'u8[32768]{0}', space=vmem, size = 0x8000, scoped, tag = 'input window, operand 18, single buffered']
    #allocation25 [shape = 'u8[512]{0}', space=vmem, size = 0x400, scoped, tag = 'input window, operand 19, single buffered']
    #allocation26 [shape = 's32[1]{0}', space=sflag, size = 0x4, scoped, tag = 'scoped memory for pedsleep_mae_forward.6']
    #allocation27 [shape = 'u8[512]{0}', space=vmem, size = 0x400, scoped, tag = 'input window, operand 20, single buffered']
    #allocation28 [shape = 'u8[512]{0}', space=vmem, size = 0x400, scoped, tag = 'input window, operand 21, single buffered']
    #allocation29 [shape = 's32[1]{0}', space=sflag, size = 0x4, scoped, tag = 'scoped memory for pedsleep_mae_forward.6']
    #allocation30 [shape = 'u8[131072]{0}', space=vmem, size = 0x20000, scoped, tag = 'input window, operand 22, single buffered']
    #allocation31 [shape = 'u8[131072]{0}', space=vmem, size = 0x20000, scoped, tag = 'input window, operand 24, single buffered']
    #allocation32 [shape = 's32[1]{0}', space=sflag, size = 0x4, scoped, tag = 'scoped memory for pedsleep_mae_forward.6']
    #allocation33 [shape = 'u8[512]{0}', space=vmem, size = 0x400, scoped, tag = 'input window, operand 25, single buffered']
    %31 = vsyncpa [#allocation3], 0
    %32 = vsyncpa [#allocation5], 0
    %33 = vsyncpa [#allocation8], 0
    %34 = vsyncpa [#allocation11], 0
    %35 = vsyncpa [#allocation14], 0
    %36 = vsyncpa [#allocation17], 0
    %37 = vsyncpa [#allocation20], 0
    %38 = vsyncpa [#allocation23], 0
    %39 = vsyncpa [#allocation26], 0
    %40 = vsyncpa [#allocation29], 0
    %41 = vsyncpa [#allocation32], 0
    loop: start=0, step=1, limit=4
    $region2: #{pedsleep_mae_forward.6} parent=1 // loop_pre_header
      _
    $region3: #{pedsleep_mae_forward.6} parent=1 // loop_header
      %s43 = sphi 0, %s47
      %p44 = scmp.ge.s32.totalorder %s43, 4
      %s53 = sphi 0, %s55
      %s56 = sphi 0, %s53
      %s57 = sphi 0, %s56
      %s73 = sphi 0, %s57
      %s77 = sphi 0, %s77
      %s79 = sphi 0, %s77
      %s80 = sphi 0, %s79
      %s94 = sphi 0, %s80
      %s98 = sphi 0, %s98
      %s100 = sphi 0, %s98
      %s101 = sphi 0, %s100
      %s115 = sphi 0, %s101
      %s119 = sphi 0, %s119
      %s121 = sphi 0, %s119
      %s122 = sphi 0, %s121
      %s136 = sphi 0, %s122
      %s140 = sphi 0, %s140
      %s142 = sphi 0, %s140
      %s143 = sphi 0, %s142
      %s157 = sphi 0, %s143
      %s161 = sphi 0, %s161
      %s163 = sphi 0, %s161
      %s164 = sphi 0, %s163
      %s178 = sphi 0, %s164
      %s182 = sphi 0, %s182
      %s184 = sphi 0, %s182
      %s185 = sphi 0, %s184
      %s199 = sphi 0, %s185
      %s203 = sphi 0, %s203
      %s205 = sphi 0, %s203
      %s206 = sphi 0, %s205
      %s220 = sphi 0, %s206
      %s224 = sphi 0, %s224
      %s226 = sphi 0, %s224
      %s227 = sphi 0, %s226
      %s241 = sphi 0, %s227
      %s245 = sphi 0, %s245
      %s247 = sphi 0, %s245
      %s248 = sphi 0, %s247
      %s262 = sphi 0, %s248
      %s266 = sphi 0, %s266
      %s268 = sphi 0, %s266
      %s269 = sphi 0, %s268
      %s283 = sphi 0, %s269
      %s287 = sphi 0, %s287
      %s289 = sphi 0, %s287
      %s290 = sphi 0, %s289
      %s304 = sphi 0, %s290
      %s308 = sphi 0, %s308
      %s310 = sphi 0, %s308
      %s311 = sphi 0, %s310
      %s325 = sphi 0, %s311
      %s329 = sphi 0, %s329
      %s331 = sphi 0, %s329
      %s332 = sphi 0, %s331
      %s346 = sphi 0, %s332
      %s350 = sphi 0, %s350
      %s352 = sphi 0, %s350
      %s353 = sphi 0, %s352
      %s367 = sphi 0, %s353
      %s371 = sphi 0, %s371
      %s373 = sphi 0, %s371
      %s374 = sphi 0, %s373
      %s388 = sphi 0, %s374
      %s392 = sphi 0, %s392
      %s394 = sphi 0, %s392
      %s395 = sphi 0, %s394
      %s409 = sphi 0, %s395
      %s413 = sphi 0, %s413
      %s415 = sphi 0, %s413
      %s416 = sphi 0, %s415
      %s430 = sphi 0, %s416
      %s434 = sphi 0, %s434
      %s436 = sphi 0, %s434
      %s437 = sphi 0, %s436
      %s451 = sphi 0, %s437
      %s455 = sphi 0, %s455
      %s457 = sphi 0, %s455
      %s458 = sphi 0, %s457
      %s472 = sphi 0, %s458
      %s476 = sphi 0, %s476
      %s478 = sphi 0, %s476
      %s479 = sphi 0, %s478
      %s493 = sphi 0, %s479
      %s497 = sphi 0, %s497
      %s499 = sphi 0, %s497
      %s500 = sphi 0, %s499
      %s514 = sphi 0, %s500
      %s518 = sphi 0, %s518
      %s520 = sphi 0, %s518
      %s521 = sphi 0, %s520
      %s535 = sphi 0, %s521
      %s539 = sphi 0, %s539
      %s541 = sphi 0, %s539
      %s542 = sphi 0, %s541
      %s556 = sphi 0, %s542
      %s560 = sphi 0, %s560
      %s562 = sphi 0, %s560
      %s563 = sphi 0, %s562
      %s577 = sphi 0, %s563
      %s581 = sphi 0, %s581
      %s583 = sphi 0, %s581
      %s584 = sphi 0, %s583
      %s598 = sphi 0, %s584
      %s604 = sphi 0, %s606
      %s607 = sphi 0, %s604
      %s608 = sphi 0, %s607
      %s624 = sphi 0, %s608
    $region4: #{pedsleep_mae_forward.6} parent=1 // loop_header_branch
      %46 = sbr.rel (%p44) target = $region8
    $region5: #{pedsleep_mae_forward.6} parent=1 // loop_body
      %s48 = ssub.s32 %s43, 1
      %s49 = ssub.s32 %s43, 2
      %s50 = sadd.s32 %s43, 1
      %s51 = ssub.s32 %s43, %s50
      %p52 = scmp.eq.s32.totalorder %s51, 0
      %s54 = sadd.s32 %s53, 1
      %s55 = scalar_select %p52, %s53, %s54
      %p58 = pneg %p52
      %p59 = scmp.eq.s32.totalorder %s43, 1
      %p60 = por %p58, %p59
      %p61 = scmp.ne.s32.totalorder %s53, %s56
      %p62 = scmp.eq.s32.totalorder %s43, 0
      %p63 = por %p61, %p62
      %p64 = scmp.ne.s32.totalorder %s53, %s56
      %p65 = scmp.eq.s32.totalorder %s48, 1
      %p66 = por %p64, %p65
      %p67 = scmp.ne.s32.totalorder %s56, %s57
      %p68 = scmp.eq.s32.totalorder %s48, 0
      %p69 = por %p67, %p68
      %p70 = scmp.ne.s32.totalorder %s56, %s57
      %p71 = scmp.eq.s32.totalorder %s49, 1
      %p72 = por %p70, %p71
      %p74 = scmp.ne.s32.totalorder %s57, %s73
      %p75 = scmp.eq.s32.totalorder %s49, 0
      %p76 = por %p74, %p75
      %s78 = sadd.s32 %s77, 1
      %p81 = scmp.eq.s32.totalorder %s43, 1
      %p82 = scmp.ne.s32.totalorder %s77, %s79
      %p83 = scmp.eq.s32.totalorder %s43, 0
      %p84 = por %p82, %p83
      %p85 = scmp.ne.s32.totalorder %s77, %s79
      %p86 = scmp.eq.s32.totalorder %s48, 1
      %p87 = por %p85, %p86
      %p88 = scmp.ne.s32.totalorder %s79, %s80
      %p89 = scmp.eq.s32.totalorder %s48, 0
      %p90 = por %p88, %p89
      %p91 = scmp.ne.s32.totalorder %s79, %s80
      %p92 = scmp.eq.s32.totalorder %s49, 1
      %p93 = por %p91, %p92
      %p95 = scmp.ne.s32.totalorder %s80, %s94
      %p96 = scmp.eq.s32.totalorder %s49, 0
      %p97 = por %p95, %p96
      %s99 = sadd.s32 %s98, 1
      %p102 = scmp.eq.s32.totalorder %s43, 1
      %p103 = scmp.ne.s32.totalorder %s98, %s100
      %p104 = scmp.eq.s32.totalorder %s43, 0
      %p105 = por %p103, %p104
      %p106 = scmp.ne.s32.totalorder %s98, %s100
      %p107 = scmp.eq.s32.totalorder %s48, 1
      %p108 = por %p106, %p107
      %p109 = scmp.ne.s32.totalorder %s100, %s101
      %p110 = scmp.eq.s32.totalorder %s48, 0
      %p111 = por %p109, %p110
      %p112 = scmp.ne.s32.totalorder %s100, %s101
      %p113 = scmp.eq.s32.totalorder %s49, 1
      %p114 = por %p112, %p113
      %p116 = scmp.ne.s32.totalorder %s101, %s115
      %p117 = scmp.eq.s32.totalorder %s49, 0
      %p118 = por %p116, %p117
      %s120 = sadd.s32 %s119, 1
      %p123 = scmp.eq.s32.totalorder %s43, 1
      %p124 = scmp.ne.s32.totalorder %s119, %s121
      %p125 = scmp.eq.s32.totalorder %s43, 0
      %p126 = por %p124, %p125
      %p127 = scmp.ne.s32.totalorder %s119, %s121
      %p128 = scmp.eq.s32.totalorder %s48, 1
      %p129 = por %p127, %p128
      %p130 = scmp.ne.s32.totalorder %s121, %s122
      %p131 = scmp.eq.s32.totalorder %s48, 0
      %p132 = por %p130, %p131
      %p133 = scmp.ne.s32.totalorder %s121, %s122
      %p134 = scmp.eq.s32.totalorder %s49, 1
      %p135 = por %p133, %p134
      %p137 = scmp.ne.s32.totalorder %s122, %s136
      %p138 = scmp.eq.s32.totalorder %s49, 0
      %p139 = por %p137, %p138
      %s141 = sadd.s32 %s140, 1
      %p144 = scmp.eq.s32.totalorder %s43, 1
      %p145 = scmp.ne.s32.totalorder %s140, %s142
      %p146 = scmp.eq.s32.totalorder %s43, 0
      %p147 = por %p145, %p146
      %p148 = scmp.ne.s32.totalorder %s140, %s142
      %p149 = scmp.eq.s32.totalorder %s48, 1
      %p150 = por %p148, %p149
      %p151 = scmp.ne.s32.totalorder %s142, %s143
      %p152 = scmp.eq.s32.totalorder %s48, 0
      %p153 = por %p151, %p152
      %p154 = scmp.ne.s32.totalorder %s142, %s143
      %p155 = scmp.eq.s32.totalorder %s49, 1
      %p156 = por %p154, %p155
      %p158 = scmp.ne.s32.totalorder %s143, %s157
      %p159 = scmp.eq.s32.totalorder %s49, 0
      %p160 = por %p158, %p159
      %s162 = sadd.s32 %s161, 1
      %p165 = scmp.eq.s32.totalorder %s43, 1
      %p166 = scmp.ne.s32.totalorder %s161, %s163
      %p167 = scmp.eq.s32.totalorder %s43, 0
      %p168 = por %p166, %p167
      %p169 = scmp.ne.s32.totalorder %s161, %s163
      %p170 = scmp.eq.s32.totalorder %s48, 1
      %p171 = por %p169, %p170
      %p172 = scmp.ne.s32.totalorder %s163, %s164
      %p173 = scmp.eq.s32.totalorder %s48, 0
      %p174 = por %p172, %p173
      %p175 = scmp.ne.s32.totalorder %s163, %s164
      %p176 = scmp.eq.s32.totalorder %s49, 1
      %p177 = por %p175, %p176
      %p179 = scmp.ne.s32.totalorder %s164, %s178
      %p180 = scmp.eq.s32.totalorder %s49, 0
      %p181 = por %p179, %p180
      %s183 = sadd.s32 %s182, 1
      %p186 = scmp.eq.s32.totalorder %s43, 1
      %p187 = scmp.ne.s32.totalorder %s182, %s184
      %p188 = scmp.eq.s32.totalorder %s43, 0
      %p189 = por %p187, %p188
      %p190 = scmp.ne.s32.totalorder %s182, %s184
      %p191 = scmp.eq.s32.totalorder %s48, 1
      %p192 = por %p190, %p191
      %p193 = scmp.ne.s32.totalorder %s184, %s185
      %p194 = scmp.eq.s32.totalorder %s48, 0
      %p195 = por %p193, %p194
      %p196 = scmp.ne.s32.totalorder %s184, %s185
      %p197 = scmp.eq.s32.totalorder %s49, 1
      %p198 = por %p196, %p197
      %p200 = scmp.ne.s32.totalorder %s185, %s199
      %p201 = scmp.eq.s32.totalorder %s49, 0
      %p202 = por %p200, %p201
      %s204 = sadd.s32 %s203, 1
      %p207 = scmp.eq.s32.totalorder %s43, 1
      %p208 = scmp.ne.s32.totalorder %s203, %s205
      %p209 = scmp.eq.s32.totalorder %s43, 0
      %p210 = por %p208, %p209
      %p211 = scmp.ne.s32.totalorder %s203, %s205
      %p212 = scmp.eq.s32.totalorder %s48, 1
      %p213 = por %p211, %p212
      %p214 = scmp.ne.s32.totalorder %s205, %s206
      %p215 = scmp.eq.s32.totalorder %s48, 0
      %p216 = por %p214, %p215
      %p217 = scmp.ne.s32.totalorder %s205, %s206
      %p218 = scmp.eq.s32.totalorder %s49, 1
      %p219 = por %p217, %p218
      %p221 = scmp.ne.s32.totalorder %s206, %s220
      %p222 = scmp.eq.s32.totalorder %s49, 0
      %p223 = por %p221, %p222
      %s225 = sadd.s32 %s224, 1
      %p228 = scmp.eq.s32.totalorder %s43, 1
      %p229 = scmp.ne.s32.totalorder %s224, %s226
      %p230 = scmp.eq.s32.totalorder %s43, 0
      %p231 = por %p229, %p230
      %p232 = scmp.ne.s32.totalorder %s224, %s226
      %p233 = scmp.eq.s32.totalorder %s48, 1
      %p234 = por %p232, %p233
      %p235 = scmp.ne.s32.totalorder %s226, %s227
      %p236 = scmp.eq.s32.totalorder %s48, 0
      %p237 = por %p235, %p236
      %p238 = scmp.ne.s32.totalorder %s226, %s227
      %p239 = scmp.eq.s32.totalorder %s49, 1
      %p240 = por %p238, %p239
      %p242 = scmp.ne.s32.totalorder %s227, %s241
      %p243 = scmp.eq.s32.totalorder %s49, 0
      %p244 = por %p242, %p243
      %s246 = sadd.s32 %s245, 1
      %p249 = scmp.eq.s32.totalorder %s43, 1
      %p250 = scmp.ne.s32.totalorder %s245, %s247
      %p251 = scmp.eq.s32.totalorder %s43, 0
      %p252 = por %p250, %p251
      %p253 = scmp.ne.s32.totalorder %s245, %s247
      %p254 = scmp.eq.s32.totalorder %s48, 1
      %p255 = por %p253, %p254
      %p256 = scmp.ne.s32.totalorder %s247, %s248
      %p257 = scmp.eq.s32.totalorder %s48, 0
      %p258 = por %p256, %p257
      %p259 = scmp.ne.s32.totalorder %s247, %s248
      %p260 = scmp.eq.s32.totalorder %s49, 1
      %p261 = por %p259, %p260
      %p263 = scmp.ne.s32.totalorder %s248, %s262
      %p264 = scmp.eq.s32.totalorder %s49, 0
      %p265 = por %p263, %p264
      %s267 = sadd.s32 %s266, 1
      %p270 = scmp.eq.s32.totalorder %s43, 1
      %p271 = scmp.ne.s32.totalorder %s266, %s268
      %p272 = scmp.eq.s32.totalorder %s43, 0
      %p273 = por %p271, %p272
      %p274 = scmp.ne.s32.totalorder %s266, %s268
      %p275 = scmp.eq.s32.totalorder %s48, 1
      %p276 = por %p274, %p275
      %p277 = scmp.ne.s32.totalorder %s268, %s269
      %p278 = scmp.eq.s32.totalorder %s48, 0
      %p279 = por %p277, %p278
      %p280 = scmp.ne.s32.totalorder %s268, %s269
      %p281 = scmp.eq.s32.totalorder %s49, 1
      %p282 = por %p280, %p281
      %p284 = scmp.ne.s32.totalorder %s269, %s283
      %p285 = scmp.eq.s32.totalorder %s49, 0
      %p286 = por %p284, %p285
      %s288 = sadd.s32 %s287, 1
      %p291 = scmp.eq.s32.totalorder %s43, 1
      %p292 = scmp.ne.s32.totalorder %s287, %s289
      %p293 = scmp.eq.s32.totalorder %s43, 0
      %p294 = por %p292, %p293
      %p295 = scmp.ne.s32.totalorder %s287, %s289
      %p296 = scmp.eq.s32.totalorder %s48, 1
      %p297 = por %p295, %p296
      %p298 = scmp.ne.s32.totalorder %s289, %s290
      %p299 = scmp.eq.s32.totalorder %s48, 0
      %p300 = por %p298, %p299
      %p301 = scmp.ne.s32.totalorder %s289, %s290
      %p302 = scmp.eq.s32.totalorder %s49, 1
      %p303 = por %p301, %p302
      %p305 = scmp.ne.s32.totalorder %s290, %s304
      %p306 = scmp.eq.s32.totalorder %s49, 0
      %p307 = por %p305, %p306
      %s309 = sadd.s32 %s308, 1
      %p312 = scmp.eq.s32.totalorder %s43, 1
      %p313 = scmp.ne.s32.totalorder %s308, %s310
      %p314 = scmp.eq.s32.totalorder %s43, 0
      %p315 = por %p313, %p314
      %p316 = scmp.ne.s32.totalorder %s308, %s310
      %p317 = scmp.eq.s32.totalorder %s48, 1
      %p318 = por %p316, %p317
      %p319 = scmp.ne.s32.totalorder %s310, %s311
      %p320 = scmp.eq.s32.totalorder %s48, 0
      %p321 = por %p319, %p320
      %p322 = scmp.ne.s32.totalorder %s310, %s311
      %p323 = scmp.eq.s32.totalorder %s49, 1
      %p324 = por %p322, %p323
      %p326 = scmp.ne.s32.totalorder %s311, %s325
      %p327 = scmp.eq.s32.totalorder %s49, 0
      %p328 = por %p326, %p327
      %s330 = sadd.s32 %s329, 1
      %p333 = scmp.eq.s32.totalorder %s43, 1
      %p334 = scmp.ne.s32.totalorder %s329, %s331
      %p335 = scmp.eq.s32.totalorder %s43, 0
      %p336 = por %p334, %p335
      %p337 = scmp.ne.s32.totalorder %s329, %s331
      %p338 = scmp.eq.s32.totalorder %s48, 1
      %p339 = por %p337, %p338
      %p340 = scmp.ne.s32.totalorder %s331, %s332
      %p341 = scmp.eq.s32.totalorder %s48, 0
      %p342 = por %p340, %p341
      %p343 = scmp.ne.s32.totalorder %s331, %s332
      %p344 = scmp.eq.s32.totalorder %s49, 1
      %p345 = por %p343, %p344
      %p347 = scmp.ne.s32.totalorder %s332, %s346
      %p348 = scmp.eq.s32.totalorder %s49, 0
      %p349 = por %p347, %p348
      %s351 = sadd.s32 %s350, 1
      %p354 = scmp.eq.s32.totalorder %s43, 1
      %p355 = scmp.ne.s32.totalorder %s350, %s352
      %p356 = scmp.eq.s32.totalorder %s43, 0
      %p357 = por %p355, %p356
      %p358 = scmp.ne.s32.totalorder %s350, %s352
      %p359 = scmp.eq.s32.totalorder %s48, 1
      %p360 = por %p358, %p359
      %p361 = scmp.ne.s32.totalorder %s352, %s353
      %p362 = scmp.eq.s32.totalorder %s48, 0
      %p363 = por %p361, %p362
      %p364 = scmp.ne.s32.totalorder %s352, %s353
      %p365 = scmp.eq.s32.totalorder %s49, 1
      %p366 = por %p364, %p365
      %p368 = scmp.ne.s32.totalorder %s353, %s367
      %p369 = scmp.eq.s32.totalorder %s49, 0
      %p370 = por %p368, %p369
      %s372 = sadd.s32 %s371, 1
      %p375 = scmp.eq.s32.totalorder %s43, 1
      %p376 = scmp.ne.s32.totalorder %s371, %s373
      %p377 = scmp.eq.s32.totalorder %s43, 0
      %p378 = por %p376, %p377
      %p379 = scmp.ne.s32.totalorder %s371, %s373
      %p380 = scmp.eq.s32.totalorder %s48, 1
      %p381 = por %p379, %p380
      %p382 = scmp.ne.s32.totalorder %s373, %s374
      %p383 = scmp.eq.s32.totalorder %s48, 0
      %p384 = por %p382, %p383
      %p385 = scmp.ne.s32.totalorder %s373, %s374
      %p386 = scmp.eq.s32.totalorder %s49, 1
      %p387 = por %p385, %p386
      %p389 = scmp.ne.s32.totalorder %s374, %s388
      %p390 = scmp.eq.s32.totalorder %s49, 0
      %p391 = por %p389, %p390
      %s393 = sadd.s32 %s392, 1
      %p396 = scmp.eq.s32.totalorder %s43, 1
      %p397 = scmp.ne.s32.totalorder %s392, %s394
      %p398 = scmp.eq.s32.totalorder %s43, 0
      %p399 = por %p397, %p398
      %p400 = scmp.ne.s32.totalorder %s392, %s394
      %p401 = scmp.eq.s32.totalorder %s48, 1
      %p402 = por %p400, %p401
      %p403 = scmp.ne.s32.totalorder %s394, %s395
      %p404 = scmp.eq.s32.totalorder %s48, 0
      %p405 = por %p403, %p404
      %p406 = scmp.ne.s32.totalorder %s394, %s395
      %p407 = scmp.eq.s32.totalorder %s49, 1
      %p408 = por %p406, %p407
      %p410 = scmp.ne.s32.totalorder %s395, %s409
      %p411 = scmp.eq.s32.totalorder %s49, 0
      %p412 = por %p410, %p411
      %s414 = sadd.s32 %s413, 1
      %p417 = scmp.eq.s32.totalorder %s43, 1
      %p418 = scmp.ne.s32.totalorder %s413, %s415
      %p419 = scmp.eq.s32.totalorder %s43, 0
      %p420 = por %p418, %p419
      %p421 = scmp.ne.s32.totalorder %s413, %s415
      %p422 = scmp.eq.s32.totalorder %s48, 1
      %p423 = por %p421, %p422
      %p424 = scmp.ne.s32.totalorder %s415, %s416
      %p425 = scmp.eq.s32.totalorder %s48, 0
      %p426 = por %p424, %p425
      %p427 = scmp.ne.s32.totalorder %s415, %s416
      %p428 = scmp.eq.s32.totalorder %s49, 1
      %p429 = por %p427, %p428
      %p431 = scmp.ne.s32.totalorder %s416, %s430
      %p432 = scmp.eq.s32.totalorder %s49, 0
      %p433 = por %p431, %p432
      %s435 = sadd.s32 %s434, 1
      %p438 = scmp.eq.s32.totalorder %s43, 1
      %p439 = scmp.ne.s32.totalorder %s434, %s436
      %p440 = scmp.eq.s32.totalorder %s43, 0
      %p441 = por %p439, %p440
      %p442 = scmp.ne.s32.totalorder %s434, %s436
      %p443 = scmp.eq.s32.totalorder %s48, 1
      %p444 = por %p442, %p443
      %p445 = scmp.ne.s32.totalorder %s436, %s437
      %p446 = scmp.eq.s32.totalorder %s48, 0
      %p447 = por %p445, %p446
      %p448 = scmp.ne.s32.totalorder %s436, %s437
      %p449 = scmp.eq.s32.totalorder %s49, 1
      %p450 = por %p448, %p449
      %p452 = scmp.ne.s32.totalorder %s437, %s451
      %p453 = scmp.eq.s32.totalorder %s49, 0
      %p454 = por %p452, %p453
      %s456 = sadd.s32 %s455, 1
      %p459 = scmp.eq.s32.totalorder %s43, 1
      %p460 = scmp.ne.s32.totalorder %s455, %s457
      %p461 = scmp.eq.s32.totalorder %s43, 0
      %p462 = por %p460, %p461
      %p463 = scmp.ne.s32.totalorder %s455, %s457
      %p464 = scmp.eq.s32.totalorder %s48, 1
      %p465 = por %p463, %p464
      %p466 = scmp.ne.s32.totalorder %s457, %s458
      %p467 = scmp.eq.s32.totalorder %s48, 0
      %p468 = por %p466, %p467
      %p469 = scmp.ne.s32.totalorder %s457, %s458
      %p470 = scmp.eq.s32.totalorder %s49, 1
      %p471 = por %p469, %p470
      %p473 = scmp.ne.s32.totalorder %s458, %s472
      %p474 = scmp.eq.s32.totalorder %s49, 0
      %p475 = por %p473, %p474
      %s477 = sadd.s32 %s476, 1
      %p480 = scmp.eq.s32.totalorder %s43, 1
      %p481 = scmp.ne.s32.totalorder %s476, %s478
      %p482 = scmp.eq.s32.totalorder %s43, 0
      %p483 = por %p481, %p482
      %p484 = scmp.ne.s32.totalorder %s476, %s478
      %p485 = scmp.eq.s32.totalorder %s48, 1
      %p486 = por %p484, %p485
      %p487 = scmp.ne.s32.totalorder %s478, %s479
      %p488 = scmp.eq.s32.totalorder %s48, 0
      %p489 = por %p487, %p488
      %p490 = scmp.ne.s32.totalorder %s478, %s479
      %p491 = scmp.eq.s32.totalorder %s49, 1
      %p492 = por %p490, %p491
      %p494 = scmp.ne.s32.totalorder %s479, %s493
      %p495 = scmp.eq.s32.totalorder %s49, 0
      %p496 = por %p494, %p495
      %s498 = sadd.s32 %s497, 1
      %p501 = scmp.eq.s32.totalorder %s43, 1
      %p502 = scmp.ne.s32.totalorder %s497, %s499
      %p503 = scmp.eq.s32.totalorder %s43, 0
      %p504 = por %p502, %p503
      %p505 = scmp.ne.s32.totalorder %s497, %s499
      %p506 = scmp.eq.s32.totalorder %s48, 1
      %p507 = por %p505, %p506
      %p508 = scmp.ne.s32.totalorder %s499, %s500
      %p509 = scmp.eq.s32.totalorder %s48, 0
      %p510 = por %p508, %p509
      %p511 = scmp.ne.s32.totalorder %s499, %s500
      %p512 = scmp.eq.s32.totalorder %s49, 1
      %p513 = por %p511, %p512
      %p515 = scmp.ne.s32.totalorder %s500, %s514
      %p516 = scmp.eq.s32.totalorder %s49, 0
      %p517 = por %p515, %p516
      %s519 = sadd.s32 %s518, 1
      %p522 = scmp.eq.s32.totalorder %s43, 1
      %p523 = scmp.ne.s32.totalorder %s518, %s520
      %p524 = scmp.eq.s32.totalorder %s43, 0
      %p525 = por %p523, %p524
      %p526 = scmp.ne.s32.totalorder %s518, %s520
      %p527 = scmp.eq.s32.totalorder %s48, 1
      %p528 = por %p526, %p527
      %p529 = scmp.ne.s32.totalorder %s520, %s521
      %p530 = scmp.eq.s32.totalorder %s48, 0
      %p531 = por %p529, %p530
      %p532 = scmp.ne.s32.totalorder %s520, %s521
      %p533 = scmp.eq.s32.totalorder %s49, 1
      %p534 = por %p532, %p533
      %p536 = scmp.ne.s32.totalorder %s521, %s535
      %p537 = scmp.eq.s32.totalorder %s49, 0
      %p538 = por %p536, %p537
      %s540 = sadd.s32 %s539, 1
      %p543 = scmp.eq.s32.totalorder %s43, 1
      %p544 = scmp.ne.s32.totalorder %s539, %s541
      %p545 = scmp.eq.s32.totalorder %s43, 0
      %p546 = por %p544, %p545
      %p547 = scmp.ne.s32.totalorder %s539, %s541
      %p548 = scmp.eq.s32.totalorder %s48, 1
      %p549 = por %p547, %p548
      %p550 = scmp.ne.s32.totalorder %s541, %s542
      %p551 = scmp.eq.s32.totalorder %s48, 0
      %p552 = por %p550, %p551
      %p553 = scmp.ne.s32.totalorder %s541, %s542
      %p554 = scmp.eq.s32.totalorder %s49, 1
      %p555 = por %p553, %p554
      %p557 = scmp.ne.s32.totalorder %s542, %s556
      %p558 = scmp.eq.s32.totalorder %s49, 0
      %p559 = por %p557, %p558
      %s561 = sadd.s32 %s560, 1
      %p564 = scmp.eq.s32.totalorder %s43, 1
      %p565 = scmp.ne.s32.totalorder %s560, %s562
      %p566 = scmp.eq.s32.totalorder %s43, 0
      %p567 = por %p565, %p566
      %p568 = scmp.ne.s32.totalorder %s560, %s562
      %p569 = scmp.eq.s32.totalorder %s48, 1
      %p570 = por %p568, %p569
      %p571 = scmp.ne.s32.totalorder %s562, %s563
      %p572 = scmp.eq.s32.totalorder %s48, 0
      %p573 = por %p571, %p572
      %p574 = scmp.ne.s32.totalorder %s562, %s563
      %p575 = scmp.eq.s32.totalorder %s49, 1
      %p576 = por %p574, %p575
      %p578 = scmp.ne.s32.totalorder %s563, %s577
      %p579 = scmp.eq.s32.totalorder %s49, 0
      %p580 = por %p578, %p579
      %s582 = sadd.s32 %s581, 1
      %p585 = scmp.eq.s32.totalorder %s43, 1
      %p586 = scmp.ne.s32.totalorder %s581, %s583
      %p587 = scmp.eq.s32.totalorder %s43, 0
      %p588 = por %p586, %p587
      %p589 = scmp.ne.s32.totalorder %s581, %s583
      %p590 = scmp.eq.s32.totalorder %s48, 1
      %p591 = por %p589, %p590
      %p592 = scmp.ne.s32.totalorder %s583, %s584
      %p593 = scmp.eq.s32.totalorder %s48, 0
      %p594 = por %p592, %p593
      %p595 = scmp.ne.s32.totalorder %s583, %s584
      %p596 = scmp.eq.s32.totalorder %s49, 1
      %p597 = por %p595, %p596
      %p599 = scmp.ne.s32.totalorder %s584, %s598
      %p600 = scmp.eq.s32.totalorder %s49, 0
      %p601 = por %p599, %p600
      %s602 = ssub.s32 %s43, %s50
      %p603 = scmp.eq.s32.totalorder %s602, 0
      %s605 = sadd.s32 %s604, 1
      %s606 = scalar_select %p603, %s604, %s605
      %p609 = pneg %p603
      %p610 = scmp.eq.s32.totalorder %s43, 1
      %p611 = por %p609, %p610
      %p612 = scmp.ne.s32.totalorder %s604, %s607
      %p613 = scmp.eq.s32.totalorder %s43, 0
      %p614 = por %p612, %p613
      %p615 = scmp.ne.s32.totalorder %s604, %s607
      %p616 = scmp.eq.s32.totalorder %s48, 1
      %p617 = por %p615, %p616
      %p618 = scmp.ne.s32.totalorder %s607, %s608
      %p619 = scmp.eq.s32.totalorder %s48, 0
      %p620 = por %p618, %p619
      %p621 = scmp.ne.s32.totalorder %s607, %s608
      %p622 = scmp.eq.s32.totalorder %s49, 1
      %p623 = por %p621, %p622
      %p625 = scmp.ne.s32.totalorder %s608, %s624
      %p626 = scmp.eq.s32.totalorder %s49, 0
      %p627 = por %p625, %p626
      %p628 = scmp.le.s32.totalorder 1, %s43
      %p629 = scmp.lt.s32.totalorder %s43, 3
      %p630 = pnand %p628, %p629
      %p631 = pneg %p630
      // Predicated region
      $region9: #{pedsleep_mae_forward.6} parent=5 // pred_check
        _
      $region10: #{pedsleep_mae_forward.6} parent=5 // pred_check_branch
        %633 = sbr.rel (%p630) target = $region12
      $region11: #{pedsleep_mae_forward.6} parent=5 // pred_region
        %s634 = ssub.s32 %s43, 1
        // Predicated region
        $region13: #{pedsleep_mae_forward.6} parent=11 // pred_check
          %p635 = pneg %p90
        $region14: #{pedsleep_mae_forward.6} parent=11 // pred_check_branch
          %637 = sbr.rel (%p635) target = $region16
        $region15: #{pedsleep_mae_forward.6} parent=11 // pred_region
          _
        $region16: #{pedsleep_mae_forward.6} parent=11 // pred_fallthru
          _
        // Predicated region
        $region17: #{pedsleep_mae_forward.6} parent=11 // pred_check
          %p638 = pneg %p111
        $region18: #{pedsleep_mae_forward.6} parent=11 // pred_check_branch
          %640 = sbr.rel (%p638) target = $region20
        $region19: #{pedsleep_mae_forward.6} parent=11 // pred_region
          _
        $region20: #{pedsleep_mae_forward.6} parent=11 // pred_fallthru
          _
        // Predicated region
        $region21: #{pedsleep_mae_forward.6} parent=11 // pred_check
          %p641 = pneg %p132
        $region22: #{pedsleep_mae_forward.6} parent=11 // pred_check_branch
          %643 = sbr.rel (%p641) target = $region24
        $region23: #{pedsleep_mae_forward.6} parent=11 // pred_region
          %645 = vsyncadd [#allocation3], 0
          %s647 = sshll.u32 %s3, 4
          %s648 = int_to_ptr.hbm [resolvable:$true] %s647
          %s649 = sshll.u32 [#allocation2], 4
          %s650 = int_to_ptr.vmem [resolvable:$true] %s649
          %652 = dma.hbm_to_vmem [thread:$0]  %s648, 16, %s650, [#allocation3]
        $region24: #{pedsleep_mae_forward.6} parent=11 // pred_fallthru
          _
        // Predicated region
        $region25: #{pedsleep_mae_forward.6} parent=11 // pred_check
          %p653 = pneg %p153
        $region26: #{pedsleep_mae_forward.6} parent=11 // pred_check_branch
          %655 = sbr.rel (%p653) target = $region28
        $region27: #{pedsleep_mae_forward.6} parent=11 // pred_region
          %657 = vsyncadd [#allocation5], 0
          %s658 = sshll.u32 %s4, 4
          %s659 = int_to_ptr.hbm [resolvable:$true] %s658
          %s660 = sshll.u32 [#allocation4], 4
          %s661 = int_to_ptr.vmem [resolvable:$true] %s660
          %666 = dma.hbm_to_vmem [thread:$0]  %s659, 3072, %s661, [#allocation5], 192, 192, 12
        $region28: #{pedsleep_mae_forward.6} parent=11 // pred_fallthru
          _
        // Predicated region
        $region29: #{pedsleep_mae_forward.6} parent=11 // pred_check
          %p667 = pneg %p174
        $region30: #{pedsleep_mae_forward.6} parent=11 // pred_check_branch
          %669 = sbr.rel (%p667) target = $region32
        $region31: #{pedsleep_mae_forward.6} parent=11 // pred_region
          %671 = vsyncadd [#allocation5], 0
          %s673 = sshll.u32 %s5, 4
          %s674 = int_to_ptr.hbm [resolvable:$true] %s673
          %s675 = sshll.u32 [#allocation6], 4
          %s676 = int_to_ptr.vmem [resolvable:$true] %s675
          %678 = dma.hbm_to_vmem [thread:$0]  %s674, 48, %s676, [#allocation5]
        $region32: #{pedsleep_mae_forward.6} parent=11 // pred_fallthru
          _
        // Predicated region
        $region33: #{pedsleep_mae_forward.6} parent=11 // pred_check
          %p679 = pneg %p195
        $region34: #{pedsleep_mae_forward.6} parent=11 // pred_check_branch
          %681 = sbr.rel (%p679) target = $region36
        $region35: #{pedsleep_mae_forward.6} parent=11 // pred_region
          %683 = vsyncadd [#allocation8], 0
          %s684 = sshll.u32 %s6, 4
          %s685 = int_to_ptr.hbm [resolvable:$true] %s684
          %s686 = sshll.u32 [#allocation7], 4
          %s687 = int_to_ptr.vmem [resolvable:$true] %s686
          %692 = dma.hbm_to_vmem [thread:$0]  %s685, 1024, %s687, [#allocation8], 64, 64, 4
        $region36: #{pedsleep_mae_forward.6} parent=11 // pred_fallthru
          _
        // Predicated region
        $region37: #{pedsleep_mae_forward.6} parent=11 // pred_check
          %p693 = pneg %p216
        $region38: #{pedsleep_mae_forward.6} parent=11 // pred_check_branch
          %695 = sbr.rel (%p693) target = $region40
        $region39: #{pedsleep_mae_forward.6} parent=11 // pred_region
          %697 = vsyncadd [#allocation8], 0
          %s699 = sshll.u32 %s7, 4
          %s700 = int_to_ptr.hbm [resolvable:$true] %s699
          %s701 = sshll.u32 [#allocation9], 4
          %s702 = int_to_ptr.vmem [resolvable:$true] %s701
          %704 = dma.hbm_to_vmem [thread:$0]  %s700, 16, %s702, [#allocation8]
        $region40: #{pedsleep_mae_forward.6} parent=11 // pred_fallthru
          _
        // Predicated region
        $region41: #{pedsleep_mae_forward.6} parent=11 // pred_check
          %p705 = pneg %p237
        $region42: #{pedsleep_mae_forward.6} parent=11 // pred_check_branch
          %707 = sbr.rel (%p705) target = $region44
        $region43: #{pedsleep_mae_forward.6} parent=11 // pred_region
          %709 = vsyncadd [#allocation11], 0
          %s711 = sshll.u32 %s8, 4
          %s712 = int_to_ptr.hbm [resolvable:$true] %s711
          %s713 = sshll.u32 [#allocation10], 4
          %s714 = int_to_ptr.vmem [resolvable:$true] %s713
          %716 = dma.hbm_to_vmem [thread:$0]  %s712, 16, %s714, [#allocation11]
        $region44: #{pedsleep_mae_forward.6} parent=11 // pred_fallthru
          _
        // Predicated region
        $region45: #{pedsleep_mae_forward.6} parent=11 // pred_check
          %p717 = pneg %p258
        $region46: #{pedsleep_mae_forward.6} parent=11 // pred_check_branch
          %719 = sbr.rel (%p717) target = $region48
        $region47: #{pedsleep_mae_forward.6} parent=11 // pred_region
          %721 = vsyncadd [#allocation11], 0
          %s723 = sshll.u32 %s9, 4
          %s724 = int_to_ptr.hbm [resolvable:$true] %s723
          %s725 = sshll.u32 [#allocation12], 4
          %s726 = int_to_ptr.vmem [resolvable:$true] %s725
          %728 = dma.hbm_to_vmem [thread:$0]  %s724, 16, %s726, [#allocation11]
        $region48: #{pedsleep_mae_forward.6} parent=11 // pred_fallthru
          _
        // Predicated region
        $region49: #{pedsleep_mae_forward.6} parent=11 // pred_check
          %p729 = pneg %p279
        $region50: #{pedsleep_mae_forward.6} parent=11 // pred_check_branch
          %731 = sbr.rel (%p729) target = $region52
        $region51: #{pedsleep_mae_forward.6} parent=11 // pred_region
          %733 = vsyncadd [#allocation14], 0
          %s734 = sshll.u32 %s10, 4
          %s735 = int_to_ptr.hbm [resolvable:$true] %s734
          %s736 = sshll.u32 [#allocation13], 4
          %s737 = int_to_ptr.vmem [resolvable:$true] %s736
          %742 = dma.hbm_to_vmem [thread:$0]  %s735, 4096, %s737, [#allocation14], 256, 256, 16
        $region52: #{pedsleep_mae_forward.6} parent=11 // pred_fallthru
          _
        // Predicated region
        $region53: #{pedsleep_mae_forward.6} parent=11 // pred_check
          %p743 = pneg %p300
        $region54: #{pedsleep_mae_forward.6} parent=11 // pred_check_branch
          %745 = sbr.rel (%p743) target = $region56
        $region55: #{pedsleep_mae_forward.6} parent=11 // pred_region
          _
        $region56: #{pedsleep_mae_forward.6} parent=11 // pred_fallthru
          _
        // Predicated region
        $region57: #{pedsleep_mae_forward.6} parent=11 // pred_check
          %p746 = pneg %p321
        $region58: #{pedsleep_mae_forward.6} parent=11 // pred_check_branch
          %748 = sbr.rel (%p746) target = $region60
        $region59: #{pedsleep_mae_forward.6} parent=11 // pred_region
          %750 = vsyncadd [#allocation14], 0
          %s751 = sshll.u32 %s12, 4
          %s752 = int_to_ptr.hbm [resolvable:$true] %s751
          %s753 = sshll.u32 [#allocation15], 4
          %s754 = int_to_ptr.vmem [resolvable:$true] %s753
          %759 = dma.hbm_to_vmem [thread:$0]  %s752, 4096, %s754, [#allocation14], 64, 64, 4
        $region60: #{pedsleep_mae_forward.6} parent=11 // pred_fallthru
          _
        // Predicated region
        $region61: #{pedsleep_mae_forward.6} parent=11 // pred_check
          %p760 = pneg %p342
        $region62: #{pedsleep_mae_forward.6} parent=11 // pred_check_branch
          %762 = sbr.rel (%p760) target = $region64
        $region63: #{pedsleep_mae_forward.6} parent=11 // pred_region
          %764 = vsyncadd [#allocation17], 0
          %s766 = sshll.u32 %s13, 4
          %s767 = int_to_ptr.hbm [resolvable:$true] %s766
          %s768 = sshll.u32 [#allocation16], 4
          %s769 = int_to_ptr.vmem [resolvable:$true] %s768
          %771 = dma.hbm_to_vmem [thread:$0]  %s767, 16, %s769, [#allocation17]
        $region64: #{pedsleep_mae_forward.6} parent=11 // pred_fallthru
          _
        // Predicated region
        $region65: #{pedsleep_mae_forward.6} parent=11 // pred_check
          %p772 = pneg %p363
        $region66: #{pedsleep_mae_forward.6} parent=11 // pred_check_branch
          %774 = sbr.rel (%p772) target = $region68
        $region67: #{pedsleep_mae_forward.6} parent=11 // pred_region
          %776 = vsyncadd [#allocation17], 0
          %s778 = sshll.u32 %s14, 4
          %s779 = int_to_ptr.hbm [resolvable:$true] %s778
          %s780 = sshll.u32 [#allocation18], 4
          %s781 = int_to_ptr.vmem [resolvable:$true] %s780
          %783 = dma.hbm_to_vmem [thread:$0]  %s779, 16, %s781, [#allocation17]
        $region68: #{pedsleep_mae_forward.6} parent=11 // pred_fallthru
          _
        // Predicated region
        $region69: #{pedsleep_mae_forward.6} parent=11 // pred_check
          %p784 = pneg %p384
        $region70: #{pedsleep_mae_forward.6} parent=11 // pred_check_branch
          %786 = sbr.rel (%p784) target = $region72
        $region71: #{pedsleep_mae_forward.6} parent=11 // pred_region
          %788 = vsyncadd [#allocation20], 0
          %s790 = sshll.u32 %s15, 4
          %s791 = int_to_ptr.hbm [resolvable:$true] %s790
          %s792 = sshll.u32 [#allocation19], 4
          %s793 = int_to_ptr.vmem [resolvable:$true] %s792
          %795 = dma.hbm_to_vmem [thread:$0]  %s791, 16, %s793, [#allocation20]
        $region72: #{pedsleep_mae_forward.6} parent=11 // pred_fallthru
          _
        // Predicated region
        $region73: #{pedsleep_mae_forward.6} parent=11 // pred_check
          %p796 = pneg %p405
        $region74: #{pedsleep_mae_forward.6} parent=11 // pred_check_branch
          %798 = sbr.rel (%p796) target = $region76
        $region75: #{pedsleep_mae_forward.6} parent=11 // pred_region
          %800 = vsyncadd [#allocation20], 0
          %s801 = sshll.u32 %s16, 4
          %s802 = int_to_ptr.hbm [resolvable:$true] %s801
          %s803 = sshll.u32 [#allocation21], 4
          %s804 = int_to_ptr.vmem [resolvable:$true] %s803
          %809 = dma.hbm_to_vmem [thread:$0]  %s802, 3072, %s804, [#allocation20], 192, 192, 12
        $region76: #{pedsleep_mae_forward.6} parent=11 // pred_fallthru
          _
        // Predicated region
        $region77: #{pedsleep_mae_forward.6} parent=11 // pred_check
          %p810 = pneg %p426
        $region78: #{pedsleep_mae_forward.6} parent=11 // pred_check_branch
          %812 = sbr.rel (%p810) target = $region80
        $region79: #{pedsleep_mae_forward.6} parent=11 // pred_region
          %814 = vsyncadd [#allocation23], 0
          %s816 = sshll.u32 %s17, 4
          %s817 = int_to_ptr.hbm [resolvable:$true] %s816
          %s818 = sshll.u32 [#allocation22], 4
          %s819 = int_to_ptr.vmem [resolvable:$true] %s818
          %821 = dma.hbm_to_vmem [thread:$0]  %s817, 48, %s819, [#allocation23]
        $region80: #{pedsleep_mae_forward.6} parent=11 // pred_fallthru
          _
        // Predicated region
        $region81: #{pedsleep_mae_forward.6} parent=11 // pred_check
          %p822 = pneg %p447
        $region82: #{pedsleep_mae_forward.6} parent=11 // pred_check_branch
          %824 = sbr.rel (%p822) target = $region84
        $region83: #{pedsleep_mae_forward.6} parent=11 // pred_region
          %826 = vsyncadd [#allocation23], 0
          %s827 = sshll.u32 %s18, 4
          %s828 = int_to_ptr.hbm [resolvable:$true] %s827
          %s829 = sshll.u32 [#allocation24], 4
          %s830 = int_to_ptr.vmem [resolvable:$true] %s829
          %835 = dma.hbm_to_vmem [thread:$0]  %s828, 1024, %s830, [#allocation23], 64, 64, 4
        $region84: #{pedsleep_mae_forward.6} parent=11 // pred_fallthru
          _
        // Predicated region
        $region85: #{pedsleep_mae_forward.6} parent=11 // pred_check
          %p836 = pneg %p468
        $region86: #{pedsleep_mae_forward.6} parent=11 // pred_check_branch
          %838 = sbr.rel (%p836) target = $region88
        $region87: #{pedsleep_mae_forward.6} parent=11 // pred_region
          %840 = vsyncadd [#allocation26], 0
          %s842 = sshll.u32 %s19, 4
          %s843 = int_to_ptr.hbm [resolvable:$true] %s842
          %s844 = sshll.u32 [#allocation25], 4
          %s845 = int_to_ptr.vmem [resolvable:$true] %s844
          %847 = dma.hbm_to_vmem [thread:$0]  %s843, 16, %s845, [#allocation26]
        $region88: #{pedsleep_mae_forward.6} parent=11 // pred_fallthru
          _
        // Predicated region
        $region89: #{pedsleep_mae_forward.6} parent=11 // pred_check
          %p848 = pneg %p489
        $region90: #{pedsleep_mae_forward.6} parent=11 // pred_check_branch
          %850 = sbr.rel (%p848) target = $region92
        $region91: #{pedsleep_mae_forward.6} parent=11 // pred_region
          %852 = vsyncadd [#allocation26], 0
          %s854 = sshll.u32 %s20, 4
          %s855 = int_to_ptr.hbm [resolvable:$true] %s854
          %s856 = sshll.u32 [#allocation27], 4
          %s857 = int_to_ptr.vmem [resolvable:$true] %s856
          %859 = dma.hbm_to_vmem [thread:$0]  %s855, 16, %s857, [#allocation26]
        $region92: #{pedsleep_mae_forward.6} parent=11 // pred_fallthru
          _
        // Predicated region
        $region93: #{pedsleep_mae_forward.6} parent=11 // pred_check
          %p860 = pneg %p510
        $region94: #{pedsleep_mae_forward.6} parent=11 // pred_check_branch
          %862 = sbr.rel (%p860) target = $region96
        $region95: #{pedsleep_mae_forward.6} parent=11 // pred_region
          %864 = vsyncadd [#allocation29], 0
          %s866 = sshll.u32 %s21, 4
          %s867 = int_to_ptr.hbm [resolvable:$true] %s866
          %s868 = sshll.u32 [#allocation28], 4
          %s869 = int_to_ptr.vmem [resolvable:$true] %s868
          %871 = dma.hbm_to_vmem [thread:$0]  %s867, 16, %s869, [#allocation29]
        $region96: #{pedsleep_mae_forward.6} parent=11 // pred_fallthru
          _
        // Predicated region
        $region97: #{pedsleep_mae_forward.6} parent=11 // pred_check
          %p872 = pneg %p531
        $region98: #{pedsleep_mae_forward.6} parent=11 // pred_check_branch
          %874 = sbr.rel (%p872) target = $region100
        $region99: #{pedsleep_mae_forward.6} parent=11 // pred_region
          %876 = vsyncadd [#allocation29], 0
          %s877 = sshll.u32 %s22, 4
          %s878 = int_to_ptr.hbm [resolvable:$true] %s877
          %s879 = sshll.u32 [#allocation30], 4
          %s880 = int_to_ptr.vmem [resolvable:$true] %s879
          %885 = dma.hbm_to_vmem [thread:$0]  %s878, 4096, %s880, [#allocation29], 256, 256, 16
        $region100: #{pedsleep_mae_forward.6} parent=11 // pred_fallthru
          _
        // Predicated region
        $region101: #{pedsleep_mae_forward.6} parent=11 // pred_check
          %p886 = pneg %p552
        $region102: #{pedsleep_mae_forward.6} parent=11 // pred_check_branch
          %888 = sbr.rel (%p886) target = $region104
        $region103: #{pedsleep_mae_forward.6} parent=11 // pred_region
          _
        $region104: #{pedsleep_mae_forward.6} parent=11 // pred_fallthru
          _
        // Predicated region
        $region105: #{pedsleep_mae_forward.6} parent=11 // pred_check
          %p889 = pneg %p573
        $region106: #{pedsleep_mae_forward.6} parent=11 // pred_check_branch
          %891 = sbr.rel (%p889) target = $region108
        $region107: #{pedsleep_mae_forward.6} parent=11 // pred_region
          %893 = vsyncadd [#allocation32], 0
          %s894 = sshll.u32 %s24, 4
          %s895 = int_to_ptr.hbm [resolvable:$true] %s894
          %s896 = sshll.u32 [#allocation31], 4
          %s897 = int_to_ptr.vmem [resolvable:$true] %s896
          %902 = dma.hbm_to_vmem [thread:$0]  %s895, 4096, %s897, [#allocation32], 64, 64, 4
        $region108: #{pedsleep_mae_forward.6} parent=11 // pred_fallthru
          _
        // Predicated region
        $region109: #{pedsleep_mae_forward.6} parent=11 // pred_check
          %p903 = pneg %p594
        $region110: #{pedsleep_mae_forward.6} parent=11 // pred_check_branch
          %905 = sbr.rel (%p903) target = $region112
        $region111: #{pedsleep_mae_forward.6} parent=11 // pred_region
          %907 = vsyncadd [#allocation32], 0
          %s909 = sshll.u32 %s25, 4
          %s910 = int_to_ptr.hbm [resolvable:$true] %s909
          %s911 = sshll.u32 [#allocation33], 4
          %s912 = int_to_ptr.vmem [resolvable:$true] %s911
          %914 = dma.hbm_to_vmem [thread:$0]  %s910, 16, %s912, [#allocation32]
        $region112: #{pedsleep_mae_forward.6} parent=11 // pred_fallthru
          _
      $region12: #{pedsleep_mae_forward.6} parent=5 // pred_fallthru
        _
      %p915 = scmp.lt.s32.totalorder %s43, 2
      // Predicated region
      $region113: #{pedsleep_mae_forward.6} parent=5 // pred_check
        %p916 = pneg %p915
      $region114: #{pedsleep_mae_forward.6} parent=5 // pred_check_branch
        %918 = sbr.rel (%p916) target = $region116
      $region115: #{pedsleep_mae_forward.6} parent=5 // pred_region
        // Predicated region
        $region117: #{pedsleep_mae_forward.6} parent=115 // pred_check
          %p919 = pneg %p63
        $region118: #{pedsleep_mae_forward.6} parent=115 // pred_check_branch
          %921 = sbr.rel (%p919) target = $region120
        $region119: #{pedsleep_mae_forward.6} parent=115 // pred_region
          %p922 = scmp.lt.s32.totalorder %s43, 1
          %s923 = scalar_select %p922, %s43, 1
          %s924 = smul.addr %s923, 2
          %s925 = smul.addr %s924, 8
          %s926 = scalar_lea.vmem %s0, %s925
        $region120: #{pedsleep_mae_forward.6} parent=115 // pred_fallthru
          _
      $region116: #{pedsleep_mae_forward.6} parent=5 // pred_fallthru
        _
      %p927 = scmp.le.s32.totalorder 1, %s43
      %p928 = scmp.lt.s32.totalorder %s43, 3
      %p929 = pnand %p927, %p928
      %p930 = pneg %p929
      // Predicated region
      $region121: #{pedsleep_mae_forward.6} parent=5 // pred_check
        _
      $region122: #{pedsleep_mae_forward.6} parent=5 // pred_check_branch
        %932 = sbr.rel (%p929) target = $region124
      $region123: #{pedsleep_mae_forward.6} parent=5 // pred_region
        %s933 = ssub.s32 %s43, 1
        // Predicated region
        $region125: #{pedsleep_mae_forward.6} parent=123 // pred_check
          %p934 = pneg %p132
        $region126: #{pedsleep_mae_forward.6} parent=123 // pred_check_branch
          %936 = sbr.rel (%p934) target = $region128
        $region127: #{pedsleep_mae_forward.6} parent=123 // pred_region
          %938 = dma.done [#allocation3], 16
        $region128: #{pedsleep_mae_forward.6} parent=123 // pred_fallthru
          _
        // Predicated region
        $region129: #{pedsleep_mae_forward.6} parent=123 // pred_check
          %p939 = pneg %p153
        $region130: #{pedsleep_mae_forward.6} parent=123 // pred_check_branch
          %941 = sbr.rel (%p939) target = $region132
        $region131: #{pedsleep_mae_forward.6} parent=123 // pred_region
          %943 = dma.done [#allocation5], 3072
        $region132: #{pedsleep_mae_forward.6} parent=123 // pred_fallthru
          _
        // Predicated region
        $region133: #{pedsleep_mae_forward.6} parent=123 // pred_check
          %p944 = pneg %p174
        $region134: #{pedsleep_mae_forward.6} parent=123 // pred_check_branch
          %946 = sbr.rel (%p944) target = $region136
        $region135: #{pedsleep_mae_forward.6} parent=123 // pred_region
          %948 = dma.done [#allocation5], 48
        $region136: #{pedsleep_mae_forward.6} parent=123 // pred_fallthru
          _
        // Predicated region
        $region137: #{pedsleep_mae_forward.6} parent=123 // pred_check
          %p949 = pneg %p195
        $region138: #{pedsleep_mae_forward.6} parent=123 // pred_check_branch
          %951 = sbr.rel (%p949) target = $region140
        $region139: #{pedsleep_mae_forward.6} parent=123 // pred_region
          %953 = dma.done [#allocation8], 1024
        $region140: #{pedsleep_mae_forward.6} parent=123 // pred_fallthru
          _
        // Predicated region
        $region141: #{pedsleep_mae_forward.6} parent=123 // pred_check
          %p954 = pneg %p216
        $region142: #{pedsleep_mae_forward.6} parent=123 // pred_check_branch
          %956 = sbr.rel (%p954) target = $region144
        $region143: #{pedsleep_mae_forward.6} parent=123 // pred_region
          %958 = dma.done [#allocation8], 16
        $region144: #{pedsleep_mae_forward.6} parent=123 // pred_fallthru
          _
        // Predicated region
        $region145: #{pedsleep_mae_forward.6} parent=123 // pred_check
          %p959 = pneg %p237
        $region146: #{pedsleep_mae_forward.6} parent=123 // pred_check_branch
          %961 = sbr.rel (%p959) target = $region148
        $region147: #{pedsleep_mae_forward.6} parent=123 // pred_region
          %963 = dma.done [#allocation11], 16
        $region148: #{pedsleep_mae_forward.6} parent=123 // pred_fallthru
          _
        // Predicated region
        $region149: #{pedsleep_mae_forward.6} parent=123 // pred_check
          %p964 = pneg %p258
        $region150: #{pedsleep_mae_forward.6} parent=123 // pred_check_branch
          %966 = sbr.rel (%p964) target = $region152
        $region151: #{pedsleep_mae_forward.6} parent=123 // pred_region
          %968 = dma.done [#allocation11], 16
        $region152: #{pedsleep_mae_forward.6} parent=123 // pred_fallthru
          _
        // Predicated region
        $region153: #{pedsleep_mae_forward.6} parent=123 // pred_check
          %p969 = pneg %p279
        $region154: #{pedsleep_mae_forward.6} parent=123 // pred_check_branch
          %971 = sbr.rel (%p969) target = $region156
        $region155: #{pedsleep_mae_forward.6} parent=123 // pred_region
          %973 = dma.done [#allocation14], 4096
        $region156: #{pedsleep_mae_forward.6} parent=123 // pred_fallthru
          _
        // Predicated region
        $region157: #{pedsleep_mae_forward.6} parent=123 // pred_check
          %p974 = pneg %p321
        $region158: #{pedsleep_mae_forward.6} parent=123 // pred_check_branch
          %976 = sbr.rel (%p974) target = $region160
        $region159: #{pedsleep_mae_forward.6} parent=123 // pred_region
          %978 = dma.done [#allocation14], 4096
        $region160: #{pedsleep_mae_forward.6} parent=123 // pred_fallthru
          _
        // Predicated region
        $region161: #{pedsleep_mae_forward.6} parent=123 // pred_check
          %p979 = pneg %p342
        $region162: #{pedsleep_mae_forward.6} parent=123 // pred_check_branch
          %981 = sbr.rel (%p979) target = $region164
        $region163: #{pedsleep_mae_forward.6} parent=123 // pred_region
          %983 = dma.done [#allocation17], 16
        $region164: #{pedsleep_mae_forward.6} parent=123 // pred_fallthru
          _
        // Predicated region
        $region165: #{pedsleep_mae_forward.6} parent=123 // pred_check
          %p984 = pneg %p363
        $region166: #{pedsleep_mae_forward.6} parent=123 // pred_check_branch
          %986 = sbr.rel (%p984) target = $region168
        $region167: #{pedsleep_mae_forward.6} parent=123 // pred_region
          %988 = dma.done [#allocation17], 16
        $region168: #{pedsleep_mae_forward.6} parent=123 // pred_fallthru
          _
        // Predicated region
        $region169: #{pedsleep_mae_forward.6} parent=123 // pred_check
          %p989 = pneg %p384
        $region170: #{pedsleep_mae_forward.6} parent=123 // pred_check_branch
          %991 = sbr.rel (%p989) target = $region172
        $region171: #{pedsleep_mae_forward.6} parent=123 // pred_region
          %993 = dma.done [#allocation20], 16
        $region172: #{pedsleep_mae_forward.6} parent=123 // pred_fallthru
          _
        // Predicated region
        $region173: #{pedsleep_mae_forward.6} parent=123 // pred_check
          %p994 = pneg %p405
        $region174: #{pedsleep_mae_forward.6} parent=123 // pred_check_branch
          %996 = sbr.rel (%p994) target = $region176
        $region175: #{pedsleep_mae_forward.6} parent=123 // pred_region
          %998 = dma.done [#allocation20], 3072
        $region176: #{pedsleep_mae_forward.6} parent=123 // pred_fallthru
          _
        // Predicated region
        $region177: #{pedsleep_mae_forward.6} parent=123 // pred_check
          %p999 = pneg %p426
        $region178: #{pedsleep_mae_forward.6} parent=123 // pred_check_branch
          %1001 = sbr.rel (%p999) target = $region180
        $region179: #{pedsleep_mae_forward.6} parent=123 // pred_region
          %1003 = dma.done [#allocation23], 48
        $region180: #{pedsleep_mae_forward.6} parent=123 // pred_fallthru
          _
        // Predicated region
        $region181: #{pedsleep_mae_forward.6} parent=123 // pred_check
          %p1004 = pneg %p447
        $region182: #{pedsleep_mae_forward.6} parent=123 // pred_check_branch
          %1006 = sbr.rel (%p1004) target = $region184
        $region183: #{pedsleep_mae_forward.6} parent=123 // pred_region
          %1008 = dma.done [#allocation23], 1024
        $region184: #{pedsleep_mae_forward.6} parent=123 // pred_fallthru
          _
        // Predicated region
        $region185: #{pedsleep_mae_forward.6} parent=123 // pred_check
          %p1009 = pneg %p468
        $region186: #{pedsleep_mae_forward.6} parent=123 // pred_check_branch
          %1011 = sbr.rel (%p1009) target = $region188
        $region187: #{pedsleep_mae_forward.6} parent=123 // pred_region
          %1013 = dma.done [#allocation26], 16
        $region188: #{pedsleep_mae_forward.6} parent=123 // pred_fallthru
          _
        // Predicated region
        $region189: #{pedsleep_mae_forward.6} parent=123 // pred_check
          %p1014 = pneg %p489
        $region190: #{pedsleep_mae_forward.6} parent=123 // pred_check_branch
          %1016 = sbr.rel (%p1014) target = $region192
        $region191: #{pedsleep_mae_forward.6} parent=123 // pred_region
          %1018 = dma.done [#allocation26], 16
        $region192: #{pedsleep_mae_forward.6} parent=123 // pred_fallthru
          _
        // Predicated region
        $region193: #{pedsleep_mae_forward.6} parent=123 // pred_check
          %p1019 = pneg %p510
        $region194: #{pedsleep_mae_forward.6} parent=123 // pred_check_branch
          %1021 = sbr.rel (%p1019) target = $region196
        $region195: #{pedsleep_mae_forward.6} parent=123 // pred_region
          %1023 = dma.done [#allocation29], 16
        $region196: #{pedsleep_mae_forward.6} parent=123 // pred_fallthru
          _
        // Predicated region
        $region197: #{pedsleep_mae_forward.6} parent=123 // pred_check
          %p1024 = pneg %p531
        $region198: #{pedsleep_mae_forward.6} parent=123 // pred_check_branch
          %1026 = sbr.rel (%p1024) target = $region200
        $region199: #{pedsleep_mae_forward.6} parent=123 // pred_region
          %1028 = dma.done [#allocation29], 4096
        $region200: #{pedsleep_mae_forward.6} parent=123 // pred_fallthru
          _
        // Predicated region
        $region201: #{pedsleep_mae_forward.6} parent=123 // pred_check
          %p1029 = pneg %p573
        $region202: #{pedsleep_mae_forward.6} parent=123 // pred_check_branch
          %1031 = sbr.rel (%p1029) target = $region204
        $region203: #{pedsleep_mae_forward.6} parent=123 // pred_region
          %1033 = dma.done [#allocation32], 4096
        $region204: #{pedsleep_mae_forward.6} parent=123 // pred_fallthru
          _
        // Predicated region
        $region205: #{pedsleep_mae_forward.6} parent=123 // pred_check
          %p1034 = pneg %p594
        $region206: #{pedsleep_mae_forward.6} parent=123 // pred_check_branch
          %1036 = sbr.rel (%p1034) target = $region208
        $region207: #{pedsleep_mae_forward.6} parent=123 // pred_region
          %1038 = dma.done [#allocation32], 16
        $region208: #{pedsleep_mae_forward.6} parent=123 // pred_fallthru
          _
        %p1039 = scmp.lt.s32.totalorder %s48, 1
        %s1040 = scalar_select %p1039, %s48, 1
        %s1041 = smul.addr %s1040, 2
        %s1042 = smul.addr %s1041, 8
        %s1043 = scalar_lea.vmem %s0, %s1042
        %p1044 = pneg %p69
        %p1045 = pneg %p66
        %p1046 = pneg %p90
        %p1047 = pneg %p87
        %p1048 = pneg %p111
        %p1049 = pneg %p108
        %p1050 = pneg %p132
        %p1051 = pneg %p129
        %p1052 = pneg %p153
        %p1053 = pneg %p150
        %p1054 = pneg %p174
        %p1055 = pneg %p171
        %p1056 = pneg %p195
        %p1057 = pneg %p192
        %p1058 = pneg %p216
        %p1059 = pneg %p213
        %p1060 = pneg %p237
        %p1061 = pneg %p234
        %p1062 = pneg %p258
        %p1063 = pneg %p255
        %p1064 = pneg %p279
        %p1065 = pneg %p276
        %p1066 = pneg %p300
        %p1067 = pneg %p297
        %p1068 = pneg %p321
        %p1069 = pneg %p318
        %p1070 = pneg %p342
        %p1071 = pneg %p339
        %p1072 = pneg %p363
        %p1073 = pneg %p360
        %p1074 = pneg %p384
        %p1075 = pneg %p381
        %p1076 = pneg %p405
        %p1077 = pneg %p402
        %p1078 = pneg %p426
        %p1079 = pneg %p423
        %p1080 = pneg %p447
        %p1081 = pneg %p444
        %p1082 = pneg %p468
        %p1083 = pneg %p465
        %p1084 = pneg %p489
        %p1085 = pneg %p486
        %p1086 = pneg %p510
        %p1087 = pneg %p507
        %p1088 = pneg %p531
        %p1089 = pneg %p528
        %p1090 = pneg %p552
        %p1091 = pneg %p549
        %p1092 = pneg %p573
        %p1093 = pneg %p570
        %p1094 = pneg %p594
        %p1095 = pneg %p591
        %p1096 = pneg %p620
        %p1097 = pneg %p617
        %p1098 = scmp.lt.s32.totalorder %s48, 1
        %s1099 = scalar_select %p1098, %s48, 1
        %s1100 = smul.addr %s1099, 2
        %s1101 = smul.addr %s1100, 8
        %s1102 = scalar_lea.vmem %s26, %s1101
        %p1103 = scmp.lt.s32.totalorder %s48, 1
        %s1104 = scalar_select %p1103, %s48, 1
        %s1105 = smul.addr %s1104, 2
        %s1106 = smul.addr %s1105, 8
        %s1107 = scalar_lea.vmem %s0, %s1106
        %p1108 = scmp.lt.s32.totalorder %s48, 1
        %s1109 = scalar_select %p1108, %s48, 1
        %s1110 = smul.addr %s1109, 2
        %s1111 = smul.addr %s1110, 8
        %s1112 = scalar_lea.vmem %s26, %s1111
        %v1114 = vld [vmem:[%s1107] sm:$0xff]
        %v1115 = vld [vmem:[%s1107 + $0x8] sm:$0x1]
        %v1116 = vld [vmem:[%s1] sm:$0xff]
        %v1117 = vld [vmem:[%s1 + $0x8] sm:$0x1]
        %v1118 = vadd.f32 %v1114, %v1116
        %v1119 = vadd.f32 %v1115, %v1117
        %v1120 = vld [vmem:[%s2] sm:$0x1]
        %v1121 = vld [vmem:[#allocation2] sm:$0x1]
        %1122 = vadd.xlane.f32.xlu0 %v1118
        %v1123 = vpop.xlane.xlu0 %1122
        %vm1124 = vcmask 1040384
        %v1125 = vsel %vm1124, %v1119, 0.0
        %1126 = vadd.xlane.f32.xlu0 %v1125
        %v1127 = vpop.xlane.xlu0 %1126
        %v1128 = vrcp.pop 128.0
        %v1129 = vmul.f32 128.0, %v1128
        %v1130 = vsub.f32 1.0, %v1129
        %v1131 = vmul.f32 %v1128, %v1130
        %v1132 = vadd.f32 %v1128, %v1131
        %vm1133 = vweird.f32 %v1128
        %v1134 = vsel %vm1133, %v1128, %v1132
        %v1135 = vmul.f32 %v1123, %v1134
        %v1136 = vmul.f32 %v1127, %v1134
        %v1137 = vsub.f32 %v1118, %v1135
        %v1138 = vsub.f32 %v1119, %v1136
        %v1139 = vmul.f32 %v1137, %v1137
        %v1140 = vmul.f32 %v1138, %v1138
        %1141 = vadd.xlane.f32.xlu0 %v1139
        %v1142 = vpop.xlane.xlu0 %1141
        %v1143 = vsel %vm1124, %v1140, 0.0
        %1144 = vadd.xlane.f32.xlu0 %v1143
        %v1145 = vpop.xlane.xlu0 %1144
        %v1146 = vmul.f32 %v1142, %v1134
        %v1147 = vmul.f32 %v1145, %v1134
        %v1148 = vadd.f32 %v1146, 1e-05
        %v1149 = vadd.f32 %v1147, 1e-05
        %v1150 = vrsqrt.pop %v1148
        %v1151 = vmul.f32 %v1150, %v1148
        %v1152 = vmul.f32 %v1151, %v1150
        %v1153 = vmul.f32 0.5, %v1152
        %v1154 = vsub.f32 1.5, %v1153
        %v1155 = vmul.f32 %v1150, %v1154
        %vm1156 = vweird.f32 %v1148
        %vm1157 = vweird.f32 %v1150
        %vm1158 = vmor %vm1156, %vm1157
        %v1159 = vsel %vm1158, %v1150, %v1155
        %v1160 = vrsqrt.pop %v1149
        %v1161 = vmul.f32 %v1160, %v1149
        %v1162 = vmul.f32 %v1161, %v1160
        %v1163 = vmul.f32 0.5, %v1162
        %v1164 = vsub.f32 1.5, %v1163
        %v1165 = vmul.f32 %v1160, %v1164
        %vm1166 = vweird.f32 %v1149
        %vm1167 = vweird.f32 %v1160
        %vm1168 = vmor %vm1166, %vm1167
        %v1169 = vsel %vm1168, %v1160, %v1165
        %v1170 = vmul.f32 %v1137, %v1159
        %v1171 = vmul.f32 %v1138, %v1169
        %v1173 = vperm.slane %v1120, 0
        %v1175 = vmul.f32 %v1170, %v1173
        %v1176 = vmul.f32 %v1171, %v1173
        %v1178 = vperm.slane %v1121, 0
        %v1180 = vadd.f32 %v1175, %v1178
        %v1181 = vadd.f32 %v1176, %v1178
        %v1182 = vpack.c.bf16 %v1181, %v1180
        %v1183 = vld [vmem:[#allocation4] sm:$0xff]
        %v1184 = vld [vmem:[#allocation4 + $0x8] sm:$0xf]
        %v1185 = vld [vmem:[#allocation4 + $0xc] sm:$0xff]
        %v1186 = vld [vmem:[#allocation4 + $0x14] sm:$0xf]
        %v1187 = vld [vmem:[#allocation4 + $0x18] sm:$0xff]
        %v1188 = vld [vmem:[#allocation4 + $0x20] sm:$0xf]
        %v1189 = vld [vmem:[#allocation4 + $0x24] sm:$0xff]
        %v1190 = vld [vmem:[#allocation4 + $0x2c] sm:$0xf]
        %v1191 = vld [vmem:[#allocation4 + $0x30] sm:$0xff]
        %v1192 = vld [vmem:[#allocation4 + $0x38] sm:$0xf]
        %v1193 = vld [vmem:[#allocation4 + $0x3c] sm:$0xff]
        %v1194 = vld [vmem:[#allocation4 + $0x44] sm:$0xf]
        %v1195 = vld [vmem:[#allocation4 + $0x48] sm:$0xff]
        %v1196 = vld [vmem:[#allocation4 + $0x50] sm:$0xf]
        %v1197 = vld [vmem:[#allocation4 + $0x54] sm:$0xff]
        %v1198 = vld [vmem:[#allocation4 + $0x5c] sm:$0xf]
        %v1199 = vld [vmem:[#allocation4 + $0x60] sm:$0xff]
        %v1200 = vld [vmem:[#allocation4 + $0x68] sm:$0xf]
        %v1201 = vld [vmem:[#allocation4 + $0x6c] sm:$0xff]
        %v1202 = vld [vmem:[#allocation4 + $0x74] sm:$0xf]
        %v1203 = vld [vmem:[#allocation4 + $0x78] sm:$0xff]
        %v1204 = vld [vmem:[#allocation4 + $0x80] sm:$0xf]
        %v1205 = vld [vmem:[#allocation4 + $0x84] sm:$0xff]
        %v1206 = vld [vmem:[#allocation4 + $0x8c] sm:$0xf]
        %v1207 = vld [vmem:[#allocation4 + $0x90] sm:$0xff]
        %v1208 = vld [vmem:[#allocation4 + $0x98] sm:$0xf]
        %v1209 = vld [vmem:[#allocation4 + $0x9c] sm:$0xff]
        %v1210 = vld [vmem:[#allocation4 + $0xa4] sm:$0xf]
        %v1211 = vld [vmem:[#allocation4 + $0xa8] sm:$0xff]
        %v1212 = vld [vmem:[#allocation4 + $0xb0] sm:$0xf]
        %v1213 = vld [vmem:[#allocation4 + $0xb4] sm:$0xff]
        %v1214 = vld [vmem:[#allocation4 + $0xbc] sm:$0xf]
        %v1215 = vld [vmem:[#allocation6] sm:$0x7]
        %v1217 = vperm.slane %v1215, 0
        %v1218 = vperm.slane %v1215, 1
        %v1219 = vperm.slane %v1215, 2
        %v1255 = vunpack.c.l.b16 %v1183
        %v1256 = vunpack.c.h.b16 %v1183
        %v1257 = vunpack.c.l.b16 %v1184
        %v1258 = vunpack.c.l.b16 %v1185
        %v1259 = vunpack.c.h.b16 %v1185
        %v1260 = vunpack.c.l.b16 %v1186
        %v1261 = vunpack.c.l.b16 %v1187
        %v1262 = vunpack.c.h.b16 %v1187
        %v1263 = vunpack.c.l.b16 %v1188
        %v1264 = vunpack.c.l.b16 %v1189
        %v1265 = vunpack.c.h.b16 %v1189
        %v1266 = vunpack.c.l.b16 %v1190
        %v1267 = vunpack.c.l.b16 %v1191
        %v1268 = vunpack.c.h.b16 %v1191
        %v1269 = vunpack.c.l.b16 %v1192
        %v1270 = vunpack.c.l.b16 %v1193
        %v1271 = vunpack.c.h.b16 %v1193
        %v1272 = vunpack.c.l.b16 %v1194
        %v1273 = vunpack.c.l.b16 %v1195
        %v1274 = vunpack.c.h.b16 %v1195
        %v1275 = vunpack.c.l.b16 %v1196
        %v1276 = vunpack.c.l.b16 %v1197
        %v1277 = vunpack.c.h.b16 %v1197
        %v1278 = vunpack.c.l.b16 %v1198
        %v1279 = vunpack.c.l.b16 %v1199
        %v1280 = vunpack.c.h.b16 %v1199
        %v1281 = vunpack.c.l.b16 %v1200
        %v1282 = vunpack.c.l.b16 %v1201
        %v1283 = vunpack.c.h.b16 %v1201
        %v1284 = vunpack.c.l.b16 %v1202
        %v1285 = vunpack.c.l.b16 %v1203
        %v1286 = vunpack.c.h.b16 %v1203
        %v1287 = vunpack.c.l.b16 %v1204
        %v1288 = vunpack.c.l.b16 %v1205
        %v1289 = vunpack.c.h.b16 %v1205
        %v1290 = vunpack.c.l.b16 %v1206
        %v1291 = vunpack.c.l.b16 %v1207
        %v1292 = vunpack.c.h.b16 %v1207
        %v1293 = vunpack.c.l.b16 %v1208
        %v1294 = vunpack.c.l.b16 %v1209
        %v1295 = vunpack.c.h.b16 %v1209
        %v1296 = vunpack.c.l.b16 %v1210
        %v1297 = vunpack.c.l.b16 %v1211
        %v1298 = vunpack.c.h.b16 %v1211
        %v1299 = vunpack.c.l.b16 %v1212
        %v1300 = vunpack.c.l.b16 %v1213
        %v1301 = vunpack.c.h.b16 %v1213
        %v1302 = vunpack.c.l.b16 %v1214
        %v1303 = vpack.c.b16 %v1258, %v1255
        %v1304 = vpack.c.b16 %v1259, %v1256
        %v1305 = vpack.c.b16 %v1260, %v1257
        %v1306 = vpack.c.b16 %v1264, %v1261
        %v1307 = vpack.c.b16 %v1265, %v1262
        %v1308 = vpack.c.b16 %v1266, %v1263
        %v1309 = vpack.c.b16 %v1270, %v1267
        %v1310 = vpack.c.b16 %v1271, %v1268
        %v1311 = vpack.c.b16 %v1272, %v1269
        %v1312 = vpack.c.b16 %v1276, %v1273
        %v1313 = vpack.c.b16 %v1277, %v1274
        %v1314 = vpack.c.b16 %v1278, %v1275
        %v1315 = vpack.c.b16 %v1282, %v1279
        %v1316 = vpack.c.b16 %v1283, %v1280
        %v1317 = vpack.c.b16 %v1284, %v1281
        %v1318 = vpack.c.b16 %v1288, %v1285
        %v1319 = vpack.c.b16 %v1289, %v1286
        %v1320 = vpack.c.b16 %v1290, %v1287
        %v1321 = vpack.c.b16 %v1294, %v1291
        %v1322 = vpack.c.b16 %v1295, %v1292
        %v1323 = vpack.c.b16 %v1296, %v1293
        %v1324 = vpack.c.b16 %v1300, %v1297
        %v1325 = vpack.c.b16 %v1301, %v1298
        %v1326 = vpack.c.b16 %v1302, %v1299
        %1351 = vmatpush.bf16.msra.mxu0 %v1324
        %1352 = vmatpush.bf16.msra.mxu0 %v1321
        %1353 = vmatpush.bf16.msra.mxu0 %v1318
        %1354 = vmatpush.bf16.msra.mxu0 %v1315
        %1355 = vmatpush.bf16.msra.mxu0 %v1312
        %1356 = vmatpush.bf16.msra.mxu0 %v1309
        %1357 = vmatpush.bf16.msra.mxu0 %v1306
        %1358 = vmatpush.bf16.msra.mxu0 %v1303
        %1359 = vmatmul.bf16.gmra.mxu0 %v1182
        %v1360 = vpop.f32.mrf.mxu0
        %v1361 = vadd.f32 %v1217, %v1360
        %v1362 = vpop.f32.mrf.mxu0
        %v1363 = vadd.f32 %v1217, %v1362
        %1364 = vdwg.mxu0
        %1365 = vmatpush.bf16.msra.mxu0 %v1325
        %1366 = vmatpush.bf16.msra.mxu0 %v1322
        %1367 = vmatpush.bf16.msra.mxu0 %v1319
        %1368 = vmatpush.bf16.msra.mxu0 %v1316
        %1369 = vmatpush.bf16.msra.mxu0 %v1313
        %1370 = vmatpush.bf16.msra.mxu0 %v1310
        %1371 = vmatpush.bf16.msra.mxu0 %v1307
        %1372 = vmatpush.bf16.msra.mxu0 %v1304
        %1373 = vmatmul.bf16.gmra.mxu0 %v1182
        %v1374 = vpop.f32.mrf.mxu0
        %v1375 = vadd.f32 %v1218, %v1374
        %v1376 = vpop.f32.mrf.mxu0
        %v1377 = vadd.f32 %v1218, %v1376
        %1378 = vdwg.mxu0
        %1379 = vmatpush.bf16.msra.mxu0 %v1326
        %1380 = vmatpush.bf16.msra.mxu0 %v1323
        %1381 = vmatpush.bf16.msra.mxu0 %v1320
        %1382 = vmatpush.bf16.msra.mxu0 %v1317
        %1383 = vmatpush.bf16.msra.mxu0 %v1314
        %1384 = vmatpush.bf16.msra.mxu0 %v1311
        %1385 = vmatpush.bf16.msra.mxu0 %v1308
        %1386 = vmatpush.bf16.msra.mxu0 %v1305
        %1387 = vmatmul.bf16.gmra.mxu0 %v1182
        %v1388 = vpop.f32.mrf.mxu0
        %v1389 = vadd.f32 %v1219, %v1388
        %v1390 = vpop.f32.mrf.mxu0
        %v1391 = vadd.f32 %v1219, %v1390
        %1392 = vdwg.mxu0
        %v1393 = vmul.f32 %v1361, 0.17677669
        %v1394 = vmul.f32 %v1363, 0.17677669
        %v1395 = vpack.c.bf16 %v1393, %v1393
        %v1396 = vpack.c.bf16 %v1394, %v1394
        %v1397 = vpack.c.bf16 %v1375, %v1375
        %v1398 = vpack.c.bf16 %v1377, %v1377
        %v1399 = vpack.c.bf16 %v1389, %v1389
        %v1400 = vpack.c.bf16 %v1391, %v1391
        %v1403 = vunpack.c.l.b16 %v1395
        %v1404 = vunpack.c.l.b16 %v1396
        %v1405 = vpack.c.b16 %v1404, %v1403
        %v1408 = vunpack.c.l.b16 %v1397
        %v1409 = vunpack.c.l.b16 %v1398
        %v1410 = vpack.c.b16 %v1409, %v1408
        %vm1411 = vcmask 261120
        %v1413 = vsel %vm1411, %v1405, 0
        %v1416 = vsel %vm1411, %v1410, 0
        %1418 = vmatpush.bf16.xpose.msra.mxu0 0
        %1419 = vmatpush.bf16.xpose.msra.mxu0 0
        %1420 = vmatpush.bf16.xpose.msra.mxu0 0
        %1421 = vmatpush.bf16.xpose.msra.mxu0 0
        %1422 = vmatpush.bf16.xpose.msra.mxu0 0
        %1423 = vmatpush.bf16.xpose.msra.mxu0 0
        %1424 = vmatpush.bf16.xpose.msra.mxu0 0
        %1425 = vmatpush.bf16.xpose.msra.mxu0 %v1416
        %1426 = vmatmul.bf16.gmra.mxu0 %v1413
        %v1427 = vpop.f32.mrf.mxu0
        %v1428 = vadd.f32 0.0, %v1427
        %v1429 = vpop.f32.mrf.mxu0
        %v1430 = vadd.f32 0.0, %v1429
        %1431 = vdwg.mxu0
        %vm1432 = vcmask 72704
        %v1433 = vsel %vm1432, %v1428, -inf
        %1434 = vmax.xlane.f32.xlu0 %v1433
        %v1435 = vpop.xlane.xlu0 %1434
        %vm1436 = vcmask 65536
        %v1437 = vsel %vm1436, %v1430, -inf
        %1438 = vmax.xlane.f32.xlu0 %v1437
        %v1439 = vpop.xlane.xlu0 %1438
        %v1440 = vsub.f32 %v1428, %v1435
        %v1441 = vsub.f32 %v1430, %v1439
        %v1442 = vmul.f32 %v1440, 1.442695
        %v1443 = vpow.pop %v1442
        %v1444 = vmul.f32 %v1441, 1.442695
        %v1445 = vpow.pop %v1444
        %v1446 = vsel %vm1432, %v1443, 0.0
        %1447 = vadd.xlane.f32.xlu0 %v1446
        %v1448 = vpop.xlane.xlu0 %1447
        %v1449 = vsel %vm1436, %v1445, 0.0
        %1450 = vadd.xlane.f32.xlu0 %v1449
        %v1451 = vpop.xlane.xlu0 %1450
        %v1452 = vrcp.pop %v1448
        %v1453 = vrcp.pop %v1451
        %v1454 = vmul.f32 %v1443, %v1452
        %v1455 = vmul.f32 %v1445, %v1453
        %v1456 = vpack.c.bf16 %v1455, %v1454
        %v1459 = vunpack.c.l.b16 %v1399
        %v1460 = vunpack.c.l.b16 %v1400
        %v1461 = vpack.c.b16 %v1460, %v1459
        %v1463 = vsel %vm1432, %v1456, 0
        %vm1465 = vcmask 1043456
        %vm1466 = vcmask 1044480
        %v1467 = vsel %vm1465, 4294967295, 65535
        %v1468 = vsel %vm1466, %v1467, 0
        %v1470 = vand.u32 %v1461, %v1468
        %1472 = vmatpush.bf16.msra.mxu0 0
        %1473 = vmatpush.bf16.msra.mxu0 0
        %1474 = vmatpush.bf16.msra.mxu0 0
        %1475 = vmatpush.bf16.msra.mxu0 0
        %1476 = vmatpush.bf16.msra.mxu0 0
        %1477 = vmatpush.bf16.msra.mxu0 0
        %1478 = vmatpush.bf16.msra.mxu0 0
        %1479 = vmatpush.bf16.msra.mxu0 %v1470
        %1480 = vmatmul.bf16.gmra.mxu0 %v1463
        %v1481 = vpop.f32.mrf.mxu0
        %v1482 = vadd.f32 0.0, %v1481
        %v1483 = vpop.f32.mrf.mxu0
        %v1484 = vadd.f32 0.0, %v1483
        %1485 = vdwg.mxu0
        %1486 = vrot.lane.b32.xlu0 %v1405, 96
        %v1487 = vpop.permute.xlu0 %1486
        %1488 = vrot.lane.b32.xlu0 %v1410, 96
        %v1489 = vpop.permute.xlu0 %1488
        %v1491 = vsel %vm1411, %v1487, 0
        %v1494 = vsel %vm1411, %v1489, 0
        %1496 = vmatpush.bf16.xpose.msra.mxu0 0
        %1497 = vmatpush.bf16.xpose.msra.mxu0 0
        %1498 = vmatpush.bf16.xpose.msra.mxu0 0
        %1499 = vmatpush.bf16.xpose.msra.mxu0 0
        %1500 = vmatpush.bf16.xpose.msra.mxu0 0
        %1501 = vmatpush.bf16.xpose.msra.mxu0 0
        %1502 = vmatpush.bf16.xpose.msra.mxu0 0
        %1503 = vmatpush.bf16.xpose.msra.mxu0 %v1494
        %1504 = vmatmul.bf16.gmra.mxu0 %v1491
        %v1505 = vpop.f32.mrf.mxu0
        %v1506 = vadd.f32 0.0, %v1505
        %v1507 = vpop.f32.mrf.mxu0
        %v1508 = vadd.f32 0.0, %v1507
        %1509 = vdwg.mxu0
        %v1510 = vsel %vm1432, %v1506, -inf
        %1511 = vmax.xlane.f32.xlu0 %v1510
        %v1512 = vpop.xlane.xlu0 %1511
        %v1513 = vsel %vm1436, %v1508, -inf
        %1514 = vmax.xlane.f32.xlu0 %v1513
        %v1515 = vpop.xlane.xlu0 %1514
        %v1516 = vsub.f32 %v1506, %v1512
        %v1517 = vsub.f32 %v1508, %v1515
        %v1518 = vmul.f32 %v1516, 1.442695
        %v1519 = vpow.pop %v1518
        %v1520 = vmul.f32 %v1517, 1.442695
        %v1521 = vpow.pop %v1520
        %v1522 = vsel %vm1432, %v1519, 0.0
        %1523 = vadd.xlane.f32.xlu0 %v1522
        %v1524 = vpop.xlane.xlu0 %1523
        %v1525 = vsel %vm1436, %v1521, 0.0
        %1526 = vadd.xlane.f32.xlu0 %v1525
        %v1527 = vpop.xlane.xlu0 %1526
        %v1528 = vrcp.pop %v1524
        %v1529 = vrcp.pop %v1527
        %v1530 = vmul.f32 %v1519, %v1528
        %v1531 = vmul.f32 %v1521, %v1529
        %v1532 = vpack.c.bf16 %v1531, %v1530
        %1533 = vrot.lane.b32.xlu0 %v1461, 96
        %v1534 = vpop.permute.xlu0 %1533
        %v1536 = vsel %vm1432, %v1532, 0
        %v1539 = vand.u32 %v1534, %v1468
        %1541 = vmatpush.bf16.msra.mxu0 0
        %1542 = vmatpush.bf16.msra.mxu0 0
        %1543 = vmatpush.bf16.msra.mxu0 0
        %1544 = vmatpush.bf16.msra.mxu0 0
        %1545 = vmatpush.bf16.msra.mxu0 0
        %1546 = vmatpush.bf16.msra.mxu0 0
        %1547 = vmatpush.bf16.msra.mxu0 0
        %1548 = vmatpush.bf16.msra.mxu0 %v1539
        %1549 = vmatmul.bf16.gmra.mxu0 %v1536
        %v1550 = vpop.f32.mrf.mxu0
        %v1551 = vadd.f32 0.0, %v1550
        %v1552 = vpop.f32.mrf.mxu0
        %v1553 = vadd.f32 0.0, %v1552
        %1554 = vdwg.mxu0
        %1555 = vrot.lane.b32.xlu0 %v1405, 64
        %v1556 = vpop.permute.xlu0 %1555
        %1557 = vrot.lane.b32.xlu0 %v1410, 64
        %v1558 = vpop.permute.xlu0 %1557
        %v1560 = vsel %vm1411, %v1556, 0
        %v1563 = vsel %vm1411, %v1558, 0
        %1565 = vmatpush.bf16.xpose.msra.mxu0 0
        %1566 = vmatpush.bf16.xpose.msra.mxu0 0
        %1567 = vmatpush.bf16.xpose.msra.mxu0 0
        %1568 = vmatpush.bf16.xpose.msra.mxu0 0
        %1569 = vmatpush.bf16.xpose.msra.mxu0 0
        %1570 = vmatpush.bf16.xpose.msra.mxu0 0
        %1571 = vmatpush.bf16.xpose.msra.mxu0 0
        %1572 = vmatpush.bf16.xpose.msra.mxu0 %v1563
        %1573 = vmatmul.bf16.gmra.mxu0 %v1560
        %v1574 = vpop.f32.mrf.mxu0
        %v1575 = vadd.f32 0.0, %v1574
        %v1576 = vpop.f32.mrf.mxu0
        %v1577 = vadd.f32 0.0, %v1576
        %1578 = vdwg.mxu0
        %v1579 = vsel %vm1432, %v1575, -inf
        %1580 = vmax.xlane.f32.xlu0 %v1579
        %v1581 = vpop.xlane.xlu0 %1580
        %v1582 = vsel %vm1436, %v1577, -inf
        %1583 = vmax.xlane.f32.xlu0 %v1582
        %v1584 = vpop.xlane.xlu0 %1583
        %v1585 = vsub.f32 %v1575, %v1581
        %v1586 = vsub.f32 %v1577, %v1584
        %v1587 = vmul.f32 %v1585, 1.442695
        %v1588 = vpow.pop %v1587
        %v1589 = vmul.f32 %v1586, 1.442695
        %v1590 = vpow.pop %v1589
        %v1591 = vsel %vm1432, %v1588, 0.0
        %1592 = vadd.xlane.f32.xlu0 %v1591
        %v1593 = vpop.xlane.xlu0 %1592
        %v1594 = vsel %vm1436, %v1590, 0.0
        %1595 = vadd.xlane.f32.xlu0 %v1594
        %v1596 = vpop.xlane.xlu0 %1595
        %v1597 = vrcp.pop %v1593
        %v1598 = vrcp.pop %v1596
        %v1599 = vmul.f32 %v1588, %v1597
        %v1600 = vmul.f32 %v1590, %v1598
        %v1601 = vpack.c.bf16 %v1600, %v1599
        %1602 = vrot.lane.b32.xlu0 %v1461, 64
        %v1603 = vpop.permute.xlu0 %1602
        %v1605 = vsel %vm1432, %v1601, 0
        %v1608 = vand.u32 %v1603, %v1468
        %1610 = vmatpush.bf16.msra.mxu0 0
        %1611 = vmatpush.bf16.msra.mxu0 0
        %1612 = vmatpush.bf16.msra.mxu0 0
        %1613 = vmatpush.bf16.msra.mxu0 0
        %1614 = vmatpush.bf16.msra.mxu0 0
        %1615 = vmatpush.bf16.msra.mxu0 0
        %1616 = vmatpush.bf16.msra.mxu0 0
        %1617 = vmatpush.bf16.msra.mxu0 %v1608
        %1618 = vmatmul.bf16.gmra.mxu0 %v1605
        %v1619 = vpop.f32.mrf.mxu0
        %v1620 = vadd.f32 0.0, %v1619
        %v1621 = vpop.f32.mrf.mxu0
        %v1622 = vadd.f32 0.0, %v1621
        %1623 = vdwg.mxu0
        %1624 = vrot.lane.b32.xlu0 %v1405, 32
        %v1625 = vpop.permute.xlu0 %1624
        %1626 = vrot.lane.b32.xlu0 %v1410, 32
        %v1627 = vpop.permute.xlu0 %1626
        %v1629 = vsel %vm1411, %v1625, 0
        %v1632 = vsel %vm1411, %v1627, 0
        %1634 = vmatpush.bf16.xpose.msra.mxu0 0
        %1635 = vmatpush.bf16.xpose.msra.mxu0 0
        %1636 = vmatpush.bf16.xpose.msra.mxu0 0
        %1637 = vmatpush.bf16.xpose.msra.mxu0 0
        %1638 = vmatpush.bf16.xpose.msra.mxu0 0
        %1639 = vmatpush.bf16.xpose.msra.mxu0 0
        %1640 = vmatpush.bf16.xpose.msra.mxu0 0
        %1641 = vmatpush.bf16.xpose.msra.mxu0 %v1632
        %1642 = vmatmul.bf16.gmra.mxu0 %v1629
        %v1643 = vpop.f32.mrf.mxu0
        %v1644 = vadd.f32 0.0, %v1643
        %v1645 = vpop.f32.mrf.mxu0
        %v1646 = vadd.f32 0.0, %v1645
        %1647 = vdwg.mxu0
        %v1648 = vsel %vm1432, %v1644, -inf
        %1649 = vmax.xlane.f32.xlu0 %v1648
        %v1650 = vpop.xlane.xlu0 %1649
        %v1651 = vsel %vm1436, %v1646, -inf
        %1652 = vmax.xlane.f32.xlu0 %v1651
        %v1653 = vpop.xlane.xlu0 %1652
        %v1654 = vsub.f32 %v1644, %v1650
        %v1655 = vsub.f32 %v1646, %v1653
        %v1656 = vmul.f32 %v1654, 1.442695
        %v1657 = vpow.pop %v1656
        %v1658 = vmul.f32 %v1655, 1.442695
        %v1659 = vpow.pop %v1658
        %v1660 = vsel %vm1432, %v1657, 0.0
        %1661 = vadd.xlane.f32.xlu0 %v1660
        %v1662 = vpop.xlane.xlu0 %1661
        %v1663 = vsel %vm1436, %v1659, 0.0
        %1664 = vadd.xlane.f32.xlu0 %v1663
        %v1665 = vpop.xlane.xlu0 %1664
        %v1666 = vrcp.pop %v1662
        %v1667 = vrcp.pop %v1665
        %v1668 = vmul.f32 %v1657, %v1666
        %v1669 = vmul.f32 %v1659, %v1667
        %v1670 = vpack.c.bf16 %v1669, %v1668
        %1671 = vrot.lane.b32.xlu0 %v1461, 32
        %v1672 = vpop.permute.xlu0 %1671
        %v1674 = vsel %vm1432, %v1670, 0
        %v1677 = vand.u32 %v1672, %v1468
        %1679 = vmatpush.bf16.msra.mxu0 0
        %1680 = vmatpush.bf16.msra.mxu0 0
        %1681 = vmatpush.bf16.msra.mxu0 0
        %1682 = vmatpush.bf16.msra.mxu0 0
        %1683 = vmatpush.bf16.msra.mxu0 0
        %1684 = vmatpush.bf16.msra.mxu0 0
        %1685 = vmatpush.bf16.msra.mxu0 0
        %1686 = vmatpush.bf16.msra.mxu0 %v1677
        %1687 = vmatmul.bf16.gmra.mxu0 %v1674
        %v1688 = vpop.f32.mrf.mxu0
        %v1689 = vadd.f32 0.0, %v1688
        %v1690 = vpop.f32.mrf.mxu0
        %v1691 = vadd.f32 0.0, %v1690
        %1692 = vdwg.mxu0
        %1695 = vrot.lane.b32.xlu0 %v1551, 32
        %v1696 = vpop.permute.xlu0 %1695
        %1697 = vrot.lane.b32.xlu0 %v1553, 32
        %v1698 = vpop.permute.xlu0 %1697
        %1703 = vrot.lane.b32.xlu0 %v1620, 64
        %v1704 = vpop.permute.xlu0 %1703
        %1705 = vrot.lane.b32.xlu0 %v1622, 64
        %v1706 = vpop.permute.xlu0 %1705
        %1711 = vrot.lane.b32.xlu0 %v1689, 96
        %v1712 = vpop.permute.xlu0 %1711
        %1713 = vrot.lane.b32.xlu0 %v1691, 96
        %v1714 = vpop.permute.xlu0 %1713
        %v1717 = vsel %vm1411, %v1482, %v1696
        %v1718 = vsel %vm1411, %v1484, %v1698
        %vm1719 = vcmask 523264
        %v1720 = vsel %vm1719, %v1717, %v1704
        %v1721 = vsel %vm1719, %v1718, %v1706
        %vm1722 = vcmask 785408
        %v1723 = vsel %vm1722, %v1720, %v1712
        %v1724 = vsel %vm1722, %v1721, %v1714
        %v1725 = vpack.c.bf16 %v1724, %v1723
        %v1726 = vld [vmem:[#allocation7] sm:$0xf]
        %v1727 = vld [vmem:[#allocation7 + $0x4] sm:$0xf]
        %v1728 = vld [vmem:[#allocation7 + $0x8] sm:$0xf]
        %v1729 = vld [vmem:[#allocation7 + $0xc] sm:$0xf]
        %v1730 = vld [vmem:[#allocation7 + $0x10] sm:$0xf]
        %v1731 = vld [vmem:[#allocation7 + $0x14] sm:$0xf]
        %v1732 = vld [vmem:[#allocation7 + $0x18] sm:$0xf]
        %v1733 = vld [vmem:[#allocation7 + $0x1c] sm:$0xf]
        %v1734 = vld [vmem:[#allocation7 + $0x20] sm:$0xf]
        %v1735 = vld [vmem:[#allocation7 + $0x24] sm:$0xf]
        %v1736 = vld [vmem:[#allocation7 + $0x28] sm:$0xf]
        %v1737 = vld [vmem:[#allocation7 + $0x2c] sm:$0xf]
        %v1738 = vld [vmem:[#allocation7 + $0x30] sm:$0xf]
        %v1739 = vld [vmem:[#allocation7 + $0x34] sm:$0xf]
        %v1740 = vld [vmem:[#allocation7 + $0x38] sm:$0xf]
        %v1741 = vld [vmem:[#allocation7 + $0x3c] sm:$0xf]
        %v1742 = vld [vmem:[#allocation9] sm:$0x1]
        %v1744 = vperm.slane %v1742, 0
        %v1762 = vunpack.c.l.b16 %v1726
        %v1763 = vunpack.c.l.b16 %v1727
        %v1764 = vunpack.c.l.b16 %v1728
        %v1765 = vunpack.c.l.b16 %v1729
        %v1766 = vunpack.c.l.b16 %v1730
        %v1767 = vunpack.c.l.b16 %v1731
        %v1768 = vunpack.c.l.b16 %v1732
        %v1769 = vunpack.c.l.b16 %v1733
        %v1770 = vunpack.c.l.b16 %v1734
        %v1771 = vunpack.c.l.b16 %v1735
        %v1772 = vunpack.c.l.b16 %v1736
        %v1773 = vunpack.c.l.b16 %v1737
        %v1774 = vunpack.c.l.b16 %v1738
        %v1775 = vunpack.c.l.b16 %v1739
        %v1776 = vunpack.c.l.b16 %v1740
        %v1777 = vunpack.c.l.b16 %v1741
        %v1778 = vpack.c.b16 %v1763, %v1762
        %v1779 = vpack.c.b16 %v1765, %v1764
        %v1780 = vpack.c.b16 %v1767, %v1766
        %v1781 = vpack.c.b16 %v1769, %v1768
        %v1782 = vpack.c.b16 %v1771, %v1770
        %v1783 = vpack.c.b16 %v1773, %v1772
        %v1784 = vpack.c.b16 %v1775, %v1774
        %v1785 = vpack.c.b16 %v1777, %v1776
        %1794 = vmatpush.bf16.msra.mxu0 %v1785
        %1795 = vmatpush.bf16.msra.mxu0 %v1784
        %1796 = vmatpush.bf16.msra.mxu0 %v1783
        %1797 = vmatpush.bf16.msra.mxu0 %v1782
        %1798 = vmatpush.bf16.msra.mxu0 %v1781
        %1799 = vmatpush.bf16.msra.mxu0 %v1780
        %1800 = vmatpush.bf16.msra.mxu0 %v1779
        %1801 = vmatpush.bf16.msra.mxu0 %v1778
        %1802 = vmatmul.bf16.gmra.mxu0 %v1725
        %v1803 = vpop.f32.mrf.mxu0
        %v1804 = vadd.f32 %v1744, %v1803
        %v1805 = vpop.f32.mrf.mxu0
        %v1806 = vadd.f32 %v1744, %v1805
        %1807 = vdwg.mxu0
        %v1808 = vadd.f32 %v1118, %v1804
        %v1809 = vadd.f32 %v1119, %v1806
        %v1810 = vld [vmem:[#allocation10] sm:$0x1]
        %v1811 = vld [vmem:[#allocation12] sm:$0x1]
        %1812 = vadd.xlane.f32.xlu0 %v1808
        %v1813 = vpop.xlane.xlu0 %1812
        %v1814 = vsel %vm1124, %v1809, 0.0
        %1815 = vadd.xlane.f32.xlu0 %v1814
        %v1816 = vpop.xlane.xlu0 %1815
        %v1817 = vmul.f32 %v1813, %v1134
        %v1818 = vmul.f32 %v1816, %v1134
        %v1819 = vsub.f32 %v1808, %v1817
        %v1820 = vsub.f32 %v1809, %v1818
        %v1821 = vmul.f32 %v1819, %v1819
        %v1822 = vmul.f32 %v1820, %v1820
        %1823 = vadd.xlane.f32.xlu0 %v1821
        %v1824 = vpop.xlane.xlu0 %1823
        %v1825 = vsel %vm1124, %v1822, 0.0
        %1826 = vadd.xlane.f32.xlu0 %v1825
        %v1827 = vpop.xlane.xlu0 %1826
        %v1828 = vmul.f32 %v1824, %v1134
        %v1829 = vmul.f32 %v1827, %v1134
        %v1830 = vadd.f32 %v1828, 1e-05
        %v1831 = vadd.f32 %v1829, 1e-05
        %v1832 = vrsqrt.pop %v1830
        %v1833 = vmul.f32 %v1832, %v1830
        %v1834 = vmul.f32 %v1833, %v1832
        %v1835 = vmul.f32 0.5, %v1834
        %v1836 = vsub.f32 1.5, %v1835
        %v1837 = vmul.f32 %v1832, %v1836
        %vm1838 = vweird.f32 %v1830
        %vm1839 = vweird.f32 %v1832
        %vm1840 = vmor %vm1838, %vm1839
        %v1841 = vsel %vm1840, %v1832, %v1837
        %v1842 = vrsqrt.pop %v1831
        %v1843 = vmul.f32 %v1842, %v1831
        %v1844 = vmul.f32 %v1843, %v1842
        %v1845 = vmul.f32 0.5, %v1844
        %v1846 = vsub.f32 1.5, %v1845
        %v1847 = vmul.f32 %v1842, %v1846
        %vm1848 = vweird.f32 %v1831
        %vm1849 = vweird.f32 %v1842
        %vm1850 = vmor %vm1848, %vm1849
        %v1851 = vsel %vm1850, %v1842, %v1847
        %v1852 = vmul.f32 %v1819, %v1841
        %v1853 = vmul.f32 %v1820, %v1851
        %v1855 = vperm.slane %v1810, 0
        %v1857 = vmul.f32 %v1852, %v1855
        %v1858 = vmul.f32 %v1853, %v1855
        %v1860 = vperm.slane %v1811, 0
        %v1862 = vadd.f32 %v1857, %v1860
        %v1863 = vadd.f32 %v1858, %v1860
        %v1864 = vpack.c.bf16 %v1863, %v1862
        %v1865 = vld [vmem:[#allocation13] sm:$0xff]
        %v1866 = vld [vmem:[#allocation13 + $0x8] sm:$0xff]
        %v1867 = vld [vmem:[#allocation13 + $0x10] sm:$0xff]
        %v1868 = vld [vmem:[#allocation13 + $0x18] sm:$0xff]
        %v1869 = vld [vmem:[#allocation13 + $0x20] sm:$0xff]
        %v1870 = vld [vmem:[#allocation13 + $0x28] sm:$0xff]
        %v1871 = vld [vmem:[#allocation13 + $0x30] sm:$0xff]
        %v1872 = vld [vmem:[#allocation13 + $0x38] sm:$0xff]
        %v1873 = vld [vmem:[#allocation13 + $0x40] sm:$0xff]
        %v1874 = vld [vmem:[#allocation13 + $0x48] sm:$0xff]
        %v1875 = vld [vmem:[#allocation13 + $0x50] sm:$0xff]
        %v1876 = vld [vmem:[#allocation13 + $0x58] sm:$0xff]
        %v1877 = vld [vmem:[#allocation13 + $0x60] sm:$0xff]
        %v1878 = vld [vmem:[#allocation13 + $0x68] sm:$0xff]
        %v1879 = vld [vmem:[#allocation13 + $0x70] sm:$0xff]
        %v1880 = vld [vmem:[#allocation13 + $0x78] sm:$0xff]
        %v1881 = vld [vmem:[#allocation13 + $0x80] sm:$0xff]
        %v1882 = vld [vmem:[#allocation13 + $0x88] sm:$0xff]
        %v1883 = vld [vmem:[#allocation13 + $0x90] sm:$0xff]
        %v1884 = vld [vmem:[#allocation13 + $0x98] sm:$0xff]
        %v1885 = vld [vmem:[#allocation13 + $0xa0] sm:$0xff]
        %v1886 = vld [vmem:[#allocation13 + $0xa8] sm:$0xff]
        %v1887 = vld [vmem:[#allocation13 + $0xb0] sm:$0xff]
        %v1888 = vld [vmem:[#allocation13 + $0xb8] sm:$0xff]
        %v1889 = vld [vmem:[#allocation13 + $0xc0] sm:$0xff]
        %v1890 = vld [vmem:[#allocation13 + $0xc8] sm:$0xff]
        %v1891 = vld [vmem:[#allocation13 + $0xd0] sm:$0xff]
        %v1892 = vld [vmem:[#allocation13 + $0xd8] sm:$0xff]
        %v1893 = vld [vmem:[#allocation13 + $0xe0] sm:$0xff]
        %v1894 = vld [vmem:[#allocation13 + $0xe8] sm:$0xff]
        %v1895 = vld [vmem:[#allocation13 + $0xf0] sm:$0xff]
        %v1896 = vld [vmem:[#allocation13 + $0xf8] sm:$0xff]
        %v1897 = vld [vmem:[%s11] sm:$0xf]
        %v1899 = vperm.slane %v1897, 0
        %v1900 = vperm.slane %v1897, 1
        %v1901 = vperm.slane %v1897, 2
        %v1902 = vperm.slane %v1897, 3
        %v1939 = vunpack.c.l.b16 %v1865
        %v1940 = vunpack.c.h.b16 %v1865
        %v1941 = vunpack.c.l.b16 %v1866
        %v1942 = vunpack.c.h.b16 %v1866
        %v1943 = vunpack.c.l.b16 %v1867
        %v1944 = vunpack.c.h.b16 %v1867
        %v1945 = vunpack.c.l.b16 %v1868
        %v1946 = vunpack.c.h.b16 %v1868
        %v1947 = vunpack.c.l.b16 %v1869
        %v1948 = vunpack.c.h.b16 %v1869
        %v1949 = vunpack.c.l.b16 %v1870
        %v1950 = vunpack.c.h.b16 %v1870
        %v1951 = vunpack.c.l.b16 %v1871
        %v1952 = vunpack.c.h.b16 %v1871
        %v1953 = vunpack.c.l.b16 %v1872
        %v1954 = vunpack.c.h.b16 %v1872
        %v1955 = vunpack.c.l.b16 %v1873
        %v1956 = vunpack.c.h.b16 %v1873
        %v1957 = vunpack.c.l.b16 %v1874
        %v1958 = vunpack.c.h.b16 %v1874
        %v1959 = vunpack.c.l.b16 %v1875
        %v1960 = vunpack.c.h.b16 %v1875
        %v1961 = vunpack.c.l.b16 %v1876
        %v1962 = vunpack.c.h.b16 %v1876
        %v1963 = vunpack.c.l.b16 %v1877
        %v1964 = vunpack.c.h.b16 %v1877
        %v1965 = vunpack.c.l.b16 %v1878
        %v1966 = vunpack.c.h.b16 %v1878
        %v1967 = vunpack.c.l.b16 %v1879
        %v1968 = vunpack.c.h.b16 %v1879
        %v1969 = vunpack.c.l.b16 %v1880
        %v1970 = vunpack.c.h.b16 %v1880
        %v1971 = vunpack.c.l.b16 %v1881
        %v1972 = vunpack.c.h.b16 %v1881
        %v1973 = vunpack.c.l.b16 %v1882
        %v1974 = vunpack.c.h.b16 %v1882
        %v1975 = vunpack.c.l.b16 %v1883
        %v1976 = vunpack.c.h.b16 %v1883
        %v1977 = vunpack.c.l.b16 %v1884
        %v1978 = vunpack.c.h.b16 %v1884
        %v1979 = vunpack.c.l.b16 %v1885
        %v1980 = vunpack.c.h.b16 %v1885
        %v1981 = vunpack.c.l.b16 %v1886
        %v1982 = vunpack.c.h.b16 %v1886
        %v1983 = vunpack.c.l.b16 %v1887
        %v1984 = vunpack.c.h.b16 %v1887
        %v1985 = vunpack.c.l.b16 %v1888
        %v1986 = vunpack.c.h.b16 %v1888
        %v1987 = vunpack.c.l.b16 %v1889
        %v1988 = vunpack.c.h.b16 %v1889
        %v1989 = vunpack.c.l.b16 %v1890
        %v1990 = vunpack.c.h.b16 %v1890
        %v1991 = vunpack.c.l.b16 %v1891
        %v1992 = vunpack.c.h.b16 %v1891
        %v1993 = vunpack.c.l.b16 %v1892
        %v1994 = vunpack.c.h.b16 %v1892
        %v1995 = vunpack.c.l.b16 %v1893
        %v1996 = vunpack.c.h.b16 %v1893
        %v1997 = vunpack.c.l.b16 %v1894
        %v1998 = vunpack.c.h.b16 %v1894
        %v1999 = vunpack.c.l.b16 %v1895
        %v2000 = vunpack.c.h.b16 %v1895
        %v2001 = vunpack.c.l.b16 %v1896
        %v2002 = vunpack.c.h.b16 %v1896
        %v2003 = vpack.c.b16 %v1943, %v1939
        %v2004 = vpack.c.b16 %v1944, %v1940
        %v2005 = vpack.c.b16 %v1945, %v1941
        %v2006 = vpack.c.b16 %v1946, %v1942
        %v2007 = vpack.c.b16 %v1951, %v1947
        %v2008 = vpack.c.b16 %v1952, %v1948
        %v2009 = vpack.c.b16 %v1953, %v1949
        %v2010 = vpack.c.b16 %v1954, %v1950
        %v2011 = vpack.c.b16 %v1959, %v1955
        %v2012 = vpack.c.b16 %v1960, %v1956
        %v2013 = vpack.c.b16 %v1961, %v1957
        %v2014 = vpack.c.b16 %v1962, %v1958
        %v2015 = vpack.c.b16 %v1967, %v1963
        %v2016 = vpack.c.b16 %v1968, %v1964
        %v2017 = vpack.c.b16 %v1969, %v1965
        %v2018 = vpack.c.b16 %v1970, %v1966
        %v2019 = vpack.c.b16 %v1975, %v1971
        %v2020 = vpack.c.b16 %v1976, %v1972
        %v2021 = vpack.c.b16 %v1977, %v1973
        %v2022 = vpack.c.b16 %v1978, %v1974
        %v2023 = vpack.c.b16 %v1983, %v1979
        %v2024 = vpack.c.b16 %v1984, %v1980
        %v2025 = vpack.c.b16 %v1985, %v1981
        %v2026 = vpack.c.b16 %v1986, %v1982
        %v2027 = vpack.c.b16 %v1991, %v1987
        %v2028 = vpack.c.b16 %v1992, %v1988
        %v2029 = vpack.c.b16 %v1993, %v1989
        %v2030 = vpack.c.b16 %v1994, %v1990
        %v2031 = vpack.c.b16 %v1999, %v1995
        %v2032 = vpack.c.b16 %v2000, %v1996
        %v2033 = vpack.c.b16 %v2001, %v1997
        %v2034 = vpack.c.b16 %v2002, %v1998
        %2067 = vmatpush.bf16.msra.mxu0 %v2031
        %2068 = vmatpush.bf16.msra.mxu0 %v2027
        %2069 = vmatpush.bf16.msra.mxu0 %v2023
        %2070 = vmatpush.bf16.msra.mxu0 %v2019
        %2071 = vmatpush.bf16.msra.mxu0 %v2015
        %2072 = vmatpush.bf16.msra.mxu0 %v2011
        %2073 = vmatpush.bf16.msra.mxu0 %v2007
        %2074 = vmatpush.bf16.msra.mxu0 %v2003
        %2075 = vmatmul.bf16.gmra.mxu0 %v1864
        %v2076 = vpop.f32.mrf.mxu0
        %v2077 = vadd.f32 %v1899, %v2076
        %v2078 = vpop.f32.mrf.mxu0
        %v2079 = vadd.f32 %v1899, %v2078
        %2080 = vdwg.mxu0
        %2081 = vmatpush.bf16.msra.mxu0 %v2032
        %2082 = vmatpush.bf16.msra.mxu0 %v2028
        %2083 = vmatpush.bf16.msra.mxu0 %v2024
        %2084 = vmatpush.bf16.msra.mxu0 %v2020
        %2085 = vmatpush.bf16.msra.mxu0 %v2016
        %2086 = vmatpush.bf16.msra.mxu0 %v2012
        %2087 = vmatpush.bf16.msra.mxu0 %v2008
        %2088 = vmatpush.bf16.msra.mxu0 %v2004
        %2089 = vmatmul.bf16.gmra.mxu0 %v1864
        %v2090 = vpop.f32.mrf.mxu0
        %v2091 = vadd.f32 %v1900, %v2090
        %v2092 = vpop.f32.mrf.mxu0
        %v2093 = vadd.f32 %v1900, %v2092
        %2094 = vdwg.mxu0
        %2095 = vmatpush.bf16.msra.mxu0 %v2033
        %2096 = vmatpush.bf16.msra.mxu0 %v2029
        %2097 = vmatpush.bf16.msra.mxu0 %v2025
        %2098 = vmatpush.bf16.msra.mxu0 %v2021
        %2099 = vmatpush.bf16.msra.mxu0 %v2017
        %2100 = vmatpush.bf16.msra.mxu0 %v2013
        %2101 = vmatpush.bf16.msra.mxu0 %v2009
        %2102 = vmatpush.bf16.msra.mxu0 %v2005
        %2103 = vmatmul.bf16.gmra.mxu0 %v1864
        %v2104 = vpop.f32.mrf.mxu0
        %v2105 = vadd.f32 %v1901, %v2104
        %v2106 = vpop.f32.mrf.mxu0
        %v2107 = vadd.f32 %v1901, %v2106
        %2108 = vdwg.mxu0
        %2109 = vmatpush.bf16.msra.mxu0 %v2034
        %2110 = vmatpush.bf16.msra.mxu0 %v2030
        %2111 = vmatpush.bf16.msra.mxu0 %v2026
        %2112 = vmatpush.bf16.msra.mxu0 %v2022
        %2113 = vmatpush.bf16.msra.mxu0 %v2018
        %2114 = vmatpush.bf16.msra.mxu0 %v2014
        %2115 = vmatpush.bf16.msra.mxu0 %v2010
        %2116 = vmatpush.bf16.msra.mxu0 %v2006
        %2117 = vmatmul.bf16.gmra.mxu0 %v1864
        %v2118 = vpop.f32.mrf.mxu0
        %v2119 = vadd.f32 %v1902, %v2118
        %v2120 = vpop.f32.mrf.mxu0
        %v2121 = vadd.f32 %v1902, %v2120
        %2122 = vdwg.mxu0
        %v2123 = vmul.f32 %v2077, %v2077
        %v2124 = vmul.f32 %v2091, %v2091
        %v2125 = vmul.f32 %v2105, %v2105
        %v2126 = vmul.f32 %v2119, %v2119
        %v2127 = vmul.f32 %v2079, %v2079
        %v2128 = vmul.f32 %v2093, %v2093
        %v2129 = vmul.f32 %v2107, %v2107
        %v2130 = vmul.f32 %v2121, %v2121
        %v2131 = vmul.f32 %v2077, %v2123
        %v2132 = vmul.f32 %v2091, %v2124
        %v2133 = vmul.f32 %v2105, %v2125
        %v2134 = vmul.f32 %v2119, %v2126
        %v2135 = vmul.f32 %v2079, %v2127
        %v2136 = vmul.f32 %v2093, %v2128
        %v2137 = vmul.f32 %v2107, %v2129
        %v2138 = vmul.f32 %v2121, %v2130
        %v2139 = vmul.f32 %v2131, 0.044715
        %v2140 = vmul.f32 %v2132, 0.044715
        %v2141 = vmul.f32 %v2133, 0.044715
        %v2142 = vmul.f32 %v2134, 0.044715
        %v2143 = vmul.f32 %v2135, 0.044715
        %v2144 = vmul.f32 %v2136, 0.044715
        %v2145 = vmul.f32 %v2137, 0.044715
        %v2146 = vmul.f32 %v2138, 0.044715
        %v2147 = vadd.f32 %v2077, %v2139
        %v2148 = vadd.f32 %v2091, %v2140
        %v2149 = vadd.f32 %v2105, %v2141
        %v2150 = vadd.f32 %v2119, %v2142
        %v2151 = vadd.f32 %v2079, %v2143
        %v2152 = vadd.f32 %v2093, %v2144
        %v2153 = vadd.f32 %v2107, %v2145
        %v2154 = vadd.f32 %v2121, %v2146
        %v2155 = vmul.f32 %v2147, 0.7978846
        %v2156 = vmul.f32 %v2148, 0.7978846
        %v2157 = vmul.f32 %v2149, 0.7978846
        %v2158 = vmul.f32 %v2150, 0.7978846
        %v2159 = vmul.f32 %v2151, 0.7978846
        %v2160 = vmul.f32 %v2152, 0.7978846
        %v2161 = vmul.f32 %v2153, 0.7978846
        %v2162 = vmul.f32 %v2154, 0.7978846
        %v2163 = vtanh.pop %v2155
        %v2164 = vtanh.pop %v2156
        %v2165 = vtanh.pop %v2157
        %v2166 = vtanh.pop %v2158
        %v2167 = vtanh.pop %v2159
        %v2168 = vtanh.pop %v2160
        %v2169 = vtanh.pop %v2161
        %v2170 = vtanh.pop %v2162
        %v2171 = vadd.f32 %v2163, 1.0
        %v2172 = vadd.f32 %v2164, 1.0
        %v2173 = vadd.f32 %v2165, 1.0
        %v2174 = vadd.f32 %v2166, 1.0
        %v2175 = vadd.f32 %v2167, 1.0
        %v2176 = vadd.f32 %v2168, 1.0
        %v2177 = vadd.f32 %v2169, 1.0
        %v2178 = vadd.f32 %v2170, 1.0
        %v2179 = vmul.f32 %v2171, 0.5
        %v2180 = vmul.f32 %v2172, 0.5
        %v2181 = vmul.f32 %v2173, 0.5
        %v2182 = vmul.f32 %v2174, 0.5
        %v2183 = vmul.f32 %v2175, 0.5
        %v2184 = vmul.f32 %v2176, 0.5
        %v2185 = vmul.f32 %v2177, 0.5
        %v2186 = vmul.f32 %v2178, 0.5
        %v2187 = vmul.f32 %v2077, %v2179
        %v2188 = vmul.f32 %v2091, %v2180
        %v2189 = vmul.f32 %v2105, %v2181
        %v2190 = vmul.f32 %v2119, %v2182
        %v2191 = vmul.f32 %v2079, %v2183
        %v2192 = vmul.f32 %v2093, %v2184
        %v2193 = vmul.f32 %v2107, %v2185
        %v2194 = vmul.f32 %v2121, %v2186
        %v2195 = vpack.c.bf16 %v2191, %v2187
        %v2196 = vpack.c.bf16 %v2192, %v2188
        %v2197 = vpack.c.bf16 %v2193, %v2189
        %v2198 = vpack.c.bf16 %v2194, %v2190
        %v2199 = vld [vmem:[#allocation15] sm:$0xf]
        %v2200 = vld [vmem:[#allocation15 + $0x4] sm:$0xf]
        %v2201 = vld [vmem:[#allocation15 + $0x8] sm:$0xf]
        %v2202 = vld [vmem:[#allocation15 + $0xc] sm:$0xf]
        %v2203 = vld [vmem:[#allocation15 + $0x10] sm:$0xf]
        %v2204 = vld [vmem:[#allocation15 + $0x14] sm:$0xf]
        %v2205 = vld [vmem:[#allocation15 + $0x18] sm:$0xf]
        %v2206 = vld [vmem:[#allocation15 + $0x1c] sm:$0xf]
        %v2207 = vld [vmem:[#allocation15 + $0x20] sm:$0xf]
        %v2208 = vld [vmem:[#allocation15 + $0x24] sm:$0xf]
        %v2209 = vld [vmem:[#allocation15 + $0x28] sm:$0xf]
        %v2210 = vld [vmem:[#allocation15 + $0x2c] sm:$0xf]
        %v2211 = vld [vmem:[#allocation15 + $0x30] sm:$0xf]
        %v2212 = vld [vmem:[#allocation15 + $0x34] sm:$0xf]
        %v2213 = vld [vmem:[#allocation15 + $0x38] sm:$0xf]
        %v2214 = vld [vmem:[#allocation15 + $0x3c] sm:$0xf]
        %v2215 = vld [vmem:[#allocation15 + $0x40] sm:$0xf]
        %v2216 = vld [vmem:[#allocation15 + $0x44] sm:$0xf]
        %v2217 = vld [vmem:[#allocation15 + $0x48] sm:$0xf]
        %v2218 = vld [vmem:[#allocation15 + $0x4c] sm:$0xf]
        %v2219 = vld [vmem:[#allocation15 + $0x50] sm:$0xf]
        %v2220 = vld [vmem:[#allocation15 + $0x54] sm:$0xf]
        %v2221 = vld [vmem:[#allocation15 + $0x58] sm:$0xf]
        %v2222 = vld [vmem:[#allocation15 + $0x5c] sm:$0xf]
        %v2223 = vld [vmem:[#allocation15 + $0x60] sm:$0xf]
        %v2224 = vld [vmem:[#allocation15 + $0x64] sm:$0xf]
        %v2225 = vld [vmem:[#allocation15 + $0x68] sm:$0xf]
        %v2226 = vld [vmem:[#allocation15 + $0x6c] sm:$0xf]
        %v2227 = vld [vmem:[#allocation15 + $0x70] sm:$0xf]
        %v2228 = vld [vmem:[#allocation15 + $0x74] sm:$0xf]
        %v2229 = vld [vmem:[#allocation15 + $0x78] sm:$0xf]
        %v2230 = vld [vmem:[#allocation15 + $0x7c] sm:$0xf]
        %v2231 = vld [vmem:[#allocation15 + $0x80] sm:$0xf]
        %v2232 = vld [vmem:[#allocation15 + $0x84] sm:$0xf]
        %v2233 = vld [vmem:[#allocation15 + $0x88] sm:$0xf]
        %v2234 = vld [vmem:[#allocation15 + $0x8c] sm:$0xf]
        %v2235 = vld [vmem:[#allocation15 + $0x90] sm:$0xf]
        %v2236 = vld [vmem:[#allocation15 + $0x94] sm:$0xf]
        %v2237 = vld [vmem:[#allocation15 + $0x98] sm:$0xf]
        %v2238 = vld [vmem:[#allocation15 + $0x9c] sm:$0xf]
        %v2239 = vld [vmem:[#allocation15 + $0xa0] sm:$0xf]
        %v2240 = vld [vmem:[#allocation15 + $0xa4] sm:$0xf]
        %v2241 = vld [vmem:[#allocation15 + $0xa8] sm:$0xf]
        %v2242 = vld [vmem:[#allocation15 + $0xac] sm:$0xf]
        %v2243 = vld [vmem:[#allocation15 + $0xb0] sm:$0xf]
        %v2244 = vld [vmem:[#allocation15 + $0xb4] sm:$0xf]
        %v2245 = vld [vmem:[#allocation15 + $0xb8] sm:$0xf]
        %v2246 = vld [vmem:[#allocation15 + $0xbc] sm:$0xf]
        %v2247 = vld [vmem:[#allocation15 + $0xc0] sm:$0xf]
        %v2248 = vld [vmem:[#allocation15 + $0xc4] sm:$0xf]
        %v2249 = vld [vmem:[#allocation15 + $0xc8] sm:$0xf]
        %v2250 = vld [vmem:[#allocation15 + $0xcc] sm:$0xf]
        %v2251 = vld [vmem:[#allocation15 + $0xd0] sm:$0xf]
        %v2252 = vld [vmem:[#allocation15 + $0xd4] sm:$0xf]
        %v2253 = vld [vmem:[#allocation15 + $0xd8] sm:$0xf]
        %v2254 = vld [vmem:[#allocation15 + $0xdc] sm:$0xf]
        %v2255 = vld [vmem:[#allocation15 + $0xe0] sm:$0xf]
        %v2256 = vld [vmem:[#allocation15 + $0xe4] sm:$0xf]
        %v2257 = vld [vmem:[#allocation15 + $0xe8] sm:$0xf]
        %v2258 = vld [vmem:[#allocation15 + $0xec] sm:$0xf]
        %v2259 = vld [vmem:[#allocation15 + $0xf0] sm:$0xf]
        %v2260 = vld [vmem:[#allocation15 + $0xf4] sm:$0xf]
        %v2261 = vld [vmem:[#allocation15 + $0xf8] sm:$0xf]
        %v2262 = vld [vmem:[#allocation15 + $0xfc] sm:$0xf]
        %v2327 = vunpack.c.l.b16 %v2199
        %v2328 = vunpack.c.l.b16 %v2200
        %v2329 = vunpack.c.l.b16 %v2201
        %v2330 = vunpack.c.l.b16 %v2202
        %v2331 = vunpack.c.l.b16 %v2203
        %v2332 = vunpack.c.l.b16 %v2204
        %v2333 = vunpack.c.l.b16 %v2205
        %v2334 = vunpack.c.l.b16 %v2206
        %v2335 = vunpack.c.l.b16 %v2207
        %v2336 = vunpack.c.l.b16 %v2208
        %v2337 = vunpack.c.l.b16 %v2209
        %v2338 = vunpack.c.l.b16 %v2210
        %v2339 = vunpack.c.l.b16 %v2211
        %v2340 = vunpack.c.l.b16 %v2212
        %v2341 = vunpack.c.l.b16 %v2213
        %v2342 = vunpack.c.l.b16 %v2214
        %v2343 = vunpack.c.l.b16 %v2215
        %v2344 = vunpack.c.l.b16 %v2216
        %v2345 = vunpack.c.l.b16 %v2217
        %v2346 = vunpack.c.l.b16 %v2218
        %v2347 = vunpack.c.l.b16 %v2219
        %v2348 = vunpack.c.l.b16 %v2220
        %v2349 = vunpack.c.l.b16 %v2221
        %v2350 = vunpack.c.l.b16 %v2222
        %v2351 = vunpack.c.l.b16 %v2223
        %v2352 = vunpack.c.l.b16 %v2224
        %v2353 = vunpack.c.l.b16 %v2225
        %v2354 = vunpack.c.l.b16 %v2226
        %v2355 = vunpack.c.l.b16 %v2227
        %v2356 = vunpack.c.l.b16 %v2228
        %v2357 = vunpack.c.l.b16 %v2229
        %v2358 = vunpack.c.l.b16 %v2230
        %v2359 = vunpack.c.l.b16 %v2231
        %v2360 = vunpack.c.l.b16 %v2232
        %v2361 = vunpack.c.l.b16 %v2233
        %v2362 = vunpack.c.l.b16 %v2234
        %v2363 = vunpack.c.l.b16 %v2235
        %v2364 = vunpack.c.l.b16 %v2236
        %v2365 = vunpack.c.l.b16 %v2237
        %v2366 = vunpack.c.l.b16 %v2238
        %v2367 = vunpack.c.l.b16 %v2239
        %v2368 = vunpack.c.l.b16 %v2240
        %v2369 = vunpack.c.l.b16 %v2241
        %v2370 = vunpack.c.l.b16 %v2242
        %v2371 = vunpack.c.l.b16 %v2243
        %v2372 = vunpack.c.l.b16 %v2244
        %v2373 = vunpack.c.l.b16 %v2245
        %v2374 = vunpack.c.l.b16 %v2246
        %v2375 = vunpack.c.l.b16 %v2247
        %v2376 = vunpack.c.l.b16 %v2248
        %v2377 = vunpack.c.l.b16 %v2249
        %v2378 = vunpack.c.l.b16 %v2250
        %v2379 = vunpack.c.l.b16 %v2251
        %v2380 = vunpack.c.l.b16 %v2252
        %v2381 = vunpack.c.l.b16 %v2253
        %v2382 = vunpack.c.l.b16 %v2254
        %v2383 = vunpack.c.l.b16 %v2255
        %v2384 = vunpack.c.l.b16 %v2256
        %v2385 = vunpack.c.l.b16 %v2257
        %v2386 = vunpack.c.l.b16 %v2258
        %v2387 = vunpack.c.l.b16 %v2259
        %v2388 = vunpack.c.l.b16 %v2260
        %v2389 = vunpack.c.l.b16 %v2261
        %v2390 = vunpack.c.l.b16 %v2262
        %v2391 = vpack.c.b16 %v2328, %v2327
        %v2392 = vpack.c.b16 %v2330, %v2329
        %v2393 = vpack.c.b16 %v2332, %v2331
        %v2394 = vpack.c.b16 %v2334, %v2333
        %v2395 = vpack.c.b16 %v2336, %v2335
        %v2396 = vpack.c.b16 %v2338, %v2337
        %v2397 = vpack.c.b16 %v2340, %v2339
        %v2398 = vpack.c.b16 %v2342, %v2341
        %v2399 = vpack.c.b16 %v2344, %v2343
        %v2400 = vpack.c.b16 %v2346, %v2345
        %v2401 = vpack.c.b16 %v2348, %v2347
        %v2402 = vpack.c.b16 %v2350, %v2349
        %v2403 = vpack.c.b16 %v2352, %v2351
        %v2404 = vpack.c.b16 %v2354, %v2353
        %v2405 = vpack.c.b16 %v2356, %v2355
        %v2406 = vpack.c.b16 %v2358, %v2357
        %v2407 = vpack.c.b16 %v2360, %v2359
        %v2408 = vpack.c.b16 %v2362, %v2361
        %v2409 = vpack.c.b16 %v2364, %v2363
        %v2410 = vpack.c.b16 %v2366, %v2365
        %v2411 = vpack.c.b16 %v2368, %v2367
        %v2412 = vpack.c.b16 %v2370, %v2369
        %v2413 = vpack.c.b16 %v2372, %v2371
        %v2414 = vpack.c.b16 %v2374, %v2373
        %v2415 = vpack.c.b16 %v2376, %v2375
        %v2416 = vpack.c.b16 %v2378, %v2377
        %v2417 = vpack.c.b16 %v2380, %v2379
        %v2418 = vpack.c.b16 %v2382, %v2381
        %v2419 = vpack.c.b16 %v2384, %v2383
        %v2420 = vpack.c.b16 %v2386, %v2385
        %v2421 = vpack.c.b16 %v2388, %v2387
        %v2422 = vpack.c.b16 %v2390, %v2389
        %2455 = vmatpush.bf16.msra.mxu0 %v2398
        %2456 = vmatpush.bf16.msra.mxu0 %v2397
        %2457 = vmatpush.bf16.msra.mxu0 %v2396
        %2458 = vmatpush.bf16.msra.mxu0 %v2395
        %2459 = vmatpush.bf16.msra.mxu0 %v2394
        %2460 = vmatpush.bf16.msra.mxu0 %v2393
        %2461 = vmatpush.bf16.msra.mxu0 %v2392
        %2462 = vmatpush.bf16.msra.mxu0 %v2391
        %2463 = vmatmul.bf16.gmra.mxu0 %v2195
        %v2464 = vpop.f32.mrf.mxu0
        %v2465 = vadd.f32 0.0, %v2464
        %v2466 = vpop.f32.mrf.mxu0
        %v2467 = vadd.f32 0.0, %v2466
        %2468 = vdwg.mxu0
        %2469 = vmatpush.bf16.msra.mxu0 %v2406
        %2470 = vmatpush.bf16.msra.mxu0 %v2405
        %2471 = vmatpush.bf16.msra.mxu0 %v2404
        %2472 = vmatpush.bf16.msra.mxu0 %v2403
        %2473 = vmatpush.bf16.msra.mxu0 %v2402
        %2474 = vmatpush.bf16.msra.mxu0 %v2401
        %2475 = vmatpush.bf16.msra.mxu0 %v2400
        %2476 = vmatpush.bf16.msra.mxu0 %v2399
        %2477 = vmatmul.bf16.gmra.mxu0 %v2196
        %v2478 = vpop.f32.mrf.mxu0
        %v2479 = vadd.f32 %v2465, %v2478
        %v2480 = vpop.f32.mrf.mxu0
        %v2481 = vadd.f32 %v2467, %v2480
        %2482 = vdwg.mxu0
        %2483 = vmatpush.bf16.msra.mxu0 %v2414
        %2484 = vmatpush.bf16.msra.mxu0 %v2413
        %2485 = vmatpush.bf16.msra.mxu0 %v2412
        %2486 = vmatpush.bf16.msra.mxu0 %v2411
        %2487 = vmatpush.bf16.msra.mxu0 %v2410
        %2488 = vmatpush.bf16.msra.mxu0 %v2409
        %2489 = vmatpush.bf16.msra.mxu0 %v2408
        %2490 = vmatpush.bf16.msra.mxu0 %v2407
        %2491 = vmatmul.bf16.gmra.mxu0 %v2197
        %v2492 = vpop.f32.mrf.mxu0
        %v2493 = vadd.f32 %v2479, %v2492
        %v2494 = vpop.f32.mrf.mxu0
        %v2495 = vadd.f32 %v2481, %v2494
        %2496 = vdwg.mxu0
        %2497 = vmatpush.bf16.msra.mxu0 %v2422
        %2498 = vmatpush.bf16.msra.mxu0 %v2421
        %2499 = vmatpush.bf16.msra.mxu0 %v2420
        %2500 = vmatpush.bf16.msra.mxu0 %v2419
        %2501 = vmatpush.bf16.msra.mxu0 %v2418
        %2502 = vmatpush.bf16.msra.mxu0 %v2417
        %2503 = vmatpush.bf16.msra.mxu0 %v2416
        %2504 = vmatpush.bf16.msra.mxu0 %v2415
        %2505 = vmatmul.bf16.gmra.mxu0 %v2198
        %v2506 = vpop.f32.mrf.mxu0
        %v2507 = vadd.f32 %v2493, %v2506
        %v2508 = vpop.f32.mrf.mxu0
        %v2509 = vadd.f32 %v2495, %v2508
        %2510 = vdwg.mxu0
        %v2511 = vadd.f32 %v1808, %v2507
        %v2512 = vadd.f32 %v1809, %v2509
        %v2513 = vld [vmem:[#allocation16] sm:$0x1]
        %v2515 = vperm.slane %v2513, 0
        %v2517 = vadd.f32 %v2511, %v2515
        %v2518 = vadd.f32 %v2512, %v2515
        %v2519 = vld [vmem:[#allocation18] sm:$0x1]
        %v2520 = vld [vmem:[#allocation19] sm:$0x1]
        %2521 = vadd.xlane.f32.xlu0 %v2517
        %v2522 = vpop.xlane.xlu0 %2521
        %v2523 = vsel %vm1124, %v2518, 0.0
        %2524 = vadd.xlane.f32.xlu0 %v2523
        %v2525 = vpop.xlane.xlu0 %2524
        %v2526 = vmul.f32 %v2522, %v1134
        %v2527 = vmul.f32 %v2525, %v1134
        %v2528 = vsub.f32 %v2517, %v2526
        %v2529 = vsub.f32 %v2518, %v2527
        %v2530 = vmul.f32 %v2528, %v2528
        %v2531 = vmul.f32 %v2529, %v2529
        %2532 = vadd.xlane.f32.xlu0 %v2530
        %v2533 = vpop.xlane.xlu0 %2532
        %v2534 = vsel %vm1124, %v2531, 0.0
        %2535 = vadd.xlane.f32.xlu0 %v2534
        %v2536 = vpop.xlane.xlu0 %2535
        %v2537 = vmul.f32 %v2533, %v1134
        %v2538 = vmul.f32 %v2536, %v1134
        %v2539 = vadd.f32 %v2537, 1e-05
        %v2540 = vadd.f32 %v2538, 1e-05
        %v2541 = vrsqrt.pop %v2539
        %v2542 = vmul.f32 %v2541, %v2539
        %v2543 = vmul.f32 %v2542, %v2541
        %v2544 = vmul.f32 0.5, %v2543
        %v2545 = vsub.f32 1.5, %v2544
        %v2546 = vmul.f32 %v2541, %v2545
        %vm2547 = vweird.f32 %v2539
        %vm2548 = vweird.f32 %v2541
        %vm2549 = vmor %vm2547, %vm2548
        %v2550 = vsel %vm2549, %v2541, %v2546
        %v2551 = vrsqrt.pop %v2540
        %v2552 = vmul.f32 %v2551, %v2540
        %v2553 = vmul.f32 %v2552, %v2551
        %v2554 = vmul.f32 0.5, %v2553
        %v2555 = vsub.f32 1.5, %v2554
        %v2556 = vmul.f32 %v2551, %v2555
        %vm2557 = vweird.f32 %v2540
        %vm2558 = vweird.f32 %v2551
        %vm2559 = vmor %vm2557, %vm2558
        %v2560 = vsel %vm2559, %v2551, %v2556
        %v2561 = vmul.f32 %v2528, %v2550
        %v2562 = vmul.f32 %v2529, %v2560
        %v2564 = vperm.slane %v2519, 0
        %v2566 = vmul.f32 %v2561, %v2564
        %v2567 = vmul.f32 %v2562, %v2564
        %v2569 = vperm.slane %v2520, 0
        %v2571 = vadd.f32 %v2566, %v2569
        %v2572 = vadd.f32 %v2567, %v2569
        %v2573 = vpack.c.bf16 %v2572, %v2571
        %v2574 = vld [vmem:[#allocation21] sm:$0xff]
        %v2575 = vld [vmem:[#allocation21 + $0x8] sm:$0xf]
        %v2576 = vld [vmem:[#allocation21 + $0xc] sm:$0xff]
        %v2577 = vld [vmem:[#allocation21 + $0x14] sm:$0xf]
        %v2578 = vld [vmem:[#allocation21 + $0x18] sm:$0xff]
        %v2579 = vld [vmem:[#allocation21 + $0x20] sm:$0xf]
        %v2580 = vld [vmem:[#allocation21 + $0x24] sm:$0xff]
        %v2581 = vld [vmem:[#allocation21 + $0x2c] sm:$0xf]
        %v2582 = vld [vmem:[#allocation21 + $0x30] sm:$0xff]
        %v2583 = vld [vmem:[#allocation21 + $0x38] sm:$0xf]
        %v2584 = vld [vmem:[#allocation21 + $0x3c] sm:$0xff]
        %v2585 = vld [vmem:[#allocation21 + $0x44] sm:$0xf]
        %v2586 = vld [vmem:[#allocation21 + $0x48] sm:$0xff]
        %v2587 = vld [vmem:[#allocation21 + $0x50] sm:$0xf]
        %v2588 = vld [vmem:[#allocation21 + $0x54] sm:$0xff]
        %v2589 = vld [vmem:[#allocation21 + $0x5c] sm:$0xf]
        %v2590 = vld [vmem:[#allocation21 + $0x60] sm:$0xff]
        %v2591 = vld [vmem:[#allocation21 + $0x68] sm:$0xf]
        %v2592 = vld [vmem:[#allocation21 + $0x6c] sm:$0xff]
        %v2593 = vld [vmem:[#allocation21 + $0x74] sm:$0xf]
        %v2594 = vld [vmem:[#allocation21 + $0x78] sm:$0xff]
        %v2595 = vld [vmem:[#allocation21 + $0x80] sm:$0xf]
        %v2596 = vld [vmem:[#allocation21 + $0x84] sm:$0xff]
        %v2597 = vld [vmem:[#allocation21 + $0x8c] sm:$0xf]
        %v2598 = vld [vmem:[#allocation21 + $0x90] sm:$0xff]
        %v2599 = vld [vmem:[#allocation21 + $0x98] sm:$0xf]
        %v2600 = vld [vmem:[#allocation21 + $0x9c] sm:$0xff]
        %v2601 = vld [vmem:[#allocation21 + $0xa4] sm:$0xf]
        %v2602 = vld [vmem:[#allocation21 + $0xa8] sm:$0xff]
        %v2603 = vld [vmem:[#allocation21 + $0xb0] sm:$0xf]
        %v2604 = vld [vmem:[#allocation21 + $0xb4] sm:$0xff]
        %v2605 = vld [vmem:[#allocation21 + $0xbc] sm:$0xf]
        %v2606 = vld [vmem:[#allocation22] sm:$0x7]
        %v2608 = vperm.slane %v2606, 0
        %v2609 = vperm.slane %v2606, 1
        %v2610 = vperm.slane %v2606, 2
        %v2646 = vunpack.c.l.b16 %v2574
        %v2647 = vunpack.c.h.b16 %v2574
        %v2648 = vunpack.c.l.b16 %v2575
        %v2649 = vunpack.c.l.b16 %v2576
        %v2650 = vunpack.c.h.b16 %v2576
        %v2651 = vunpack.c.l.b16 %v2577
        %v2652 = vunpack.c.l.b16 %v2578
        %v2653 = vunpack.c.h.b16 %v2578
        %v2654 = vunpack.c.l.b16 %v2579
        %v2655 = vunpack.c.l.b16 %v2580
        %v2656 = vunpack.c.h.b16 %v2580
        %v2657 = vunpack.c.l.b16 %v2581
        %v2658 = vunpack.c.l.b16 %v2582
        %v2659 = vunpack.c.h.b16 %v2582
        %v2660 = vunpack.c.l.b16 %v2583
        %v2661 = vunpack.c.l.b16 %v2584
        %v2662 = vunpack.c.h.b16 %v2584
        %v2663 = vunpack.c.l.b16 %v2585
        %v2664 = vunpack.c.l.b16 %v2586
        %v2665 = vunpack.c.h.b16 %v2586
        %v2666 = vunpack.c.l.b16 %v2587
        %v2667 = vunpack.c.l.b16 %v2588
        %v2668 = vunpack.c.h.b16 %v2588
        %v2669 = vunpack.c.l.b16 %v2589
        %v2670 = vunpack.c.l.b16 %v2590
        %v2671 = vunpack.c.h.b16 %v2590
        %v2672 = vunpack.c.l.b16 %v2591
        %v2673 = vunpack.c.l.b16 %v2592
        %v2674 = vunpack.c.h.b16 %v2592
        %v2675 = vunpack.c.l.b16 %v2593
        %v2676 = vunpack.c.l.b16 %v2594
        %v2677 = vunpack.c.h.b16 %v2594
        %v2678 = vunpack.c.l.b16 %v2595
        %v2679 = vunpack.c.l.b16 %v2596
        %v2680 = vunpack.c.h.b16 %v2596
        %v2681 = vunpack.c.l.b16 %v2597
        %v2682 = vunpack.c.l.b16 %v2598
        %v2683 = vunpack.c.h.b16 %v2598
        %v2684 = vunpack.c.l.b16 %v2599
        %v2685 = vunpack.c.l.b16 %v2600
        %v2686 = vunpack.c.h.b16 %v2600
        %v2687 = vunpack.c.l.b16 %v2601
        %v2688 = vunpack.c.l.b16 %v2602
        %v2689 = vunpack.c.h.b16 %v2602
        %v2690 = vunpack.c.l.b16 %v2603
        %v2691 = vunpack.c.l.b16 %v2604
        %v2692 = vunpack.c.h.b16 %v2604
        %v2693 = vunpack.c.l.b16 %v2605
        %v2694 = vpack.c.b16 %v2649, %v2646
        %v2695 = vpack.c.b16 %v2650, %v2647
        %v2696 = vpack.c.b16 %v2651, %v2648
        %v2697 = vpack.c.b16 %v2655, %v2652
        %v2698 = vpack.c.b16 %v2656, %v2653
        %v2699 = vpack.c.b16 %v2657, %v2654
        %v2700 = vpack.c.b16 %v2661, %v2658
        %v2701 = vpack.c.b16 %v2662, %v2659
        %v2702 = vpack.c.b16 %v2663, %v2660
        %v2703 = vpack.c.b16 %v2667, %v2664
        %v2704 = vpack.c.b16 %v2668, %v2665
        %v2705 = vpack.c.b16 %v2669, %v2666
        %v2706 = vpack.c.b16 %v2673, %v2670
        %v2707 = vpack.c.b16 %v2674, %v2671
        %v2708 = vpack.c.b16 %v2675, %v2672
        %v2709 = vpack.c.b16 %v2679, %v2676
        %v2710 = vpack.c.b16 %v2680, %v2677
        %v2711 = vpack.c.b16 %v2681, %v2678
        %v2712 = vpack.c.b16 %v2685, %v2682
        %v2713 = vpack.c.b16 %v2686, %v2683
        %v2714 = vpack.c.b16 %v2687, %v2684
        %v2715 = vpack.c.b16 %v2691, %v2688
        %v2716 = vpack.c.b16 %v2692, %v2689
        %v2717 = vpack.c.b16 %v2693, %v2690
        %2742 = vmatpush.bf16.msra.mxu0 %v2715
        %2743 = vmatpush.bf16.msra.mxu0 %v2712
        %2744 = vmatpush.bf16.msra.mxu0 %v2709
        %2745 = vmatpush.bf16.msra.mxu0 %v2706
        %2746 = vmatpush.bf16.msra.mxu0 %v2703
        %2747 = vmatpush.bf16.msra.mxu0 %v2700
        %2748 = vmatpush.bf16.msra.mxu0 %v2697
        %2749 = vmatpush.bf16.msra.mxu0 %v2694
        %2750 = vmatmul.bf16.gmra.mxu0 %v2573
        %v2751 = vpop.f32.mrf.mxu0
        %v2752 = vadd.f32 %v2608, %v2751
        %v2753 = vpop.f32.mrf.mxu0
        %v2754 = vadd.f32 %v2608, %v2753
        %2755 = vdwg.mxu0
        %2756 = vmatpush.bf16.msra.mxu0 %v2716
        %2757 = vmatpush.bf16.msra.mxu0 %v2713
        %2758 = vmatpush.bf16.msra.mxu0 %v2710
        %2759 = vmatpush.bf16.msra.mxu0 %v2707
        %2760 = vmatpush.bf16.msra.mxu0 %v2704
        %2761 = vmatpush.bf16.msra.mxu0 %v2701
        %2762 = vmatpush.bf16.msra.mxu0 %v2698
        %2763 = vmatpush.bf16.msra.mxu0 %v2695
        %2764 = vmatmul.bf16.gmra.mxu0 %v2573
        %v2765 = vpop.f32.mrf.mxu0
        %v2766 = vadd.f32 %v2609, %v2765
        %v2767 = vpop.f32.mrf.mxu0
        %v2768 = vadd.f32 %v2609, %v2767
        %2769 = vdwg.mxu0
        %2770 = vmatpush.bf16.msra.mxu0 %v2717
        %2771 = vmatpush.bf16.msra.mxu0 %v2714
        %2772 = vmatpush.bf16.msra.mxu0 %v2711
        %2773 = vmatpush.bf16.msra.mxu0 %v2708
        %2774 = vmatpush.bf16.msra.mxu0 %v2705
        %2775 = vmatpush.bf16.msra.mxu0 %v2702
        %2776 = vmatpush.bf16.msra.mxu0 %v2699
        %2777 = vmatpush.bf16.msra.mxu0 %v2696
        %2778 = vmatmul.bf16.gmra.mxu0 %v2573
        %v2779 = vpop.f32.mrf.mxu0
        %v2780 = vadd.f32 %v2610, %v2779
        %v2781 = vpop.f32.mrf.mxu0
        %v2782 = vadd.f32 %v2610, %v2781
        %2783 = vdwg.mxu0
        %v2784 = vmul.f32 %v2752, 0.17677669
        %v2785 = vmul.f32 %v2754, 0.17677669
        %v2786 = vpack.c.bf16 %v2784, %v2784
        %v2787 = vpack.c.bf16 %v2785, %v2785
        %v2788 = vpack.c.bf16 %v2766, %v2766
        %v2789 = vpack.c.bf16 %v2768, %v2768
        %v2790 = vpack.c.bf16 %v2780, %v2780
        %v2791 = vpack.c.bf16 %v2782, %v2782
        %v2794 = vunpack.c.l.b16 %v2786
        %v2795 = vunpack.c.l.b16 %v2787
        %v2796 = vpack.c.b16 %v2795, %v2794
        %v2799 = vunpack.c.l.b16 %v2788
        %v2800 = vunpack.c.l.b16 %v2789
        %v2801 = vpack.c.b16 %v2800, %v2799
        %v2803 = vsel %vm1411, %v2796, 0
        %v2806 = vsel %vm1411, %v2801, 0
        %2808 = vmatpush.bf16.xpose.msra.mxu0 0
        %2809 = vmatpush.bf16.xpose.msra.mxu0 0
        %2810 = vmatpush.bf16.xpose.msra.mxu0 0
        %2811 = vmatpush.bf16.xpose.msra.mxu0 0
        %2812 = vmatpush.bf16.xpose.msra.mxu0 0
        %2813 = vmatpush.bf16.xpose.msra.mxu0 0
        %2814 = vmatpush.bf16.xpose.msra.mxu0 0
        %2815 = vmatpush.bf16.xpose.msra.mxu0 %v2806
        %2816 = vmatmul.bf16.gmra.mxu0 %v2803
        %v2817 = vpop.f32.mrf.mxu0
        %v2818 = vadd.f32 0.0, %v2817
        %v2819 = vpop.f32.mrf.mxu0
        %v2820 = vadd.f32 0.0, %v2819
        %2821 = vdwg.mxu0
        %v2822 = vsel %vm1432, %v2818, -inf
        %2823 = vmax.xlane.f32.xlu0 %v2822
        %v2824 = vpop.xlane.xlu0 %2823
        %v2825 = vsel %vm1436, %v2820, -inf
        %2826 = vmax.xlane.f32.xlu0 %v2825
        %v2827 = vpop.xlane.xlu0 %2826
        %v2828 = vsub.f32 %v2818, %v2824
        %v2829 = vsub.f32 %v2820, %v2827
        %v2830 = vmul.f32 %v2828, 1.442695
        %v2831 = vpow.pop %v2830
        %v2832 = vmul.f32 %v2829, 1.442695
        %v2833 = vpow.pop %v2832
        %v2834 = vsel %vm1432, %v2831, 0.0
        %2835 = vadd.xlane.f32.xlu0 %v2834
        %v2836 = vpop.xlane.xlu0 %2835
        %v2837 = vsel %vm1436, %v2833, 0.0
        %2838 = vadd.xlane.f32.xlu0 %v2837
        %v2839 = vpop.xlane.xlu0 %2838
        %v2840 = vrcp.pop %v2836
        %v2841 = vrcp.pop %v2839
        %v2842 = vmul.f32 %v2831, %v2840
        %v2843 = vmul.f32 %v2833, %v2841
        %v2844 = vpack.c.bf16 %v2843, %v2842
        %v2847 = vunpack.c.l.b16 %v2790
        %v2848 = vunpack.c.l.b16 %v2791
        %v2849 = vpack.c.b16 %v2848, %v2847
        %v2851 = vsel %vm1432, %v2844, 0
        %v2854 = vand.u32 %v2849, %v1468
        %2856 = vmatpush.bf16.msra.mxu0 0
        %2857 = vmatpush.bf16.msra.mxu0 0
        %2858 = vmatpush.bf16.msra.mxu0 0
        %2859 = vmatpush.bf16.msra.mxu0 0
        %2860 = vmatpush.bf16.msra.mxu0 0
        %2861 = vmatpush.bf16.msra.mxu0 0
        %2862 = vmatpush.bf16.msra.mxu0 0
        %2863 = vmatpush.bf16.msra.mxu0 %v2854
        %2864 = vmatmul.bf16.gmra.mxu0 %v2851
        %v2865 = vpop.f32.mrf.mxu0
        %v2866 = vadd.f32 0.0, %v2865
        %v2867 = vpop.f32.mrf.mxu0
        %v2868 = vadd.f32 0.0, %v2867
        %2869 = vdwg.mxu0
        %2870 = vrot.lane.b32.xlu0 %v2796, 96
        %v2871 = vpop.permute.xlu0 %2870
        %2872 = vrot.lane.b32.xlu0 %v2801, 96
        %v2873 = vpop.permute.xlu0 %2872
        %v2875 = vsel %vm1411, %v2871, 0
        %v2878 = vsel %vm1411, %v2873, 0
        %2880 = vmatpush.bf16.xpose.msra.mxu0 0
        %2881 = vmatpush.bf16.xpose.msra.mxu0 0
        %2882 = vmatpush.bf16.xpose.msra.mxu0 0
        %2883 = vmatpush.bf16.xpose.msra.mxu0 0
        %2884 = vmatpush.bf16.xpose.msra.mxu0 0
        %2885 = vmatpush.bf16.xpose.msra.mxu0 0
        %2886 = vmatpush.bf16.xpose.msra.mxu0 0
        %2887 = vmatpush.bf16.xpose.msra.mxu0 %v2878
        %2888 = vmatmul.bf16.gmra.mxu0 %v2875
        %v2889 = vpop.f32.mrf.mxu0
        %v2890 = vadd.f32 0.0, %v2889
        %v2891 = vpop.f32.mrf.mxu0
        %v2892 = vadd.f32 0.0, %v2891
        %2893 = vdwg.mxu0
        %v2894 = vsel %vm1432, %v2890, -inf
        %2895 = vmax.xlane.f32.xlu0 %v2894
        %v2896 = vpop.xlane.xlu0 %2895
        %v2897 = vsel %vm1436, %v2892, -inf
        %2898 = vmax.xlane.f32.xlu0 %v2897
        %v2899 = vpop.xlane.xlu0 %2898
        %v2900 = vsub.f32 %v2890, %v2896
        %v2901 = vsub.f32 %v2892, %v2899
        %v2902 = vmul.f32 %v2900, 1.442695
        %v2903 = vpow.pop %v2902
        %v2904 = vmul.f32 %v2901, 1.442695
        %v2905 = vpow.pop %v2904
        %v2906 = vsel %vm1432, %v2903, 0.0
        %2907 = vadd.xlane.f32.xlu0 %v2906
        %v2908 = vpop.xlane.xlu0 %2907
        %v2909 = vsel %vm1436, %v2905, 0.0
        %2910 = vadd.xlane.f32.xlu0 %v2909
        %v2911 = vpop.xlane.xlu0 %2910
        %v2912 = vrcp.pop %v2908
        %v2913 = vrcp.pop %v2911
        %v2914 = vmul.f32 %v2903, %v2912
        %v2915 = vmul.f32 %v2905, %v2913
        %v2916 = vpack.c.bf16 %v2915, %v2914
        %2917 = vrot.lane.b32.xlu0 %v2849, 96
        %v2918 = vpop.permute.xlu0 %2917
        %v2920 = vsel %vm1432, %v2916, 0
        %v2923 = vand.u32 %v2918, %v1468
        %2925 = vmatpush.bf16.msra.mxu0 0
        %2926 = vmatpush.bf16.msra.mxu0 0
        %2927 = vmatpush.bf16.msra.mxu0 0
        %2928 = vmatpush.bf16.msra.mxu0 0
        %2929 = vmatpush.bf16.msra.mxu0 0
        %2930 = vmatpush.bf16.msra.mxu0 0
        %2931 = vmatpush.bf16.msra.mxu0 0
        %2932 = vmatpush.bf16.msra.mxu0 %v2923
        %2933 = vmatmul.bf16.gmra.mxu0 %v2920
        %v2934 = vpop.f32.mrf.mxu0
        %v2935 = vadd.f32 0.0, %v2934
        %v2936 = vpop.f32.mrf.mxu0
        %v2937 = vadd.f32 0.0, %v2936
        %2938 = vdwg.mxu0
        %2939 = vrot.lane.b32.xlu0 %v2796, 64
        %v2940 = vpop.permute.xlu0 %2939
        %2941 = vrot.lane.b32.xlu0 %v2801, 64
        %v2942 = vpop.permute.xlu0 %2941
        %v2944 = vsel %vm1411, %v2940, 0
        %v2947 = vsel %vm1411, %v2942, 0
        %2949 = vmatpush.bf16.xpose.msra.mxu0 0
        %2950 = vmatpush.bf16.xpose.msra.mxu0 0
        %2951 = vmatpush.bf16.xpose.msra.mxu0 0
        %2952 = vmatpush.bf16.xpose.msra.mxu0 0
        %2953 = vmatpush.bf16.xpose.msra.mxu0 0
        %2954 = vmatpush.bf16.xpose.msra.mxu0 0
        %2955 = vmatpush.bf16.xpose.msra.mxu0 0
        %2956 = vmatpush.bf16.xpose.msra.mxu0 %v2947
        %2957 = vmatmul.bf16.gmra.mxu0 %v2944
        %v2958 = vpop.f32.mrf.mxu0
        %v2959 = vadd.f32 0.0, %v2958
        %v2960 = vpop.f32.mrf.mxu0
        %v2961 = vadd.f32 0.0, %v2960
        %2962 = vdwg.mxu0
        %v2963 = vsel %vm1432, %v2959, -inf
        %2964 = vmax.xlane.f32.xlu0 %v2963
        %v2965 = vpop.xlane.xlu0 %2964
        %v2966 = vsel %vm1436, %v2961, -inf
        %2967 = vmax.xlane.f32.xlu0 %v2966
        %v2968 = vpop.xlane.xlu0 %2967
        %v2969 = vsub.f32 %v2959, %v2965
        %v2970 = vsub.f32 %v2961, %v2968
        %v2971 = vmul.f32 %v2969, 1.442695
        %v2972 = vpow.pop %v2971
        %v2973 = vmul.f32 %v2970, 1.442695
        %v2974 = vpow.pop %v2973
        %v2975 = vsel %vm1432, %v2972, 0.0
        %2976 = vadd.xlane.f32.xlu0 %v2975
        %v2977 = vpop.xlane.xlu0 %2976
        %v2978 = vsel %vm1436, %v2974, 0.0
        %2979 = vadd.xlane.f32.xlu0 %v2978
        %v2980 = vpop.xlane.xlu0 %2979
        %v2981 = vrcp.pop %v2977
        %v2982 = vrcp.pop %v2980
        %v2983 = vmul.f32 %v2972, %v2981
        %v2984 = vmul.f32 %v2974, %v2982
        %v2985 = vpack.c.bf16 %v2984, %v2983
        %2986 = vrot.lane.b32.xlu0 %v2849, 64
        %v2987 = vpop.permute.xlu0 %2986
        %v2989 = vsel %vm1432, %v2985, 0
        %v2992 = vand.u32 %v2987, %v1468
        %2994 = vmatpush.bf16.msra.mxu0 0
        %2995 = vmatpush.bf16.msra.mxu0 0
        %2996 = vmatpush.bf16.msra.mxu0 0
        %2997 = vmatpush.bf16.msra.mxu0 0
        %2998 = vmatpush.bf16.msra.mxu0 0
        %2999 = vmatpush.bf16.msra.mxu0 0
        %3000 = vmatpush.bf16.msra.mxu0 0
        %3001 = vmatpush.bf16.msra.mxu0 %v2992
        %3002 = vmatmul.bf16.gmra.mxu0 %v2989
        %v3003 = vpop.f32.mrf.mxu0
        %v3004 = vadd.f32 0.0, %v3003
        %v3005 = vpop.f32.mrf.mxu0
        %v3006 = vadd.f32 0.0, %v3005
        %3007 = vdwg.mxu0
        %3008 = vrot.lane.b32.xlu0 %v2796, 32
        %v3009 = vpop.permute.xlu0 %3008
        %3010 = vrot.lane.b32.xlu0 %v2801, 32
        %v3011 = vpop.permute.xlu0 %3010
        %v3013 = vsel %vm1411, %v3009, 0
        %v3016 = vsel %vm1411, %v3011, 0
        %3018 = vmatpush.bf16.xpose.msra.mxu0 0
        %3019 = vmatpush.bf16.xpose.msra.mxu0 0
        %3020 = vmatpush.bf16.xpose.msra.mxu0 0
        %3021 = vmatpush.bf16.xpose.msra.mxu0 0
        %3022 = vmatpush.bf16.xpose.msra.mxu0 0
        %3023 = vmatpush.bf16.xpose.msra.mxu0 0
        %3024 = vmatpush.bf16.xpose.msra.mxu0 0
        %3025 = vmatpush.bf16.xpose.msra.mxu0 %v3016
        %3026 = vmatmul.bf16.gmra.mxu0 %v3013
        %v3027 = vpop.f32.mrf.mxu0
        %v3028 = vadd.f32 0.0, %v3027
        %v3029 = vpop.f32.mrf.mxu0
        %v3030 = vadd.f32 0.0, %v3029
        %3031 = vdwg.mxu0
        %v3032 = vsel %vm1432, %v3028, -inf
        %3033 = vmax.xlane.f32.xlu0 %v3032
        %v3034 = vpop.xlane.xlu0 %3033
        %v3035 = vsel %vm1436, %v3030, -inf
        %3036 = vmax.xlane.f32.xlu0 %v3035
        %v3037 = vpop.xlane.xlu0 %3036
        %v3038 = vsub.f32 %v3028, %v3034
        %v3039 = vsub.f32 %v3030, %v3037
        %v3040 = vmul.f32 %v3038, 1.442695
        %v3041 = vpow.pop %v3040
        %v3042 = vmul.f32 %v3039, 1.442695
        %v3043 = vpow.pop %v3042
        %v3044 = vsel %vm1432, %v3041, 0.0
        %3045 = vadd.xlane.f32.xlu0 %v3044
        %v3046 = vpop.xlane.xlu0 %3045
        %v3047 = vsel %vm1436, %v3043, 0.0
        %3048 = vadd.xlane.f32.xlu0 %v3047
        %v3049 = vpop.xlane.xlu0 %3048
        %v3050 = vrcp.pop %v3046
        %v3051 = vrcp.pop %v3049
        %v3052 = vmul.f32 %v3041, %v3050
        %v3053 = vmul.f32 %v3043, %v3051
        %v3054 = vpack.c.bf16 %v3053, %v3052
        %3055 = vrot.lane.b32.xlu0 %v2849, 32
        %v3056 = vpop.permute.xlu0 %3055
        %v3058 = vsel %vm1432, %v3054, 0
        %v3061 = vand.u32 %v3056, %v1468
        %3063 = vmatpush.bf16.msra.mxu0 0
        %3064 = vmatpush.bf16.msra.mxu0 0
        %3065 = vmatpush.bf16.msra.mxu0 0
        %3066 = vmatpush.bf16.msra.mxu0 0
        %3067 = vmatpush.bf16.msra.mxu0 0
        %3068 = vmatpush.bf16.msra.mxu0 0
        %3069 = vmatpush.bf16.msra.mxu0 0
        %3070 = vmatpush.bf16.msra.mxu0 %v3061
        %3071 = vmatmul.bf16.gmra.mxu0 %v3058
        %v3072 = vpop.f32.mrf.mxu0
        %v3073 = vadd.f32 0.0, %v3072
        %v3074 = vpop.f32.mrf.mxu0
        %v3075 = vadd.f32 0.0, %v3074
        %3076 = vdwg.mxu0
        %3079 = vrot.lane.b32.xlu0 %v2935, 32
        %v3080 = vpop.permute.xlu0 %3079
        %3081 = vrot.lane.b32.xlu0 %v2937, 32
        %v3082 = vpop.permute.xlu0 %3081
        %3087 = vrot.lane.b32.xlu0 %v3004, 64
        %v3088 = vpop.permute.xlu0 %3087
        %3089 = vrot.lane.b32.xlu0 %v3006, 64
        %v3090 = vpop.permute.xlu0 %3089
        %3095 = vrot.lane.b32.xlu0 %v3073, 96
        %v3096 = vpop.permute.xlu0 %3095
        %3097 = vrot.lane.b32.xlu0 %v3075, 96
        %v3098 = vpop.permute.xlu0 %3097
        %v3101 = vsel %vm1411, %v2866, %v3080
        %v3102 = vsel %vm1411, %v2868, %v3082
        %v3103 = vsel %vm1719, %v3101, %v3088
        %v3104 = vsel %vm1719, %v3102, %v3090
        %v3105 = vsel %vm1722, %v3103, %v3096
        %v3106 = vsel %vm1722, %v3104, %v3098
        %v3107 = vpack.c.bf16 %v3106, %v3105
        %v3108 = vld [vmem:[#allocation24] sm:$0xf]
        %v3109 = vld [vmem:[#allocation24 + $0x4] sm:$0xf]
        %v3110 = vld [vmem:[#allocation24 + $0x8] sm:$0xf]
        %v3111 = vld [vmem:[#allocation24 + $0xc] sm:$0xf]
        %v3112 = vld [vmem:[#allocation24 + $0x10] sm:$0xf]
        %v3113 = vld [vmem:[#allocation24 + $0x14] sm:$0xf]
        %v3114 = vld [vmem:[#allocation24 + $0x18] sm:$0xf]
        %v3115 = vld [vmem:[#allocation24 + $0x1c] sm:$0xf]
        %v3116 = vld [vmem:[#allocation24 + $0x20] sm:$0xf]
        %v3117 = vld [vmem:[#allocation24 + $0x24] sm:$0xf]
        %v3118 = vld [vmem:[#allocation24 + $0x28] sm:$0xf]
        %v3119 = vld [vmem:[#allocation24 + $0x2c] sm:$0xf]
        %v3120 = vld [vmem:[#allocation24 + $0x30] sm:$0xf]
        %v3121 = vld [vmem:[#allocation24 + $0x34] sm:$0xf]
        %v3122 = vld [vmem:[#allocation24 + $0x38] sm:$0xf]
        %v3123 = vld [vmem:[#allocation24 + $0x3c] sm:$0xf]
        %v3124 = vld [vmem:[#allocation25] sm:$0x1]
        %v3126 = vperm.slane %v3124, 0
        %v3144 = vunpack.c.l.b16 %v3108
        %v3145 = vunpack.c.l.b16 %v3109
        %v3146 = vunpack.c.l.b16 %v3110
        %v3147 = vunpack.c.l.b16 %v3111
        %v3148 = vunpack.c.l.b16 %v3112
        %v3149 = vunpack.c.l.b16 %v3113
        %v3150 = vunpack.c.l.b16 %v3114
        %v3151 = vunpack.c.l.b16 %v3115
        %v3152 = vunpack.c.l.b16 %v3116
        %v3153 = vunpack.c.l.b16 %v3117
        %v3154 = vunpack.c.l.b16 %v3118
        %v3155 = vunpack.c.l.b16 %v3119
        %v3156 = vunpack.c.l.b16 %v3120
        %v3157 = vunpack.c.l.b16 %v3121
        %v3158 = vunpack.c.l.b16 %v3122
        %v3159 = vunpack.c.l.b16 %v3123
        %v3160 = vpack.c.b16 %v3145, %v3144
        %v3161 = vpack.c.b16 %v3147, %v3146
        %v3162 = vpack.c.b16 %v3149, %v3148
        %v3163 = vpack.c.b16 %v3151, %v3150
        %v3164 = vpack.c.b16 %v3153, %v3152
        %v3165 = vpack.c.b16 %v3155, %v3154
        %v3166 = vpack.c.b16 %v3157, %v3156
        %v3167 = vpack.c.b16 %v3159, %v3158
        %3176 = vmatpush.bf16.msra.mxu0 %v3167
        %3177 = vmatpush.bf16.msra.mxu0 %v3166
        %3178 = vmatpush.bf16.msra.mxu0 %v3165
        %3179 = vmatpush.bf16.msra.mxu0 %v3164
        %3180 = vmatpush.bf16.msra.mxu0 %v3163
        %3181 = vmatpush.bf16.msra.mxu0 %v3162
        %3182 = vmatpush.bf16.msra.mxu0 %v3161
        %3183 = vmatpush.bf16.msra.mxu0 %v3160
        %3184 = vmatmul.bf16.gmra.mxu0 %v3107
        %v3185 = vpop.f32.mrf.mxu0
        %v3186 = vadd.f32 %v3126, %v3185
        %v3187 = vpop.f32.mrf.mxu0
        %v3188 = vadd.f32 %v3126, %v3187
        %3189 = vdwg.mxu0
        %v3190 = vadd.f32 %v2517, %v3186
        %v3191 = vadd.f32 %v2518, %v3188
        %v3192 = vld [vmem:[#allocation27] sm:$0x1]
        %v3193 = vld [vmem:[#allocation28] sm:$0x1]
        %3194 = vadd.xlane.f32.xlu0 %v3190
        %v3195 = vpop.xlane.xlu0 %3194
        %v3196 = vsel %vm1124, %v3191, 0.0
        %3197 = vadd.xlane.f32.xlu0 %v3196
        %v3198 = vpop.xlane.xlu0 %3197
        %v3199 = vmul.f32 %v3195, %v1134
        %v3200 = vmul.f32 %v3198, %v1134
        %v3201 = vsub.f32 %v3190, %v3199
        %v3202 = vsub.f32 %v3191, %v3200
        %v3203 = vmul.f32 %v3201, %v3201
        %v3204 = vmul.f32 %v3202, %v3202
        %3205 = vadd.xlane.f32.xlu0 %v3203
        %v3206 = vpop.xlane.xlu0 %3205
        %v3207 = vsel %vm1124, %v3204, 0.0
        %3208 = vadd.xlane.f32.xlu0 %v3207
        %v3209 = vpop.xlane.xlu0 %3208
        %v3210 = vmul.f32 %v3206, %v1134
        %v3211 = vmul.f32 %v3209, %v1134
        %v3212 = vadd.f32 %v3210, 1e-05
        %v3213 = vadd.f32 %v3211, 1e-05
        %v3214 = vrsqrt.pop %v3212
        %v3215 = vmul.f32 %v3214, %v3212
        %v3216 = vmul.f32 %v3215, %v3214
        %v3217 = vmul.f32 0.5, %v3216
        %v3218 = vsub.f32 1.5, %v3217
        %v3219 = vmul.f32 %v3214, %v3218
        %vm3220 = vweird.f32 %v3212
        %vm3221 = vweird.f32 %v3214
        %vm3222 = vmor %vm3220, %vm3221
        %v3223 = vsel %vm3222, %v3214, %v3219
        %v3224 = vrsqrt.pop %v3213
        %v3225 = vmul.f32 %v3224, %v3213
        %v3226 = vmul.f32 %v3225, %v3224
        %v3227 = vmul.f32 0.5, %v3226
        %v3228 = vsub.f32 1.5, %v3227
        %v3229 = vmul.f32 %v3224, %v3228
        %vm3230 = vweird.f32 %v3213
        %vm3231 = vweird.f32 %v3224
        %vm3232 = vmor %vm3230, %vm3231
        %v3233 = vsel %vm3232, %v3224, %v3229
        %v3234 = vmul.f32 %v3201, %v3223
        %v3235 = vmul.f32 %v3202, %v3233
        %v3237 = vperm.slane %v3192, 0
        %v3239 = vmul.f32 %v3234, %v3237
        %v3240 = vmul.f32 %v3235, %v3237
        %v3242 = vperm.slane %v3193, 0
        %v3244 = vadd.f32 %v3239, %v3242
        %v3245 = vadd.f32 %v3240, %v3242
        %v3246 = vpack.c.bf16 %v3245, %v3244
        %v3247 = vld [vmem:[#allocation30] sm:$0xff]
        %v3248 = vld [vmem:[#allocation30 + $0x8] sm:$0xff]
        %v3249 = vld [vmem:[#allocation30 + $0x10] sm:$0xff]
        %v3250 = vld [vmem:[#allocation30 + $0x18] sm:$0xff]
        %v3251 = vld [vmem:[#allocation30 + $0x20] sm:$0xff]
        %v3252 = vld [vmem:[#allocation30 + $0x28] sm:$0xff]
        %v3253 = vld [vmem:[#allocation30 + $0x30] sm:$0xff]
        %v3254 = vld [vmem:[#allocation30 + $0x38] sm:$0xff]
        %v3255 = vld [vmem:[#allocation30 + $0x40] sm:$0xff]
        %v3256 = vld [vmem:[#allocation30 + $0x48] sm:$0xff]
        %v3257 = vld [vmem:[#allocation30 + $0x50] sm:$0xff]
        %v3258 = vld [vmem:[#allocation30 + $0x58] sm:$0xff]
        %v3259 = vld [vmem:[#allocation30 + $0x60] sm:$0xff]
        %v3260 = vld [vmem:[#allocation30 + $0x68] sm:$0xff]
        %v3261 = vld [vmem:[#allocation30 + $0x70] sm:$0xff]
        %v3262 = vld [vmem:[#allocation30 + $0x78] sm:$0xff]
        %v3263 = vld [vmem:[#allocation30 + $0x80] sm:$0xff]
        %v3264 = vld [vmem:[#allocation30 + $0x88] sm:$0xff]
        %v3265 = vld [vmem:[#allocation30 + $0x90] sm:$0xff]
        %v3266 = vld [vmem:[#allocation30 + $0x98] sm:$0xff]
        %v3267 = vld [vmem:[#allocation30 + $0xa0] sm:$0xff]
        %v3268 = vld [vmem:[#allocation30 + $0xa8] sm:$0xff]
        %v3269 = vld [vmem:[#allocation30 + $0xb0] sm:$0xff]
        %v3270 = vld [vmem:[#allocation30 + $0xb8] sm:$0xff]
        %v3271 = vld [vmem:[#allocation30 + $0xc0] sm:$0xff]
        %v3272 = vld [vmem:[#allocation30 + $0xc8] sm:$0xff]
        %v3273 = vld [vmem:[#allocation30 + $0xd0] sm:$0xff]
        %v3274 = vld [vmem:[#allocation30 + $0xd8] sm:$0xff]
        %v3275 = vld [vmem:[#allocation30 + $0xe0] sm:$0xff]
        %v3276 = vld [vmem:[#allocation30 + $0xe8] sm:$0xff]
        %v3277 = vld [vmem:[#allocation30 + $0xf0] sm:$0xff]
        %v3278 = vld [vmem:[#allocation30 + $0xf8] sm:$0xff]
        %v3279 = vld [vmem:[%s23] sm:$0xf]
        %v3281 = vperm.slane %v3279, 0
        %v3282 = vperm.slane %v3279, 1
        %v3283 = vperm.slane %v3279, 2
        %v3284 = vperm.slane %v3279, 3
        %v3321 = vunpack.c.l.b16 %v3247
        %v3322 = vunpack.c.h.b16 %v3247
        %v3323 = vunpack.c.l.b16 %v3248
        %v3324 = vunpack.c.h.b16 %v3248
        %v3325 = vunpack.c.l.b16 %v3249
        %v3326 = vunpack.c.h.b16 %v3249
        %v3327 = vunpack.c.l.b16 %v3250
        %v3328 = vunpack.c.h.b16 %v3250
        %v3329 = vunpack.c.l.b16 %v3251
        %v3330 = vunpack.c.h.b16 %v3251
        %v3331 = vunpack.c.l.b16 %v3252
        %v3332 = vunpack.c.h.b16 %v3252
        %v3333 = vunpack.c.l.b16 %v3253
        %v3334 = vunpack.c.h.b16 %v3253
        %v3335 = vunpack.c.l.b16 %v3254
        %v3336 = vunpack.c.h.b16 %v3254
        %v3337 = vunpack.c.l.b16 %v3255
        %v3338 = vunpack.c.h.b16 %v3255
        %v3339 = vunpack.c.l.b16 %v3256
        %v3340 = vunpack.c.h.b16 %v3256
        %v3341 = vunpack.c.l.b16 %v3257
        %v3342 = vunpack.c.h.b16 %v3257
        %v3343 = vunpack.c.l.b16 %v3258
        %v3344 = vunpack.c.h.b16 %v3258
        %v3345 = vunpack.c.l.b16 %v3259
        %v3346 = vunpack.c.h.b16 %v3259
        %v3347 = vunpack.c.l.b16 %v3260
        %v3348 = vunpack.c.h.b16 %v3260
        %v3349 = vunpack.c.l.b16 %v3261
        %v3350 = vunpack.c.h.b16 %v3261
        %v3351 = vunpack.c.l.b16 %v3262
        %v3352 = vunpack.c.h.b16 %v3262
        %v3353 = vunpack.c.l.b16 %v3263
        %v3354 = vunpack.c.h.b16 %v3263
        %v3355 = vunpack.c.l.b16 %v3264
        %v3356 = vunpack.c.h.b16 %v3264
        %v3357 = vunpack.c.l.b16 %v3265
        %v3358 = vunpack.c.h.b16 %v3265
        %v3359 = vunpack.c.l.b16 %v3266
        %v3360 = vunpack.c.h.b16 %v3266
        %v3361 = vunpack.c.l.b16 %v3267
        %v3362 = vunpack.c.h.b16 %v3267
        %v3363 = vunpack.c.l.b16 %v3268
        %v3364 = vunpack.c.h.b16 %v3268
        %v3365 = vunpack.c.l.b16 %v3269
        %v3366 = vunpack.c.h.b16 %v3269
        %v3367 = vunpack.c.l.b16 %v3270
        %v3368 = vunpack.c.h.b16 %v3270
        %v3369 = vunpack.c.l.b16 %v3271
        %v3370 = vunpack.c.h.b16 %v3271
        %v3371 = vunpack.c.l.b16 %v3272
        %v3372 = vunpack.c.h.b16 %v3272
        %v3373 = vunpack.c.l.b16 %v3273
        %v3374 = vunpack.c.h.b16 %v3273
        %v3375 = vunpack.c.l.b16 %v3274
        %v3376 = vunpack.c.h.b16 %v3274
        %v3377 = vunpack.c.l.b16 %v3275
        %v3378 = vunpack.c.h.b16 %v3275
        %v3379 = vunpack.c.l.b16 %v3276
        %v3380 = vunpack.c.h.b16 %v3276
        %v3381 = vunpack.c.l.b16 %v3277
        %v3382 = vunpack.c.h.b16 %v3277
        %v3383 = vunpack.c.l.b16 %v3278
        %v3384 = vunpack.c.h.b16 %v3278
        %v3385 = vpack.c.b16 %v3325, %v3321
        %v3386 = vpack.c.b16 %v3326, %v3322
        %v3387 = vpack.c.b16 %v3327, %v3323
        %v3388 = vpack.c.b16 %v3328, %v3324
        %v3389 = vpack.c.b16 %v3333, %v3329
        %v3390 = vpack.c.b16 %v3334, %v3330
        %v3391 = vpack.c.b16 %v3335, %v3331
        %v3392 = vpack.c.b16 %v3336, %v3332
        %v3393 = vpack.c.b16 %v3341, %v3337
        %v3394 = vpack.c.b16 %v3342, %v3338
        %v3395 = vpack.c.b16 %v3343, %v3339
        %v3396 = vpack.c.b16 %v3344, %v3340
        %v3397 = vpack.c.b16 %v3349, %v3345
        %v3398 = vpack.c.b16 %v3350, %v3346
        %v3399 = vpack.c.b16 %v3351, %v3347
        %v3400 = vpack.c.b16 %v3352, %v3348
        %v3401 = vpack.c.b16 %v3357, %v3353
        %v3402 = vpack.c.b16 %v3358, %v3354
        %v3403 = vpack.c.b16 %v3359, %v3355
        %v3404 = vpack.c.b16 %v3360, %v3356
        %v3405 = vpack.c.b16 %v3365, %v3361
        %v3406 = vpack.c.b16 %v3366, %v3362
        %v3407 = vpack.c.b16 %v3367, %v3363
        %v3408 = vpack.c.b16 %v3368, %v3364
        %v3409 = vpack.c.b16 %v3373, %v3369
        %v3410 = vpack.c.b16 %v3374, %v3370
        %v3411 = vpack.c.b16 %v3375, %v3371
        %v3412 = vpack.c.b16 %v3376, %v3372
        %v3413 = vpack.c.b16 %v3381, %v3377
        %v3414 = vpack.c.b16 %v3382, %v3378
        %v3415 = vpack.c.b16 %v3383, %v3379
        %v3416 = vpack.c.b16 %v3384, %v3380
        %3449 = vmatpush.bf16.msra.mxu0 %v3413
        %3450 = vmatpush.bf16.msra.mxu0 %v3409
        %3451 = vmatpush.bf16.msra.mxu0 %v3405
        %3452 = vmatpush.bf16.msra.mxu0 %v3401
        %3453 = vmatpush.bf16.msra.mxu0 %v3397
        %3454 = vmatpush.bf16.msra.mxu0 %v3393
        %3455 = vmatpush.bf16.msra.mxu0 %v3389
        %3456 = vmatpush.bf16.msra.mxu0 %v3385
        %3457 = vmatmul.bf16.gmra.mxu0 %v3246
        %v3458 = vpop.f32.mrf.mxu0
        %v3459 = vadd.f32 %v3281, %v3458
        %v3460 = vpop.f32.mrf.mxu0
        %v3461 = vadd.f32 %v3281, %v3460
        %3462 = vdwg.mxu0
        %3463 = vmatpush.bf16.msra.mxu0 %v3414
        %3464 = vmatpush.bf16.msra.mxu0 %v3410
        %3465 = vmatpush.bf16.msra.mxu0 %v3406
        %3466 = vmatpush.bf16.msra.mxu0 %v3402
        %3467 = vmatpush.bf16.msra.mxu0 %v3398
        %3468 = vmatpush.bf16.msra.mxu0 %v3394
        %3469 = vmatpush.bf16.msra.mxu0 %v3390
        %3470 = vmatpush.bf16.msra.mxu0 %v3386
        %3471 = vmatmul.bf16.gmra.mxu0 %v3246
        %v3472 = vpop.f32.mrf.mxu0
        %v3473 = vadd.f32 %v3282, %v3472
        %v3474 = vpop.f32.mrf.mxu0
        %v3475 = vadd.f32 %v3282, %v3474
        %3476 = vdwg.mxu0
        %3477 = vmatpush.bf16.msra.mxu0 %v3415
        %3478 = vmatpush.bf16.msra.mxu0 %v3411
        %3479 = vmatpush.bf16.msra.mxu0 %v3407
        %3480 = vmatpush.bf16.msra.mxu0 %v3403
        %3481 = vmatpush.bf16.msra.mxu0 %v3399
        %3482 = vmatpush.bf16.msra.mxu0 %v3395
        %3483 = vmatpush.bf16.msra.mxu0 %v3391
        %3484 = vmatpush.bf16.msra.mxu0 %v3387
        %3485 = vmatmul.bf16.gmra.mxu0 %v3246
        %v3486 = vpop.f32.mrf.mxu0
        %v3487 = vadd.f32 %v3283, %v3486
        %v3488 = vpop.f32.mrf.mxu0
        %v3489 = vadd.f32 %v3283, %v3488
        %3490 = vdwg.mxu0
        %3491 = vmatpush.bf16.msra.mxu0 %v3416
        %3492 = vmatpush.bf16.msra.mxu0 %v3412
        %3493 = vmatpush.bf16.msra.mxu0 %v3408
        %3494 = vmatpush.bf16.msra.mxu0 %v3404
        %3495 = vmatpush.bf16.msra.mxu0 %v3400
        %3496 = vmatpush.bf16.msra.mxu0 %v3396
        %3497 = vmatpush.bf16.msra.mxu0 %v3392
        %3498 = vmatpush.bf16.msra.mxu0 %v3388
        %3499 = vmatmul.bf16.gmra.mxu0 %v3246
        %v3500 = vpop.f32.mrf.mxu0
        %v3501 = vadd.f32 %v3284, %v3500
        %v3502 = vpop.f32.mrf.mxu0
        %v3503 = vadd.f32 %v3284, %v3502
        %3504 = vdwg.mxu0
        %v3505 = vmul.f32 %v3459, %v3459
        %v3506 = vmul.f32 %v3473, %v3473
        %v3507 = vmul.f32 %v3487, %v3487
        %v3508 = vmul.f32 %v3501, %v3501
        %v3509 = vmul.f32 %v3461, %v3461
        %v3510 = vmul.f32 %v3475, %v3475
        %v3511 = vmul.f32 %v3489, %v3489
        %v3512 = vmul.f32 %v3503, %v3503
        %v3513 = vmul.f32 %v3459, %v3505
        %v3514 = vmul.f32 %v3473, %v3506
        %v3515 = vmul.f32 %v3487, %v3507
        %v3516 = vmul.f32 %v3501, %v3508
        %v3517 = vmul.f32 %v3461, %v3509
        %v3518 = vmul.f32 %v3475, %v3510
        %v3519 = vmul.f32 %v3489, %v3511
        %v3520 = vmul.f32 %v3503, %v3512
        %v3521 = vmul.f32 %v3513, 0.044715
        %v3522 = vmul.f32 %v3514, 0.044715
        %v3523 = vmul.f32 %v3515, 0.044715
        %v3524 = vmul.f32 %v3516, 0.044715
        %v3525 = vmul.f32 %v3517, 0.044715
        %v3526 = vmul.f32 %v3518, 0.044715
        %v3527 = vmul.f32 %v3519, 0.044715
        %v3528 = vmul.f32 %v3520, 0.044715
        %v3529 = vadd.f32 %v3459, %v3521
        %v3530 = vadd.f32 %v3473, %v3522
        %v3531 = vadd.f32 %v3487, %v3523
        %v3532 = vadd.f32 %v3501, %v3524
        %v3533 = vadd.f32 %v3461, %v3525
        %v3534 = vadd.f32 %v3475, %v3526
        %v3535 = vadd.f32 %v3489, %v3527
        %v3536 = vadd.f32 %v3503, %v3528
        %v3537 = vmul.f32 %v3529, 0.7978846
        %v3538 = vmul.f32 %v3530, 0.7978846
        %v3539 = vmul.f32 %v3531, 0.7978846
        %v3540 = vmul.f32 %v3532, 0.7978846
        %v3541 = vmul.f32 %v3533, 0.7978846
        %v3542 = vmul.f32 %v3534, 0.7978846
        %v3543 = vmul.f32 %v3535, 0.7978846
        %v3544 = vmul.f32 %v3536, 0.7978846
        %v3545 = vtanh.pop %v3537
        %v3546 = vtanh.pop %v3538
        %v3547 = vtanh.pop %v3539
        %v3548 = vtanh.pop %v3540
        %v3549 = vtanh.pop %v3541
        %v3550 = vtanh.pop %v3542
        %v3551 = vtanh.pop %v3543
        %v3552 = vtanh.pop %v3544
        %v3553 = vadd.f32 %v3545, 1.0
        %v3554 = vadd.f32 %v3546, 1.0
        %v3555 = vadd.f32 %v3547, 1.0
        %v3556 = vadd.f32 %v3548, 1.0
        %v3557 = vadd.f32 %v3549, 1.0
        %v3558 = vadd.f32 %v3550, 1.0
        %v3559 = vadd.f32 %v3551, 1.0
        %v3560 = vadd.f32 %v3552, 1.0
        %v3561 = vmul.f32 %v3553, 0.5
        %v3562 = vmul.f32 %v3554, 0.5
        %v3563 = vmul.f32 %v3555, 0.5
        %v3564 = vmul.f32 %v3556, 0.5
        %v3565 = vmul.f32 %v3557, 0.5
        %v3566 = vmul.f32 %v3558, 0.5
        %v3567 = vmul.f32 %v3559, 0.5
        %v3568 = vmul.f32 %v3560, 0.5
        %v3569 = vmul.f32 %v3459, %v3561
        %v3570 = vmul.f32 %v3473, %v3562
        %v3571 = vmul.f32 %v3487, %v3563
        %v3572 = vmul.f32 %v3501, %v3564
        %v3573 = vmul.f32 %v3461, %v3565
        %v3574 = vmul.f32 %v3475, %v3566
        %v3575 = vmul.f32 %v3489, %v3567
        %v3576 = vmul.f32 %v3503, %v3568
        %v3577 = vpack.c.bf16 %v3573, %v3569
        %v3578 = vpack.c.bf16 %v3574, %v3570
        %v3579 = vpack.c.bf16 %v3575, %v3571
        %v3580 = vpack.c.bf16 %v3576, %v3572
        %v3581 = vld [vmem:[#allocation31] sm:$0xf]
        %v3582 = vld [vmem:[#allocation31 + $0x4] sm:$0xf]
        %v3583 = vld [vmem:[#allocation31 + $0x8] sm:$0xf]
        %v3584 = vld [vmem:[#allocation31 + $0xc] sm:$0xf]
        %v3585 = vld [vmem:[#allocation31 + $0x10] sm:$0xf]
        %v3586 = vld [vmem:[#allocation31 + $0x14] sm:$0xf]
        %v3587 = vld [vmem:[#allocation31 + $0x18] sm:$0xf]
        %v3588 = vld [vmem:[#allocation31 + $0x1c] sm:$0xf]
        %v3589 = vld [vmem:[#allocation31 + $0x20] sm:$0xf]
        %v3590 = vld [vmem:[#allocation31 + $0x24] sm:$0xf]
        %v3591 = vld [vmem:[#allocation31 + $0x28] sm:$0xf]
        %v3592 = vld [vmem:[#allocation31 + $0x2c] sm:$0xf]
        %v3593 = vld [vmem:[#allocation31 + $0x30] sm:$0xf]
        %v3594 = vld [vmem:[#allocation31 + $0x34] sm:$0xf]
        %v3595 = vld [vmem:[#allocation31 + $0x38] sm:$0xf]
        %v3596 = vld [vmem:[#allocation31 + $0x3c] sm:$0xf]
        %v3597 = vld [vmem:[#allocation31 + $0x40] sm:$0xf]
        %v3598 = vld [vmem:[#allocation31 + $0x44] sm:$0xf]
        %v3599 = vld [vmem:[#allocation31 + $0x48] sm:$0xf]
        %v3600 = vld [vmem:[#allocation31 + $0x4c] sm:$0xf]
        %v3601 = vld [vmem:[#allocation31 + $0x50] sm:$0xf]
        %v3602 = vld [vmem:[#allocation31 + $0x54] sm:$0xf]
        %v3603 = vld [vmem:[#allocation31 + $0x58] sm:$0xf]
        %v3604 = vld [vmem:[#allocation31 + $0x5c] sm:$0xf]
        %v3605 = vld [vmem:[#allocation31 + $0x60] sm:$0xf]
        %v3606 = vld [vmem:[#allocation31 + $0x64] sm:$0xf]
        %v3607 = vld [vmem:[#allocation31 + $0x68] sm:$0xf]
        %v3608 = vld [vmem:[#allocation31 + $0x6c] sm:$0xf]
        %v3609 = vld [vmem:[#allocation31 + $0x70] sm:$0xf]
        %v3610 = vld [vmem:[#allocation31 + $0x74] sm:$0xf]
        %v3611 = vld [vmem:[#allocation31 + $0x78] sm:$0xf]
        %v3612 = vld [vmem:[#allocation31 + $0x7c] sm:$0xf]
        %v3613 = vld [vmem:[#allocation31 + $0x80] sm:$0xf]
        %v3614 = vld [vmem:[#allocation31 + $0x84] sm:$0xf]
        %v3615 = vld [vmem:[#allocation31 + $0x88] sm:$0xf]
        %v3616 = vld [vmem:[#allocation31 + $0x8c] sm:$0xf]
        %v3617 = vld [vmem:[#allocation31 + $0x90] sm:$0xf]
        %v3618 = vld [vmem:[#allocation31 + $0x94] sm:$0xf]
        %v3619 = vld [vmem:[#allocation31 + $0x98] sm:$0xf]
        %v3620 = vld [vmem:[#allocation31 + $0x9c] sm:$0xf]
        %v3621 = vld [vmem:[#allocation31 + $0xa0] sm:$0xf]
        %v3622 = vld [vmem:[#allocation31 + $0xa4] sm:$0xf]
        %v3623 = vld [vmem:[#allocation31 + $0xa8] sm:$0xf]
        %v3624 = vld [vmem:[#allocation31 + $0xac] sm:$0xf]
        %v3625 = vld [vmem:[#allocation31 + $0xb0] sm:$0xf]
        %v3626 = vld [vmem:[#allocation31 + $0xb4] sm:$0xf]
        %v3627 = vld [vmem:[#allocation31 + $0xb8] sm:$0xf]
        %v3628 = vld [vmem:[#allocation31 + $0xbc] sm:$0xf]
        %v3629 = vld [vmem:[#allocation31 + $0xc0] sm:$0xf]
        %v3630 = vld [vmem:[#allocation31 + $0xc4] sm:$0xf]
        %v3631 = vld [vmem:[#allocation31 + $0xc8] sm:$0xf]
        %v3632 = vld [vmem:[#allocation31 + $0xcc] sm:$0xf]
        %v3633 = vld [vmem:[#allocation31 + $0xd0] sm:$0xf]
        %v3634 = vld [vmem:[#allocation31 + $0xd4] sm:$0xf]
        %v3635 = vld [vmem:[#allocation31 + $0xd8] sm:$0xf]
        %v3636 = vld [vmem:[#allocation31 + $0xdc] sm:$0xf]
        %v3637 = vld [vmem:[#allocation31 + $0xe0] sm:$0xf]
        %v3638 = vld [vmem:[#allocation31 + $0xe4] sm:$0xf]
        %v3639 = vld [vmem:[#allocation31 + $0xe8] sm:$0xf]
        %v3640 = vld [vmem:[#allocation31 + $0xec] sm:$0xf]
        %v3641 = vld [vmem:[#allocation31 + $0xf0] sm:$0xf]
        %v3642 = vld [vmem:[#allocation31 + $0xf4] sm:$0xf]
        %v3643 = vld [vmem:[#allocation31 + $0xf8] sm:$0xf]
        %v3644 = vld [vmem:[#allocation31 + $0xfc] sm:$0xf]
        %v3709 = vunpack.c.l.b16 %v3581
        %v3710 = vunpack.c.l.b16 %v3582
        %v3711 = vunpack.c.l.b16 %v3583
        %v3712 = vunpack.c.l.b16 %v3584
        %v3713 = vunpack.c.l.b16 %v3585
        %v3714 = vunpack.c.l.b16 %v3586
        %v3715 = vunpack.c.l.b16 %v3587
        %v3716 = vunpack.c.l.b16 %v3588
        %v3717 = vunpack.c.l.b16 %v3589
        %v3718 = vunpack.c.l.b16 %v3590
        %v3719 = vunpack.c.l.b16 %v3591
        %v3720 = vunpack.c.l.b16 %v3592
        %v3721 = vunpack.c.l.b16 %v3593
        %v3722 = vunpack.c.l.b16 %v3594
        %v3723 = vunpack.c.l.b16 %v3595
        %v3724 = vunpack.c.l.b16 %v3596
        %v3725 = vunpack.c.l.b16 %v3597
        %v3726 = vunpack.c.l.b16 %v3598
        %v3727 = vunpack.c.l.b16 %v3599
        %v3728 = vunpack.c.l.b16 %v3600
        %v3729 = vunpack.c.l.b16 %v3601
        %v3730 = vunpack.c.l.b16 %v3602
        %v3731 = vunpack.c.l.b16 %v3603
        %v3732 = vunpack.c.l.b16 %v3604
        %v3733 = vunpack.c.l.b16 %v3605
        %v3734 = vunpack.c.l.b16 %v3606
        %v3735 = vunpack.c.l.b16 %v3607
        %v3736 = vunpack.c.l.b16 %v3608
        %v3737 = vunpack.c.l.b16 %v3609
        %v3738 = vunpack.c.l.b16 %v3610
        %v3739 = vunpack.c.l.b16 %v3611
        %v3740 = vunpack.c.l.b16 %v3612
        %v3741 = vunpack.c.l.b16 %v3613
        %v3742 = vunpack.c.l.b16 %v3614
        %v3743 = vunpack.c.l.b16 %v3615
        %v3744 = vunpack.c.l.b16 %v3616
        %v3745 = vunpack.c.l.b16 %v3617
        %v3746 = vunpack.c.l.b16 %v3618
        %v3747 = vunpack.c.l.b16 %v3619
        %v3748 = vunpack.c.l.b16 %v3620
        %v3749 = vunpack.c.l.b16 %v3621
        %v3750 = vunpack.c.l.b16 %v3622
        %v3751 = vunpack.c.l.b16 %v3623
        %v3752 = vunpack.c.l.b16 %v3624
        %v3753 = vunpack.c.l.b16 %v3625
        %v3754 = vunpack.c.l.b16 %v3626
        %v3755 = vunpack.c.l.b16 %v3627
        %v3756 = vunpack.c.l.b16 %v3628
        %v3757 = vunpack.c.l.b16 %v3629
        %v3758 = vunpack.c.l.b16 %v3630
        %v3759 = vunpack.c.l.b16 %v3631
        %v3760 = vunpack.c.l.b16 %v3632
        %v3761 = vunpack.c.l.b16 %v3633
        %v3762 = vunpack.c.l.b16 %v3634
        %v3763 = vunpack.c.l.b16 %v3635
        %v3764 = vunpack.c.l.b16 %v3636
        %v3765 = vunpack.c.l.b16 %v3637
        %v3766 = vunpack.c.l.b16 %v3638
        %v3767 = vunpack.c.l.b16 %v3639
        %v3768 = vunpack.c.l.b16 %v3640
        %v3769 = vunpack.c.l.b16 %v3641
        %v3770 = vunpack.c.l.b16 %v3642
        %v3771 = vunpack.c.l.b16 %v3643
        %v3772 = vunpack.c.l.b16 %v3644
        %v3773 = vpack.c.b16 %v3710, %v3709
        %v3774 = vpack.c.b16 %v3712, %v3711
        %v3775 = vpack.c.b16 %v3714, %v3713
        %v3776 = vpack.c.b16 %v3716, %v3715
        %v3777 = vpack.c.b16 %v3718, %v3717
        %v3778 = vpack.c.b16 %v3720, %v3719
        %v3779 = vpack.c.b16 %v3722, %v3721
        %v3780 = vpack.c.b16 %v3724, %v3723
        %v3781 = vpack.c.b16 %v3726, %v3725
        %v3782 = vpack.c.b16 %v3728, %v3727
        %v3783 = vpack.c.b16 %v3730, %v3729
        %v3784 = vpack.c.b16 %v3732, %v3731
        %v3785 = vpack.c.b16 %v3734, %v3733
        %v3786 = vpack.c.b16 %v3736, %v3735
        %v3787 = vpack.c.b16 %v3738, %v3737
        %v3788 = vpack.c.b16 %v3740, %v3739
        %v3789 = vpack.c.b16 %v3742, %v3741
        %v3790 = vpack.c.b16 %v3744, %v3743
        %v3791 = vpack.c.b16 %v3746, %v3745
        %v3792 = vpack.c.b16 %v3748, %v3747
        %v3793 = vpack.c.b16 %v3750, %v3749
        %v3794 = vpack.c.b16 %v3752, %v3751
        %v3795 = vpack.c.b16 %v3754, %v3753
        %v3796 = vpack.c.b16 %v3756, %v3755
        %v3797 = vpack.c.b16 %v3758, %v3757
        %v3798 = vpack.c.b16 %v3760, %v3759
        %v3799 = vpack.c.b16 %v3762, %v3761
        %v3800 = vpack.c.b16 %v3764, %v3763
        %v3801 = vpack.c.b16 %v3766, %v3765
        %v3802 = vpack.c.b16 %v3768, %v3767
        %v3803 = vpack.c.b16 %v3770, %v3769
        %v3804 = vpack.c.b16 %v3772, %v3771
        %3837 = vmatpush.bf16.msra.mxu0 %v3780
        %3838 = vmatpush.bf16.msra.mxu0 %v3779
        %3839 = vmatpush.bf16.msra.mxu0 %v3778
        %3840 = vmatpush.bf16.msra.mxu0 %v3777
        %3841 = vmatpush.bf16.msra.mxu0 %v3776
        %3842 = vmatpush.bf16.msra.mxu0 %v3775
        %3843 = vmatpush.bf16.msra.mxu0 %v3774
        %3844 = vmatpush.bf16.msra.mxu0 %v3773
        %3845 = vmatmul.bf16.gmra.mxu0 %v3577
        %v3846 = vpop.f32.mrf.mxu0
        %v3847 = vadd.f32 0.0, %v3846
        %v3848 = vpop.f32.mrf.mxu0
        %v3849 = vadd.f32 0.0, %v3848
        %3850 = vdwg.mxu0
        %3851 = vmatpush.bf16.msra.mxu0 %v3788
        %3852 = vmatpush.bf16.msra.mxu0 %v3787
        %3853 = vmatpush.bf16.msra.mxu0 %v3786
        %3854 = vmatpush.bf16.msra.mxu0 %v3785
        %3855 = vmatpush.bf16.msra.mxu0 %v3784
        %3856 = vmatpush.bf16.msra.mxu0 %v3783
        %3857 = vmatpush.bf16.msra.mxu0 %v3782
        %3858 = vmatpush.bf16.msra.mxu0 %v3781
        %3859 = vmatmul.bf16.gmra.mxu0 %v3578
        %v3860 = vpop.f32.mrf.mxu0
        %v3861 = vadd.f32 %v3847, %v3860
        %v3862 = vpop.f32.mrf.mxu0
        %v3863 = vadd.f32 %v3849, %v3862
        %3864 = vdwg.mxu0
        %3865 = vmatpush.bf16.msra.mxu0 %v3796
        %3866 = vmatpush.bf16.msra.mxu0 %v3795
        %3867 = vmatpush.bf16.msra.mxu0 %v3794
        %3868 = vmatpush.bf16.msra.mxu0 %v3793
        %3869 = vmatpush.bf16.msra.mxu0 %v3792
        %3870 = vmatpush.bf16.msra.mxu0 %v3791
        %3871 = vmatpush.bf16.msra.mxu0 %v3790
        %3872 = vmatpush.bf16.msra.mxu0 %v3789
        %3873 = vmatmul.bf16.gmra.mxu0 %v3579
        %v3874 = vpop.f32.mrf.mxu0
        %v3875 = vadd.f32 %v3861, %v3874
        %v3876 = vpop.f32.mrf.mxu0
        %v3877 = vadd.f32 %v3863, %v3876
        %3878 = vdwg.mxu0
        %3879 = vmatpush.bf16.msra.mxu0 %v3804
        %3880 = vmatpush.bf16.msra.mxu0 %v3803
        %3881 = vmatpush.bf16.msra.mxu0 %v3802
        %3882 = vmatpush.bf16.msra.mxu0 %v3801
        %3883 = vmatpush.bf16.msra.mxu0 %v3800
        %3884 = vmatpush.bf16.msra.mxu0 %v3799
        %3885 = vmatpush.bf16.msra.mxu0 %v3798
        %3886 = vmatpush.bf16.msra.mxu0 %v3797
        %3887 = vmatmul.bf16.gmra.mxu0 %v3580
        %v3888 = vpop.f32.mrf.mxu0
        %v3889 = vadd.f32 %v3875, %v3888
        %v3890 = vpop.f32.mrf.mxu0
        %v3891 = vadd.f32 %v3877, %v3890
        %3892 = vdwg.mxu0
        %v3893 = vadd.f32 %v3190, %v3889
        %v3894 = vadd.f32 %v3191, %v3891
        %v3895 = vld [vmem:[#allocation33] sm:$0x1]
        %v3897 = vperm.slane %v3895, 0
        %v3899 = vadd.f32 %v3893, %v3897
        %v3900 = vadd.f32 %v3894, %v3897
        %3901 = vst [vmem:[%s1112] sm:$0xff] %v3899
        %3902 = vst [vmem:[%s1112 + $0x8] sm:$0x1] %v3900
        %p3903 = scmp.lt.s32.totalorder %s48, 1
        %s3904 = scalar_select %p3903, %s48, 1
        %s3905 = smul.addr %s3904, 2
        %s3906 = smul.addr %s3905, 8
        %s3907 = scalar_lea.vmem %s26, %s3906
        // Predicated region
        $region209: #{pedsleep_mae_forward.6} parent=123 // pred_check
          %p3908 = pneg %p617
        $region210: #{pedsleep_mae_forward.6} parent=123 // pred_check_branch
          %3910 = sbr.rel (%p3908) target = $region212
        $region211: #{pedsleep_mae_forward.6} parent=123 // pred_region
          _
        $region212: #{pedsleep_mae_forward.6} parent=123 // pred_fallthru
          _
      $region124: #{pedsleep_mae_forward.6} parent=5 // pred_fallthru
        _
      %p3911 = scmp.le.s32.totalorder 2, %s43
      // Predicated region
      $region213: #{pedsleep_mae_forward.6} parent=5 // pred_check
        %p3912 = pneg %p3911
      $region214: #{pedsleep_mae_forward.6} parent=5 // pred_check_branch
        %3914 = sbr.rel (%p3912) target = $region216
      $region215: #{pedsleep_mae_forward.6} parent=5 // pred_region
        %s3915 = ssub.s32 %s43, 2
        // Predicated region
        $region217: #{pedsleep_mae_forward.6} parent=215 // pred_check
          %p3916 = pneg %p623
        $region218: #{pedsleep_mae_forward.6} parent=215 // pred_check_branch
          %3918 = sbr.rel (%p3916) target = $region220
        $region219: #{pedsleep_mae_forward.6} parent=215 // pred_region
          %p3919 = scmp.lt.s32.totalorder %s49, 1
          %s3920 = scalar_select %p3919, %s49, 1
          %s3921 = smul.addr %s3920, 2
          %s3922 = smul.addr %s3921, 8
          %s3923 = scalar_lea.vmem %s26, %s3922
        $region220: #{pedsleep_mae_forward.6} parent=215 // pred_fallthru
          _
      $region216: #{pedsleep_mae_forward.6} parent=5 // pred_fallthru
        _
    $region6: #{pedsleep_mae_forward.6} parent=1 // loop_footer
      %s47 = sadd.s32 1, %s43
    $region7: #{pedsleep_mae_forward.6} parent=1 // loop_footer_branch
      %42 = sbr.rel target = $region3
    $region8: #{pedsleep_mae_forward.6} parent=1 // loop_exit
      _
    %3924 = vsyncpa [#allocation3], 1
    %s3925 = scalar_lea.sflag [#allocation3], 1
    %3926 = vsyncpa %s3925, 1
    %3927 = vsyncpa [#allocation5], 1
    %3928 = vsyncpa [#allocation8], 1
    %3929 = vsyncpa [#allocation11], 1
    %3930 = vsyncpa [#allocation14], 1
    %3931 = vsyncpa [#allocation17], 1
    %3932 = vsyncpa [#allocation20], 1
    %3933 = vsyncpa [#allocation23], 1
    %3934 = vsyncpa [#allocation26], 1
    %3935 = vsyncpa [#allocation29], 1
    %3936 = vsyncpa [#allocation32], 1

</llo_original>
